<compile_context>
chip_gen: v6e
topology: v6e:2x2x1
jax: 0.10.0
libtpu: 0.0.40
codegen_flags: <defaults>
</compile_context>

<pallas_src>
import functools

import jax
import jax.numpy as jnp
from jax.experimental import pallas as pl
from jax.experimental.pallas import tpu as pltpu

_EPS = 1e-5  # PyTorch InstanceNorm2d default eps


# ---------------------------------------------------------------------------
# Fused Pallas kernel:  sum_t (P_t x W_t)  [+ bias]  [+ InstanceNorm + PReLU]
# ---------------------------------------------------------------------------
def _fused_kernel(*refs, n_terms, apply_bias, apply_adn, has_pool, chan_lanes):
    """One grid step = one sample.

    chan_lanes=True : p_t (1, L, K_t), w_t (K_t, G*C) -> y (L, G*C)  (channels on lanes)
    chan_lanes=False: p_t (1, K_t, L), w_t (G*C, K_t) -> y (G*C, L)  (spatial on lanes)

    For phase-decomposed transposed convs (G=4) the G*C channel axis is
    [phase_ee | phase_eo | phase_oe | phase_oo] x C; the pooling matrix m_ref pools
    the InstanceNorm stats over the 4 phases (i.e. the full upsampled spatial extent)
    and broadcasts them back, with 1/(G*L) folded in.
    """
    idx = 0
    p_refs = refs[idx:idx + n_terms]; idx += n_terms
    w_refs = refs[idx:idx + n_terms]; idx += n_terms
    b_ref = None
    if apply_bias:
        b_ref = refs[idx]; idx += 1
    m_ref = None
    if has_pool:
        m_ref = refs[idx]; idx += 1
    a_ref = None
    if apply_adn:
        a_ref = refs[idx]; idx += 1
    o_ref = refs[idx]

    if chan_lanes:
        y = jnp.dot(p_refs[0][0], w_refs[0][...], preferred_element_type=jnp.float32)
        for t in range(1, n_terms):
            y = y + jnp.dot(p_refs[t][0], w_refs[t][...],
                            preferred_element_type=jnp.float32)
        red = 0                                   # reduce over spatial rows
    else:
        y = jnp.dot(w_refs[0][...], p_refs[0][0], preferred_element_type=jnp.float32)
        for t in range(1, n_terms):
            y = y + jnp.dot(w_refs[t][...], p_refs[t][0],
                            preferred_element_type=jnp.float32)
        red = 1                                   # reduce over spatial lanes

    if apply_bias:
        y = y + b_ref[...]                        # f32; only for the conv_only head

    if apply_adn:
        # InstanceNorm2d(affine=False), centered variance, all in f32.
        s1 = jnp.sum(y, axis=red, keepdims=True)
        if has_pool:
            mean = (jnp.dot(s1, m_ref[...], preferred_element_type=jnp.float32)
                    if chan_lanes else
                    jnp.dot(m_ref[...], s1, preferred_element_type=jnp.float32))
        else:
            mean = s1 * (1.0 / float(y.shape[red]))
        yc = y - mean
        s2 = jnp.sum(yc * yc, axis=red, keepdims=True)
        if has_pool:
            var = (jnp.dot(s2, m_ref[...], preferred_element_type=jnp.float32)
                   if chan_lanes else
                   jnp.dot(m_ref[...], s2, preferred_element_type=jnp.float32))
        else:
            var = s2 * (1.0 / float(y.shape[red]))
        y = yc * jax.lax.rsqrt(var + _EPS)
        # Dropout(p=0.0) is identity; PReLU with a single learned slope (SMEM scalar).
        alpha = a_ref[0]
        y = jnp.where(y >= 0.0, y, y * alpha)

    o_ref[0] = y.astype(o_ref.dtype)


def _fused_conv(ps, ws, bias, pool_mat, alpha, *, apply_adn, chan_lanes, out_dtype):
    """ps: list of (N, L, K_t) [chan_lanes] or (N, K_t, L) patch tensors.
       ws: matching (K_t, G*C) / (G*C, K_t) weights."""
    n = ps[0].shape[0]
    n_terms = len(ps)
    if chan_lanes:
        l, gc = ps[0].shape[1], ws[0].shape[1]
        out_shape = (n, l, gc)
    else:
        l, gc = ps[0].shape[2], ws[0].shape[0]
        out_shape = (n, gc, l)

    in_specs = [pl.BlockSpec((1,) + p.shape[1:], lambda i: (i, 0, 0)) for p in ps]
    in_specs += [pl.BlockSpec(w.shape, lambda i: (0, 0)) for w in ws]
    operands = [p.astype(jnp.bfloat16) for p in ps] + [w.astype(jnp.bfloat16) for w in ws]

    apply_bias = bias is not None
    if apply_bias:
        in_specs.append(pl.BlockSpec(bias.shape, lambda i: (0, 0)))
        operands.append(bias.astype(jnp.float32))
    has_pool = pool_mat is not None
    if has_pool:
        in_specs.append(pl.BlockSpec(pool_mat.shape, lambda i: (0, 0)))
        operands.append(pool_mat.astype(jnp.float32))
    if apply_adn:
        in_specs.append(pl.BlockSpec(memory_space=pltpu.MemorySpace.SMEM))
        operands.append(jnp.reshape(alpha, (1,)).astype(jnp.float32))

    kernel = functools.partial(
        _fused_kernel, n_terms=n_terms, apply_bias=apply_bias,
        apply_adn=apply_adn, has_pool=has_pool, chan_lanes=chan_lanes)

    k_total = sum((w.shape[0] if chan_lanes else w.shape[1]) for w in ws)
    out_isize = jnp.dtype(out_dtype).itemsize
    cost = pl.CostEstimate(
        flops=2 * n * gc * k_total * l,
        transcendentals=(n * gc) if apply_adn else 0,
        bytes_accessed=int(sum(p.size for p in ps) * 2 + sum(w.size for w in ws) * 2
                           + (bias.size * 4 if apply_bias else 0)
                           + (pool_mat.size * 4 if has_pool else 0)
                           + n * gc * l * out_isize))

    # per-step VMEM need (double-buffered blocks + f32 intermediates), capped for v7x.
    block_bytes = (sum(p.shape[1] * p.shape[2] for p in ps) * 2
                   + sum(w.shape[0] * w.shape[1] for w in ws) * 2
                   + (pool_mat.size * 4 if has_pool else 0)
                   + gc * l * (4 + out_isize))
    vmem_limit = int(min(48 * 1024 * 1024, max(16 * 1024 * 1024, 6 * block_bytes)))

    return pl.pallas_call(
        kernel,
        out_shape=jax.ShapeDtypeStruct(out_shape, out_dtype),
        grid=(n,),
        in_specs=in_specs,
        out_specs=pl.BlockSpec((1,) + out_shape[1:], lambda i: (i, 0, 0)),
        compiler_params=pltpu.CompilerParams(
            dimension_semantics=("parallel",),     # batch axis -> both v7x TensorCores
            vmem_limit_bytes=vmem_limit),
        cost_estimate=cost,
    )(*operands)


# ---------------------------------------------------------------------------
# Layout plumbing (XLA side): im2col, shift views, phase weights, pooling matrix
# ---------------------------------------------------------------------------
def _im2col3x3(x, stride, chan_lanes):
    """3x3, padding=1 im2col.  Returns (patches, ho, wo); K ordered tap-major."""
    n, cin, h, w = x.shape
    ho = (h + 2 - 3) // stride + 1
    wo = (w + 2 - 3) // stride + 1
    xp = jnp.pad(x, ((0, 0), (0, 0), (1, 1), (1, 1)))
    taps = []
    for kh in range(3):
        for kw in range(3):
            taps.append(xp[:, :, kh:kh + stride * (ho - 1) + 1:stride,
                               kw:kw + stride * (wo - 1) + 1:stride])
    p = jnp.stack(taps, axis=1)                                    # (N, 9, Cin, Ho, Wo)
    if chan_lanes:
        p = p.transpose(0, 3, 4, 1, 2).reshape(n, ho * wo, 9 * cin)
    else:
        p = p.reshape(n, 9 * cin, ho * wo)
    return p.astype(jnp.bfloat16), ho, wo


def _shift_views(x, chan_lanes):
    """The 4 high-padded unit-shift views S00,S01,S10,S11 for the sub-pixel
    decomposition of a k=3, s=2, p=1, output_padding=1 transposed conv."""
    n, c, h, w = x.shape
    xp = jnp.pad(x, ((0, 0), (0, 0), (0, 1), (0, 1)))
    views = []
    for dh in (0, 1):
        for dw in (0, 1):
            views.append(xp[:, :, dh:dh + h, dw:dw + w])
    p = jnp.stack(views, axis=1)                                   # (N, 4, C, h, w)
    if chan_lanes:
        p = p.transpose(0, 3, 4, 1, 2).reshape(n, h * w, 4 * c)
    else:
        p = p.reshape(n, 4 * c, h * w)
    return p.astype(jnp.bfloat16)


def _phase_weights(w_sub, chan_lanes):
    """Phase-decomposed transposed-conv weight for one input stream.
    w_sub: (Cin_s, Cout, 3, 3) slice of the torch ConvTranspose2d weight.
      y[2m,2n]     = W11.x[m,n]
      y[2m,2n+1]   = W10.x[m,n+1] + W12.x[m,n]
      y[2m+1,2n]   = W01.x[m+1,n] + W21.x[m,n]
      y[2m+1,2n+1] = W00.x[m+1,n+1] + W02.x[m+1,n] + W20.x[m,n+1] + W22.x[m,n]
    Rows = phases [ee,eo,oe,oo] x Cout; columns = shift views [S00,S01,S10,S11] x Cin."""
    cin_s, cout = w_sub.shape[0], w_sub.shape[1]

    def wt(kh, kw):
        return w_sub[:, :, kh, kw].T                               # (Cout, Cin_s)

    z = jnp.zeros((cout, cin_s), w_sub.dtype)
    w_ph = jnp.concatenate([
        jnp.concatenate([wt(1, 1), z,        z,        z       ], axis=1),   # ee
        jnp.concatenate([wt(1, 2), wt(1, 0), z,        z       ], axis=1),   # eo
        jnp.concatenate([wt(2, 1), z,        wt(0, 1), z       ], axis=1),   # oe
        jnp.concatenate([wt(2, 2), wt(2, 0), wt(0, 2), wt(0, 0)], axis=1),   # oo
    ], axis=0)                                                      # (4*Cout, 4*Cin_s)
    if chan_lanes:
        w_ph = w_ph.T                                               # (4*Cin_s, 4*Cout)
    return w_ph.astype(jnp.bfloat16)


def _pool_matrix(groups, chans, n_spatial):
    """(G*C, G*C) symmetric matrix: M[i,j] = 1/(G*n_spatial) iff i%C == j%C.
    dot(per-(phase,channel) stat row, M) pools over the G phases and broadcasts the
    per-channel result back to every phase slot in one MXU op."""
    gc = groups * chans
    idx = jnp.arange(gc) % chans
    return (idx[:, None] == idx[None, :]).astype(jnp.float32) / float(groups * n_spatial)


# ---------------------------------------------------------------------------
# Layer wrappers
# ---------------------------------------------------------------------------
def conv2d_down(x, w, b_unused, alpha, *, stride):
    """Conv2d(k=3, p=1, stride) + InstanceNorm + PReLU ('NDA').  The conv bias is
    skipped: a per-channel bias before InstanceNorm(affine=False) cancels exactly."""
    del b_unused
    n, cin, h, wd = x.shape
    cout = w.shape[0]
    ho = (h + 2 - 3) // stride + 1
    wo = (wd + 2 - 3) // stride + 1
    chan_lanes = cout > ho * wo                 # lane-dense output orientation
    p, ho, wo = _im2col3x3(x, stride, chan_lanes)
    if chan_lanes:
        wk = jnp.transpose(w, (2, 3, 1, 0)).reshape(9 * cin, cout)
    else:
        wk = jnp.transpose(w, (0, 2, 3, 1)).reshape(cout, 9 * cin)
    y = _fused_conv([p], [wk], None, None, alpha,
                    apply_adn=True, chan_lanes=chan_lanes, out_dtype=jnp.bfloat16)
    if chan_lanes:                              # (N, L, C) -> (N, C, L)
        y = jnp.transpose(y, (0, 2, 1))
    return y.reshape(n, cout, ho, wo)


def conv_transpose2d_up(skip, up, w, b, alpha=None, out_dtype=jnp.bfloat16):
    """ConvTranspose2d(k=3, s=2, p=1, output_padding=1) applied to cat([skip, up], C)
    [+ InstanceNorm + PReLU].  Skip-concat is fused: two patch operands, weight split
    along K, two accumulated dots in-kernel.  Output spatial = 2x input spatial."""
    n, c_skip, h, wd = skip.shape
    cout = w.shape[1]
    l = h * wd
    gc = 4 * cout
    chan_lanes = gc > l

    p_skip = _shift_views(skip, chan_lanes)
    p_up = _shift_views(up, chan_lanes)
    w_skip = _phase_weights(w[:c_skip], chan_lanes)
    w_up = _phase_weights(w[c_skip:], chan_lanes)

    apply_adn = alpha is not None
    bias = None
    pool = None
    if apply_adn:
        pool = _pool_matrix(4, cout, l)
    else:                                        # conv_only head keeps its bias
        b_ph = jnp.tile(b.astype(jnp.float32), 4)
        bias = b_ph[None, :] if chan_lanes else b_ph[:, None]

    y = _fused_conv([p_skip, p_up], [w_skip, w_up], bias, pool, alpha,
                    apply_adn=apply_adn, chan_lanes=chan_lanes, out_dtype=out_dtype)

    # interleave the 4 phases back onto the 2x upsampled grid (layout-only)
    if chan_lanes:                               # y: (N, h*w, 4*Cout)
        y = y.reshape(n, h, wd, 2, 2, cout)
        y = jnp.transpose(y, (0, 5, 1, 3, 2, 4))
    else:                                        # y: (N, 4*Cout, h*w)
        y = y.reshape(n, 2, 2, cout, h, wd)
        y = jnp.transpose(y, (0, 3, 4, 1, 5, 2))
    return y.reshape(n, cout, 2 * h, 2 * wd)


# ---------------------------------------------------------------------------
# Parameter init (deterministic, synthetic)
# ---------------------------------------------------------------------------
def _init_conv(key, cout, cin, k=3):
    kw_, kb_ = jax.random.split(key)
    w = jax.random.normal(kw_, (cout, cin, k, k), jnp.float32) * (2.0 / (cin * k * k)) ** 0.5
    b = jax.random.normal(kb_, (cout,), jnp.float32) * 0.01
    return w, b


def _init_convt(key, cin, cout, k=3):
    kw_, kb_ = jax.random.split(key)
    w = jax.random.normal(kw_, (cin, cout, k, k), jnp.float32) * (2.0 / (cin * k * k)) ** 0.5
    b = jax.random.normal(kb_, (cout,), jnp.float32) * 0.01
    return w, b


def init_unet_params(key):
    ks = jax.random.split(key, 9)
    prelu = jnp.array(0.25, jnp.float32)         # nn.PReLU() default init
    p = {}
    p["down0"] = _init_conv(ks[0], 16, 3) + (prelu,)
    p["down1"] = _init_conv(ks[1], 32, 16) + (prelu,)
    p["down2"] = _init_conv(ks[2], 64, 32) + (prelu,)
    p["down3"] = _init_conv(ks[3], 128, 64) + (prelu,)
    p["bottom"] = _init_conv(ks[4], 256, 128) + (prelu,)
    p["up3"] = _init_convt(ks[5], 384, 64) + (prelu,)    # cat(128, 256) -> 64
    p["up2"] = _init_convt(ks[6], 128, 32) + (prelu,)    # cat(64, 64)  -> 32
    p["up1"] = _init_convt(ks[7], 64, 16) + (prelu,)     # cat(32, 32)  -> 16
    p["up0"] = _init_convt(ks[8], 32, 1)                 # cat(16, 16)  -> 1, conv_only
    return p


# ---------------------------------------------------------------------------
# UNet forward (MONAI UNet, num_res_units=0), NCHW in/out like PyTorch
# ---------------------------------------------------------------------------
def unet_monai_forward(x_nchw, params):
    x = x_nchw.astype(jnp.bfloat16)

    d0 = conv2d_down(x,  *params["down0"], stride=2)     # (N, 16,  H/2,  W/2)
    d1 = conv2d_down(d0, *params["down1"], stride=2)     # (N, 32,  H/4,  W/4)
    d2 = conv2d_down(d1, *params["down2"], stride=2)     # (N, 64,  H/8,  W/8)
    d3 = conv2d_down(d2, *params["down3"], stride=2)     # (N, 128, H/16, W/16)
    bt = conv2d_down(d3, *params["bottom"], stride=1)    # (N, 256, H/16, W/16)

    u3 = conv_transpose2d_up(d3, bt, *params["up3"])     # (N, 64, H/8, W/8)
    u2 = conv_transpose2d_up(d2, u3, *params["up2"])     # (N, 32, H/4, W/4)
    u1 = conv_transpose2d_up(d1, u2, *params["up1"])     # (N, 16, H/2, W/2)
    w0, b0 = params["up0"]
    u0 = conv_transpose2d_up(d0, u1, w0, b0, alpha=None,
                             out_dtype=jnp.float32)      # (N, 1, H, W), conv_only
    return u0


if __name__ == "__main__":
    key = jax.random.PRNGKey(0)
    k_x, k_p = jax.random.split(key)
    # batch=2, in_channels=3, spatial=32 (4 stride-2 downsamplings -> 2x2 bottleneck)
    x = jax.random.normal(k_x, (2, 3, 32, 32), jnp.float32)
    params = init_unet_params(k_p)

    fwd = jax.jit(unet_monai_forward)
    y = jax.block_until_ready(fwd(x, params))

    assert y.shape == (2, 1, 32, 32), y.shape
    assert y.dtype == jnp.float32, y.dtype
    assert bool(jnp.all(jnp.isfinite(y)))
    print("KERNEL_OK")
</pallas_src>

<mosaic_0001>
module attributes {stable_mosaic.version = 11 : i64} {
  func.func @_fused_kernel(%arg0: i32, %arg1: memref<1x27x256xbf16, #tpu.memory_space<vmem>>, %arg2: memref<16x27xbf16, #tpu.memory_space<vmem>>, %arg3: memref<1xf32, #tpu.memory_space<smem>>, %arg4: memref<1x16x256xbf16, #tpu.memory_space<vmem>>) attributes {dimension_semantics = [#tpu.dimension_semantics<parallel>], iteration_bounds = array<i64: 2>, scalar_prefetch = 0 : i64, scratch_operands = 0 : i64, tpu.core_type = #tpu.core_type<tc>, window_params = [{transform_indices = @transform_0, window_bounds = array<i64: 1, 27, 256>}, {pipeline_mode = #tpu.pipeline_mode<synchronous>, transform_indices = @transform_1, window_bounds = array<i64: 16, 27>}, {transform_indices = @transform_2, window_bounds = array<i64: 1>}, {transform_indices = @transform_3, window_bounds = array<i64: 1, 16, 256>}]} {
    %c0 = arith.constant 0 : index
    %c0_0 = arith.constant 0 : index
    %0 = vector.load %arg2[%c0, %c0_0] : memref<16x27xbf16, #tpu.memory_space<vmem>>, vector<16x27xbf16>
    %c0_1 = arith.constant 0 : index
    %c0_2 = arith.constant 0 : index
    %c0_3 = arith.constant 0 : index
    %1 = vector.load %arg1[%c0_1, %c0_2, %c0_3] : memref<1x27x256xbf16, #tpu.memory_space<vmem>>, vector<1x27x256xbf16>
    %2 = vector.shape_cast %1 : vector<1x27x256xbf16> to vector<27x256xbf16>
    %cst = arith.constant dense<0.000000e+00> : vector<16x256xf32>
    %3 = tpu.matmul %0, %2, %cst {dimension_numbers = #tpu.dot_dimension_numbers<[1], [0], [0], [1], [0, 0, 1, 1], [], []>} : vector<16x27xbf16>, vector<27x256xbf16>, vector<16x256xf32> -> vector<16x256xf32>
    %cst_4 = arith.constant dense<0.000000e+00> : vector<16xf32>
    %4 = vector.multi_reduction <add>, %3, %cst_4 [1] : vector<16x256xf32> to vector<16xf32>
    %5 = vector.shape_cast %4 : vector<16xf32> to vector<16x1xf32>
    %cst_5 = arith.constant 3.906250e-03 : f32
    %6 = vector.broadcast %cst_5 : f32 to vector<16x1xf32>
    %7 = arith.mulf %5, %6 : vector<16x1xf32>
    %8 = vector.broadcast %7 : vector<16x1xf32> to vector<16x256xf32>
    %9 = arith.subf %3, %8 : vector<16x256xf32>
    %10 = arith.mulf %9, %9 : vector<16x256xf32>
    %cst_6 = arith.constant dense<0.000000e+00> : vector<16xf32>
    %11 = vector.multi_reduction <add>, %10, %cst_6 [1] : vector<16x256xf32> to vector<16xf32>
    %12 = vector.shape_cast %11 : vector<16xf32> to vector<16x1xf32>
    %cst_7 = arith.constant 3.906250e-03 : f32
    %13 = vector.broadcast %cst_7 : f32 to vector<16x1xf32>
    %14 = arith.mulf %12, %13 : vector<16x1xf32>
    %cst_8 = arith.constant 9.99999974E-6 : f32
    %15 = vector.broadcast %cst_8 : f32 to vector<16x1xf32>
    %16 = arith.addf %14, %15 : vector<16x1xf32>
    %17 = math.rsqrt %16 : vector<16x1xf32>
    %18 = vector.broadcast %17 : vector<16x1xf32> to vector<16x256xf32>
    %19 = arith.mulf %9, %18 : vector<16x256xf32>
    %c0_9 = arith.constant 0 : index
    %20 = memref.load %arg3[%c0_9] : memref<1xf32, #tpu.memory_space<smem>>
    %cst_10 = arith.constant 0.000000e+00 : f32
    %21 = vector.broadcast %cst_10 : f32 to vector<16x256xf32>
    %22 = arith.cmpf oge, %19, %21 : vector<16x256xf32>
    %23 = vector.broadcast %20 : f32 to vector<16x256xf32>
    %24 = arith.mulf %19, %23 : vector<16x256xf32>
    %25 = arith.select %22, %19, %24 : vector<16x256xi1>, vector<16x256xf32>
    %26 = arith.truncf %25 : vector<16x256xf32> to vector<16x256xbf16>
    %c0_11 = arith.constant 0 : index
    %c0_12 = arith.constant 0 : index
    %c0_13 = arith.constant 0 : index
    %27 = vector.load %arg4[%c0_11, %c0_12, %c0_13] : memref<1x16x256xbf16, #tpu.memory_space<vmem>>, vector<1x16x256xbf16>
    %28 = vector.shape_cast %27 : vector<1x16x256xbf16> to vector<16x256xbf16>
    %29 = vector.shape_cast %26 : vector<16x256xbf16> to vector<1x16x256xbf16>
    tpu.vector_store %arg4[%c0_11, %c0_12, %c0_13], %29 {strides = array<i32>} : memref<1x16x256xbf16, #tpu.memory_space<vmem>>, vector<1x16x256xbf16>,
    return
  }
  func.func @transform_0(%arg0: i32) -> (i32, i32, i32) {
    %c0_i32 = arith.constant 0 : i32
    %c0_i32_0 = arith.constant 0 : i32
    %c0_i32_1 = arith.constant 0 : i32
    return %arg0, %c0_i32, %c0_i32_0 : i32, i32, i32
  }
  func.func @transform_1(%arg0: i32) -> (i32, i32) {
    %c0_i32 = arith.constant 0 : i32
    %c0_i32_0 = arith.constant 0 : i32
    %c0_i32_1 = arith.constant 0 : i32
    return %c0_i32, %c0_i32_0 : i32, i32
  }
  func.func @transform_2(%arg0: i32) -> i32 {
    %c0_i32 = arith.constant 0 : i32
    %c0_i32_0 = arith.constant 0 : i32
    return %c0_i32 : i32
  }
  func.func @transform_3(%arg0: i32) -> (i32, i32, i32) {
    %c0_i32 = arith.constant 0 : i32
    %c0_i32_0 = arith.constant 0 : i32
    %c0_i32_1 = arith.constant 0 : i32
    return %arg0, %c0_i32, %c0_i32_0 : i32, i32, i32
  }
}

module attributes {stable_mosaic.version = 11 : i64} {
  func.func @_fused_kernel(%arg0: i32, %arg1: memref<1x144x64xbf16, #tpu.memory_space<vmem>>, %arg2: memref<32x144xbf16, #tpu.memory_space<vmem>>, %arg3: memref<1xf32, #tpu.memory_space<smem>>, %arg4: memref<1x32x64xbf16, #tpu.memory_space<vmem>>) attributes {dimension_semantics = [#tpu.dimension_semantics<parallel>], iteration_bounds = array<i64: 2>, scalar_prefetch = 0 : i64, scratch_operands = 0 : i64, tpu.core_type = #tpu.core_type<tc>, window_params = [{transform_indices = @transform_0, window_bounds = array<i64: 1, 144, 64>}, {pipeline_mode = #tpu.pipeline_mode<synchronous>, transform_indices = @transform_1, window_bounds = array<i64: 32, 144>}, {transform_indices = @transform_2, window_bounds = array<i64: 1>}, {transform_indices = @transform_3, window_bounds = array<i64: 1, 32, 64>}]} {
    %c0 = arith.constant 0 : index
    %c0_0 = arith.constant 0 : index
    %0 = vector.load %arg2[%c0, %c0_0] : memref<32x144xbf16, #tpu.memory_space<vmem>>, vector<32x144xbf16>
    %c0_1 = arith.constant 0 : index
    %c0_2 = arith.constant 0 : index
    %c0_3 = arith.constant 0 : index
    %1 = vector.load %arg1[%c0_1, %c0_2, %c0_3] : memref<1x144x64xbf16, #tpu.memory_space<vmem>>, vector<1x144x64xbf16>
    %2 = vector.shape_cast %1 : vector<1x144x64xbf16> to vector<144x64xbf16>
    %cst = arith.constant dense<0.000000e+00> : vector<32x64xf32>
    %3 = tpu.matmul %0, %2, %cst {dimension_numbers = #tpu.dot_dimension_numbers<[1], [0], [0], [1], [0, 0, 1, 1], [], []>} : vector<32x144xbf16>, vector<144x64xbf16>, vector<32x64xf32> -> vector<32x64xf32>
    %cst_4 = arith.constant dense<0.000000e+00> : vector<32xf32>
    %4 = vector.multi_reduction <add>, %3, %cst_4 [1] : vector<32x64xf32> to vector<32xf32>
    %5 = vector.shape_cast %4 : vector<32xf32> to vector<32x1xf32>
    %cst_5 = arith.constant 1.562500e-02 : f32
    %6 = vector.broadcast %cst_5 : f32 to vector<32x1xf32>
    %7 = arith.mulf %5, %6 : vector<32x1xf32>
    %8 = vector.broadcast %7 : vector<32x1xf32> to vector<32x64xf32>
    %9 = arith.subf %3, %8 : vector<32x64xf32>
    %10 = arith.mulf %9, %9 : vector<32x64xf32>
    %cst_6 = arith.constant dense<0.000000e+00> : vector<32xf32>
    %11 = vector.multi_reduction <add>, %10, %cst_6 [1] : vector<32x64xf32> to vector<32xf32>
    %12 = vector.shape_cast %11 : vector<32xf32> to vector<32x1xf32>
    %cst_7 = arith.constant 1.562500e-02 : f32
    %13 = vector.broadcast %cst_7 : f32 to vector<32x1xf32>
    %14 = arith.mulf %12, %13 : vector<32x1xf32>
    %cst_8 = arith.constant 9.99999974E-6 : f32
    %15 = vector.broadcast %cst_8 : f32 to vector<32x1xf32>
    %16 = arith.addf %14, %15 : vector<32x1xf32>
    %17 = math.rsqrt %16 : vector<32x1xf32>
    %18 = vector.broadcast %17 : vector<32x1xf32> to vector<32x64xf32>
    %19 = arith.mulf %9, %18 : vector<32x64xf32>
    %c0_9 = arith.constant 0 : index
    %20 = memref.load %arg3[%c0_9] : memref<1xf32, #tpu.memory_space<smem>>
    %cst_10 = arith.constant 0.000000e+00 : f32
    %21 = vector.broadcast %cst_10 : f32 to vector<32x64xf32>
    %22 = arith.cmpf oge, %19, %21 : vector<32x64xf32>
    %23 = vector.broadcast %20 : f32 to vector<32x64xf32>
    %24 = arith.mulf %19, %23 : vector<32x64xf32>
    %25 = arith.select %22, %19, %24 : vector<32x64xi1>, vector<32x64xf32>
    %26 = arith.truncf %25 : vector<32x64xf32> to vector<32x64xbf16>
    %c0_11 = arith.constant 0 : index
    %c0_12 = arith.constant 0 : index
    %c0_13 = arith.constant 0 : index
    %27 = vector.load %arg4[%c0_11, %c0_12, %c0_13] : memref<1x32x64xbf16, #tpu.memory_space<vmem>>, vector<1x32x64xbf16>
    %28 = vector.shape_cast %27 : vector<1x32x64xbf16> to vector<32x64xbf16>
    %29 = vector.shape_cast %26 : vector<32x64xbf16> to vector<1x32x64xbf16>
    tpu.vector_store %arg4[%c0_11, %c0_12, %c0_13], %29 {strides = array<i32>} : memref<1x32x64xbf16, #tpu.memory_space<vmem>>, vector<1x32x64xbf16>,
    return
  }
  func.func @transform_0(%arg0: i32) -> (i32, i32, i32) {
    %c0_i32 = arith.constant 0 : i32
    %c0_i32_0 = arith.constant 0 : i32
    %c0_i32_1 = arith.constant 0 : i32
    return %arg0, %c0_i32, %c0_i32_0 : i32, i32, i32
  }
  func.func @transform_1(%arg0: i32) -> (i32, i32) {
    %c0_i32 = arith.constant 0 : i32
    %c0_i32_0 = arith.constant 0 : i32
    %c0_i32_1 = arith.constant 0 : i32
    return %c0_i32, %c0_i32_0 : i32, i32
  }
  func.func @transform_2(%arg0: i32) -> i32 {
    %c0_i32 = arith.constant 0 : i32
    %c0_i32_0 = arith.constant 0 : i32
    return %c0_i32 : i32
  }
  func.func @transform_3(%arg0: i32) -> (i32, i32, i32) {
    %c0_i32 = arith.constant 0 : i32
    %c0_i32_0 = arith.constant 0 : i32
    %c0_i32_1 = arith.constant 0 : i32
    return %arg0, %c0_i32, %c0_i32_0 : i32, i32, i32
  }
}

module attributes {stable_mosaic.version = 11 : i64} {
  func.func @_fused_kernel(%arg0: i32, %arg1: memref<1x16x288xbf16, #tpu.memory_space<vmem>>, %arg2: memref<288x64xbf16, #tpu.memory_space<vmem>>, %arg3: memref<1xf32, #tpu.memory_space<smem>>, %arg4: memref<1x16x64xbf16, #tpu.memory_space<vmem>>) attributes {dimension_semantics = [#tpu.dimension_semantics<parallel>], iteration_bounds = array<i64: 2>, scalar_prefetch = 0 : i64, scratch_operands = 0 : i64, tpu.core_type = #tpu.core_type<tc>, window_params = [{transform_indices = @transform_0, window_bounds = array<i64: 1, 16, 288>}, {pipeline_mode = #tpu.pipeline_mode<synchronous>, transform_indices = @transform_1, window_bounds = array<i64: 288, 64>}, {transform_indices = @transform_2, window_bounds = array<i64: 1>}, {transform_indices = @transform_3, window_bounds = array<i64: 1, 16, 64>}]} {
    %c0 = arith.constant 0 : index
    %c0_0 = arith.constant 0 : index
    %c0_1 = arith.constant 0 : index
    %0 = vector.load %arg1[%c0, %c0_0, %c0_1] : memref<1x16x288xbf16, #tpu.memory_space<vmem>>, vector<1x16x288xbf16>
    %1 = vector.shape_cast %0 : vector<1x16x288xbf16> to vector<16x288xbf16>
    %c0_2 = arith.constant 0 : index
    %c0_3 = arith.constant 0 : index
    %2 = vector.load %arg2[%c0_2, %c0_3] : memref<288x64xbf16, #tpu.memory_space<vmem>>, vector<288x64xbf16>
    %cst = arith.constant dense<0.000000e+00> : vector<16x64xf32>
    %3 = tpu.matmul %1, %2, %cst {dimension_numbers = #tpu.dot_dimension_numbers<[1], [0], [0], [1], [0, 0, 1, 1], [], []>} : vector<16x288xbf16>, vector<288x64xbf16>, vector<16x64xf32> -> vector<16x64xf32>
    %cst_4 = arith.constant dense<0.000000e+00> : vector<64xf32>
    %4 = vector.multi_reduction <add>, %3, %cst_4 [0] : vector<16x64xf32> to vector<64xf32>
    %5 = vector.shape_cast %4 : vector<64xf32> to vector<1x64xf32>
    %cst_5 = arith.constant 6.250000e-02 : f32
    %6 = vector.broadcast %cst_5 : f32 to vector<1x64xf32>
    %7 = arith.mulf %5, %6 : vector<1x64xf32>
    %8 = vector.broadcast %7 : vector<1x64xf32> to vector<16x64xf32>
    %9 = arith.subf %3, %8 : vector<16x64xf32>
    %10 = arith.mulf %9, %9 : vector<16x64xf32>
    %cst_6 = arith.constant dense<0.000000e+00> : vector<64xf32>
    %11 = vector.multi_reduction <add>, %10, %cst_6 [0] : vector<16x64xf32> to vector<64xf32>
    %12 = vector.shape_cast %11 : vector<64xf32> to vector<1x64xf32>
    %cst_7 = arith.constant 6.250000e-02 : f32
    %13 = vector.broadcast %cst_7 : f32 to vector<1x64xf32>
    %14 = arith.mulf %12, %13 : vector<1x64xf32>
    %cst_8 = arith.constant 9.99999974E-6 : f32
    %15 = vector.broadcast %cst_8 : f32 to vector<1x64xf32>
    %16 = arith.addf %14, %15 : vector<1x64xf32>
    %17 = math.rsqrt %16 : vector<1x64xf32>
    %18 = vector.broadcast %17 : vector<1x64xf32> to vector<16x64xf32>
    %19 = arith.mulf %9, %18 : vector<16x64xf32>
    %c0_9 = arith.constant 0 : index
    %20 = memref.load %arg3[%c0_9] : memref<1xf32, #tpu.memory_space<smem>>
    %cst_10 = arith.constant 0.000000e+00 : f32
    %21 = vector.broadcast %cst_10 : f32 to vector<16x64xf32>
    %22 = arith.cmpf oge, %19, %21 : vector<16x64xf32>
    %23 = vector.broadcast %20 : f32 to vector<16x64xf32>
    %24 = arith.mulf %19, %23 : vector<16x64xf32>
    %25 = arith.select %22, %19, %24 : vector<16x64xi1>, vector<16x64xf32>
    %26 = arith.truncf %25 : vector<16x64xf32> to vector<16x64xbf16>
    %c0_11 = arith.constant 0 : index
    %c0_12 = arith.constant 0 : index
    %c0_13 = arith.constant 0 : index
    %27 = vector.load %arg4[%c0_11, %c0_12, %c0_13] : memref<1x16x64xbf16, #tpu.memory_space<vmem>>, vector<1x16x64xbf16>
    %28 = vector.shape_cast %27 : vector<1x16x64xbf16> to vector<16x64xbf16>
    %29 = vector.shape_cast %26 : vector<16x64xbf16> to vector<1x16x64xbf16>
    tpu.vector_store %arg4[%c0_11, %c0_12, %c0_13], %29 {strides = array<i32>} : memref<1x16x64xbf16, #tpu.memory_space<vmem>>, vector<1x16x64xbf16>,
    return
  }
  func.func @transform_0(%arg0: i32) -> (i32, i32, i32) {
    %c0_i32 = arith.constant 0 : i32
    %c0_i32_0 = arith.constant 0 : i32
    %c0_i32_1 = arith.constant 0 : i32
    return %arg0, %c0_i32, %c0_i32_0 : i32, i32, i32
  }
  func.func @transform_1(%arg0: i32) -> (i32, i32) {
    %c0_i32 = arith.constant 0 : i32
    %c0_i32_0 = arith.constant 0 : i32
    %c0_i32_1 = arith.constant 0 : i32
    return %c0_i32, %c0_i32_0 : i32, i32
  }
  func.func @transform_2(%arg0: i32) -> i32 {
    %c0_i32 = arith.constant 0 : i32
    %c0_i32_0 = arith.constant 0 : i32
    return %c0_i32 : i32
  }
  func.func @transform_3(%arg0: i32) -> (i32, i32, i32) {
    %c0_i32 = arith.constant 0 : i32
    %c0_i32_0 = arith.constant 0 : i32
    %c0_i32_1 = arith.constant 0 : i32
    return %arg0, %c0_i32, %c0_i32_0 : i32, i32, i32
  }
}

module attributes {stable_mosaic.version = 11 : i64} {
  func.func @_fused_kernel(%arg0: i32, %arg1: memref<1x4x576xbf16, #tpu.memory_space<vmem>>, %arg2: memref<576x128xbf16, #tpu.memory_space<vmem>>, %arg3: memref<1xf32, #tpu.memory_space<smem>>, %arg4: memref<1x4x128xbf16, #tpu.memory_space<vmem>>) attributes {dimension_semantics = [#tpu.dimension_semantics<parallel>], iteration_bounds = array<i64: 2>, scalar_prefetch = 0 : i64, scratch_operands = 0 : i64, tpu.core_type = #tpu.core_type<tc>, window_params = [{transform_indices = @transform_0, window_bounds = array<i64: 1, 4, 576>}, {pipeline_mode = #tpu.pipeline_mode<synchronous>, transform_indices = @transform_1, window_bounds = array<i64: 576, 128>}, {transform_indices = @transform_2, window_bounds = array<i64: 1>}, {transform_indices = @transform_3, window_bounds = array<i64: 1, 4, 128>}]} {
    %c0 = arith.constant 0 : index
    %c0_0 = arith.constant 0 : index
    %c0_1 = arith.constant 0 : index
    %0 = vector.load %arg1[%c0, %c0_0, %c0_1] : memref<1x4x576xbf16, #tpu.memory_space<vmem>>, vector<1x4x576xbf16>
    %1 = vector.shape_cast %0 : vector<1x4x576xbf16> to vector<4x576xbf16>
    %c0_2 = arith.constant 0 : index
    %c0_3 = arith.constant 0 : index
    %2 = vector.load %arg2[%c0_2, %c0_3] : memref<576x128xbf16, #tpu.memory_space<vmem>>, vector<576x128xbf16>
    %cst = arith.constant dense<0.000000e+00> : vector<4x128xf32>
    %3 = tpu.matmul %1, %2, %cst {dimension_numbers = #tpu.dot_dimension_numbers<[1], [0], [0], [1], [0, 0, 1, 1], [], []>} : vector<4x576xbf16>, vector<576x128xbf16>, vector<4x128xf32> -> vector<4x128xf32>
    %cst_4 = arith.constant dense<0.000000e+00> : vector<128xf32>
    %4 = vector.multi_reduction <add>, %3, %cst_4 [0] : vector<4x128xf32> to vector<128xf32>
    %5 = vector.shape_cast %4 : vector<128xf32> to vector<1x128xf32>
    %cst_5 = arith.constant 2.500000e-01 : f32
    %6 = vector.broadcast %cst_5 : f32 to vector<1x128xf32>
    %7 = arith.mulf %5, %6 : vector<1x128xf32>
    %8 = vector.broadcast %7 : vector<1x128xf32> to vector<4x128xf32>
    %9 = arith.subf %3, %8 : vector<4x128xf32>
    %10 = arith.mulf %9, %9 : vector<4x128xf32>
    %cst_6 = arith.constant dense<0.000000e+00> : vector<128xf32>
    %11 = vector.multi_reduction <add>, %10, %cst_6 [0] : vector<4x128xf32> to vector<128xf32>
    %12 = vector.shape_cast %11 : vector<128xf32> to vector<1x128xf32>
    %cst_7 = arith.constant 2.500000e-01 : f32
    %13 = vector.broadcast %cst_7 : f32 to vector<1x128xf32>
    %14 = arith.mulf %12, %13 : vector<1x128xf32>
    %cst_8 = arith.constant 9.99999974E-6 : f32
    %15 = vector.broadcast %cst_8 : f32 to vector<1x128xf32>
    %16 = arith.addf %14, %15 : vector<1x128xf32>
    %17 = math.rsqrt %16 : vector<1x128xf32>
    %18 = vector.broadcast %17 : vector<1x128xf32> to vector<4x128xf32>
    %19 = arith.mulf %9, %18 : vector<4x128xf32>
    %c0_9 = arith.constant 0 : index
    %20 = memref.load %arg3[%c0_9] : memref<1xf32, #tpu.memory_space<smem>>
    %cst_10 = arith.constant 0.000000e+00 : f32
    %21 = vector.broadcast %cst_10 : f32 to vector<4x128xf32>
    %22 = arith.cmpf oge, %19, %21 : vector<4x128xf32>
    %23 = vector.broadcast %20 : f32 to vector<4x128xf32>
    %24 = arith.mulf %19, %23 : vector<4x128xf32>
    %25 = arith.select %22, %19, %24 : vector<4x128xi1>, vector<4x128xf32>
    %26 = arith.truncf %25 : vector<4x128xf32> to vector<4x128xbf16>
    %c0_11 = arith.constant 0 : index
    %c0_12 = arith.constant 0 : index
    %c0_13 = arith.constant 0 : index
    %27 = vector.load %arg4[%c0_11, %c0_12, %c0_13] : memref<1x4x128xbf16, #tpu.memory_space<vmem>>, vector<1x4x128xbf16>
    %28 = vector.shape_cast %27 : vector<1x4x128xbf16> to vector<4x128xbf16>
    %29 = vector.shape_cast %26 : vector<4x128xbf16> to vector<1x4x128xbf16>
    tpu.vector_store %arg4[%c0_11, %c0_12, %c0_13], %29 {strides = array<i32>} : memref<1x4x128xbf16, #tpu.memory_space<vmem>>, vector<1x4x128xbf16>,
    return
  }
  func.func @transform_0(%arg0: i32) -> (i32, i32, i32) {
    %c0_i32 = arith.constant 0 : i32
    %c0_i32_0 = arith.constant 0 : i32
    %c0_i32_1 = arith.constant 0 : i32
    return %arg0, %c0_i32, %c0_i32_0 : i32, i32, i32
  }
  func.func @transform_1(%arg0: i32) -> (i32, i32) {
    %c0_i32 = arith.constant 0 : i32
    %c0_i32_0 = arith.constant 0 : i32
    %c0_i32_1 = arith.constant 0 : i32
    return %c0_i32, %c0_i32_0 : i32, i32
  }
  func.func @transform_2(%arg0: i32) -> i32 {
    %c0_i32 = arith.constant 0 : i32
    %c0_i32_0 = arith.constant 0 : i32
    return %c0_i32 : i32
  }
  func.func @transform_3(%arg0: i32) -> (i32, i32, i32) {
    %c0_i32 = arith.constant 0 : i32
    %c0_i32_0 = arith.constant 0 : i32
    %c0_i32_1 = arith.constant 0 : i32
    return %arg0, %c0_i32, %c0_i32_0 : i32, i32, i32
  }
}

module attributes {stable_mosaic.version = 11 : i64} {
  func.func @_fused_kernel(%arg0: i32, %arg1: memref<1x4x1152xbf16, #tpu.memory_space<vmem>>, %arg2: memref<1152x256xbf16, #tpu.memory_space<vmem>>, %arg3: memref<1xf32, #tpu.memory_space<smem>>, %arg4: memref<1x4x256xbf16, #tpu.memory_space<vmem>>) attributes {dimension_semantics = [#tpu.dimension_semantics<parallel>], iteration_bounds = array<i64: 2>, scalar_prefetch = 0 : i64, scratch_operands = 0 : i64, tpu.core_type = #tpu.core_type<tc>, window_params = [{transform_indices = @transform_0, window_bounds = array<i64: 1, 4, 1152>}, {pipeline_mode = #tpu.pipeline_mode<synchronous>, transform_indices = @transform_1, window_bounds = array<i64: 1152, 256>}, {transform_indices = @transform_2, window_bounds = array<i64: 1>}, {transform_indices = @transform_3, window_bounds = array<i64: 1, 4, 256>}]} {
    %c0 = arith.constant 0 : index
    %c0_0 = arith.constant 0 : index
    %c0_1 = arith.constant 0 : index
    %0 = vector.load %arg1[%c0, %c0_0, %c0_1] : memref<1x4x1152xbf16, #tpu.memory_space<vmem>>, vector<1x4x1152xbf16>
    %1 = vector.shape_cast %0 : vector<1x4x1152xbf16> to vector<4x1152xbf16>
    %c0_2 = arith.constant 0 : index
    %c0_3 = arith.constant 0 : index
    %2 = vector.load %arg2[%c0_2, %c0_3] : memref<1152x256xbf16, #tpu.memory_space<vmem>>, vector<1152x256xbf16>
    %cst = arith.constant dense<0.000000e+00> : vector<4x256xf32>
    %3 = tpu.matmul %1, %2, %cst {dimension_numbers = #tpu.dot_dimension_numbers<[1], [0], [0], [1], [0, 0, 1, 1], [], []>} : vector<4x1152xbf16>, vector<1152x256xbf16>, vector<4x256xf32> -> vector<4x256xf32>
    %cst_4 = arith.constant dense<0.000000e+00> : vector<256xf32>
    %4 = vector.multi_reduction <add>, %3, %cst_4 [0] : vector<4x256xf32> to vector<256xf32>
    %5 = vector.shape_cast %4 : vector<256xf32> to vector<1x256xf32>
    %cst_5 = arith.constant 2.500000e-01 : f32
    %6 = vector.broadcast %cst_5 : f32 to vector<1x256xf32>
    %7 = arith.mulf %5, %6 : vector<1x256xf32>
    %8 = vector.broadcast %7 : vector<1x256xf32> to vector<4x256xf32>
    %9 = arith.subf %3, %8 : vector<4x256xf32>
    %10 = arith.mulf %9, %9 : vector<4x256xf32>
    %cst_6 = arith.constant dense<0.000000e+00> : vector<256xf32>
    %11 = vector.multi_reduction <add>, %10, %cst_6 [0] : vector<4x256xf32> to vector<256xf32>
    %12 = vector.shape_cast %11 : vector<256xf32> to vector<1x256xf32>
    %cst_7 = arith.constant 2.500000e-01 : f32
    %13 = vector.broadcast %cst_7 : f32 to vector<1x256xf32>
    %14 = arith.mulf %12, %13 : vector<1x256xf32>
    %cst_8 = arith.constant 9.99999974E-6 : f32
    %15 = vector.broadcast %cst_8 : f32 to vector<1x256xf32>
    %16 = arith.addf %14, %15 : vector<1x256xf32>
    %17 = math.rsqrt %16 : vector<1x256xf32>
    %18 = vector.broadcast %17 : vector<1x256xf32> to vector<4x256xf32>
    %19 = arith.mulf %9, %18 : vector<4x256xf32>
    %c0_9 = arith.constant 0 : index
    %20 = memref.load %arg3[%c0_9] : memref<1xf32, #tpu.memory_space<smem>>
    %cst_10 = arith.constant 0.000000e+00 : f32
    %21 = vector.broadcast %cst_10 : f32 to vector<4x256xf32>
    %22 = arith.cmpf oge, %19, %21 : vector<4x256xf32>
    %23 = vector.broadcast %20 : f32 to vector<4x256xf32>
    %24 = arith.mulf %19, %23 : vector<4x256xf32>
    %25 = arith.select %22, %19, %24 : vector<4x256xi1>, vector<4x256xf32>
    %26 = arith.truncf %25 : vector<4x256xf32> to vector<4x256xbf16>
    %c0_11 = arith.constant 0 : index
    %c0_12 = arith.constant 0 : index
    %c0_13 = arith.constant 0 : index
    %27 = vector.load %arg4[%c0_11, %c0_12, %c0_13] : memref<1x4x256xbf16, #tpu.memory_space<vmem>>, vector<1x4x256xbf16>
    %28 = vector.shape_cast %27 : vector<1x4x256xbf16> to vector<4x256xbf16>
    %29 = vector.shape_cast %26 : vector<4x256xbf16> to vector<1x4x256xbf16>
    tpu.vector_store %arg4[%c0_11, %c0_12, %c0_13], %29 {strides = array<i32>} : memref<1x4x256xbf16, #tpu.memory_space<vmem>>, vector<1x4x256xbf16>,
    return
  }
  func.func @transform_0(%arg0: i32) -> (i32, i32, i32) {
    %c0_i32 = arith.constant 0 : i32
    %c0_i32_0 = arith.constant 0 : i32
    %c0_i32_1 = arith.constant 0 : i32
    return %arg0, %c0_i32, %c0_i32_0 : i32, i32, i32
  }
  func.func @transform_1(%arg0: i32) -> (i32, i32) {
    %c0_i32 = arith.constant 0 : i32
    %c0_i32_0 = arith.constant 0 : i32
    %c0_i32_1 = arith.constant 0 : i32
    return %c0_i32, %c0_i32_0 : i32, i32
  }
  func.func @transform_2(%arg0: i32) -> i32 {
    %c0_i32 = arith.constant 0 : i32
    %c0_i32_0 = arith.constant 0 : i32
    return %c0_i32 : i32
  }
  func.func @transform_3(%arg0: i32) -> (i32, i32, i32) {
    %c0_i32 = arith.constant 0 : i32
    %c0_i32_0 = arith.constant 0 : i32
    %c0_i32_1 = arith.constant 0 : i32
    return %arg0, %c0_i32, %c0_i32_0 : i32, i32, i32
  }
}

module attributes {stable_mosaic.version = 11 : i64} {
  func.func @_fused_kernel(%arg0: i32, %arg1: memref<1x4x512xbf16, #tpu.memory_space<vmem>>, %arg2: memref<1x4x1024xbf16, #tpu.memory_space<vmem>>, %arg3: memref<512x256xbf16, #tpu.memory_space<vmem>>, %arg4: memref<1024x256xbf16, #tpu.memory_space<vmem>>, %arg5: memref<256x256xf32, #tpu.memory_space<vmem>>, %arg6: memref<1xf32, #tpu.memory_space<smem>>, %arg7: memref<1x4x256xbf16, #tpu.memory_space<vmem>>) attributes {dimension_semantics = [#tpu.dimension_semantics<parallel>], iteration_bounds = array<i64: 2>, scalar_prefetch = 0 : i64, scratch_operands = 0 : i64, tpu.core_type = #tpu.core_type<tc>, window_params = [{transform_indices = @transform_0, window_bounds = array<i64: 1, 4, 512>}, {transform_indices = @transform_1, window_bounds = array<i64: 1, 4, 1024>}, {pipeline_mode = #tpu.pipeline_mode<synchronous>, transform_indices = @transform_2, window_bounds = array<i64: 512, 256>}, {pipeline_mode = #tpu.pipeline_mode<synchronous>, transform_indices = @transform_3, window_bounds = array<i64: 1024, 256>}, {pipeline_mode = #tpu.pipeline_mode<synchronous>, transform_indices = @transform_4, window_bounds = array<i64: 256, 256>}, {transform_indices = @transform_5, window_bounds = array<i64: 1>}, {transform_indices = @transform_6, window_bounds = array<i64: 1, 4, 256>}]} {
    %c0 = arith.constant 0 : index
    %c0_0 = arith.constant 0 : index
    %c0_1 = arith.constant 0 : index
    %0 = vector.load %arg1[%c0, %c0_0, %c0_1] : memref<1x4x512xbf16, #tpu.memory_space<vmem>>, vector<1x4x512xbf16>
    %1 = vector.shape_cast %0 : vector<1x4x512xbf16> to vector<4x512xbf16>
    %c0_2 = arith.constant 0 : index
    %c0_3 = arith.constant 0 : index
    %2 = vector.load %arg3[%c0_2, %c0_3] : memref<512x256xbf16, #tpu.memory_space<vmem>>, vector<512x256xbf16>
    %cst = arith.constant dense<0.000000e+00> : vector<4x256xf32>
    %3 = tpu.matmul %1, %2, %cst {dimension_numbers = #tpu.dot_dimension_numbers<[1], [0], [0], [1], [0, 0, 1, 1], [], []>} : vector<4x512xbf16>, vector<512x256xbf16>, vector<4x256xf32> -> vector<4x256xf32>
    %c0_4 = arith.constant 0 : index
    %c0_5 = arith.constant 0 : index
    %c0_6 = arith.constant 0 : index
    %4 = vector.load %arg2[%c0_4, %c0_5, %c0_6] : memref<1x4x1024xbf16, #tpu.memory_space<vmem>>, vector<1x4x1024xbf16>
    %5 = vector.shape_cast %4 : vector<1x4x1024xbf16> to vector<4x1024xbf16>
    %c0_7 = arith.constant 0 : index
    %c0_8 = arith.constant 0 : index
    %6 = vector.load %arg4[%c0_7, %c0_8] : memref<1024x256xbf16, #tpu.memory_space<vmem>>, vector<1024x256xbf16>
    %cst_9 = arith.constant dense<0.000000e+00> : vector<4x256xf32>
    %7 = tpu.matmul %5, %6, %cst_9 {dimension_numbers = #tpu.dot_dimension_numbers<[1], [0], [0], [1], [0, 0, 1, 1], [], []>} : vector<4x1024xbf16>, vector<1024x256xbf16>, vector<4x256xf32> -> vector<4x256xf32>
    %8 = arith.addf %3, %7 : vector<4x256xf32>
    %cst_10 = arith.constant dense<0.000000e+00> : vector<256xf32>
    %9 = vector.multi_reduction <add>, %8, %cst_10 [0] : vector<4x256xf32> to vector<256xf32>
    %10 = vector.shape_cast %9 : vector<256xf32> to vector<1x256xf32>
    %c0_11 = arith.constant 0 : index
    %c0_12 = arith.constant 0 : index
    %11 = vector.load %arg5[%c0_11, %c0_12] : memref<256x256xf32, #tpu.memory_space<vmem>>, vector<256x256xf32>
    %cst_13 = arith.constant dense<0.000000e+00> : vector<1x256xf32>
    %12 = tpu.matmul %10, %11, %cst_13 {dimension_numbers = #tpu.dot_dimension_numbers<[1], [0], [0], [1], [0, 0, 1, 1], [], []>} : vector<1x256xf32>, vector<256x256xf32>, vector<1x256xf32> -> vector<1x256xf32>
    %13 = vector.broadcast %12 : vector<1x256xf32> to vector<4x256xf32>
    %14 = arith.subf %8, %13 : vector<4x256xf32>
    %15 = arith.mulf %14, %14 : vector<4x256xf32>
    %cst_14 = arith.constant dense<0.000000e+00> : vector<256xf32>
    %16 = vector.multi_reduction <add>, %15, %cst_14 [0] : vector<4x256xf32> to vector<256xf32>
    %17 = vector.shape_cast %16 : vector<256xf32> to vector<1x256xf32>
    %c0_15 = arith.constant 0 : index
    %c0_16 = arith.constant 0 : index
    %18 = vector.load %arg5[%c0_15, %c0_16] : memref<256x256xf32, #tpu.memory_space<vmem>>, vector<256x256xf32>
    %cst_17 = arith.constant dense<0.000000e+00> : vector<1x256xf32>
    %19 = tpu.matmul %17, %18, %cst_17 {dimension_numbers = #tpu.dot_dimension_numbers<[1], [0], [0], [1], [0, 0, 1, 1], [], []>} : vector<1x256xf32>, vector<256x256xf32>, vector<1x256xf32> -> vector<1x256xf32>
    %cst_18 = arith.constant 9.99999974E-6 : f32
    %20 = vector.broadcast %cst_18 : f32 to vector<1x256xf32>
    %21 = arith.addf %19, %20 : vector<1x256xf32>
    %22 = math.rsqrt %21 : vector<1x256xf32>
    %23 = vector.broadcast %22 : vector<1x256xf32> to vector<4x256xf32>
    %24 = arith.mulf %14, %23 : vector<4x256xf32>
    %c0_19 = arith.constant 0 : index
    %25 = memref.load %arg6[%c0_19] : memref<1xf32, #tpu.memory_space<smem>>
    %cst_20 = arith.constant 0.000000e+00 : f32
    %26 = vector.broadcast %cst_20 : f32 to vector<4x256xf32>
    %27 = arith.cmpf oge, %24, %26 : vector<4x256xf32>
    %28 = vector.broadcast %25 : f32 to vector<4x256xf32>
    %29 = arith.mulf %24, %28 : vector<4x256xf32>
    %30 = arith.select %27, %24, %29 : vector<4x256xi1>, vector<4x256xf32>
    %31 = arith.truncf %30 : vector<4x256xf32> to vector<4x256xbf16>
    %c0_21 = arith.constant 0 : index
    %c0_22 = arith.constant 0 : index
    %c0_23 = arith.constant 0 : index
    %32 = vector.load %arg7[%c0_21, %c0_22, %c0_23] : memref<1x4x256xbf16, #tpu.memory_space<vmem>>, vector<1x4x256xbf16>
    %33 = vector.shape_cast %32 : vector<1x4x256xbf16> to vector<4x256xbf16>
    %34 = vector.shape_cast %31 : vector<4x256xbf16> to vector<1x4x256xbf16>
    tpu.vector_store %arg7[%c0_21, %c0_22, %c0_23], %34 {strides = array<i32>} : memref<1x4x256xbf16, #tpu.memory_space<vmem>>, vector<1x4x256xbf16>,
    return
  }
  func.func @transform_0(%arg0: i32) -> (i32, i32, i32) {
    %c0_i32 = arith.constant 0 : i32
    %c0_i32_0 = arith.constant 0 : i32
    %c0_i32_1 = arith.constant 0 : i32
    return %arg0, %c0_i32, %c0_i32_0 : i32, i32, i32
  }
  func.func @transform_1(%arg0: i32) -> (i32, i32, i32) {
    %c0_i32 = arith.constant 0 : i32
    %c0_i32_0 = arith.constant 0 : i32
    %c0_i32_1 = arith.constant 0 : i32
    return %arg0, %c0_i32, %c0_i32_0 : i32, i32, i32
  }
  func.func @transform_2(%arg0: i32) -> (i32, i32) {
    %c0_i32 = arith.constant 0 : i32
    %c0_i32_0 = arith.constant 0 : i32
    %c0_i32_1 = arith.constant 0 : i32
    return %c0_i32, %c0_i32_0 : i32, i32
  }
  func.func @transform_3(%arg0: i32) -> (i32, i32) {
    %c0_i32 = arith.constant 0 : i32
    %c0_i32_0 = arith.constant 0 : i32
    %c0_i32_1 = arith.constant 0 : i32
    return %c0_i32, %c0_i32_0 : i32, i32
  }
  func.func @transform_4(%arg0: i32) -> (i32, i32) {
    %c0_i32 = arith.constant 0 : i32
    %c0_i32_0 = arith.constant 0 : i32
    %c0_i32_1 = arith.constant 0 : i32
    return %c0_i32, %c0_i32_0 : i32, i32
  }
  func.func @transform_5(%arg0: i32) -> i32 {
    %c0_i32 = arith.constant 0 : i32
    %c0_i32_0 = arith.constant 0 : i32
    return %c0_i32 : i32
  }
  func.func @transform_6(%arg0: i32) -> (i32, i32, i32) {
    %c0_i32 = arith.constant 0 : i32
    %c0_i32_0 = arith.constant 0 : i32
    %c0_i32_1 = arith.constant 0 : i32
    return %arg0, %c0_i32, %c0_i32_0 : i32, i32, i32
  }
}

module attributes {stable_mosaic.version = 11 : i64} {
  func.func @_fused_kernel(%arg0: i32, %arg1: memref<1x16x256xbf16, #tpu.memory_space<vmem>>, %arg2: memref<1x16x256xbf16, #tpu.memory_space<vmem>>, %arg3: memref<256x128xbf16, #tpu.memory_space<vmem>>, %arg4: memref<256x128xbf16, #tpu.memory_space<vmem>>, %arg5: memref<128x128xf32, #tpu.memory_space<vmem>>, %arg6: memref<1xf32, #tpu.memory_space<smem>>, %arg7: memref<1x16x128xbf16, #tpu.memory_space<vmem>>) attributes {dimension_semantics = [#tpu.dimension_semantics<parallel>], iteration_bounds = array<i64: 2>, scalar_prefetch = 0 : i64, scratch_operands = 0 : i64, tpu.core_type = #tpu.core_type<tc>, window_params = [{transform_indices = @transform_0, window_bounds = array<i64: 1, 16, 256>}, {transform_indices = @transform_1, window_bounds = array<i64: 1, 16, 256>}, {pipeline_mode = #tpu.pipeline_mode<synchronous>, transform_indices = @transform_2, window_bounds = array<i64: 256, 128>}, {pipeline_mode = #tpu.pipeline_mode<synchronous>, transform_indices = @transform_3, window_bounds = array<i64: 256, 128>}, {pipeline_mode = #tpu.pipeline_mode<synchronous>, transform_indices = @transform_4, window_bounds = array<i64: 128, 128>}, {transform_indices = @transform_5, window_bounds = array<i64: 1>}, {transform_indices = @transform_6, window_bounds = array<i64: 1, 16, 128>}]} {
    %c0 = arith.constant 0 : index
    %c0_0 = arith.constant 0 : index
    %c0_1 = arith.constant 0 : index
    %0 = vector.load %arg1[%c0, %c0_0, %c0_1] : memref<1x16x256xbf16, #tpu.memory_space<vmem>>, vector<1x16x256xbf16>
    %1 = vector.shape_cast %0 : vector<1x16x256xbf16> to vector<16x256xbf16>
    %c0_2 = arith.constant 0 : index
    %c0_3 = arith.constant 0 : index
    %2 = vector.load %arg3[%c0_2, %c0_3] : memref<256x128xbf16, #tpu.memory_space<vmem>>, vector<256x128xbf16>
    %cst = arith.constant dense<0.000000e+00> : vector<16x128xf32>
    %3 = tpu.matmul %1, %2, %cst {dimension_numbers = #tpu.dot_dimension_numbers<[1], [0], [0], [1], [0, 0, 1, 1], [], []>} : vector<16x256xbf16>, vector<256x128xbf16>, vector<16x128xf32> -> vector<16x128xf32>
    %c0_4 = arith.constant 0 : index
    %c0_5 = arith.constant 0 : index
    %c0_6 = arith.constant 0 : index
    %4 = vector.load %arg2[%c0_4, %c0_5, %c0_6] : memref<1x16x256xbf16, #tpu.memory_space<vmem>>, vector<1x16x256xbf16>
    %5 = vector.shape_cast %4 : vector<1x16x256xbf16> to vector<16x256xbf16>
    %c0_7 = arith.constant 0 : index
    %c0_8 = arith.constant 0 : index
    %6 = vector.load %arg4[%c0_7, %c0_8] : memref<256x128xbf16, #tpu.memory_space<vmem>>, vector<256x128xbf16>
    %cst_9 = arith.constant dense<0.000000e+00> : vector<16x128xf32>
    %7 = tpu.matmul %5, %6, %cst_9 {dimension_numbers = #tpu.dot_dimension_numbers<[1], [0], [0], [1], [0, 0, 1, 1], [], []>} : vector<16x256xbf16>, vector<256x128xbf16>, vector<16x128xf32> -> vector<16x128xf32>
    %8 = arith.addf %3, %7 : vector<16x128xf32>
    %cst_10 = arith.constant dense<0.000000e+00> : vector<128xf32>
    %9 = vector.multi_reduction <add>, %8, %cst_10 [0] : vector<16x128xf32> to vector<128xf32>
    %10 = vector.shape_cast %9 : vector<128xf32> to vector<1x128xf32>
    %c0_11 = arith.constant 0 : index
    %c0_12 = arith.constant 0 : index
    %11 = vector.load %arg5[%c0_11, %c0_12] : memref<128x128xf32, #tpu.memory_space<vmem>>, vector<128x128xf32>
    %cst_13 = arith.constant dense<0.000000e+00> : vector<1x128xf32>
    %12 = tpu.matmul %10, %11, %cst_13 {dimension_numbers = #tpu.dot_dimension_numbers<[1], [0], [0], [1], [0, 0, 1, 1], [], []>} : vector<1x128xf32>, vector<128x128xf32>, vector<1x128xf32> -> vector<1x128xf32>
    %13 = vector.broadcast %12 : vector<1x128xf32> to vector<16x128xf32>
    %14 = arith.subf %8, %13 : vector<16x128xf32>
    %15 = arith.mulf %14, %14 : vector<16x128xf32>
    %cst_14 = arith.constant dense<0.000000e+00> : vector<128xf32>
    %16 = vector.multi_reduction <add>, %15, %cst_14 [0] : vector<16x128xf32> to vector<128xf32>
    %17 = vector.shape_cast %16 : vector<128xf32> to vector<1x128xf32>
    %c0_15 = arith.constant 0 : index
    %c0_16 = arith.constant 0 : index
    %18 = vector.load %arg5[%c0_15, %c0_16] : memref<128x128xf32, #tpu.memory_space<vmem>>, vector<128x128xf32>
    %cst_17 = arith.constant dense<0.000000e+00> : vector<1x128xf32>
    %19 = tpu.matmul %17, %18, %cst_17 {dimension_numbers = #tpu.dot_dimension_numbers<[1], [0], [0], [1], [0, 0, 1, 1], [], []>} : vector<1x128xf32>, vector<128x128xf32>, vector<1x128xf32> -> vector<1x128xf32>
    %cst_18 = arith.constant 9.99999974E-6 : f32
    %20 = vector.broadcast %cst_18 : f32 to vector<1x128xf32>
    %21 = arith.addf %19, %20 : vector<1x128xf32>
    %22 = math.rsqrt %21 : vector<1x128xf32>
    %23 = vector.broadcast %22 : vector<1x128xf32> to vector<16x128xf32>
    %24 = arith.mulf %14, %23 : vector<16x128xf32>
    %c0_19 = arith.constant 0 : index
    %25 = memref.load %arg6[%c0_19] : memref<1xf32, #tpu.memory_space<smem>>
    %cst_20 = arith.constant 0.000000e+00 : f32
    %26 = vector.broadcast %cst_20 : f32 to vector<16x128xf32>
    %27 = arith.cmpf oge, %24, %26 : vector<16x128xf32>
    %28 = vector.broadcast %25 : f32 to vector<16x128xf32>
    %29 = arith.mulf %24, %28 : vector<16x128xf32>
    %30 = arith.select %27, %24, %29 : vector<16x128xi1>, vector<16x128xf32>
    %31 = arith.truncf %30 : vector<16x128xf32> to vector<16x128xbf16>
    %c0_21 = arith.constant 0 : index
    %c0_22 = arith.constant 0 : index
    %c0_23 = arith.constant 0 : index
    %32 = vector.load %arg7[%c0_21, %c0_22, %c0_23] : memref<1x16x128xbf16, #tpu.memory_space<vmem>>, vector<1x16x128xbf16>
    %33 = vector.shape_cast %32 : vector<1x16x128xbf16> to vector<16x128xbf16>
    %34 = vector.shape_cast %31 : vector<16x128xbf16> to vector<1x16x128xbf16>
    tpu.vector_store %arg7[%c0_21, %c0_22, %c0_23], %34 {strides = array<i32>} : memref<1x16x128xbf16, #tpu.memory_space<vmem>>, vector<1x16x128xbf16>,
    return
  }
  func.func @transform_0(%arg0: i32) -> (i32, i32, i32) {
    %c0_i32 = arith.constant 0 : i32
    %c0_i32_0 = arith.constant 0 : i32
    %c0_i32_1 = arith.constant 0 : i32
    return %arg0, %c0_i32, %c0_i32_0 : i32, i32, i32
  }
  func.func @transform_1(%arg0: i32) -> (i32, i32, i32) {
    %c0_i32 = arith.constant 0 : i32
    %c0_i32_0 = arith.constant 0 : i32
    %c0_i32_1 = arith.constant 0 : i32
    return %arg0, %c0_i32, %c0_i32_0 : i32, i32, i32
  }
  func.func @transform_2(%arg0: i32) -> (i32, i32) {
    %c0_i32 = arith.constant 0 : i32
    %c0_i32_0 = arith.constant 0 : i32
    %c0_i32_1 = arith.constant 0 : i32
    return %c0_i32, %c0_i32_0 : i32, i32
  }
  func.func @transform_3(%arg0: i32) -> (i32, i32) {
    %c0_i32 = arith.constant 0 : i32
    %c0_i32_0 = arith.constant 0 : i32
    %c0_i32_1 = arith.constant 0 : i32
    return %c0_i32, %c0_i32_0 : i32, i32
  }
  func.func @transform_4(%arg0: i32) -> (i32, i32) {
    %c0_i32 = arith.constant 0 : i32
    %c0_i32_0 = arith.constant 0 : i32
    %c0_i32_1 = arith.constant 0 : i32
    return %c0_i32, %c0_i32_0 : i32, i32
  }
  func.func @transform_5(%arg0: i32) -> i32 {
    %c0_i32 = arith.constant 0 : i32
    %c0_i32_0 = arith.constant 0 : i32
    return %c0_i32 : i32
  }
  func.func @transform_6(%arg0: i32) -> (i32, i32, i32) {
    %c0_i32 = arith.constant 0 : i32
    %c0_i32_0 = arith.constant 0 : i32
    %c0_i32_1 = arith.constant 0 : i32
    return %arg0, %c0_i32, %c0_i32_0 : i32, i32, i32
  }
}

module attributes {stable_mosaic.version = 11 : i64} {
  func.func @_fused_kernel(%arg0: i32, %arg1: memref<1x128x64xbf16, #tpu.memory_space<vmem>>, %arg2: memref<1x128x64xbf16, #tpu.memory_space<vmem>>, %arg3: memref<64x128xbf16, #tpu.memory_space<vmem>>, %arg4: memref<64x128xbf16, #tpu.memory_space<vmem>>, %arg5: memref<64x64xf32, #tpu.memory_space<vmem>>, %arg6: memref<1xf32, #tpu.memory_space<smem>>, %arg7: memref<1x64x64xbf16, #tpu.memory_space<vmem>>) attributes {dimension_semantics = [#tpu.dimension_semantics<parallel>], iteration_bounds = array<i64: 2>, scalar_prefetch = 0 : i64, scratch_operands = 0 : i64, tpu.core_type = #tpu.core_type<tc>, window_params = [{transform_indices = @transform_0, window_bounds = array<i64: 1, 128, 64>}, {transform_indices = @transform_1, window_bounds = array<i64: 1, 128, 64>}, {pipeline_mode = #tpu.pipeline_mode<synchronous>, transform_indices = @transform_2, window_bounds = array<i64: 64, 128>}, {pipeline_mode = #tpu.pipeline_mode<synchronous>, transform_indices = @transform_3, window_bounds = array<i64: 64, 128>}, {pipeline_mode = #tpu.pipeline_mode<synchronous>, transform_indices = @transform_4, window_bounds = array<i64: 64, 64>}, {transform_indices = @transform_5, window_bounds = array<i64: 1>}, {transform_indices = @transform_6, window_bounds = array<i64: 1, 64, 64>}]} {
    %c0 = arith.constant 0 : index
    %c0_0 = arith.constant 0 : index
    %0 = vector.load %arg3[%c0, %c0_0] : memref<64x128xbf16, #tpu.memory_space<vmem>>, vector<64x128xbf16>
    %c0_1 = arith.constant 0 : index
    %c0_2 = arith.constant 0 : index
    %c0_3 = arith.constant 0 : index
    %1 = vector.load %arg1[%c0_1, %c0_2, %c0_3] : memref<1x128x64xbf16, #tpu.memory_space<vmem>>, vector<1x128x64xbf16>
    %2 = vector.shape_cast %1 : vector<1x128x64xbf16> to vector<128x64xbf16>
    %cst = arith.constant dense<0.000000e+00> : vector<64x64xf32>
    %3 = tpu.matmul %0, %2, %cst {dimension_numbers = #tpu.dot_dimension_numbers<[1], [0], [0], [1], [0, 0, 1, 1], [], []>} : vector<64x128xbf16>, vector<128x64xbf16>, vector<64x64xf32> -> vector<64x64xf32>
    %c0_4 = arith.constant 0 : index
    %c0_5 = arith.constant 0 : index
    %4 = vector.load %arg4[%c0_4, %c0_5] : memref<64x128xbf16, #tpu.memory_space<vmem>>, vector<64x128xbf16>
    %c0_6 = arith.constant 0 : index
    %c0_7 = arith.constant 0 : index
    %c0_8 = arith.constant 0 : index
    %5 = vector.load %arg2[%c0_6, %c0_7, %c0_8] : memref<1x128x64xbf16, #tpu.memory_space<vmem>>, vector<1x128x64xbf16>
    %6 = vector.shape_cast %5 : vector<1x128x64xbf16> to vector<128x64xbf16>
    %cst_9 = arith.constant dense<0.000000e+00> : vector<64x64xf32>
    %7 = tpu.matmul %4, %6, %cst_9 {dimension_numbers = #tpu.dot_dimension_numbers<[1], [0], [0], [1], [0, 0, 1, 1], [], []>} : vector<64x128xbf16>, vector<128x64xbf16>, vector<64x64xf32> -> vector<64x64xf32>
    %8 = arith.addf %3, %7 : vector<64x64xf32>
    %cst_10 = arith.constant dense<0.000000e+00> : vector<64xf32>
    %9 = vector.multi_reduction <add>, %8, %cst_10 [1] : vector<64x64xf32> to vector<64xf32>
    %10 = vector.shape_cast %9 : vector<64xf32> to vector<64x1xf32>
    %c0_11 = arith.constant 0 : index
    %c0_12 = arith.constant 0 : index
    %11 = vector.load %arg5[%c0_11, %c0_12] : memref<64x64xf32, #tpu.memory_space<vmem>>, vector<64x64xf32>
    %cst_13 = arith.constant dense<0.000000e+00> : vector<64x1xf32>
    %12 = tpu.matmul %11, %10, %cst_13 {dimension_numbers = #tpu.dot_dimension_numbers<[1], [0], [0], [1], [0, 0, 1, 1], [], []>} : vector<64x64xf32>, vector<64x1xf32>, vector<64x1xf32> -> vector<64x1xf32>
    %13 = vector.broadcast %12 : vector<64x1xf32> to vector<64x64xf32>
    %14 = arith.subf %8, %13 : vector<64x64xf32>
    %15 = arith.mulf %14, %14 : vector<64x64xf32>
    %cst_14 = arith.constant dense<0.000000e+00> : vector<64xf32>
    %16 = vector.multi_reduction <add>, %15, %cst_14 [1] : vector<64x64xf32> to vector<64xf32>
    %17 = vector.shape_cast %16 : vector<64xf32> to vector<64x1xf32>
    %c0_15 = arith.constant 0 : index
    %c0_16 = arith.constant 0 : index
    %18 = vector.load %arg5[%c0_15, %c0_16] : memref<64x64xf32, #tpu.memory_space<vmem>>, vector<64x64xf32>
    %cst_17 = arith.constant dense<0.000000e+00> : vector<64x1xf32>
    %19 = tpu.matmul %18, %17, %cst_17 {dimension_numbers = #tpu.dot_dimension_numbers<[1], [0], [0], [1], [0, 0, 1, 1], [], []>} : vector<64x64xf32>, vector<64x1xf32>, vector<64x1xf32> -> vector<64x1xf32>
    %cst_18 = arith.constant 9.99999974E-6 : f32
    %20 = vector.broadcast %cst_18 : f32 to vector<64x1xf32>
    %21 = arith.addf %19, %20 : vector<64x1xf32>
    %22 = math.rsqrt %21 : vector<64x1xf32>
    %23 = vector.broadcast %22 : vector<64x1xf32> to vector<64x64xf32>
    %24 = arith.mulf %14, %23 : vector<64x64xf32>
    %c0_19 = arith.constant 0 : index
    %25 = memref.load %arg6[%c0_19] : memref<1xf32, #tpu.memory_space<smem>>
    %cst_20 = arith.constant 0.000000e+00 : f32
    %26 = vector.broadcast %cst_20 : f32 to vector<64x64xf32>
    %27 = arith.cmpf oge, %24, %26 : vector<64x64xf32>
    %28 = vector.broadcast %25 : f32 to vector<64x64xf32>
    %29 = arith.mulf %24, %28 : vector<64x64xf32>
    %30 = arith.select %27, %24, %29 : vector<64x64xi1>, vector<64x64xf32>
    %31 = arith.truncf %30 : vector<64x64xf32> to vector<64x64xbf16>
    %c0_21 = arith.constant 0 : index
    %c0_22 = arith.constant 0 : index
    %c0_23 = arith.constant 0 : index
    %32 = vector.load %arg7[%c0_21, %c0_22, %c0_23] : memref<1x64x64xbf16, #tpu.memory_space<vmem>>, vector<1x64x64xbf16>
    %33 = vector.shape_cast %32 : vector<1x64x64xbf16> to vector<64x64xbf16>
    %34 = vector.shape_cast %31 : vector<64x64xbf16> to vector<1x64x64xbf16>
    tpu.vector_store %arg7[%c0_21, %c0_22, %c0_23], %34 {strides = array<i32>} : memref<1x64x64xbf16, #tpu.memory_space<vmem>>, vector<1x64x64xbf16>,
    return
  }
  func.func @transform_0(%arg0: i32) -> (i32, i32, i32) {
    %c0_i32 = arith.constant 0 : i32
    %c0_i32_0 = arith.constant 0 : i32
    %c0_i32_1 = arith.constant 0 : i32
    return %arg0, %c0_i32, %c0_i32_0 : i32, i32, i32
  }
  func.func @transform_1(%arg0: i32) -> (i32, i32, i32) {
    %c0_i32 = arith.constant 0 : i32
    %c0_i32_0 = arith.constant 0 : i32
    %c0_i32_1 = arith.constant 0 : i32
    return %arg0, %c0_i32, %c0_i32_0 : i32, i32, i32
  }
  func.func @transform_2(%arg0: i32) -> (i32, i32) {
    %c0_i32 = arith.constant 0 : i32
    %c0_i32_0 = arith.constant 0 : i32
    %c0_i32_1 = arith.constant 0 : i32
    return %c0_i32, %c0_i32_0 : i32, i32
  }
  func.func @transform_3(%arg0: i32) -> (i32, i32) {
    %c0_i32 = arith.constant 0 : i32
    %c0_i32_0 = arith.constant 0 : i32
    %c0_i32_1 = arith.constant 0 : i32
    return %c0_i32, %c0_i32_0 : i32, i32
  }
  func.func @transform_4(%arg0: i32) -> (i32, i32) {
    %c0_i32 = arith.constant 0 : i32
    %c0_i32_0 = arith.constant 0 : i32
    %c0_i32_1 = arith.constant 0 : i32
    return %c0_i32, %c0_i32_0 : i32, i32
  }
  func.func @transform_5(%arg0: i32) -> i32 {
    %c0_i32 = arith.constant 0 : i32
    %c0_i32_0 = arith.constant 0 : i32
    return %c0_i32 : i32
  }
  func.func @transform_6(%arg0: i32) -> (i32, i32, i32) {
    %c0_i32 = arith.constant 0 : i32
    %c0_i32_0 = arith.constant 0 : i32
    %c0_i32_1 = arith.constant 0 : i32
    return %arg0, %c0_i32, %c0_i32_0 : i32, i32, i32
  }
}

module attributes {stable_mosaic.version = 11 : i64} {
  func.func @_fused_kernel(%arg0: i32, %arg1: memref<1x64x256xbf16, #tpu.memory_space<vmem>>, %arg2: memref<1x64x256xbf16, #tpu.memory_space<vmem>>, %arg3: memref<4x64xbf16, #tpu.memory_space<vmem>>, %arg4: memref<4x64xbf16, #tpu.memory_space<vmem>>, %arg5: memref<4x1xf32, #tpu.memory_space<vmem>>, %arg6: memref<1x4x256xf32, #tpu.memory_space<vmem>>) attributes {dimension_semantics = [#tpu.dimension_semantics<parallel>], iteration_bounds = array<i64: 2>, scalar_prefetch = 0 : i64, scratch_operands = 0 : i64, tpu.core_type = #tpu.core_type<tc>, window_params = [{transform_indices = @transform_0, window_bounds = array<i64: 1, 64, 256>}, {transform_indices = @transform_1, window_bounds = array<i64: 1, 64, 256>}, {pipeline_mode = #tpu.pipeline_mode<synchronous>, transform_indices = @transform_2, window_bounds = array<i64: 4, 64>}, {pipeline_mode = #tpu.pipeline_mode<synchronous>, transform_indices = @transform_3, window_bounds = array<i64: 4, 64>}, {pipeline_mode = #tpu.pipeline_mode<synchronous>, transform_indices = @transform_4, window_bounds = array<i64: 4, 1>}, {transform_indices = @transform_5, window_bounds = array<i64: 1, 4, 256>}]} {
    %c0 = arith.constant 0 : index
    %c0_0 = arith.constant 0 : index
    %0 = vector.load %arg3[%c0, %c0_0] : memref<4x64xbf16, #tpu.memory_space<vmem>>, vector<4x64xbf16>
    %c0_1 = arith.constant 0 : index
    %c0_2 = arith.constant 0 : index
    %c0_3 = arith.constant 0 : index
    %1 = vector.load %arg1[%c0_1, %c0_2, %c0_3] : memref<1x64x256xbf16, #tpu.memory_space<vmem>>, vector<1x64x256xbf16>
    %2 = vector.shape_cast %1 : vector<1x64x256xbf16> to vector<64x256xbf16>
    %cst = arith.constant dense<0.000000e+00> : vector<4x256xf32>
    %3 = tpu.matmul %0, %2, %cst {dimension_numbers = #tpu.dot_dimension_numbers<[1], [0], [0], [1], [0, 0, 1, 1], [], []>} : vector<4x64xbf16>, vector<64x256xbf16>, vector<4x256xf32> -> vector<4x256xf32>
    %c0_4 = arith.constant 0 : index
    %c0_5 = arith.constant 0 : index
    %4 = vector.load %arg4[%c0_4, %c0_5] : memref<4x64xbf16, #tpu.memory_space<vmem>>, vector<4x64xbf16>
    %c0_6 = arith.constant 0 : index
    %c0_7 = arith.constant 0 : index
    %c0_8 = arith.constant 0 : index
    %5 = vector.load %arg2[%c0_6, %c0_7, %c0_8] : memref<1x64x256xbf16, #tpu.memory_space<vmem>>, vector<1x64x256xbf16>
    %6 = vector.shape_cast %5 : vector<1x64x256xbf16> to vector<64x256xbf16>
    %cst_9 = arith.constant dense<0.000000e+00> : vector<4x256xf32>
    %7 = tpu.matmul %4, %6, %cst_9 {dimension_numbers = #tpu.dot_dimension_numbers<[1], [0], [0], [1], [0, 0, 1, 1], [], []>} : vector<4x64xbf16>, vector<64x256xbf16>, vector<4x256xf32> -> vector<4x256xf32>
    %8 = arith.addf %3, %7 : vector<4x256xf32>
    %c0_10 = arith.constant 0 : index
    %c0_11 = arith.constant 0 : index
    %9 = vector.load %arg5[%c0_10, %c0_11] : memref<4x1xf32, #tpu.memory_space<vmem>>, vector<4x1xf32>
    %10 = vector.broadcast %9 : vector<4x1xf32> to vector<4x256xf32>
    %11 = arith.addf %8, %10 : vector<4x256xf32>
    %c0_12 = arith.constant 0 : index
    %c0_13 = arith.constant 0 : index
    %c0_14 = arith.constant 0 : index
    %12 = vector.load %arg6[%c0_12, %c0_13, %c0_14] : memref<1x4x256xf32, #tpu.memory_space<vmem>>, vector<1x4x256xf32>
    %13 = vector.shape_cast %12 : vector<1x4x256xf32> to vector<4x256xf32>
    %14 = vector.shape_cast %11 : vector<4x256xf32> to vector<1x4x256xf32>
    tpu.vector_store %arg6[%c0_12, %c0_13, %c0_14], %14 {strides = array<i32>} : memref<1x4x256xf32, #tpu.memory_space<vmem>>, vector<1x4x256xf32>,
    return
  }
  func.func @transform_0(%arg0: i32) -> (i32, i32, i32) {
    %c0_i32 = arith.constant 0 : i32
    %c0_i32_0 = arith.constant 0 : i32
    %c0_i32_1 = arith.constant 0 : i32
    return %arg0, %c0_i32, %c0_i32_0 : i32, i32, i32
  }
  func.func @transform_1(%arg0: i32) -> (i32, i32, i32) {
    %c0_i32 = arith.constant 0 : i32
    %c0_i32_0 = arith.constant 0 : i32
    %c0_i32_1 = arith.constant 0 : i32
    return %arg0, %c0_i32, %c0_i32_0 : i32, i32, i32
  }
  func.func @transform_2(%arg0: i32) -> (i32, i32) {
    %c0_i32 = arith.constant 0 : i32
    %c0_i32_0 = arith.constant 0 : i32
    %c0_i32_1 = arith.constant 0 : i32
    return %c0_i32, %c0_i32_0 : i32, i32
  }
  func.func @transform_3(%arg0: i32) -> (i32, i32) {
    %c0_i32 = arith.constant 0 : i32
    %c0_i32_0 = arith.constant 0 : i32
    %c0_i32_1 = arith.constant 0 : i32
    return %c0_i32, %c0_i32_0 : i32, i32
  }
  func.func @transform_4(%arg0: i32) -> (i32, i32) {
    %c0_i32 = arith.constant 0 : i32
    %c0_i32_0 = arith.constant 0 : i32
    %c0_i32_1 = arith.constant 0 : i32
    return %c0_i32, %c0_i32_0 : i32, i32
  }
  func.func @transform_5(%arg0: i32) -> (i32, i32, i32) {
    %c0_i32 = arith.constant 0 : i32
    %c0_i32_0 = arith.constant 0 : i32
    %c0_i32_1 = arith.constant 0 : i32
    return %arg0, %c0_i32, %c0_i32_0 : i32, i32, i32
  }
}

</mosaic_0001>

<llo_original>
// kernel: unet_monai_forward.9
$region0: #{unet_monai_forward.9}
  #allocation0 [shape = 'u32[]', space=smem, size = 0x4, offset = 0x4, fixed_abs, tag = 'smem constant byte address 0x4 - core index']
  #allocation1 [shape = 'u32[144,128]{1,0:T(1,128)}', space=vmem, size = 0x12000, scoped, tag = 'internal scratch']
  #allocation2 [shape = 'f32[1]{0:T(128)S(6)}', space=smem, size = 0x200, scoped, tag = 'scoped memory for unet_monai_forward.9']
  %s0 = inlined_call_operand.vmem [shape: bf16[2,27,256], index: 0, kind: input, shape index: {}]
  %s1 = inlined_call_operand.vmem [shape: bf16[16,27], index: 1, kind: input, shape index: {}]
  %s2 = inlined_call_operand.<no memory space> [shape: f32[1], index: 2, kind: input, shape index: {}]
  %s3 = inlined_call_operand.vmem [shape: bf16[2,16,256], index: 3, kind: output, shape index: {}]
  %s4 = sld [smem:[#allocation0]]
  $region45: #{unet_monai_forward.9} parent=0
    _
  %s6 = ssub.s32 1, %s4
  %s7 = scalar_select 0, %s6, %s4
  %8 = sst [smem:[#allocation2]] %s2
  loop: start=0, step=1, limit=4
  $region2: #{unet_monai_forward.9} parent=0 // loop_pre_header
    _
  $region3: #{unet_monai_forward.9} parent=0 // loop_header
    %s10 = sphi 0, %s14
    %p11 = scmp.ge.s32.totalorder %s10, 4
    %s20 = sphi 0, %s22
    %s23 = sphi 0, %s20
    %s24 = sphi 0, %s23
    %s40 = sphi 0, %s24
    %s44 = sphi 0, %s44
    %s46 = sphi 0, %s44
    %s47 = sphi 0, %s46
    %s61 = sphi 0, %s47
    %s65 = sphi 0, %s65
    %s67 = sphi 0, %s65
    %s68 = sphi 0, %s67
    %s82 = sphi 0, %s68
    %s88 = sphi 0, %s90
    %s91 = sphi 0, %s88
    %s92 = sphi 0, %s91
    %s108 = sphi 0, %s92
  $region4: #{unet_monai_forward.9} parent=0 // loop_header_branch
    %13 = sbr.rel (%p11) target = $region8
  $region5: #{unet_monai_forward.9} parent=0 // loop_body
    %s15 = ssub.s32 %s10, 1
    %s16 = ssub.s32 %s10, 2
    %s17 = sadd.s32 %s10, 1
    %s18 = ssub.s32 %s10, %s17
    %p19 = scmp.eq.s32.totalorder %s18, 0
    %s21 = sadd.s32 %s20, 1
    %s22 = scalar_select %p19, %s20, %s21
    %p25 = pneg %p19
    %p26 = scmp.eq.s32.totalorder %s10, 1
    %p27 = por %p25, %p26
    %p28 = scmp.ne.s32.totalorder %s20, %s23
    %p29 = scmp.eq.s32.totalorder %s10, 0
    %p30 = por %p28, %p29
    %p31 = scmp.ne.s32.totalorder %s20, %s23
    %p32 = scmp.eq.s32.totalorder %s15, 1
    %p33 = por %p31, %p32
    %p34 = scmp.ne.s32.totalorder %s23, %s24
    %p35 = scmp.eq.s32.totalorder %s15, 0
    %p36 = por %p34, %p35
    %p37 = scmp.ne.s32.totalorder %s23, %s24
    %p38 = scmp.eq.s32.totalorder %s16, 1
    %p39 = por %p37, %p38
    %p41 = scmp.ne.s32.totalorder %s24, %s40
    %p42 = scmp.eq.s32.totalorder %s16, 0
    %p43 = por %p41, %p42
    %s45 = sadd.s32 %s44, 1
    %p48 = scmp.eq.s32.totalorder %s10, 1
    %p49 = scmp.ne.s32.totalorder %s44, %s46
    %p50 = scmp.eq.s32.totalorder %s10, 0
    %p51 = por %p49, %p50
    %p52 = scmp.ne.s32.totalorder %s44, %s46
    %p53 = scmp.eq.s32.totalorder %s15, 1
    %p54 = por %p52, %p53
    %p55 = scmp.ne.s32.totalorder %s46, %s47
    %p56 = scmp.eq.s32.totalorder %s15, 0
    %p57 = por %p55, %p56
    %p58 = scmp.ne.s32.totalorder %s46, %s47
    %p59 = scmp.eq.s32.totalorder %s16, 1
    %p60 = por %p58, %p59
    %p62 = scmp.ne.s32.totalorder %s47, %s61
    %p63 = scmp.eq.s32.totalorder %s16, 0
    %p64 = por %p62, %p63
    %s66 = sadd.s32 %s65, 1
    %p69 = scmp.eq.s32.totalorder %s10, 1
    %p70 = scmp.ne.s32.totalorder %s65, %s67
    %p71 = scmp.eq.s32.totalorder %s10, 0
    %p72 = por %p70, %p71
    %p73 = scmp.ne.s32.totalorder %s65, %s67
    %p74 = scmp.eq.s32.totalorder %s15, 1
    %p75 = por %p73, %p74
    %p76 = scmp.ne.s32.totalorder %s67, %s68
    %p77 = scmp.eq.s32.totalorder %s15, 0
    %p78 = por %p76, %p77
    %p79 = scmp.ne.s32.totalorder %s67, %s68
    %p80 = scmp.eq.s32.totalorder %s16, 1
    %p81 = por %p79, %p80
    %p83 = scmp.ne.s32.totalorder %s68, %s82
    %p84 = scmp.eq.s32.totalorder %s16, 0
    %p85 = por %p83, %p84
    %s86 = ssub.s32 %s10, %s17
    %p87 = scmp.eq.s32.totalorder %s86, 0
    %s89 = sadd.s32 %s88, 1
    %s90 = scalar_select %p87, %s88, %s89
    %p93 = pneg %p87
    %p94 = scmp.eq.s32.totalorder %s10, 1
    %p95 = por %p93, %p94
    %p96 = scmp.ne.s32.totalorder %s88, %s91
    %p97 = scmp.eq.s32.totalorder %s10, 0
    %p98 = por %p96, %p97
    %p99 = scmp.ne.s32.totalorder %s88, %s91
    %p100 = scmp.eq.s32.totalorder %s15, 1
    %p101 = por %p99, %p100
    %p102 = scmp.ne.s32.totalorder %s91, %s92
    %p103 = scmp.eq.s32.totalorder %s15, 0
    %p104 = por %p102, %p103
    %p105 = scmp.ne.s32.totalorder %s91, %s92
    %p106 = scmp.eq.s32.totalorder %s16, 1
    %p107 = por %p105, %p106
    %p109 = scmp.ne.s32.totalorder %s92, %s108
    %p110 = scmp.eq.s32.totalorder %s16, 0
    %p111 = por %p109, %p110
    %p112 = scmp.le.s32.totalorder 1, %s10
    %p113 = scmp.lt.s32.totalorder %s10, 3
    %p114 = pnand %p112, %p113
    %p115 = pneg %p114
    // Predicated region
    $region9: #{unet_monai_forward.9} parent=5 // pred_check
      _
    $region10: #{unet_monai_forward.9} parent=5 // pred_check_branch
      %117 = sbr.rel (%p114) target = $region12
    $region11: #{unet_monai_forward.9} parent=5 // pred_region
      %s118 = ssub.s32 %s10, 1
      // Predicated region
      $region13: #{unet_monai_forward.9} parent=11 // pred_check
        %p119 = pneg %p57
      $region14: #{unet_monai_forward.9} parent=11 // pred_check_branch
        %121 = sbr.rel (%p119) target = $region16
      $region15: #{unet_monai_forward.9} parent=11 // pred_region
        _
      $region16: #{unet_monai_forward.9} parent=11 // pred_fallthru
        _
      // Predicated region
      $region17: #{unet_monai_forward.9} parent=11 // pred_check
        %p122 = pneg %p78
      $region18: #{unet_monai_forward.9} parent=11 // pred_check_branch
        %124 = sbr.rel (%p122) target = $region20
      $region19: #{unet_monai_forward.9} parent=11 // pred_region
        _
      $region20: #{unet_monai_forward.9} parent=11 // pred_fallthru
        _
    $region12: #{unet_monai_forward.9} parent=5 // pred_fallthru
      _
    %p125 = scmp.lt.s32.totalorder %s10, 2
    // Predicated region
    $region21: #{unet_monai_forward.9} parent=5 // pred_check
      %p126 = pneg %p125
    $region22: #{unet_monai_forward.9} parent=5 // pred_check_branch
      %128 = sbr.rel (%p126) target = $region24
    $region23: #{unet_monai_forward.9} parent=5 // pred_region
      // Predicated region
      $region25: #{unet_monai_forward.9} parent=23 // pred_check
        %p129 = pneg %p30
      $region26: #{unet_monai_forward.9} parent=23 // pred_check_branch
        %131 = sbr.rel (%p129) target = $region28
      $region27: #{unet_monai_forward.9} parent=23 // pred_region
        %p132 = scmp.lt.s32.totalorder %s10, 1
        %s133 = scalar_select %p132, %s10, 1
        %s134 = smul.addr %s133, 8
        %s135 = smul.addr %s134, 4
        %s136 = scalar_lea.vmem %s0, %s135
      $region28: #{unet_monai_forward.9} parent=23 // pred_fallthru
        _
    $region24: #{unet_monai_forward.9} parent=5 // pred_fallthru
      _
    %p137 = scmp.le.s32.totalorder 1, %s10
    %p138 = scmp.lt.s32.totalorder %s10, 3
    %p139 = pnand %p137, %p138
    %p140 = pneg %p139
    // Predicated region
    $region29: #{unet_monai_forward.9} parent=5 // pred_check
      _
    $region30: #{unet_monai_forward.9} parent=5 // pred_check_branch
      %142 = sbr.rel (%p139) target = $region32
    $region31: #{unet_monai_forward.9} parent=5 // pred_region
      %s143 = ssub.s32 %s10, 1
      %p144 = scmp.lt.s32.totalorder %s15, 1
      %s145 = scalar_select %p144, %s15, 1
      %s146 = smul.addr %s145, 8
      %s147 = smul.addr %s146, 4
      %s148 = scalar_lea.vmem %s0, %s147
      %p149 = pneg %p36
      %p150 = pneg %p33
      %p151 = pneg %p57
      %p152 = pneg %p54
      %p153 = pneg %p78
      %p154 = pneg %p75
      %p155 = pneg %p104
      %p156 = pneg %p101
      %p157 = scmp.lt.s32.totalorder %s15, 1
      %s158 = scalar_select %p157, %s15, 1
      %s159 = smul.addr %s158, 4
      %s160 = smul.addr %s159, 4
      %s161 = scalar_lea.vmem %s3, %s160
      %p162 = scmp.lt.s32.totalorder %s15, 1
      %s163 = scalar_select %p162, %s15, 1
      %s164 = smul.addr %s163, 8
      %s165 = smul.addr %s164, 4
      %s166 = scalar_lea.vmem %s0, %s165
      %p167 = scmp.lt.s32.totalorder %s15, 1
      %s168 = scalar_select %p167, %s15, 1
      %s169 = smul.addr %s168, 4
      %s170 = smul.addr %s169, 4
      %s171 = scalar_lea.vmem %s3, %s170
      %v173 = vld [vmem:[%s1] sm:$0xf]
      %v174 = vld [vmem:[%s1 + $0x4] sm:$0xf]
      %v175 = vld [vmem:[%s166] sm:$0xff]
      %v176 = vld [vmem:[%s166 + $0x8] sm:$0xff]
      %v177 = vld [vmem:[%s166 + $0x10] sm:$0xff]
      %v178 = vld [vmem:[%s166 + $0x18] sm:$0x33]
      %v181 = vunpack.c.l.b16 %v173
      %v182 = vunpack.c.l.b16 %v174
      %v183 = vpack.c.b16 %v182, %v181
      %v188 = vunpack.c.l.b16 %v175
      %v189 = vunpack.c.h.b16 %v175
      %v190 = vunpack.c.l.b16 %v176
      %v191 = vunpack.c.h.b16 %v176
      %v192 = vunpack.c.l.b16 %v177
      %v193 = vunpack.c.h.b16 %v177
      %v194 = vunpack.c.l.b16 %v178
      %v195 = vunpack.c.h.b16 %v178
      %v196 = vpack.c.b16 %v190, %v188
      %v197 = vpack.c.b16 %v191, %v189
      %v198 = vpack.c.b16 %v194, %v192
      %v199 = vpack.c.b16 %v195, %v193
      %vm202 = vcmask 220160
      %v204 = vsel %vm202, %v183, 0
      %vm206 = vcmask 1044480
      %vm207 = vcmask 1045504
      %v208 = vsel %vm206, 4294967295, 65535
      %v209 = vsel %vm207, %v208, 0
      %v211 = vand.u32 %v198, %v209
      %v214 = vand.u32 %v199, %v209
      %216 = vmatprep.subr.bf16.mxu0 0
      %217 = vmatpush1.bf16.msra.mxu0 0
      %218 = vmatprep.subr.bf16.mxu0 0
      %219 = vmatpush1.bf16.msra.mxu0 0
      %220 = vmatprep.subr.bf16.mxu0 0
      %221 = vmatpush1.bf16.msra.mxu0 0
      %222 = vmatprep.subr.bf16.mxu0 0
      %223 = vmatpush1.bf16.msra.mxu0 0
      %224 = vmatprep.subr.bf16.mxu0 0
      %225 = vmatpush1.bf16.msra.mxu0 0
      %226 = vmatprep.subr.bf16.mxu0 0
      %227 = vmatpush1.bf16.msra.mxu0 0
      %228 = vmatprep.subr.bf16.mxu0 %v214
      %229 = vmatpush1.bf16.msra.mxu0 %v211
      %230 = vmatprep.subr.bf16.mxu0 %v197
      %231 = vmatpush1.bf16.msra.mxu0 %v196
      %232 = vmatprep.subr.bf16.mxu0 0
      %233 = vmatpush2.bf16.msra.mxu0 0
      %234 = vmatprep.subr.bf16.mxu0 0
      %235 = vmatpush2.bf16.msra.mxu0 0
      %236 = vmatprep.subr.bf16.mxu0 0
      %237 = vmatpush2.bf16.msra.mxu0 0
      %238 = vmatprep.subr.bf16.mxu0 0
      %239 = vmatpush2.bf16.msra.mxu0 0
      %240 = vmatprep.subr.bf16.mxu0 0
      %241 = vmatpush2.bf16.msra.mxu0 0
      %242 = vmatprep.subr.bf16.mxu0 0
      %243 = vmatpush2.bf16.msra.mxu0 0
      %244 = vmatprep.subr.bf16.mxu0 0
      %245 = vmatpush2.bf16.msra.mxu0 0
      %246 = vmatprep.subr.bf16.mxu0 0
      %247 = vmatpush2.bf16.msra.mxu0 0
      %248 = vmatprep.mubr.bf16.mxu0 0
      %249 = vmatmul.mubr.bf16.gmra.mxu0 %v204
      %v250 = vpop.f32.mrf.mxu0
      %v251 = vadd.f32 0.0, %v250
      %v252 = vpop.f32.mrf.mxu0
      %v253 = vadd.f32 0.0, %v252
      %v254 = vpop.f32.mrf.mxu0
      %v255 = vadd.f32 0.0, %v254
      %v256 = vpop.f32.mrf.mxu0
      %v257 = vadd.f32 0.0, %v256
      %258 = vdwg.mxu0
      %v259 = vadd.f32 %v251, %v253
      %260 = vadd.xlane.f32.xlu0 %v259
      %v261 = vpop.xlane.xlu0 %260
      %v262 = vadd.f32 %v255, %v257
      %263 = vadd.xlane.f32.xlu0 %v262
      %v264 = vpop.xlane.xlu0 %263
      %v265 = vmul.f32 %v261, 0.00390625
      %v266 = vmul.f32 %v264, 0.00390625
      %v267 = vsub.f32 %v251, %v265
      %v268 = vsub.f32 %v253, %v265
      %v269 = vsub.f32 %v255, %v266
      %v270 = vsub.f32 %v257, %v266
      %v271 = vmul.f32 %v267, %v267
      %v272 = vmul.f32 %v268, %v268
      %v273 = vmul.f32 %v269, %v269
      %v274 = vmul.f32 %v270, %v270
      %v275 = vadd.f32 %v271, %v272
      %276 = vadd.xlane.f32.xlu0 %v275
      %v277 = vpop.xlane.xlu0 %276
      %v278 = vadd.f32 %v273, %v274
      %279 = vadd.xlane.f32.xlu0 %v278
      %v280 = vpop.xlane.xlu0 %279
      %v281 = vmul.f32 %v277, 0.00390625
      %v282 = vmul.f32 %v280, 0.00390625
      %v283 = vadd.f32 %v281, 1e-05
      %v284 = vadd.f32 %v282, 1e-05
      %v285 = vrsqrt.pop %v283
      %v286 = vrsqrt.pop %v284
      %v287 = vmul.f32 %v267, %v285
      %v288 = vmul.f32 %v268, %v285
      %v289 = vmul.f32 %v269, %v286
      %v290 = vmul.f32 %v270, %v286
      %s291 = sld [smem:[#allocation2]]
      %vm292 = vcmp.ge.f32.partialorder %v287, 0.0
      %vm293 = vcmp.ge.f32.partialorder %v288, 0.0
      %vm294 = vcmp.ge.f32.partialorder %v289, 0.0
      %vm295 = vcmp.ge.f32.partialorder %v290, 0.0
      %v296 = vstv %s291
      %v297 = vmul.f32 %v287, %v296
      %v298 = vmul.f32 %v288, %v296
      %v299 = vmul.f32 %v289, %v296
      %v300 = vmul.f32 %v290, %v296
      %v301 = vsel %vm292, %v287, %v297
      %v302 = vsel %vm293, %v288, %v298
      %v303 = vsel %vm294, %v289, %v299
      %v304 = vsel %vm295, %v290, %v300
      %v305 = vpack.c.bf16 %v303, %v301
      %v306 = vpack.c.bf16 %v304, %v302
      %v309 = vunpack.c.l.b16 %v305
      %v310 = vunpack.c.l.b16 %v306
      %v311 = vunpack.c.h.b16 %v305
      %v312 = vunpack.c.h.b16 %v306
      %v313 = vpack.c.b16 %v310, %v309
      %v314 = vpack.c.b16 %v312, %v311
      %317 = vst [vmem:[%s171] sm:$0xff] %v313
      %318 = vst [vmem:[%s171 + $0x8] sm:$0xff] %v314
      %p319 = scmp.lt.s32.totalorder %s15, 1
      %s320 = scalar_select %p319, %s15, 1
      %s321 = smul.addr %s320, 4
      %s322 = smul.addr %s321, 4
      %s323 = scalar_lea.vmem %s3, %s322
      // Predicated region
      $region33: #{unet_monai_forward.9} parent=31 // pred_check
        %p324 = pneg %p101
      $region34: #{unet_monai_forward.9} parent=31 // pred_check_branch
        %326 = sbr.rel (%p324) target = $region36
      $region35: #{unet_monai_forward.9} parent=31 // pred_region
        _
      $region36: #{unet_monai_forward.9} parent=31 // pred_fallthru
        _
    $region32: #{unet_monai_forward.9} parent=5 // pred_fallthru
      _
    %p327 = scmp.le.s32.totalorder 2, %s10
    // Predicated region
    $region37: #{unet_monai_forward.9} parent=5 // pred_check
      %p328 = pneg %p327
    $region38: #{unet_monai_forward.9} parent=5 // pred_check_branch
      %330 = sbr.rel (%p328) target = $region40
    $region39: #{unet_monai_forward.9} parent=5 // pred_region
      %s331 = ssub.s32 %s10, 2
      // Predicated region
      $region41: #{unet_monai_forward.9} parent=39 // pred_check
        %p332 = pneg %p107
      $region42: #{unet_monai_forward.9} parent=39 // pred_check_branch
        %334 = sbr.rel (%p332) target = $region44
      $region43: #{unet_monai_forward.9} parent=39 // pred_region
        %p335 = scmp.lt.s32.totalorder %s16, 1
        %s336 = scalar_select %p335, %s16, 1
        %s337 = smul.addr %s336, 4
        %s338 = smul.addr %s337, 4
        %s339 = scalar_lea.vmem %s3, %s338
      $region44: #{unet_monai_forward.9} parent=39 // pred_fallthru
        _
    $region40: #{unet_monai_forward.9} parent=5 // pred_fallthru
      _
  $region6: #{unet_monai_forward.9} parent=0 // loop_footer
    %s14 = sadd.s32 1, %s10
  $region7: #{unet_monai_forward.9} parent=0 // loop_footer_branch
    %9 = sbr.rel target = $region3
  $region8: #{unet_monai_forward.9} parent=0 // loop_exit
    _

// kernel: unet_monai_forward.10
$region0: #{unet_monai_forward.10}
  #allocation0 [shape = 'u32[]', space=smem, size = 0x4, offset = 0x4, fixed_abs, tag = 'smem constant byte address 0x4 - core index']
  #allocation1 [shape = 'u32[144,128]{1,0:T(1,128)}', space=vmem, size = 0x12000, scoped, tag = 'internal scratch']
  #allocation2 [shape = 'f32[1]{0:T(128)S(6)}', space=smem, size = 0x200, scoped, tag = 'scoped memory for unet_monai_forward.10']
  %s0 = inlined_call_operand.vmem [shape: bf16[2,144,64], index: 0, kind: input, shape index: {}]
  %s1 = inlined_call_operand.vmem [shape: bf16[32,144], index: 1, kind: input, shape index: {}]
  %s2 = inlined_call_operand.<no memory space> [shape: f32[1], index: 2, kind: input, shape index: {}]
  %s3 = inlined_call_operand.vmem [shape: bf16[2,32,64], index: 3, kind: output, shape index: {}]
  %s4 = sld [smem:[#allocation0]]
  $region45: #{unet_monai_forward.10} parent=0
    _
  %s6 = ssub.s32 1, %s4
  %s7 = scalar_select 0, %s6, %s4
  %8 = sst [smem:[#allocation2]] %s2
  loop: start=0, step=1, limit=4
  $region2: #{unet_monai_forward.10} parent=0 // loop_pre_header
    _
  $region3: #{unet_monai_forward.10} parent=0 // loop_header
    %s10 = sphi 0, %s14
    %p11 = scmp.ge.s32.totalorder %s10, 4
    %s20 = sphi 0, %s22
    %s23 = sphi 0, %s20
    %s24 = sphi 0, %s23
    %s40 = sphi 0, %s24
    %s44 = sphi 0, %s44
    %s46 = sphi 0, %s44
    %s47 = sphi 0, %s46
    %s61 = sphi 0, %s47
    %s65 = sphi 0, %s65
    %s67 = sphi 0, %s65
    %s68 = sphi 0, %s67
    %s82 = sphi 0, %s68
    %s88 = sphi 0, %s90
    %s91 = sphi 0, %s88
    %s92 = sphi 0, %s91
    %s108 = sphi 0, %s92
  $region4: #{unet_monai_forward.10} parent=0 // loop_header_branch
    %13 = sbr.rel (%p11) target = $region8
  $region5: #{unet_monai_forward.10} parent=0 // loop_body
    %s15 = ssub.s32 %s10, 1
    %s16 = ssub.s32 %s10, 2
    %s17 = sadd.s32 %s10, 1
    %s18 = ssub.s32 %s10, %s17
    %p19 = scmp.eq.s32.totalorder %s18, 0
    %s21 = sadd.s32 %s20, 1
    %s22 = scalar_select %p19, %s20, %s21
    %p25 = pneg %p19
    %p26 = scmp.eq.s32.totalorder %s10, 1
    %p27 = por %p25, %p26
    %p28 = scmp.ne.s32.totalorder %s20, %s23
    %p29 = scmp.eq.s32.totalorder %s10, 0
    %p30 = por %p28, %p29
    %p31 = scmp.ne.s32.totalorder %s20, %s23
    %p32 = scmp.eq.s32.totalorder %s15, 1
    %p33 = por %p31, %p32
    %p34 = scmp.ne.s32.totalorder %s23, %s24
    %p35 = scmp.eq.s32.totalorder %s15, 0
    %p36 = por %p34, %p35
    %p37 = scmp.ne.s32.totalorder %s23, %s24
    %p38 = scmp.eq.s32.totalorder %s16, 1
    %p39 = por %p37, %p38
    %p41 = scmp.ne.s32.totalorder %s24, %s40
    %p42 = scmp.eq.s32.totalorder %s16, 0
    %p43 = por %p41, %p42
    %s45 = sadd.s32 %s44, 1
    %p48 = scmp.eq.s32.totalorder %s10, 1
    %p49 = scmp.ne.s32.totalorder %s44, %s46
    %p50 = scmp.eq.s32.totalorder %s10, 0
    %p51 = por %p49, %p50
    %p52 = scmp.ne.s32.totalorder %s44, %s46
    %p53 = scmp.eq.s32.totalorder %s15, 1
    %p54 = por %p52, %p53
    %p55 = scmp.ne.s32.totalorder %s46, %s47
    %p56 = scmp.eq.s32.totalorder %s15, 0
    %p57 = por %p55, %p56
    %p58 = scmp.ne.s32.totalorder %s46, %s47
    %p59 = scmp.eq.s32.totalorder %s16, 1
    %p60 = por %p58, %p59
    %p62 = scmp.ne.s32.totalorder %s47, %s61
    %p63 = scmp.eq.s32.totalorder %s16, 0
    %p64 = por %p62, %p63
    %s66 = sadd.s32 %s65, 1
    %p69 = scmp.eq.s32.totalorder %s10, 1
    %p70 = scmp.ne.s32.totalorder %s65, %s67
    %p71 = scmp.eq.s32.totalorder %s10, 0
    %p72 = por %p70, %p71
    %p73 = scmp.ne.s32.totalorder %s65, %s67
    %p74 = scmp.eq.s32.totalorder %s15, 1
    %p75 = por %p73, %p74
    %p76 = scmp.ne.s32.totalorder %s67, %s68
    %p77 = scmp.eq.s32.totalorder %s15, 0
    %p78 = por %p76, %p77
    %p79 = scmp.ne.s32.totalorder %s67, %s68
    %p80 = scmp.eq.s32.totalorder %s16, 1
    %p81 = por %p79, %p80
    %p83 = scmp.ne.s32.totalorder %s68, %s82
    %p84 = scmp.eq.s32.totalorder %s16, 0
    %p85 = por %p83, %p84
    %s86 = ssub.s32 %s10, %s17
    %p87 = scmp.eq.s32.totalorder %s86, 0
    %s89 = sadd.s32 %s88, 1
    %s90 = scalar_select %p87, %s88, %s89
    %p93 = pneg %p87
    %p94 = scmp.eq.s32.totalorder %s10, 1
    %p95 = por %p93, %p94
    %p96 = scmp.ne.s32.totalorder %s88, %s91
    %p97 = scmp.eq.s32.totalorder %s10, 0
    %p98 = por %p96, %p97
    %p99 = scmp.ne.s32.totalorder %s88, %s91
    %p100 = scmp.eq.s32.totalorder %s15, 1
    %p101 = por %p99, %p100
    %p102 = scmp.ne.s32.totalorder %s91, %s92
    %p103 = scmp.eq.s32.totalorder %s15, 0
    %p104 = por %p102, %p103
    %p105 = scmp.ne.s32.totalorder %s91, %s92
    %p106 = scmp.eq.s32.totalorder %s16, 1
    %p107 = por %p105, %p106
    %p109 = scmp.ne.s32.totalorder %s92, %s108
    %p110 = scmp.eq.s32.totalorder %s16, 0
    %p111 = por %p109, %p110
    %p112 = scmp.le.s32.totalorder 1, %s10
    %p113 = scmp.lt.s32.totalorder %s10, 3
    %p114 = pnand %p112, %p113
    %p115 = pneg %p114
    // Predicated region
    $region9: #{unet_monai_forward.10} parent=5 // pred_check
      _
    $region10: #{unet_monai_forward.10} parent=5 // pred_check_branch
      %117 = sbr.rel (%p114) target = $region12
    $region11: #{unet_monai_forward.10} parent=5 // pred_region
      %s118 = ssub.s32 %s10, 1
      // Predicated region
      $region13: #{unet_monai_forward.10} parent=11 // pred_check
        %p119 = pneg %p57
      $region14: #{unet_monai_forward.10} parent=11 // pred_check_branch
        %121 = sbr.rel (%p119) target = $region16
      $region15: #{unet_monai_forward.10} parent=11 // pred_region
        _
      $region16: #{unet_monai_forward.10} parent=11 // pred_fallthru
        _
      // Predicated region
      $region17: #{unet_monai_forward.10} parent=11 // pred_check
        %p122 = pneg %p78
      $region18: #{unet_monai_forward.10} parent=11 // pred_check_branch
        %124 = sbr.rel (%p122) target = $region20
      $region19: #{unet_monai_forward.10} parent=11 // pred_region
        _
      $region20: #{unet_monai_forward.10} parent=11 // pred_fallthru
        _
    $region12: #{unet_monai_forward.10} parent=5 // pred_fallthru
      _
    %p125 = scmp.lt.s32.totalorder %s10, 2
    // Predicated region
    $region21: #{unet_monai_forward.10} parent=5 // pred_check
      %p126 = pneg %p125
    $region22: #{unet_monai_forward.10} parent=5 // pred_check_branch
      %128 = sbr.rel (%p126) target = $region24
    $region23: #{unet_monai_forward.10} parent=5 // pred_region
      // Predicated region
      $region25: #{unet_monai_forward.10} parent=23 // pred_check
        %p129 = pneg %p30
      $region26: #{unet_monai_forward.10} parent=23 // pred_check_branch
        %131 = sbr.rel (%p129) target = $region28
      $region27: #{unet_monai_forward.10} parent=23 // pred_region
        %p132 = scmp.lt.s32.totalorder %s10, 1
        %s133 = scalar_select %p132, %s10, 1
        %s134 = smul.addr %s133, 18
        %s135 = smul.addr %s134, 4
        %s136 = scalar_lea.vmem %s0, %s135
      $region28: #{unet_monai_forward.10} parent=23 // pred_fallthru
        _
    $region24: #{unet_monai_forward.10} parent=5 // pred_fallthru
      _
    %p137 = scmp.le.s32.totalorder 1, %s10
    %p138 = scmp.lt.s32.totalorder %s10, 3
    %p139 = pnand %p137, %p138
    %p140 = pneg %p139
    // Predicated region
    $region29: #{unet_monai_forward.10} parent=5 // pred_check
      _
    $region30: #{unet_monai_forward.10} parent=5 // pred_check_branch
      %142 = sbr.rel (%p139) target = $region32
    $region31: #{unet_monai_forward.10} parent=5 // pred_region
      %s143 = ssub.s32 %s10, 1
      %p144 = scmp.lt.s32.totalorder %s15, 1
      %s145 = scalar_select %p144, %s15, 1
      %s146 = smul.addr %s145, 18
      %s147 = smul.addr %s146, 4
      %s148 = scalar_lea.vmem %s0, %s147
      %p149 = pneg %p36
      %p150 = pneg %p33
      %p151 = pneg %p57
      %p152 = pneg %p54
      %p153 = pneg %p78
      %p154 = pneg %p75
      %p155 = pneg %p104
      %p156 = pneg %p101
      %p157 = scmp.lt.s32.totalorder %s15, 1
      %s158 = scalar_select %p157, %s15, 1
      %s159 = smul.addr %s158, 4
      %s160 = smul.addr %s159, 4
      %s161 = scalar_lea.vmem %s3, %s160
      %p162 = scmp.lt.s32.totalorder %s15, 1
      %s163 = scalar_select %p162, %s15, 1
      %s164 = smul.addr %s163, 18
      %s165 = smul.addr %s164, 4
      %s166 = scalar_lea.vmem %s0, %s165
      %p167 = scmp.lt.s32.totalorder %s15, 1
      %s168 = scalar_select %p167, %s15, 1
      %s169 = smul.addr %s168, 4
      %s170 = smul.addr %s169, 4
      %s171 = scalar_lea.vmem %s3, %s170
      %v173 = vld [vmem:[%s1] sm:$0xff]
      %v174 = vld [vmem:[%s1 + $0x8] sm:$0xff]
      %v175 = vld [vmem:[%s1 + $0x10] sm:$0xff]
      %v176 = vld [vmem:[%s1 + $0x18] sm:$0xff]
      %v177 = vld [vmem:[%s166] sm:$0xf]
      %v178 = vld [vmem:[%s166 + $0x4] sm:$0xf]
      %v179 = vld [vmem:[%s166 + $0x8] sm:$0xf]
      %v180 = vld [vmem:[%s166 + $0xc] sm:$0xf]
      %v181 = vld [vmem:[%s166 + $0x10] sm:$0xf]
      %v182 = vld [vmem:[%s166 + $0x14] sm:$0xf]
      %v183 = vld [vmem:[%s166 + $0x18] sm:$0xf]
      %v184 = vld [vmem:[%s166 + $0x1c] sm:$0xf]
      %v185 = vld [vmem:[%s166 + $0x20] sm:$0xf]
      %v186 = vld [vmem:[%s166 + $0x24] sm:$0xf]
      %v187 = vld [vmem:[%s166 + $0x28] sm:$0xf]
      %v188 = vld [vmem:[%s166 + $0x2c] sm:$0xf]
      %v189 = vld [vmem:[%s166 + $0x30] sm:$0xf]
      %v190 = vld [vmem:[%s166 + $0x34] sm:$0xf]
      %v191 = vld [vmem:[%s166 + $0x38] sm:$0xf]
      %v192 = vld [vmem:[%s166 + $0x3c] sm:$0xf]
      %v193 = vld [vmem:[%s166 + $0x40] sm:$0xf]
      %v194 = vld [vmem:[%s166 + $0x44] sm:$0xf]
      %v199 = vunpack.c.l.b16 %v173
      %v200 = vunpack.c.h.b16 %v173
      %v201 = vunpack.c.l.b16 %v174
      %v202 = vunpack.c.h.b16 %v174
      %v203 = vunpack.c.l.b16 %v175
      %v204 = vunpack.c.h.b16 %v175
      %v205 = vunpack.c.l.b16 %v176
      %v206 = vunpack.c.h.b16 %v176
      %v207 = vpack.c.b16 %v201, %v199
      %v208 = vpack.c.b16 %v202, %v200
      %v209 = vpack.c.b16 %v205, %v203
      %v210 = vpack.c.b16 %v206, %v204
      %v231 = vunpack.c.l.b16 %v177
      %v232 = vunpack.c.l.b16 %v178
      %v233 = vunpack.c.l.b16 %v179
      %v234 = vunpack.c.l.b16 %v180
      %v235 = vunpack.c.l.b16 %v181
      %v236 = vunpack.c.l.b16 %v182
      %v237 = vunpack.c.l.b16 %v183
      %v238 = vunpack.c.l.b16 %v184
      %v239 = vunpack.c.l.b16 %v185
      %v240 = vunpack.c.l.b16 %v186
      %v241 = vunpack.c.l.b16 %v187
      %v242 = vunpack.c.l.b16 %v188
      %v243 = vunpack.c.l.b16 %v189
      %v244 = vunpack.c.l.b16 %v190
      %v245 = vunpack.c.l.b16 %v191
      %v246 = vunpack.c.l.b16 %v192
      %v247 = vunpack.c.l.b16 %v193
      %v248 = vunpack.c.l.b16 %v194
      %v249 = vpack.c.b16 %v232, %v231
      %v250 = vpack.c.b16 %v234, %v233
      %v251 = vpack.c.b16 %v236, %v235
      %v252 = vpack.c.b16 %v238, %v237
      %v253 = vpack.c.b16 %v240, %v239
      %v254 = vpack.c.b16 %v242, %v241
      %v255 = vpack.c.b16 %v244, %v243
      %v256 = vpack.c.b16 %v246, %v245
      %v257 = vpack.c.b16 %v248, %v247
      %vm267 = vcmask 130048
      %v269 = vsel %vm267, %v208, 0
      %v272 = vsel %vm267, %v210, 0
      %274 = vmatprep.subr.bf16.mxu0 0
      %275 = vmatpush1.bf16.msra.mxu0 %v256
      %276 = vmatprep.subr.bf16.mxu0 0
      %277 = vmatpush1.bf16.msra.mxu0 %v255
      %278 = vmatprep.subr.bf16.mxu0 0
      %279 = vmatpush1.bf16.msra.mxu0 %v254
      %280 = vmatprep.subr.bf16.mxu0 0
      %281 = vmatpush1.bf16.msra.mxu0 %v253
      %282 = vmatprep.subr.bf16.mxu0 0
      %283 = vmatpush1.bf16.msra.mxu0 %v252
      %284 = vmatprep.subr.bf16.mxu0 0
      %285 = vmatpush1.bf16.msra.mxu0 %v251
      %286 = vmatprep.subr.bf16.mxu0 0
      %287 = vmatpush1.bf16.msra.mxu0 %v250
      %288 = vmatprep.subr.bf16.mxu0 0
      %289 = vmatpush1.bf16.msra.mxu0 %v249
      %290 = vmatprep.subr.bf16.mxu0 0
      %291 = vmatpush2.bf16.msra.mxu0 0
      %292 = vmatprep.subr.bf16.mxu0 0
      %293 = vmatpush2.bf16.msra.mxu0 0
      %294 = vmatprep.subr.bf16.mxu0 0
      %295 = vmatpush2.bf16.msra.mxu0 0
      %296 = vmatprep.subr.bf16.mxu0 0
      %297 = vmatpush2.bf16.msra.mxu0 0
      %298 = vmatprep.subr.bf16.mxu0 0
      %299 = vmatpush2.bf16.msra.mxu0 0
      %300 = vmatprep.subr.bf16.mxu0 0
      %301 = vmatpush2.bf16.msra.mxu0 0
      %302 = vmatprep.subr.bf16.mxu0 0
      %303 = vmatpush2.bf16.msra.mxu0 0
      %304 = vmatprep.subr.bf16.mxu0 0
      %305 = vmatpush2.bf16.msra.mxu0 %v257
      %306 = vmatprep.mubr.bf16.mxu0 %v269
      %307 = vmatmul.mubr.bf16.gmra.mxu0 %v207
      %v308 = vpop.f32.mrf.mxu0
      %v309 = vadd.f32 0.0, %v308
      %v310 = vpop.f32.mrf.mxu0
      %v311 = vpop.f32.mrf.mxu0
      %v312 = vadd.f32 0.0, %v311
      %v313 = vpop.f32.mrf.mxu0
      %314 = vmatprep.mubr.bf16.mxu0 %v272
      %315 = vmatmul.mubr.bf16.gmra.mxu0 %v209
      %v316 = vpop.f32.mrf.mxu0
      %v317 = vadd.f32 0.0, %v316
      %v318 = vpop.f32.mrf.mxu0
      %v319 = vpop.f32.mrf.mxu0
      %v320 = vadd.f32 0.0, %v319
      %v321 = vpop.f32.mrf.mxu0
      %322 = vdwg.mxu0
      %vm323 = vcmask 523264
      %v324 = vsel %vm323, %v309, 0.0
      %325 = vadd.xlane.f32.xlu0 %v324
      %v326 = vpop.xlane.xlu0 %325
      %v327 = vsel %vm323, %v312, 0.0
      %328 = vadd.xlane.f32.xlu0 %v327
      %v329 = vpop.xlane.xlu0 %328
      %v330 = vsel %vm323, %v317, 0.0
      %331 = vadd.xlane.f32.xlu0 %v330
      %v332 = vpop.xlane.xlu0 %331
      %v333 = vsel %vm323, %v320, 0.0
      %334 = vadd.xlane.f32.xlu0 %v333
      %v335 = vpop.xlane.xlu0 %334
      %v336 = vmul.f32 %v326, 0.015625
      %v337 = vmul.f32 %v329, 0.015625
      %v338 = vmul.f32 %v332, 0.015625
      %v339 = vmul.f32 %v335, 0.015625
      %v340 = vsub.f32 %v309, %v336
      %v341 = vsub.f32 %v312, %v337
      %v342 = vsub.f32 %v317, %v338
      %v343 = vsub.f32 %v320, %v339
      %v344 = vmul.f32 %v340, %v340
      %v345 = vmul.f32 %v341, %v341
      %v346 = vmul.f32 %v342, %v342
      %v347 = vmul.f32 %v343, %v343
      %v348 = vsel %vm323, %v344, 0.0
      %349 = vadd.xlane.f32.xlu0 %v348
      %v350 = vpop.xlane.xlu0 %349
      %v351 = vsel %vm323, %v345, 0.0
      %352 = vadd.xlane.f32.xlu0 %v351
      %v353 = vpop.xlane.xlu0 %352
      %v354 = vsel %vm323, %v346, 0.0
      %355 = vadd.xlane.f32.xlu0 %v354
      %v356 = vpop.xlane.xlu0 %355
      %v357 = vsel %vm323, %v347, 0.0
      %358 = vadd.xlane.f32.xlu0 %v357
      %v359 = vpop.xlane.xlu0 %358
      %v360 = vmul.f32 %v350, 0.015625
      %v361 = vmul.f32 %v353, 0.015625
      %v362 = vmul.f32 %v356, 0.015625
      %v363 = vmul.f32 %v359, 0.015625
      %v364 = vadd.f32 %v360, 1e-05
      %v365 = vadd.f32 %v361, 1e-05
      %v366 = vadd.f32 %v362, 1e-05
      %v367 = vadd.f32 %v363, 1e-05
      %v368 = vrsqrt.pop %v364
      %v369 = vrsqrt.pop %v365
      %v370 = vrsqrt.pop %v366
      %v371 = vrsqrt.pop %v367
      %v372 = vmul.f32 %v340, %v368
      %v373 = vmul.f32 %v341, %v369
      %v374 = vmul.f32 %v342, %v370
      %v375 = vmul.f32 %v343, %v371
      %s376 = sld [smem:[#allocation2]]
      %vm377 = vcmp.ge.f32.partialorder %v372, 0.0
      %vm378 = vcmp.ge.f32.partialorder %v373, 0.0
      %vm379 = vcmp.ge.f32.partialorder %v374, 0.0
      %vm380 = vcmp.ge.f32.partialorder %v375, 0.0
      %v381 = vstv %s376
      %v382 = vmul.f32 %v372, %v381
      %v383 = vmul.f32 %v373, %v381
      %v384 = vmul.f32 %v374, %v381
      %v385 = vmul.f32 %v375, %v381
      %v386 = vsel %vm377, %v372, %v382
      %v387 = vsel %vm378, %v373, %v383
      %v388 = vsel %vm379, %v374, %v384
      %v389 = vsel %vm380, %v375, %v385
      %v390 = vpack.c.bf16 %v387, %v386
      %v391 = vpack.c.bf16 %v389, %v388
      %v394 = vunpack.c.l.b16 %v390
      %v395 = vunpack.c.h.b16 %v390
      %v396 = vunpack.c.l.b16 %v391
      %v397 = vunpack.c.h.b16 %v391
      %v398 = vpack.c.b16 %v394, %v394
      %v399 = vpack.c.b16 %v395, %v395
      %v400 = vpack.c.b16 %v396, %v396
      %v401 = vpack.c.b16 %v397, %v397
      %vm406 = vcmask 519168
      %407 = vst.msk [vmem:[%s171] sm:$0xf] %vm406, %v398
      %408 = vst.msk [vmem:[%s171 + $0x4] sm:$0xf] %vm406, %v399
      %409 = vst.msk [vmem:[%s171 + $0x8] sm:$0xf] %vm406, %v400
      %410 = vst.msk [vmem:[%s171 + $0xc] sm:$0xf] %vm406, %v401
      %p411 = scmp.lt.s32.totalorder %s15, 1
      %s412 = scalar_select %p411, %s15, 1
      %s413 = smul.addr %s412, 4
      %s414 = smul.addr %s413, 4
      %s415 = scalar_lea.vmem %s3, %s414
      // Predicated region
      $region33: #{unet_monai_forward.10} parent=31 // pred_check
        %p416 = pneg %p101
      $region34: #{unet_monai_forward.10} parent=31 // pred_check_branch
        %418 = sbr.rel (%p416) target = $region36
      $region35: #{unet_monai_forward.10} parent=31 // pred_region
        _
      $region36: #{unet_monai_forward.10} parent=31 // pred_fallthru
        _
    $region32: #{unet_monai_forward.10} parent=5 // pred_fallthru
      _
    %p419 = scmp.le.s32.totalorder 2, %s10
    // Predicated region
    $region37: #{unet_monai_forward.10} parent=5 // pred_check
      %p420 = pneg %p419
    $region38: #{unet_monai_forward.10} parent=5 // pred_check_branch
      %422 = sbr.rel (%p420) target = $region40
    $region39: #{unet_monai_forward.10} parent=5 // pred_region
      %s423 = ssub.s32 %s10, 2
      // Predicated region
      $region41: #{unet_monai_forward.10} parent=39 // pred_check
        %p424 = pneg %p107
      $region42: #{unet_monai_forward.10} parent=39 // pred_check_branch
        %426 = sbr.rel (%p424) target = $region44
      $region43: #{unet_monai_forward.10} parent=39 // pred_region
        %p427 = scmp.lt.s32.totalorder %s16, 1
        %s428 = scalar_select %p427, %s16, 1
        %s429 = smul.addr %s428, 4
        %s430 = smul.addr %s429, 4
        %s431 = scalar_lea.vmem %s3, %s430
      $region44: #{unet_monai_forward.10} parent=39 // pred_fallthru
        _
    $region40: #{unet_monai_forward.10} parent=5 // pred_fallthru
      _
  $region6: #{unet_monai_forward.10} parent=0 // loop_footer
    %s14 = sadd.s32 1, %s10
  $region7: #{unet_monai_forward.10} parent=0 // loop_footer_branch
    %9 = sbr.rel target = $region3
  $region8: #{unet_monai_forward.10} parent=0 // loop_exit
    _

// kernel: unet_monai_forward.11
$region0: #{unet_monai_forward.11}
  #allocation0 [shape = 'u32[]', space=smem, size = 0x4, offset = 0x4, fixed_abs, tag = 'smem constant byte address 0x4 - core index']
  #allocation1 [shape = 'u32[144,128]{1,0:T(1,128)}', space=vmem, size = 0x12000, scoped, tag = 'internal scratch']
  #allocation2 [shape = 'f32[1]{0:T(128)S(6)}', space=smem, size = 0x200, scoped, tag = 'scoped memory for unet_monai_forward.11']
  %s0 = inlined_call_operand.vmem [shape: bf16[2,16,288], index: 0, kind: input, shape index: {}]
  %s1 = inlined_call_operand.vmem [shape: bf16[288,64], index: 1, kind: input, shape index: {}]
  %s2 = inlined_call_operand.<no memory space> [shape: f32[1], index: 2, kind: input, shape index: {}]
  %s3 = inlined_call_operand.vmem [shape: bf16[2,16,64], index: 3, kind: output, shape index: {}]
  %s4 = sld [smem:[#allocation0]]
  $region45: #{unet_monai_forward.11} parent=0
    _
  %s6 = ssub.s32 1, %s4
  %s7 = scalar_select 0, %s6, %s4
  %8 = sst [smem:[#allocation2]] %s2
  loop: start=0, step=1, limit=4
  $region2: #{unet_monai_forward.11} parent=0 // loop_pre_header
    _
  $region3: #{unet_monai_forward.11} parent=0 // loop_header
    %s10 = sphi 0, %s14
    %p11 = scmp.ge.s32.totalorder %s10, 4
    %s20 = sphi 0, %s22
    %s23 = sphi 0, %s20
    %s24 = sphi 0, %s23
    %s40 = sphi 0, %s24
    %s44 = sphi 0, %s44
    %s46 = sphi 0, %s44
    %s47 = sphi 0, %s46
    %s61 = sphi 0, %s47
    %s65 = sphi 0, %s65
    %s67 = sphi 0, %s65
    %s68 = sphi 0, %s67
    %s82 = sphi 0, %s68
    %s88 = sphi 0, %s90
    %s91 = sphi 0, %s88
    %s92 = sphi 0, %s91
    %s108 = sphi 0, %s92
  $region4: #{unet_monai_forward.11} parent=0 // loop_header_branch
    %13 = sbr.rel (%p11) target = $region8
  $region5: #{unet_monai_forward.11} parent=0 // loop_body
    %s15 = ssub.s32 %s10, 1
    %s16 = ssub.s32 %s10, 2
    %s17 = sadd.s32 %s10, 1
    %s18 = ssub.s32 %s10, %s17
    %p19 = scmp.eq.s32.totalorder %s18, 0
    %s21 = sadd.s32 %s20, 1
    %s22 = scalar_select %p19, %s20, %s21
    %p25 = pneg %p19
    %p26 = scmp.eq.s32.totalorder %s10, 1
    %p27 = por %p25, %p26
    %p28 = scmp.ne.s32.totalorder %s20, %s23
    %p29 = scmp.eq.s32.totalorder %s10, 0
    %p30 = por %p28, %p29
    %p31 = scmp.ne.s32.totalorder %s20, %s23
    %p32 = scmp.eq.s32.totalorder %s15, 1
    %p33 = por %p31, %p32
    %p34 = scmp.ne.s32.totalorder %s23, %s24
    %p35 = scmp.eq.s32.totalorder %s15, 0
    %p36 = por %p34, %p35
    %p37 = scmp.ne.s32.totalorder %s23, %s24
    %p38 = scmp.eq.s32.totalorder %s16, 1
    %p39 = por %p37, %p38
    %p41 = scmp.ne.s32.totalorder %s24, %s40
    %p42 = scmp.eq.s32.totalorder %s16, 0
    %p43 = por %p41, %p42
    %s45 = sadd.s32 %s44, 1
    %p48 = scmp.eq.s32.totalorder %s10, 1
    %p49 = scmp.ne.s32.totalorder %s44, %s46
    %p50 = scmp.eq.s32.totalorder %s10, 0
    %p51 = por %p49, %p50
    %p52 = scmp.ne.s32.totalorder %s44, %s46
    %p53 = scmp.eq.s32.totalorder %s15, 1
    %p54 = por %p52, %p53
    %p55 = scmp.ne.s32.totalorder %s46, %s47
    %p56 = scmp.eq.s32.totalorder %s15, 0
    %p57 = por %p55, %p56
    %p58 = scmp.ne.s32.totalorder %s46, %s47
    %p59 = scmp.eq.s32.totalorder %s16, 1
    %p60 = por %p58, %p59
    %p62 = scmp.ne.s32.totalorder %s47, %s61
    %p63 = scmp.eq.s32.totalorder %s16, 0
    %p64 = por %p62, %p63
    %s66 = sadd.s32 %s65, 1
    %p69 = scmp.eq.s32.totalorder %s10, 1
    %p70 = scmp.ne.s32.totalorder %s65, %s67
    %p71 = scmp.eq.s32.totalorder %s10, 0
    %p72 = por %p70, %p71
    %p73 = scmp.ne.s32.totalorder %s65, %s67
    %p74 = scmp.eq.s32.totalorder %s15, 1
    %p75 = por %p73, %p74
    %p76 = scmp.ne.s32.totalorder %s67, %s68
    %p77 = scmp.eq.s32.totalorder %s15, 0
    %p78 = por %p76, %p77
    %p79 = scmp.ne.s32.totalorder %s67, %s68
    %p80 = scmp.eq.s32.totalorder %s16, 1
    %p81 = por %p79, %p80
    %p83 = scmp.ne.s32.totalorder %s68, %s82
    %p84 = scmp.eq.s32.totalorder %s16, 0
    %p85 = por %p83, %p84
    %s86 = ssub.s32 %s10, %s17
    %p87 = scmp.eq.s32.totalorder %s86, 0
    %s89 = sadd.s32 %s88, 1
    %s90 = scalar_select %p87, %s88, %s89
    %p93 = pneg %p87
    %p94 = scmp.eq.s32.totalorder %s10, 1
    %p95 = por %p93, %p94
    %p96 = scmp.ne.s32.totalorder %s88, %s91
    %p97 = scmp.eq.s32.totalorder %s10, 0
    %p98 = por %p96, %p97
    %p99 = scmp.ne.s32.totalorder %s88, %s91
    %p100 = scmp.eq.s32.totalorder %s15, 1
    %p101 = por %p99, %p100
    %p102 = scmp.ne.s32.totalorder %s91, %s92
    %p103 = scmp.eq.s32.totalorder %s15, 0
    %p104 = por %p102, %p103
    %p105 = scmp.ne.s32.totalorder %s91, %s92
    %p106 = scmp.eq.s32.totalorder %s16, 1
    %p107 = por %p105, %p106
    %p109 = scmp.ne.s32.totalorder %s92, %s108
    %p110 = scmp.eq.s32.totalorder %s16, 0
    %p111 = por %p109, %p110
    %p112 = scmp.le.s32.totalorder 1, %s10
    %p113 = scmp.lt.s32.totalorder %s10, 3
    %p114 = pnand %p112, %p113
    %p115 = pneg %p114
    // Predicated region
    $region9: #{unet_monai_forward.11} parent=5 // pred_check
      _
    $region10: #{unet_monai_forward.11} parent=5 // pred_check_branch
      %117 = sbr.rel (%p114) target = $region12
    $region11: #{unet_monai_forward.11} parent=5 // pred_region
      %s118 = ssub.s32 %s10, 1
      // Predicated region
      $region13: #{unet_monai_forward.11} parent=11 // pred_check
        %p119 = pneg %p57
      $region14: #{unet_monai_forward.11} parent=11 // pred_check_branch
        %121 = sbr.rel (%p119) target = $region16
      $region15: #{unet_monai_forward.11} parent=11 // pred_region
        _
      $region16: #{unet_monai_forward.11} parent=11 // pred_fallthru
        _
      // Predicated region
      $region17: #{unet_monai_forward.11} parent=11 // pred_check
        %p122 = pneg %p78
      $region18: #{unet_monai_forward.11} parent=11 // pred_check_branch
        %124 = sbr.rel (%p122) target = $region20
      $region19: #{unet_monai_forward.11} parent=11 // pred_region
        _
      $region20: #{unet_monai_forward.11} parent=11 // pred_fallthru
        _
    $region12: #{unet_monai_forward.11} parent=5 // pred_fallthru
      _
    %p125 = scmp.lt.s32.totalorder %s10, 2
    // Predicated region
    $region21: #{unet_monai_forward.11} parent=5 // pred_check
      %p126 = pneg %p125
    $region22: #{unet_monai_forward.11} parent=5 // pred_check_branch
      %128 = sbr.rel (%p126) target = $region24
    $region23: #{unet_monai_forward.11} parent=5 // pred_region
      // Predicated region
      $region25: #{unet_monai_forward.11} parent=23 // pred_check
        %p129 = pneg %p30
      $region26: #{unet_monai_forward.11} parent=23 // pred_check_branch
        %131 = sbr.rel (%p129) target = $region28
      $region27: #{unet_monai_forward.11} parent=23 // pred_region
        %p132 = scmp.lt.s32.totalorder %s10, 1
        %s133 = scalar_select %p132, %s10, 1
        %s134 = smul.addr %s133, 6
        %s135 = smul.addr %s134, 4
        %s136 = scalar_lea.vmem %s0, %s135
      $region28: #{unet_monai_forward.11} parent=23 // pred_fallthru
        _
    $region24: #{unet_monai_forward.11} parent=5 // pred_fallthru
      _
    %p137 = scmp.le.s32.totalorder 1, %s10
    %p138 = scmp.lt.s32.totalorder %s10, 3
    %p139 = pnand %p137, %p138
    %p140 = pneg %p139
    // Predicated region
    $region29: #{unet_monai_forward.11} parent=5 // pred_check
      _
    $region30: #{unet_monai_forward.11} parent=5 // pred_check_branch
      %142 = sbr.rel (%p139) target = $region32
    $region31: #{unet_monai_forward.11} parent=5 // pred_region
      %s143 = ssub.s32 %s10, 1
      %p144 = scmp.lt.s32.totalorder %s15, 1
      %s145 = scalar_select %p144, %s15, 1
      %s146 = smul.addr %s145, 6
      %s147 = smul.addr %s146, 4
      %s148 = scalar_lea.vmem %s0, %s147
      %p149 = pneg %p36
      %p150 = pneg %p33
      %p151 = pneg %p57
      %p152 = pneg %p54
      %p153 = pneg %p78
      %p154 = pneg %p75
      %p155 = pneg %p104
      %p156 = pneg %p101
      %p157 = scmp.lt.s32.totalorder %s15, 1
      %s158 = scalar_select %p157, %s15, 1
      %s159 = smul.addr %s158, 2
      %s160 = smul.addr %s159, 4
      %s161 = scalar_lea.vmem %s3, %s160
      %p162 = scmp.lt.s32.totalorder %s15, 1
      %s163 = scalar_select %p162, %s15, 1
      %s164 = smul.addr %s163, 6
      %s165 = smul.addr %s164, 4
      %s166 = scalar_lea.vmem %s0, %s165
      %p167 = scmp.lt.s32.totalorder %s15, 1
      %s168 = scalar_select %p167, %s15, 1
      %s169 = smul.addr %s168, 2
      %s170 = smul.addr %s169, 4
      %s171 = scalar_lea.vmem %s3, %s170
      %v173 = vld [vmem:[%s166] sm:$0xff]
      %v174 = vld [vmem:[%s166 + $0x8] sm:$0xf]
      %v175 = vld [vmem:[%s166 + $0xc] sm:$0xff]
      %v176 = vld [vmem:[%s166 + $0x14] sm:$0xf]
      %v177 = vld [vmem:[%s1] sm:$0xf]
      %v178 = vld [vmem:[%s1 + $0x4] sm:$0xf]
      %v179 = vld [vmem:[%s1 + $0x8] sm:$0xf]
      %v180 = vld [vmem:[%s1 + $0xc] sm:$0xf]
      %v181 = vld [vmem:[%s1 + $0x10] sm:$0xf]
      %v182 = vld [vmem:[%s1 + $0x14] sm:$0xf]
      %v183 = vld [vmem:[%s1 + $0x18] sm:$0xf]
      %v184 = vld [vmem:[%s1 + $0x1c] sm:$0xf]
      %v185 = vld [vmem:[%s1 + $0x20] sm:$0xf]
      %v186 = vld [vmem:[%s1 + $0x24] sm:$0xf]
      %v187 = vld [vmem:[%s1 + $0x28] sm:$0xf]
      %v188 = vld [vmem:[%s1 + $0x2c] sm:$0xf]
      %v189 = vld [vmem:[%s1 + $0x30] sm:$0xf]
      %v190 = vld [vmem:[%s1 + $0x34] sm:$0xf]
      %v191 = vld [vmem:[%s1 + $0x38] sm:$0xf]
      %v192 = vld [vmem:[%s1 + $0x3c] sm:$0xf]
      %v193 = vld [vmem:[%s1 + $0x40] sm:$0xf]
      %v194 = vld [vmem:[%s1 + $0x44] sm:$0xf]
      %v195 = vld [vmem:[%s1 + $0x48] sm:$0xf]
      %v196 = vld [vmem:[%s1 + $0x4c] sm:$0xf]
      %v197 = vld [vmem:[%s1 + $0x50] sm:$0xf]
      %v198 = vld [vmem:[%s1 + $0x54] sm:$0xf]
      %v199 = vld [vmem:[%s1 + $0x58] sm:$0xf]
      %v200 = vld [vmem:[%s1 + $0x5c] sm:$0xf]
      %v201 = vld [vmem:[%s1 + $0x60] sm:$0xf]
      %v202 = vld [vmem:[%s1 + $0x64] sm:$0xf]
      %v203 = vld [vmem:[%s1 + $0x68] sm:$0xf]
      %v204 = vld [vmem:[%s1 + $0x6c] sm:$0xf]
      %v205 = vld [vmem:[%s1 + $0x70] sm:$0xf]
      %v206 = vld [vmem:[%s1 + $0x74] sm:$0xf]
      %v207 = vld [vmem:[%s1 + $0x78] sm:$0xf]
      %v208 = vld [vmem:[%s1 + $0x7c] sm:$0xf]
      %v209 = vld [vmem:[%s1 + $0x80] sm:$0xf]
      %v210 = vld [vmem:[%s1 + $0x84] sm:$0xf]
      %v211 = vld [vmem:[%s1 + $0x88] sm:$0xf]
      %v212 = vld [vmem:[%s1 + $0x8c] sm:$0xf]
      %v217 = vunpack.c.l.b16 %v173
      %v218 = vunpack.c.h.b16 %v173
      %v219 = vunpack.c.l.b16 %v174
      %v220 = vunpack.c.l.b16 %v175
      %v221 = vunpack.c.h.b16 %v175
      %v222 = vunpack.c.l.b16 %v176
      %v223 = vpack.c.b16 %v220, %v217
      %v224 = vpack.c.b16 %v221, %v218
      %v225 = vpack.c.b16 %v222, %v219
      %v264 = vunpack.c.l.b16 %v177
      %v265 = vunpack.c.l.b16 %v178
      %v266 = vunpack.c.l.b16 %v179
      %v267 = vunpack.c.l.b16 %v180
      %v268 = vunpack.c.l.b16 %v181
      %v269 = vunpack.c.l.b16 %v182
      %v270 = vunpack.c.l.b16 %v183
      %v271 = vunpack.c.l.b16 %v184
      %v272 = vunpack.c.l.b16 %v185
      %v273 = vunpack.c.l.b16 %v186
      %v274 = vunpack.c.l.b16 %v187
      %v275 = vunpack.c.l.b16 %v188
      %v276 = vunpack.c.l.b16 %v189
      %v277 = vunpack.c.l.b16 %v190
      %v278 = vunpack.c.l.b16 %v191
      %v279 = vunpack.c.l.b16 %v192
      %v280 = vunpack.c.l.b16 %v193
      %v281 = vunpack.c.l.b16 %v194
      %v282 = vunpack.c.l.b16 %v195
      %v283 = vunpack.c.l.b16 %v196
      %v284 = vunpack.c.l.b16 %v197
      %v285 = vunpack.c.l.b16 %v198
      %v286 = vunpack.c.l.b16 %v199
      %v287 = vunpack.c.l.b16 %v200
      %v288 = vunpack.c.l.b16 %v201
      %v289 = vunpack.c.l.b16 %v202
      %v290 = vunpack.c.l.b16 %v203
      %v291 = vunpack.c.l.b16 %v204
      %v292 = vunpack.c.l.b16 %v205
      %v293 = vunpack.c.l.b16 %v206
      %v294 = vunpack.c.l.b16 %v207
      %v295 = vunpack.c.l.b16 %v208
      %v296 = vunpack.c.l.b16 %v209
      %v297 = vunpack.c.l.b16 %v210
      %v298 = vunpack.c.l.b16 %v211
      %v299 = vunpack.c.l.b16 %v212
      %v300 = vpack.c.b16 %v265, %v264
      %v301 = vpack.c.b16 %v267, %v266
      %v302 = vpack.c.b16 %v269, %v268
      %v303 = vpack.c.b16 %v271, %v270
      %v304 = vpack.c.b16 %v273, %v272
      %v305 = vpack.c.b16 %v275, %v274
      %v306 = vpack.c.b16 %v277, %v276
      %v307 = vpack.c.b16 %v279, %v278
      %v308 = vpack.c.b16 %v281, %v280
      %v309 = vpack.c.b16 %v283, %v282
      %v310 = vpack.c.b16 %v285, %v284
      %v311 = vpack.c.b16 %v287, %v286
      %v312 = vpack.c.b16 %v289, %v288
      %v313 = vpack.c.b16 %v291, %v290
      %v314 = vpack.c.b16 %v293, %v292
      %v315 = vpack.c.b16 %v295, %v294
      %v316 = vpack.c.b16 %v297, %v296
      %v317 = vpack.c.b16 %v299, %v298
      %vm336 = vcmask 261120
      %v338 = vsel %vm336, %v225, 0
      %340 = vmatprep.subr.bf16.mxu0 0
      %341 = vmatpush1.bf16.msra.mxu0 %v307
      %342 = vmatprep.subr.bf16.mxu0 0
      %343 = vmatpush1.bf16.msra.mxu0 %v306
      %344 = vmatprep.subr.bf16.mxu0 0
      %345 = vmatpush1.bf16.msra.mxu0 %v305
      %346 = vmatprep.subr.bf16.mxu0 0
      %347 = vmatpush1.bf16.msra.mxu0 %v304
      %348 = vmatprep.subr.bf16.mxu0 0
      %349 = vmatpush1.bf16.msra.mxu0 %v303
      %350 = vmatprep.subr.bf16.mxu0 0
      %351 = vmatpush1.bf16.msra.mxu0 %v302
      %352 = vmatprep.subr.bf16.mxu0 0
      %353 = vmatpush1.bf16.msra.mxu0 %v301
      %354 = vmatprep.subr.bf16.mxu0 0
      %355 = vmatpush1.bf16.msra.mxu0 %v300
      %356 = vmatprep.subr.bf16.mxu0 0
      %357 = vmatpush2.bf16.msra.mxu0 %v315
      %358 = vmatprep.subr.bf16.mxu0 0
      %359 = vmatpush2.bf16.msra.mxu0 %v314
      %360 = vmatprep.subr.bf16.mxu0 0
      %361 = vmatpush2.bf16.msra.mxu0 %v313
      %362 = vmatprep.subr.bf16.mxu0 0
      %363 = vmatpush2.bf16.msra.mxu0 %v312
      %364 = vmatprep.subr.bf16.mxu0 0
      %365 = vmatpush2.bf16.msra.mxu0 %v311
      %366 = vmatprep.subr.bf16.mxu0 0
      %367 = vmatpush2.bf16.msra.mxu0 %v310
      %368 = vmatprep.subr.bf16.mxu0 0
      %369 = vmatpush2.bf16.msra.mxu0 %v309
      %370 = vmatprep.subr.bf16.mxu0 0
      %371 = vmatpush2.bf16.msra.mxu0 %v308
      %372 = vmatprep.mubr.bf16.mxu0 %v224
      %373 = vmatmul.mubr.bf16.gmra.mxu0 %v223
      %v374 = vpop.f32.mrf.mxu0
      %v375 = vadd.f32 0.0, %v374
      %v376 = vpop.f32.mrf.mxu0
      %v377 = vpop.f32.mrf.mxu0
      %v378 = vadd.f32 0.0, %v377
      %v379 = vpop.f32.mrf.mxu0
      %380 = vdwg.mxu0
      %381 = vmatprep.subr.bf16.mxu0 0
      %382 = vmatpush1.bf16.msra.mxu0 0
      %383 = vmatprep.subr.bf16.mxu0 0
      %384 = vmatpush1.bf16.msra.mxu0 0
      %385 = vmatprep.subr.bf16.mxu0 0
      %386 = vmatpush1.bf16.msra.mxu0 0
      %387 = vmatprep.subr.bf16.mxu0 0
      %388 = vmatpush1.bf16.msra.mxu0 0
      %389 = vmatprep.subr.bf16.mxu0 0
      %390 = vmatpush1.bf16.msra.mxu0 0
      %391 = vmatprep.subr.bf16.mxu0 0
      %392 = vmatpush1.bf16.msra.mxu0 0
      %393 = vmatprep.subr.bf16.mxu0 0
      %394 = vmatpush1.bf16.msra.mxu0 %v317
      %395 = vmatprep.subr.bf16.mxu0 0
      %396 = vmatpush1.bf16.msra.mxu0 %v316
      %397 = vmatprep.subr.bf16.mxu0 0
      %398 = vmatpush2.bf16.msra.mxu0 0
      %399 = vmatprep.subr.bf16.mxu0 0
      %400 = vmatpush2.bf16.msra.mxu0 0
      %401 = vmatprep.subr.bf16.mxu0 0
      %402 = vmatpush2.bf16.msra.mxu0 0
      %403 = vmatprep.subr.bf16.mxu0 0
      %404 = vmatpush2.bf16.msra.mxu0 0
      %405 = vmatprep.subr.bf16.mxu0 0
      %406 = vmatpush2.bf16.msra.mxu0 0
      %407 = vmatprep.subr.bf16.mxu0 0
      %408 = vmatpush2.bf16.msra.mxu0 0
      %409 = vmatprep.subr.bf16.mxu0 0
      %410 = vmatpush2.bf16.msra.mxu0 0
      %411 = vmatprep.subr.bf16.mxu0 0
      %412 = vmatpush2.bf16.msra.mxu0 0
      %413 = vmatprep.mubr.bf16.mxu0 0
      %414 = vmatmul.mubr.bf16.gmra.mxu0 %v338
      %v415 = vpop.f32.mrf.mxu0
      %v416 = vadd.f32 %v375, %v415
      %v417 = vpop.f32.mrf.mxu0
      %v418 = vpop.f32.mrf.mxu0
      %v419 = vadd.f32 %v378, %v418
      %v420 = vpop.f32.mrf.mxu0
      %421 = vdwg.mxu0
      %vm422 = vcmask 523264
      %v423 = vsel %vm422, %v416, 0.0
      %v424 = vsel %vm422, %v419, 0.0
      %v425 = vadd.f32 %v423, %v424
      %v426 = vrot.slane %v425, 4
      %v427 = vadd.f32 %v425, %v426
      %v428 = vrot.slane %v427, 2
      %v429 = vadd.f32 %v427, %v428
      %v430 = vrot.slane %v429, 1
      %v431 = vadd.f32 %v429, %v430
      %v432 = vmul.f32 %v431, 0.0625
      %v433 = vsub.f32 %v416, %v432
      %v434 = vsub.f32 %v419, %v432
      %v435 = vmul.f32 %v433, %v433
      %v436 = vmul.f32 %v434, %v434
      %v437 = vsel %vm422, %v435, 0.0
      %v438 = vsel %vm422, %v436, 0.0
      %v439 = vadd.f32 %v437, %v438
      %v440 = vrot.slane %v439, 4
      %v441 = vadd.f32 %v439, %v440
      %v442 = vrot.slane %v441, 2
      %v443 = vadd.f32 %v441, %v442
      %v444 = vrot.slane %v443, 1
      %v445 = vadd.f32 %v443, %v444
      %v446 = vmul.f32 %v445, 0.0625
      %v447 = vadd.f32 %v446, 1e-05
      %v448 = vrsqrt.pop %v447
      %v449 = vmul.f32 %v433, %v448
      %v450 = vmul.f32 %v434, %v448
      %s451 = sld [smem:[#allocation2]]
      %vm452 = vcmp.ge.f32.partialorder %v449, 0.0
      %vm453 = vcmp.ge.f32.partialorder %v450, 0.0
      %v454 = vstv %s451
      %v455 = vmul.f32 %v449, %v454
      %v456 = vmul.f32 %v450, %v454
      %v457 = vsel %vm452, %v449, %v455
      %v458 = vsel %vm453, %v450, %v456
      %v459 = vpack.c.bf16 %v458, %v457
      %v461 = vunpack.c.l.b16 %v459
      %v462 = vunpack.c.h.b16 %v459
      %v463 = vpack.c.b16 %v461, %v461
      %v464 = vpack.c.b16 %v462, %v462
      %vm467 = vcmask 519168
      %468 = vst.msk [vmem:[%s171] sm:$0xf] %vm467, %v463
      %469 = vst.msk [vmem:[%s171 + $0x4] sm:$0xf] %vm467, %v464
      %p470 = scmp.lt.s32.totalorder %s15, 1
      %s471 = scalar_select %p470, %s15, 1
      %s472 = smul.addr %s471, 2
      %s473 = smul.addr %s472, 4
      %s474 = scalar_lea.vmem %s3, %s473
      // Predicated region
      $region33: #{unet_monai_forward.11} parent=31 // pred_check
        %p475 = pneg %p101
      $region34: #{unet_monai_forward.11} parent=31 // pred_check_branch
        %477 = sbr.rel (%p475) target = $region36
      $region35: #{unet_monai_forward.11} parent=31 // pred_region
        _
      $region36: #{unet_monai_forward.11} parent=31 // pred_fallthru
        _
    $region32: #{unet_monai_forward.11} parent=5 // pred_fallthru
      _
    %p478 = scmp.le.s32.totalorder 2, %s10
    // Predicated region
    $region37: #{unet_monai_forward.11} parent=5 // pred_check
      %p479 = pneg %p478
    $region38: #{unet_monai_forward.11} parent=5 // pred_check_branch
      %481 = sbr.rel (%p479) target = $region40
    $region39: #{unet_monai_forward.11} parent=5 // pred_region
      %s482 = ssub.s32 %s10, 2
      // Predicated region
      $region41: #{unet_monai_forward.11} parent=39 // pred_check
        %p483 = pneg %p107
      $region42: #{unet_monai_forward.11} parent=39 // pred_check_branch
        %485 = sbr.rel (%p483) target = $region44
      $region43: #{unet_monai_forward.11} parent=39 // pred_region
        %p486 = scmp.lt.s32.totalorder %s16, 1
        %s487 = scalar_select %p486, %s16, 1
        %s488 = smul.addr %s487, 2
        %s489 = smul.addr %s488, 4
        %s490 = scalar_lea.vmem %s3, %s489
      $region44: #{unet_monai_forward.11} parent=39 // pred_fallthru
        _
    $region40: #{unet_monai_forward.11} parent=5 // pred_fallthru
      _
  $region6: #{unet_monai_forward.11} parent=0 // loop_footer
    %s14 = sadd.s32 1, %s10
  $region7: #{unet_monai_forward.11} parent=0 // loop_footer_branch
    %9 = sbr.rel target = $region3
  $region8: #{unet_monai_forward.11} parent=0 // loop_exit
    _

// kernel: unet_monai_forward.12
$region0: #{unet_monai_forward.12}
  #allocation0 [shape = 'u32[]', space=smem, size = 0x4, offset = 0x4, fixed_abs, tag = 'smem constant byte address 0x4 - core index']
  #allocation1 [shape = 'u32[144,128]{1,0:T(1,128)}', space=vmem, size = 0x12000, scoped, tag = 'internal scratch']
  #allocation2 [shape = 'f32[1]{0:T(128)S(6)}', space=smem, size = 0x200, scoped, tag = 'scoped memory for unet_monai_forward.12']
  %s0 = inlined_call_operand.vmem [shape: bf16[2,4,576], index: 0, kind: input, shape index: {}]
  %s1 = inlined_call_operand.vmem [shape: bf16[576,128], index: 1, kind: input, shape index: {}]
  %s2 = inlined_call_operand.<no memory space> [shape: f32[1], index: 2, kind: input, shape index: {}]
  %s3 = inlined_call_operand.vmem [shape: bf16[2,4,128], index: 3, kind: output, shape index: {}]
  %s4 = sld [smem:[#allocation0]]
  $region45: #{unet_monai_forward.12} parent=0
    _
  %s6 = ssub.s32 1, %s4
  %s7 = scalar_select 0, %s6, %s4
  %8 = sst [smem:[#allocation2]] %s2
  loop: start=0, step=1, limit=4
  $region2: #{unet_monai_forward.12} parent=0 // loop_pre_header
    _
  $region3: #{unet_monai_forward.12} parent=0 // loop_header
    %s10 = sphi 0, %s14
    %p11 = scmp.ge.s32.totalorder %s10, 4
    %s20 = sphi 0, %s22
    %s23 = sphi 0, %s20
    %s24 = sphi 0, %s23
    %s40 = sphi 0, %s24
    %s44 = sphi 0, %s44
    %s46 = sphi 0, %s44
    %s47 = sphi 0, %s46
    %s61 = sphi 0, %s47
    %s65 = sphi 0, %s65
    %s67 = sphi 0, %s65
    %s68 = sphi 0, %s67
    %s82 = sphi 0, %s68
    %s88 = sphi 0, %s90
    %s91 = sphi 0, %s88
    %s92 = sphi 0, %s91
    %s108 = sphi 0, %s92
  $region4: #{unet_monai_forward.12} parent=0 // loop_header_branch
    %13 = sbr.rel (%p11) target = $region8
  $region5: #{unet_monai_forward.12} parent=0 // loop_body
    %s15 = ssub.s32 %s10, 1
    %s16 = ssub.s32 %s10, 2
    %s17 = sadd.s32 %s10, 1
    %s18 = ssub.s32 %s10, %s17
    %p19 = scmp.eq.s32.totalorder %s18, 0
    %s21 = sadd.s32 %s20, 1
    %s22 = scalar_select %p19, %s20, %s21
    %p25 = pneg %p19
    %p26 = scmp.eq.s32.totalorder %s10, 1
    %p27 = por %p25, %p26
    %p28 = scmp.ne.s32.totalorder %s20, %s23
    %p29 = scmp.eq.s32.totalorder %s10, 0
    %p30 = por %p28, %p29
    %p31 = scmp.ne.s32.totalorder %s20, %s23
    %p32 = scmp.eq.s32.totalorder %s15, 1
    %p33 = por %p31, %p32
    %p34 = scmp.ne.s32.totalorder %s23, %s24
    %p35 = scmp.eq.s32.totalorder %s15, 0
    %p36 = por %p34, %p35
    %p37 = scmp.ne.s32.totalorder %s23, %s24
    %p38 = scmp.eq.s32.totalorder %s16, 1
    %p39 = por %p37, %p38
    %p41 = scmp.ne.s32.totalorder %s24, %s40
    %p42 = scmp.eq.s32.totalorder %s16, 0
    %p43 = por %p41, %p42
    %s45 = sadd.s32 %s44, 1
    %p48 = scmp.eq.s32.totalorder %s10, 1
    %p49 = scmp.ne.s32.totalorder %s44, %s46
    %p50 = scmp.eq.s32.totalorder %s10, 0
    %p51 = por %p49, %p50
    %p52 = scmp.ne.s32.totalorder %s44, %s46
    %p53 = scmp.eq.s32.totalorder %s15, 1
    %p54 = por %p52, %p53
    %p55 = scmp.ne.s32.totalorder %s46, %s47
    %p56 = scmp.eq.s32.totalorder %s15, 0
    %p57 = por %p55, %p56
    %p58 = scmp.ne.s32.totalorder %s46, %s47
    %p59 = scmp.eq.s32.totalorder %s16, 1
    %p60 = por %p58, %p59
    %p62 = scmp.ne.s32.totalorder %s47, %s61
    %p63 = scmp.eq.s32.totalorder %s16, 0
    %p64 = por %p62, %p63
    %s66 = sadd.s32 %s65, 1
    %p69 = scmp.eq.s32.totalorder %s10, 1
    %p70 = scmp.ne.s32.totalorder %s65, %s67
    %p71 = scmp.eq.s32.totalorder %s10, 0
    %p72 = por %p70, %p71
    %p73 = scmp.ne.s32.totalorder %s65, %s67
    %p74 = scmp.eq.s32.totalorder %s15, 1
    %p75 = por %p73, %p74
    %p76 = scmp.ne.s32.totalorder %s67, %s68
    %p77 = scmp.eq.s32.totalorder %s15, 0
    %p78 = por %p76, %p77
    %p79 = scmp.ne.s32.totalorder %s67, %s68
    %p80 = scmp.eq.s32.totalorder %s16, 1
    %p81 = por %p79, %p80
    %p83 = scmp.ne.s32.totalorder %s68, %s82
    %p84 = scmp.eq.s32.totalorder %s16, 0
    %p85 = por %p83, %p84
    %s86 = ssub.s32 %s10, %s17
    %p87 = scmp.eq.s32.totalorder %s86, 0
    %s89 = sadd.s32 %s88, 1
    %s90 = scalar_select %p87, %s88, %s89
    %p93 = pneg %p87
    %p94 = scmp.eq.s32.totalorder %s10, 1
    %p95 = por %p93, %p94
    %p96 = scmp.ne.s32.totalorder %s88, %s91
    %p97 = scmp.eq.s32.totalorder %s10, 0
    %p98 = por %p96, %p97
    %p99 = scmp.ne.s32.totalorder %s88, %s91
    %p100 = scmp.eq.s32.totalorder %s15, 1
    %p101 = por %p99, %p100
    %p102 = scmp.ne.s32.totalorder %s91, %s92
    %p103 = scmp.eq.s32.totalorder %s15, 0
    %p104 = por %p102, %p103
    %p105 = scmp.ne.s32.totalorder %s91, %s92
    %p106 = scmp.eq.s32.totalorder %s16, 1
    %p107 = por %p105, %p106
    %p109 = scmp.ne.s32.totalorder %s92, %s108
    %p110 = scmp.eq.s32.totalorder %s16, 0
    %p111 = por %p109, %p110
    %p112 = scmp.le.s32.totalorder 1, %s10
    %p113 = scmp.lt.s32.totalorder %s10, 3
    %p114 = pnand %p112, %p113
    %p115 = pneg %p114
    // Predicated region
    $region9: #{unet_monai_forward.12} parent=5 // pred_check
      _
    $region10: #{unet_monai_forward.12} parent=5 // pred_check_branch
      %117 = sbr.rel (%p114) target = $region12
    $region11: #{unet_monai_forward.12} parent=5 // pred_region
      %s118 = ssub.s32 %s10, 1
      // Predicated region
      $region13: #{unet_monai_forward.12} parent=11 // pred_check
        %p119 = pneg %p57
      $region14: #{unet_monai_forward.12} parent=11 // pred_check_branch
        %121 = sbr.rel (%p119) target = $region16
      $region15: #{unet_monai_forward.12} parent=11 // pred_region
        _
      $region16: #{unet_monai_forward.12} parent=11 // pred_fallthru
        _
      // Predicated region
      $region17: #{unet_monai_forward.12} parent=11 // pred_check
        %p122 = pneg %p78
      $region18: #{unet_monai_forward.12} parent=11 // pred_check_branch
        %124 = sbr.rel (%p122) target = $region20
      $region19: #{unet_monai_forward.12} parent=11 // pred_region
        _
      $region20: #{unet_monai_forward.12} parent=11 // pred_fallthru
        _
    $region12: #{unet_monai_forward.12} parent=5 // pred_fallthru
      _
    %p125 = scmp.lt.s32.totalorder %s10, 2
    // Predicated region
    $region21: #{unet_monai_forward.12} parent=5 // pred_check
      %p126 = pneg %p125
    $region22: #{unet_monai_forward.12} parent=5 // pred_check_branch
      %128 = sbr.rel (%p126) target = $region24
    $region23: #{unet_monai_forward.12} parent=5 // pred_region
      // Predicated region
      $region25: #{unet_monai_forward.12} parent=23 // pred_check
        %p129 = pneg %p30
      $region26: #{unet_monai_forward.12} parent=23 // pred_check_branch
        %131 = sbr.rel (%p129) target = $region28
      $region27: #{unet_monai_forward.12} parent=23 // pred_region
        %p132 = scmp.lt.s32.totalorder %s10, 1
        %s133 = scalar_select %p132, %s10, 1
        %s134 = smul.addr %s133, 5
        %s135 = smul.addr %s134, 2
        %s136 = scalar_lea.vmem %s0, %s135
      $region28: #{unet_monai_forward.12} parent=23 // pred_fallthru
        _
    $region24: #{unet_monai_forward.12} parent=5 // pred_fallthru
      _
    %p137 = scmp.le.s32.totalorder 1, %s10
    %p138 = scmp.lt.s32.totalorder %s10, 3
    %p139 = pnand %p137, %p138
    %p140 = pneg %p139
    // Predicated region
    $region29: #{unet_monai_forward.12} parent=5 // pred_check
      _
    $region30: #{unet_monai_forward.12} parent=5 // pred_check_branch
      %142 = sbr.rel (%p139) target = $region32
    $region31: #{unet_monai_forward.12} parent=5 // pred_region
      %s143 = ssub.s32 %s10, 1
      %p144 = scmp.lt.s32.totalorder %s15, 1
      %s145 = scalar_select %p144, %s15, 1
      %s146 = smul.addr %s145, 5
      %s147 = smul.addr %s146, 2
      %s148 = scalar_lea.vmem %s0, %s147
      %p149 = pneg %p36
      %p150 = pneg %p33
      %p151 = pneg %p57
      %p152 = pneg %p54
      %p153 = pneg %p78
      %p154 = pneg %p75
      %p155 = pneg %p104
      %p156 = pneg %p101
      %p157 = scmp.lt.s32.totalorder %s15, 1
      %s158 = scalar_select %p157, %s15, 1
      %s159 = smul.addr %s158, 2
      %s160 = scalar_lea.vmem %s3, %s159
      %p161 = scmp.lt.s32.totalorder %s15, 1
      %s162 = scalar_select %p161, %s15, 1
      %s163 = smul.addr %s162, 5
      %s164 = smul.addr %s163, 2
      %s165 = scalar_lea.vmem %s0, %s164
      %p166 = scmp.lt.s32.totalorder %s15, 1
      %s167 = scalar_select %p166, %s15, 1
      %s168 = smul.addr %s167, 2
      %s169 = scalar_lea.vmem %s3, %s168
      %v171 = vld [vmem:[%s165] sm:$0xff]
      %v172 = vld [vmem:[%s165 + $0x8] sm:$0x3]
      %v173 = vld [vmem:[%s1] sm:$0xf]
      %v174 = vld [vmem:[%s1 + $0x4] sm:$0xf]
      %v175 = vld [vmem:[%s1 + $0x8] sm:$0xf]
      %v176 = vld [vmem:[%s1 + $0xc] sm:$0xf]
      %v177 = vld [vmem:[%s1 + $0x10] sm:$0xf]
      %v178 = vld [vmem:[%s1 + $0x14] sm:$0xf]
      %v179 = vld [vmem:[%s1 + $0x18] sm:$0xf]
      %v180 = vld [vmem:[%s1 + $0x1c] sm:$0xf]
      %v181 = vld [vmem:[%s1 + $0x20] sm:$0xf]
      %v182 = vld [vmem:[%s1 + $0x24] sm:$0xf]
      %v183 = vld [vmem:[%s1 + $0x28] sm:$0xf]
      %v184 = vld [vmem:[%s1 + $0x2c] sm:$0xf]
      %v185 = vld [vmem:[%s1 + $0x30] sm:$0xf]
      %v186 = vld [vmem:[%s1 + $0x34] sm:$0xf]
      %v187 = vld [vmem:[%s1 + $0x38] sm:$0xf]
      %v188 = vld [vmem:[%s1 + $0x3c] sm:$0xf]
      %v189 = vld [vmem:[%s1 + $0x40] sm:$0xf]
      %v190 = vld [vmem:[%s1 + $0x44] sm:$0xf]
      %v191 = vld [vmem:[%s1 + $0x48] sm:$0xf]
      %v192 = vld [vmem:[%s1 + $0x4c] sm:$0xf]
      %v193 = vld [vmem:[%s1 + $0x50] sm:$0xf]
      %v194 = vld [vmem:[%s1 + $0x54] sm:$0xf]
      %v195 = vld [vmem:[%s1 + $0x58] sm:$0xf]
      %v196 = vld [vmem:[%s1 + $0x5c] sm:$0xf]
      %v197 = vld [vmem:[%s1 + $0x60] sm:$0xf]
      %v198 = vld [vmem:[%s1 + $0x64] sm:$0xf]
      %v199 = vld [vmem:[%s1 + $0x68] sm:$0xf]
      %v200 = vld [vmem:[%s1 + $0x6c] sm:$0xf]
      %v201 = vld [vmem:[%s1 + $0x70] sm:$0xf]
      %v202 = vld [vmem:[%s1 + $0x74] sm:$0xf]
      %v203 = vld [vmem:[%s1 + $0x78] sm:$0xf]
      %v204 = vld [vmem:[%s1 + $0x7c] sm:$0xf]
      %v205 = vld [vmem:[%s1 + $0x80] sm:$0xf]
      %v206 = vld [vmem:[%s1 + $0x84] sm:$0xf]
      %v207 = vld [vmem:[%s1 + $0x88] sm:$0xf]
      %v208 = vld [vmem:[%s1 + $0x8c] sm:$0xf]
      %v209 = vld [vmem:[%s1 + $0x90] sm:$0xf]
      %v210 = vld [vmem:[%s1 + $0x94] sm:$0xf]
      %v211 = vld [vmem:[%s1 + $0x98] sm:$0xf]
      %v212 = vld [vmem:[%s1 + $0x9c] sm:$0xf]
      %v213 = vld [vmem:[%s1 + $0xa0] sm:$0xf]
      %v214 = vld [vmem:[%s1 + $0xa4] sm:$0xf]
      %v215 = vld [vmem:[%s1 + $0xa8] sm:$0xf]
      %v216 = vld [vmem:[%s1 + $0xac] sm:$0xf]
      %v217 = vld [vmem:[%s1 + $0xb0] sm:$0xf]
      %v218 = vld [vmem:[%s1 + $0xb4] sm:$0xf]
      %v219 = vld [vmem:[%s1 + $0xb8] sm:$0xf]
      %v220 = vld [vmem:[%s1 + $0xbc] sm:$0xf]
      %v221 = vld [vmem:[%s1 + $0xc0] sm:$0xf]
      %v222 = vld [vmem:[%s1 + $0xc4] sm:$0xf]
      %v223 = vld [vmem:[%s1 + $0xc8] sm:$0xf]
      %v224 = vld [vmem:[%s1 + $0xcc] sm:$0xf]
      %v225 = vld [vmem:[%s1 + $0xd0] sm:$0xf]
      %v226 = vld [vmem:[%s1 + $0xd4] sm:$0xf]
      %v227 = vld [vmem:[%s1 + $0xd8] sm:$0xf]
      %v228 = vld [vmem:[%s1 + $0xdc] sm:$0xf]
      %v229 = vld [vmem:[%s1 + $0xe0] sm:$0xf]
      %v230 = vld [vmem:[%s1 + $0xe4] sm:$0xf]
      %v231 = vld [vmem:[%s1 + $0xe8] sm:$0xf]
      %v232 = vld [vmem:[%s1 + $0xec] sm:$0xf]
      %v233 = vld [vmem:[%s1 + $0xf0] sm:$0xf]
      %v234 = vld [vmem:[%s1 + $0xf4] sm:$0xf]
      %v235 = vld [vmem:[%s1 + $0xf8] sm:$0xf]
      %v236 = vld [vmem:[%s1 + $0xfc] sm:$0xf]
      %v237 = vld [vmem:[%s1 + $0x100] sm:$0xf]
      %v238 = vld [vmem:[%s1 + $0x104] sm:$0xf]
      %v239 = vld [vmem:[%s1 + $0x108] sm:$0xf]
      %v240 = vld [vmem:[%s1 + $0x10c] sm:$0xf]
      %v241 = vld [vmem:[%s1 + $0x110] sm:$0xf]
      %v242 = vld [vmem:[%s1 + $0x114] sm:$0xf]
      %v243 = vld [vmem:[%s1 + $0x118] sm:$0xf]
      %v244 = vld [vmem:[%s1 + $0x11c] sm:$0xf]
      %v247 = vcombine.high %v171, %v171
      %v249 = vunpack.c.l.s4 1983009808
      %v250 = vunpack.c.0.s8 %v249
      %v251 = vlaneseq
      %v252 = vshrl.u32 %v251, 7
      %v253 = vsub.s32 %v250, %v252
      %v254 = vrot.slane %v171, %v253
      %v256 = vunpack.c.l.s4 1983009808
      %v257 = vunpack.c.0.s8 %v256
      %v258 = vlaneseq
      %v259 = vshrl.u32 %v258, 7
      %v260 = vsub.s32 %v257, %v259
      %v261 = vrot.slane %v247, %v260
      %v262 = vcombine.high %v254, %v254
      %v263 = vcombine.high %v261, %v261
      %v265 = vunpack.c.l.s4 1983009808
      %v266 = vunpack.c.0.s8 %v265
      %v267 = vlaneseq
      %v268 = vshrl.u32 %v267, 7
      %v269 = vsub.s32 %v266, %v268
      %v270 = vrot.slane %v172, %v269
      %v347 = vunpack.c.l.b16 %v173
      %v348 = vunpack.c.l.b16 %v174
      %v349 = vunpack.c.l.b16 %v175
      %v350 = vunpack.c.l.b16 %v176
      %v351 = vunpack.c.l.b16 %v177
      %v352 = vunpack.c.l.b16 %v178
      %v353 = vunpack.c.l.b16 %v179
      %v354 = vunpack.c.l.b16 %v180
      %v355 = vunpack.c.l.b16 %v181
      %v356 = vunpack.c.l.b16 %v182
      %v357 = vunpack.c.l.b16 %v183
      %v358 = vunpack.c.l.b16 %v184
      %v359 = vunpack.c.l.b16 %v185
      %v360 = vunpack.c.l.b16 %v186
      %v361 = vunpack.c.l.b16 %v187
      %v362 = vunpack.c.l.b16 %v188
      %v363 = vunpack.c.l.b16 %v189
      %v364 = vunpack.c.l.b16 %v190
      %v365 = vunpack.c.l.b16 %v191
      %v366 = vunpack.c.l.b16 %v192
      %v367 = vunpack.c.l.b16 %v193
      %v368 = vunpack.c.l.b16 %v194
      %v369 = vunpack.c.l.b16 %v195
      %v370 = vunpack.c.l.b16 %v196
      %v371 = vunpack.c.l.b16 %v197
      %v372 = vunpack.c.l.b16 %v198
      %v373 = vunpack.c.l.b16 %v199
      %v374 = vunpack.c.l.b16 %v200
      %v375 = vunpack.c.l.b16 %v201
      %v376 = vunpack.c.l.b16 %v202
      %v377 = vunpack.c.l.b16 %v203
      %v378 = vunpack.c.l.b16 %v204
      %v379 = vunpack.c.l.b16 %v205
      %v380 = vunpack.c.l.b16 %v206
      %v381 = vunpack.c.l.b16 %v207
      %v382 = vunpack.c.l.b16 %v208
      %v383 = vunpack.c.l.b16 %v209
      %v384 = vunpack.c.l.b16 %v210
      %v385 = vunpack.c.l.b16 %v211
      %v386 = vunpack.c.l.b16 %v212
      %v387 = vunpack.c.l.b16 %v213
      %v388 = vunpack.c.l.b16 %v214
      %v389 = vunpack.c.l.b16 %v215
      %v390 = vunpack.c.l.b16 %v216
      %v391 = vunpack.c.l.b16 %v217
      %v392 = vunpack.c.l.b16 %v218
      %v393 = vunpack.c.l.b16 %v219
      %v394 = vunpack.c.l.b16 %v220
      %v395 = vunpack.c.l.b16 %v221
      %v396 = vunpack.c.l.b16 %v222
      %v397 = vunpack.c.l.b16 %v223
      %v398 = vunpack.c.l.b16 %v224
      %v399 = vunpack.c.l.b16 %v225
      %v400 = vunpack.c.l.b16 %v226
      %v401 = vunpack.c.l.b16 %v227
      %v402 = vunpack.c.l.b16 %v228
      %v403 = vunpack.c.l.b16 %v229
      %v404 = vunpack.c.l.b16 %v230
      %v405 = vunpack.c.l.b16 %v231
      %v406 = vunpack.c.l.b16 %v232
      %v407 = vunpack.c.l.b16 %v233
      %v408 = vunpack.c.l.b16 %v234
      %v409 = vunpack.c.l.b16 %v235
      %v410 = vunpack.c.l.b16 %v236
      %v411 = vunpack.c.l.b16 %v237
      %v412 = vunpack.c.l.b16 %v238
      %v413 = vunpack.c.l.b16 %v239
      %v414 = vunpack.c.l.b16 %v240
      %v415 = vunpack.c.l.b16 %v241
      %v416 = vunpack.c.l.b16 %v242
      %v417 = vunpack.c.l.b16 %v243
      %v418 = vunpack.c.l.b16 %v244
      %v419 = vpack.c.b16 %v348, %v347
      %v420 = vpack.c.b16 %v350, %v349
      %v421 = vpack.c.b16 %v352, %v351
      %v422 = vpack.c.b16 %v354, %v353
      %v423 = vpack.c.b16 %v356, %v355
      %v424 = vpack.c.b16 %v358, %v357
      %v425 = vpack.c.b16 %v360, %v359
      %v426 = vpack.c.b16 %v362, %v361
      %v427 = vpack.c.b16 %v364, %v363
      %v428 = vpack.c.b16 %v366, %v365
      %v429 = vpack.c.b16 %v368, %v367
      %v430 = vpack.c.b16 %v370, %v369
      %v431 = vpack.c.b16 %v372, %v371
      %v432 = vpack.c.b16 %v374, %v373
      %v433 = vpack.c.b16 %v376, %v375
      %v434 = vpack.c.b16 %v378, %v377
      %v435 = vpack.c.b16 %v380, %v379
      %v436 = vpack.c.b16 %v382, %v381
      %v437 = vpack.c.b16 %v384, %v383
      %v438 = vpack.c.b16 %v386, %v385
      %v439 = vpack.c.b16 %v388, %v387
      %v440 = vpack.c.b16 %v390, %v389
      %v441 = vpack.c.b16 %v392, %v391
      %v442 = vpack.c.b16 %v394, %v393
      %v443 = vpack.c.b16 %v396, %v395
      %v444 = vpack.c.b16 %v398, %v397
      %v445 = vpack.c.b16 %v400, %v399
      %v446 = vpack.c.b16 %v402, %v401
      %v447 = vpack.c.b16 %v404, %v403
      %v448 = vpack.c.b16 %v406, %v405
      %v449 = vpack.c.b16 %v408, %v407
      %v450 = vpack.c.b16 %v410, %v409
      %v451 = vpack.c.b16 %v412, %v411
      %v452 = vpack.c.b16 %v414, %v413
      %v453 = vpack.c.b16 %v416, %v415
      %v454 = vpack.c.b16 %v418, %v417
      %vm491 = vcmask 523264
      %v493 = vsel %vm491, %v270, 0
      %495 = vmatprep.subr.bf16.mxu0 0
      %496 = vmatpush1.bf16.msra.mxu0 %v426
      %497 = vmatprep.subr.bf16.mxu0 0
      %498 = vmatpush1.bf16.msra.mxu0 %v425
      %499 = vmatprep.subr.bf16.mxu0 0
      %500 = vmatpush1.bf16.msra.mxu0 %v424
      %501 = vmatprep.subr.bf16.mxu0 0
      %502 = vmatpush1.bf16.msra.mxu0 %v423
      %503 = vmatprep.subr.bf16.mxu0 0
      %504 = vmatpush1.bf16.msra.mxu0 %v422
      %505 = vmatprep.subr.bf16.mxu0 0
      %506 = vmatpush1.bf16.msra.mxu0 %v421
      %507 = vmatprep.subr.bf16.mxu0 0
      %508 = vmatpush1.bf16.msra.mxu0 %v420
      %509 = vmatprep.subr.bf16.mxu0 0
      %510 = vmatpush1.bf16.msra.mxu0 %v419
      %511 = vmatprep.subr.bf16.mxu0 0
      %512 = vmatpush2.bf16.msra.mxu0 %v434
      %513 = vmatprep.subr.bf16.mxu0 0
      %514 = vmatpush2.bf16.msra.mxu0 %v433
      %515 = vmatprep.subr.bf16.mxu0 0
      %516 = vmatpush2.bf16.msra.mxu0 %v432
      %517 = vmatprep.subr.bf16.mxu0 0
      %518 = vmatpush2.bf16.msra.mxu0 %v431
      %519 = vmatprep.subr.bf16.mxu0 0
      %520 = vmatpush2.bf16.msra.mxu0 %v430
      %521 = vmatprep.subr.bf16.mxu0 0
      %522 = vmatpush2.bf16.msra.mxu0 %v429
      %523 = vmatprep.subr.bf16.mxu0 0
      %524 = vmatpush2.bf16.msra.mxu0 %v428
      %525 = vmatprep.subr.bf16.mxu0 0
      %526 = vmatpush2.bf16.msra.mxu0 %v427
      %527 = vmatprep.mubr.bf16.mxu0 %v262
      %528 = vmatmul.mubr.bf16.gmra.mxu0 %v254
      %v529 = vpop.f32.mrf.mxu0
      %v530 = vadd.f32 0.0, %v529
      %v531 = vpop.f32.mrf.mxu0
      %v532 = vpop.f32.mrf.mxu0
      %v533 = vpop.f32.mrf.mxu0
      %534 = vdwg.mxu0
      %535 = vmatprep.subr.bf16.mxu0 0
      %536 = vmatpush1.bf16.msra.mxu0 %v442
      %537 = vmatprep.subr.bf16.mxu0 0
      %538 = vmatpush1.bf16.msra.mxu0 %v441
      %539 = vmatprep.subr.bf16.mxu0 0
      %540 = vmatpush1.bf16.msra.mxu0 %v440
      %541 = vmatprep.subr.bf16.mxu0 0
      %542 = vmatpush1.bf16.msra.mxu0 %v439
      %543 = vmatprep.subr.bf16.mxu0 0
      %544 = vmatpush1.bf16.msra.mxu0 %v438
      %545 = vmatprep.subr.bf16.mxu0 0
      %546 = vmatpush1.bf16.msra.mxu0 %v437
      %547 = vmatprep.subr.bf16.mxu0 0
      %548 = vmatpush1.bf16.msra.mxu0 %v436
      %549 = vmatprep.subr.bf16.mxu0 0
      %550 = vmatpush1.bf16.msra.mxu0 %v435
      %551 = vmatprep.subr.bf16.mxu0 0
      %552 = vmatpush2.bf16.msra.mxu0 %v450
      %553 = vmatprep.subr.bf16.mxu0 0
      %554 = vmatpush2.bf16.msra.mxu0 %v449
      %555 = vmatprep.subr.bf16.mxu0 0
      %556 = vmatpush2.bf16.msra.mxu0 %v448
      %557 = vmatprep.subr.bf16.mxu0 0
      %558 = vmatpush2.bf16.msra.mxu0 %v447
      %559 = vmatprep.subr.bf16.mxu0 0
      %560 = vmatpush2.bf16.msra.mxu0 %v446
      %561 = vmatprep.subr.bf16.mxu0 0
      %562 = vmatpush2.bf16.msra.mxu0 %v445
      %563 = vmatprep.subr.bf16.mxu0 0
      %564 = vmatpush2.bf16.msra.mxu0 %v444
      %565 = vmatprep.subr.bf16.mxu0 0
      %566 = vmatpush2.bf16.msra.mxu0 %v443
      %567 = vmatprep.mubr.bf16.mxu0 %v263
      %568 = vmatmul.mubr.bf16.gmra.mxu0 %v261
      %v569 = vpop.f32.mrf.mxu0
      %v570 = vadd.f32 %v530, %v569
      %v571 = vpop.f32.mrf.mxu0
      %v572 = vpop.f32.mrf.mxu0
      %v573 = vpop.f32.mrf.mxu0
      %574 = vdwg.mxu0
      %575 = vmatprep.subr.bf16.mxu0 0
      %576 = vmatpush1.bf16.msra.mxu0 0
      %577 = vmatprep.subr.bf16.mxu0 0
      %578 = vmatpush1.bf16.msra.mxu0 0
      %579 = vmatprep.subr.bf16.mxu0 0
      %580 = vmatpush1.bf16.msra.mxu0 0
      %581 = vmatprep.subr.bf16.mxu0 0
      %582 = vmatpush1.bf16.msra.mxu0 0
      %583 = vmatprep.subr.bf16.mxu0 0
      %584 = vmatpush1.bf16.msra.mxu0 %v454
      %585 = vmatprep.subr.bf16.mxu0 0
      %586 = vmatpush1.bf16.msra.mxu0 %v453
      %587 = vmatprep.subr.bf16.mxu0 0
      %588 = vmatpush1.bf16.msra.mxu0 %v452
      %589 = vmatprep.subr.bf16.mxu0 0
      %590 = vmatpush1.bf16.msra.mxu0 %v451
      %591 = vmatprep.subr.bf16.mxu0 0
      %592 = vmatpush2.bf16.msra.mxu0 0
      %593 = vmatprep.subr.bf16.mxu0 0
      %594 = vmatpush2.bf16.msra.mxu0 0
      %595 = vmatprep.subr.bf16.mxu0 0
      %596 = vmatpush2.bf16.msra.mxu0 0
      %597 = vmatprep.subr.bf16.mxu0 0
      %598 = vmatpush2.bf16.msra.mxu0 0
      %599 = vmatprep.subr.bf16.mxu0 0
      %600 = vmatpush2.bf16.msra.mxu0 0
      %601 = vmatprep.subr.bf16.mxu0 0
      %602 = vmatpush2.bf16.msra.mxu0 0
      %603 = vmatprep.subr.bf16.mxu0 0
      %604 = vmatpush2.bf16.msra.mxu0 0
      %605 = vmatprep.subr.bf16.mxu0 0
      %606 = vmatpush2.bf16.msra.mxu0 0
      %607 = vmatprep.mubr.bf16.mxu0 0
      %608 = vmatmul.mubr.bf16.gmra.mxu0 %v493
      %v609 = vpop.f32.mrf.mxu0
      %v610 = vadd.f32 %v570, %v609
      %v611 = vpop.f32.mrf.mxu0
      %v612 = vpop.f32.mrf.mxu0
      %v613 = vpop.f32.mrf.mxu0
      %614 = vdwg.mxu0
      %vm615 = vcmask 1043456
      %v616 = vsel %vm615, %v610, 0.0
      %v617 = vrot.slane %v616, 4
      %v618 = vadd.f32 %v616, %v617
      %v619 = vrot.slane %v618, 2
      %v620 = vadd.f32 %v618, %v619
      %v621 = vrot.slane %v620, 1
      %v622 = vadd.f32 %v620, %v621
      %v623 = vmul.f32 %v622, 0.25
      %v624 = vsub.f32 %v610, %v623
      %v625 = vmul.f32 %v624, %v624
      %v626 = vsel %vm615, %v625, 0.0
      %v627 = vrot.slane %v626, 4
      %v628 = vadd.f32 %v626, %v627
      %v629 = vrot.slane %v628, 2
      %v630 = vadd.f32 %v628, %v629
      %v631 = vrot.slane %v630, 1
      %v632 = vadd.f32 %v630, %v631
      %v633 = vmul.f32 %v632, 0.25
      %v634 = vadd.f32 %v633, 1e-05
      %v635 = vrsqrt.pop %v634
      %v636 = vmul.f32 %v624, %v635
      %s637 = sld [smem:[#allocation2]]
      %vm638 = vcmp.ge.f32.partialorder %v636, 0.0
      %v639 = vstv %s637
      %v640 = vmul.f32 %v636, %v639
      %v641 = vsel %vm638, %v636, %v640
      %v642 = vpack.c.bf16 %v641, %v641
      %643 = vst [vmem:[%s169] sm:$0x3] %v642
      %p644 = scmp.lt.s32.totalorder %s15, 1
      %s645 = scalar_select %p644, %s15, 1
      %s646 = smul.addr %s645, 2
      %s647 = scalar_lea.vmem %s3, %s646
      // Predicated region
      $region33: #{unet_monai_forward.12} parent=31 // pred_check
        %p648 = pneg %p101
      $region34: #{unet_monai_forward.12} parent=31 // pred_check_branch
        %650 = sbr.rel (%p648) target = $region36
      $region35: #{unet_monai_forward.12} parent=31 // pred_region
        _
      $region36: #{unet_monai_forward.12} parent=31 // pred_fallthru
        _
    $region32: #{unet_monai_forward.12} parent=5 // pred_fallthru
      _
    %p651 = scmp.le.s32.totalorder 2, %s10
    // Predicated region
    $region37: #{unet_monai_forward.12} parent=5 // pred_check
      %p652 = pneg %p651
    $region38: #{unet_monai_forward.12} parent=5 // pred_check_branch
      %654 = sbr.rel (%p652) target = $region40
    $region39: #{unet_monai_forward.12} parent=5 // pred_region
      %s655 = ssub.s32 %s10, 2
      // Predicated region
      $region41: #{unet_monai_forward.12} parent=39 // pred_check
        %p656 = pneg %p107
      $region42: #{unet_monai_forward.12} parent=39 // pred_check_branch
        %658 = sbr.rel (%p656) target = $region44
      $region43: #{unet_monai_forward.12} parent=39 // pred_region
        %p659 = scmp.lt.s32.totalorder %s16, 1
        %s660 = scalar_select %p659, %s16, 1
        %s661 = smul.addr %s660, 2
        %s662 = scalar_lea.vmem %s3, %s661
      $region44: #{unet_monai_forward.12} parent=39 // pred_fallthru
        _
    $region40: #{unet_monai_forward.12} parent=5 // pred_fallthru
      _
  $region6: #{unet_monai_forward.12} parent=0 // loop_footer
    %s14 = sadd.s32 1, %s10
  $region7: #{unet_monai_forward.12} parent=0 // loop_footer_branch
    %9 = sbr.rel target = $region3
  $region8: #{unet_monai_forward.12} parent=0 // loop_exit
    _

// kernel: unet_monai_forward.13
$region0: #{unet_monai_forward.13}
  #allocation0 [shape = 'u32[]', space=smem, size = 0x4, offset = 0x4, fixed_abs, tag = 'smem constant byte address 0x4 - core index']
  #allocation1 [shape = 'u32[144,128]{1,0:T(1,128)}', space=vmem, size = 0x12000, scoped, tag = 'internal scratch']
  #allocation2 [shape = 'f32[1]{0:T(128)S(6)}', space=smem, size = 0x200, scoped, tag = 'scoped memory for unet_monai_forward.13']
  %s0 = inlined_call_operand.vmem [shape: bf16[2,4,1152], index: 0, kind: input, shape index: {}]
  %s1 = inlined_call_operand.vmem [shape: bf16[1152,256], index: 1, kind: input, shape index: {}]
  %s2 = inlined_call_operand.<no memory space> [shape: f32[1], index: 2, kind: input, shape index: {}]
  %s3 = inlined_call_operand.vmem [shape: bf16[2,4,256], index: 3, kind: output, shape index: {}]
  %s4 = sld [smem:[#allocation0]]
  $region45: #{unet_monai_forward.13} parent=0
    _
  %s6 = ssub.s32 1, %s4
  %s7 = scalar_select 0, %s6, %s4
  %8 = sst [smem:[#allocation2]] %s2
  loop: start=0, step=1, limit=4
  $region2: #{unet_monai_forward.13} parent=0 // loop_pre_header
    _
  $region3: #{unet_monai_forward.13} parent=0 // loop_header
    %s10 = sphi 0, %s14
    %p11 = scmp.ge.s32.totalorder %s10, 4
    %s20 = sphi 0, %s22
    %s23 = sphi 0, %s20
    %s24 = sphi 0, %s23
    %s40 = sphi 0, %s24
    %s44 = sphi 0, %s44
    %s46 = sphi 0, %s44
    %s47 = sphi 0, %s46
    %s61 = sphi 0, %s47
    %s65 = sphi 0, %s65
    %s67 = sphi 0, %s65
    %s68 = sphi 0, %s67
    %s82 = sphi 0, %s68
    %s88 = sphi 0, %s90
    %s91 = sphi 0, %s88
    %s92 = sphi 0, %s91
    %s108 = sphi 0, %s92
  $region4: #{unet_monai_forward.13} parent=0 // loop_header_branch
    %13 = sbr.rel (%p11) target = $region8
  $region5: #{unet_monai_forward.13} parent=0 // loop_body
    %s15 = ssub.s32 %s10, 1
    %s16 = ssub.s32 %s10, 2
    %s17 = sadd.s32 %s10, 1
    %s18 = ssub.s32 %s10, %s17
    %p19 = scmp.eq.s32.totalorder %s18, 0
    %s21 = sadd.s32 %s20, 1
    %s22 = scalar_select %p19, %s20, %s21
    %p25 = pneg %p19
    %p26 = scmp.eq.s32.totalorder %s10, 1
    %p27 = por %p25, %p26
    %p28 = scmp.ne.s32.totalorder %s20, %s23
    %p29 = scmp.eq.s32.totalorder %s10, 0
    %p30 = por %p28, %p29
    %p31 = scmp.ne.s32.totalorder %s20, %s23
    %p32 = scmp.eq.s32.totalorder %s15, 1
    %p33 = por %p31, %p32
    %p34 = scmp.ne.s32.totalorder %s23, %s24
    %p35 = scmp.eq.s32.totalorder %s15, 0
    %p36 = por %p34, %p35
    %p37 = scmp.ne.s32.totalorder %s23, %s24
    %p38 = scmp.eq.s32.totalorder %s16, 1
    %p39 = por %p37, %p38
    %p41 = scmp.ne.s32.totalorder %s24, %s40
    %p42 = scmp.eq.s32.totalorder %s16, 0
    %p43 = por %p41, %p42
    %s45 = sadd.s32 %s44, 1
    %p48 = scmp.eq.s32.totalorder %s10, 1
    %p49 = scmp.ne.s32.totalorder %s44, %s46
    %p50 = scmp.eq.s32.totalorder %s10, 0
    %p51 = por %p49, %p50
    %p52 = scmp.ne.s32.totalorder %s44, %s46
    %p53 = scmp.eq.s32.totalorder %s15, 1
    %p54 = por %p52, %p53
    %p55 = scmp.ne.s32.totalorder %s46, %s47
    %p56 = scmp.eq.s32.totalorder %s15, 0
    %p57 = por %p55, %p56
    %p58 = scmp.ne.s32.totalorder %s46, %s47
    %p59 = scmp.eq.s32.totalorder %s16, 1
    %p60 = por %p58, %p59
    %p62 = scmp.ne.s32.totalorder %s47, %s61
    %p63 = scmp.eq.s32.totalorder %s16, 0
    %p64 = por %p62, %p63
    %s66 = sadd.s32 %s65, 1
    %p69 = scmp.eq.s32.totalorder %s10, 1
    %p70 = scmp.ne.s32.totalorder %s65, %s67
    %p71 = scmp.eq.s32.totalorder %s10, 0
    %p72 = por %p70, %p71
    %p73 = scmp.ne.s32.totalorder %s65, %s67
    %p74 = scmp.eq.s32.totalorder %s15, 1
    %p75 = por %p73, %p74
    %p76 = scmp.ne.s32.totalorder %s67, %s68
    %p77 = scmp.eq.s32.totalorder %s15, 0
    %p78 = por %p76, %p77
    %p79 = scmp.ne.s32.totalorder %s67, %s68
    %p80 = scmp.eq.s32.totalorder %s16, 1
    %p81 = por %p79, %p80
    %p83 = scmp.ne.s32.totalorder %s68, %s82
    %p84 = scmp.eq.s32.totalorder %s16, 0
    %p85 = por %p83, %p84
    %s86 = ssub.s32 %s10, %s17
    %p87 = scmp.eq.s32.totalorder %s86, 0
    %s89 = sadd.s32 %s88, 1
    %s90 = scalar_select %p87, %s88, %s89
    %p93 = pneg %p87
    %p94 = scmp.eq.s32.totalorder %s10, 1
    %p95 = por %p93, %p94
    %p96 = scmp.ne.s32.totalorder %s88, %s91
    %p97 = scmp.eq.s32.totalorder %s10, 0
    %p98 = por %p96, %p97
    %p99 = scmp.ne.s32.totalorder %s88, %s91
    %p100 = scmp.eq.s32.totalorder %s15, 1
    %p101 = por %p99, %p100
    %p102 = scmp.ne.s32.totalorder %s91, %s92
    %p103 = scmp.eq.s32.totalorder %s15, 0
    %p104 = por %p102, %p103
    %p105 = scmp.ne.s32.totalorder %s91, %s92
    %p106 = scmp.eq.s32.totalorder %s16, 1
    %p107 = por %p105, %p106
    %p109 = scmp.ne.s32.totalorder %s92, %s108
    %p110 = scmp.eq.s32.totalorder %s16, 0
    %p111 = por %p109, %p110
    %p112 = scmp.le.s32.totalorder 1, %s10
    %p113 = scmp.lt.s32.totalorder %s10, 3
    %p114 = pnand %p112, %p113
    %p115 = pneg %p114
    // Predicated region
    $region9: #{unet_monai_forward.13} parent=5 // pred_check
      _
    $region10: #{unet_monai_forward.13} parent=5 // pred_check_branch
      %117 = sbr.rel (%p114) target = $region12
    $region11: #{unet_monai_forward.13} parent=5 // pred_region
      %s118 = ssub.s32 %s10, 1
      // Predicated region
      $region13: #{unet_monai_forward.13} parent=11 // pred_check
        %p119 = pneg %p57
      $region14: #{unet_monai_forward.13} parent=11 // pred_check_branch
        %121 = sbr.rel (%p119) target = $region16
      $region15: #{unet_monai_forward.13} parent=11 // pred_region
        _
      $region16: #{unet_monai_forward.13} parent=11 // pred_fallthru
        _
      // Predicated region
      $region17: #{unet_monai_forward.13} parent=11 // pred_check
        %p122 = pneg %p78
      $region18: #{unet_monai_forward.13} parent=11 // pred_check_branch
        %124 = sbr.rel (%p122) target = $region20
      $region19: #{unet_monai_forward.13} parent=11 // pred_region
        _
      $region20: #{unet_monai_forward.13} parent=11 // pred_fallthru
        _
    $region12: #{unet_monai_forward.13} parent=5 // pred_fallthru
      _
    %p125 = scmp.lt.s32.totalorder %s10, 2
    // Predicated region
    $region21: #{unet_monai_forward.13} parent=5 // pred_check
      %p126 = pneg %p125
    $region22: #{unet_monai_forward.13} parent=5 // pred_check_branch
      %128 = sbr.rel (%p126) target = $region24
    $region23: #{unet_monai_forward.13} parent=5 // pred_region
      // Predicated region
      $region25: #{unet_monai_forward.13} parent=23 // pred_check
        %p129 = pneg %p30
      $region26: #{unet_monai_forward.13} parent=23 // pred_check_branch
        %131 = sbr.rel (%p129) target = $region28
      $region27: #{unet_monai_forward.13} parent=23 // pred_region
        %p132 = scmp.lt.s32.totalorder %s10, 1
        %s133 = scalar_select %p132, %s10, 1
        %s134 = smul.addr %s133, 9
        %s135 = smul.addr %s134, 2
        %s136 = scalar_lea.vmem %s0, %s135
      $region28: #{unet_monai_forward.13} parent=23 // pred_fallthru
        _
    $region24: #{unet_monai_forward.13} parent=5 // pred_fallthru
      _
    %p137 = scmp.le.s32.totalorder 1, %s10
    %p138 = scmp.lt.s32.totalorder %s10, 3
    %p139 = pnand %p137, %p138
    %p140 = pneg %p139
    // Predicated region
    $region29: #{unet_monai_forward.13} parent=5 // pred_check
      _
    $region30: #{unet_monai_forward.13} parent=5 // pred_check_branch
      %142 = sbr.rel (%p139) target = $region32
    $region31: #{unet_monai_forward.13} parent=5 // pred_region
      %s143 = ssub.s32 %s10, 1
      %p144 = scmp.lt.s32.totalorder %s15, 1
      %s145 = scalar_select %p144, %s15, 1
      %s146 = smul.addr %s145, 9
      %s147 = smul.addr %s146, 2
      %s148 = scalar_lea.vmem %s0, %s147
      %p149 = pneg %p36
      %p150 = pneg %p33
      %p151 = pneg %p57
      %p152 = pneg %p54
      %p153 = pneg %p78
      %p154 = pneg %p75
      %p155 = pneg %p104
      %p156 = pneg %p101
      %p157 = scmp.lt.s32.totalorder %s15, 1
      %s158 = scalar_select %p157, %s15, 1
      %s159 = smul.addr %s158, 2
      %s160 = smul.addr %s159, 2
      %s161 = scalar_lea.vmem %s3, %s160
      %p162 = scmp.lt.s32.totalorder %s15, 1
      %s163 = scalar_select %p162, %s15, 1
      %s164 = smul.addr %s163, 9
      %s165 = smul.addr %s164, 2
      %s166 = scalar_lea.vmem %s0, %s165
      %p167 = scmp.lt.s32.totalorder %s15, 1
      %s168 = scalar_select %p167, %s15, 1
      %s169 = smul.addr %s168, 2
      %s170 = smul.addr %s169, 2
      %s171 = scalar_lea.vmem %s3, %s170
      %v173 = vld [vmem:[%s166] sm:$0xff]
      %v174 = vld [vmem:[%s166 + $0x8] sm:$0xff]
      %v175 = vld [vmem:[%s166 + $0x10] sm:$0x3]
      %v176 = vld [vmem:[%s1] sm:$0xff]
      %v177 = vld [vmem:[%s1 + $0x8] sm:$0xff]
      %v178 = vld [vmem:[%s1 + $0x10] sm:$0xff]
      %v179 = vld [vmem:[%s1 + $0x18] sm:$0xff]
      %v180 = vld [vmem:[%s1 + $0x20] sm:$0xff]
      %v181 = vld [vmem:[%s1 + $0x28] sm:$0xff]
      %v182 = vld [vmem:[%s1 + $0x30] sm:$0xff]
      %v183 = vld [vmem:[%s1 + $0x38] sm:$0xff]
      %v184 = vld [vmem:[%s1 + $0x40] sm:$0xff]
      %v185 = vld [vmem:[%s1 + $0x48] sm:$0xff]
      %v186 = vld [vmem:[%s1 + $0x50] sm:$0xff]
      %v187 = vld [vmem:[%s1 + $0x58] sm:$0xff]
      %v188 = vld [vmem:[%s1 + $0x60] sm:$0xff]
      %v189 = vld [vmem:[%s1 + $0x68] sm:$0xff]
      %v190 = vld [vmem:[%s1 + $0x70] sm:$0xff]
      %v191 = vld [vmem:[%s1 + $0x78] sm:$0xff]
      %v192 = vld [vmem:[%s1 + $0x80] sm:$0xff]
      %v193 = vld [vmem:[%s1 + $0x88] sm:$0xff]
      %v194 = vld [vmem:[%s1 + $0x90] sm:$0xff]
      %v195 = vld [vmem:[%s1 + $0x98] sm:$0xff]
      %v196 = vld [vmem:[%s1 + $0xa0] sm:$0xff]
      %v197 = vld [vmem:[%s1 + $0xa8] sm:$0xff]
      %v198 = vld [vmem:[%s1 + $0xb0] sm:$0xff]
      %v199 = vld [vmem:[%s1 + $0xb8] sm:$0xff]
      %v200 = vld [vmem:[%s1 + $0xc0] sm:$0xff]
      %v201 = vld [vmem:[%s1 + $0xc8] sm:$0xff]
      %v202 = vld [vmem:[%s1 + $0xd0] sm:$0xff]
      %v203 = vld [vmem:[%s1 + $0xd8] sm:$0xff]
      %v204 = vld [vmem:[%s1 + $0xe0] sm:$0xff]
      %v205 = vld [vmem:[%s1 + $0xe8] sm:$0xff]
      %v206 = vld [vmem:[%s1 + $0xf0] sm:$0xff]
      %v207 = vld [vmem:[%s1 + $0xf8] sm:$0xff]
      %v208 = vld [vmem:[%s1 + $0x100] sm:$0xff]
      %v209 = vld [vmem:[%s1 + $0x108] sm:$0xff]
      %v210 = vld [vmem:[%s1 + $0x110] sm:$0xff]
      %v211 = vld [vmem:[%s1 + $0x118] sm:$0xff]
      %v212 = vld [vmem:[%s1 + $0x120] sm:$0xff]
      %v213 = vld [vmem:[%s1 + $0x128] sm:$0xff]
      %v214 = vld [vmem:[%s1 + $0x130] sm:$0xff]
      %v215 = vld [vmem:[%s1 + $0x138] sm:$0xff]
      %v216 = vld [vmem:[%s1 + $0x140] sm:$0xff]
      %v217 = vld [vmem:[%s1 + $0x148] sm:$0xff]
      %v218 = vld [vmem:[%s1 + $0x150] sm:$0xff]
      %v219 = vld [vmem:[%s1 + $0x158] sm:$0xff]
      %v220 = vld [vmem:[%s1 + $0x160] sm:$0xff]
      %v221 = vld [vmem:[%s1 + $0x168] sm:$0xff]
      %v222 = vld [vmem:[%s1 + $0x170] sm:$0xff]
      %v223 = vld [vmem:[%s1 + $0x178] sm:$0xff]
      %v224 = vld [vmem:[%s1 + $0x180] sm:$0xff]
      %v225 = vld [vmem:[%s1 + $0x188] sm:$0xff]
      %v226 = vld [vmem:[%s1 + $0x190] sm:$0xff]
      %v227 = vld [vmem:[%s1 + $0x198] sm:$0xff]
      %v228 = vld [vmem:[%s1 + $0x1a0] sm:$0xff]
      %v229 = vld [vmem:[%s1 + $0x1a8] sm:$0xff]
      %v230 = vld [vmem:[%s1 + $0x1b0] sm:$0xff]
      %v231 = vld [vmem:[%s1 + $0x1b8] sm:$0xff]
      %v232 = vld [vmem:[%s1 + $0x1c0] sm:$0xff]
      %v233 = vld [vmem:[%s1 + $0x1c8] sm:$0xff]
      %v234 = vld [vmem:[%s1 + $0x1d0] sm:$0xff]
      %v235 = vld [vmem:[%s1 + $0x1d8] sm:$0xff]
      %v236 = vld [vmem:[%s1 + $0x1e0] sm:$0xff]
      %v237 = vld [vmem:[%s1 + $0x1e8] sm:$0xff]
      %v238 = vld [vmem:[%s1 + $0x1f0] sm:$0xff]
      %v239 = vld [vmem:[%s1 + $0x1f8] sm:$0xff]
      %v240 = vld [vmem:[%s1 + $0x200] sm:$0xff]
      %v241 = vld [vmem:[%s1 + $0x208] sm:$0xff]
      %v242 = vld [vmem:[%s1 + $0x210] sm:$0xff]
      %v243 = vld [vmem:[%s1 + $0x218] sm:$0xff]
      %v244 = vld [vmem:[%s1 + $0x220] sm:$0xff]
      %v245 = vld [vmem:[%s1 + $0x228] sm:$0xff]
      %v246 = vld [vmem:[%s1 + $0x230] sm:$0xff]
      %v247 = vld [vmem:[%s1 + $0x238] sm:$0xff]
      %v248 = vld [vmem:[%s1 + $0x240] sm:$0xff]
      %v249 = vld [vmem:[%s1 + $0x248] sm:$0xff]
      %v250 = vld [vmem:[%s1 + $0x250] sm:$0xff]
      %v251 = vld [vmem:[%s1 + $0x258] sm:$0xff]
      %v252 = vld [vmem:[%s1 + $0x260] sm:$0xff]
      %v253 = vld [vmem:[%s1 + $0x268] sm:$0xff]
      %v254 = vld [vmem:[%s1 + $0x270] sm:$0xff]
      %v255 = vld [vmem:[%s1 + $0x278] sm:$0xff]
      %v256 = vld [vmem:[%s1 + $0x280] sm:$0xff]
      %v257 = vld [vmem:[%s1 + $0x288] sm:$0xff]
      %v258 = vld [vmem:[%s1 + $0x290] sm:$0xff]
      %v259 = vld [vmem:[%s1 + $0x298] sm:$0xff]
      %v260 = vld [vmem:[%s1 + $0x2a0] sm:$0xff]
      %v261 = vld [vmem:[%s1 + $0x2a8] sm:$0xff]
      %v262 = vld [vmem:[%s1 + $0x2b0] sm:$0xff]
      %v263 = vld [vmem:[%s1 + $0x2b8] sm:$0xff]
      %v264 = vld [vmem:[%s1 + $0x2c0] sm:$0xff]
      %v265 = vld [vmem:[%s1 + $0x2c8] sm:$0xff]
      %v266 = vld [vmem:[%s1 + $0x2d0] sm:$0xff]
      %v267 = vld [vmem:[%s1 + $0x2d8] sm:$0xff]
      %v268 = vld [vmem:[%s1 + $0x2e0] sm:$0xff]
      %v269 = vld [vmem:[%s1 + $0x2e8] sm:$0xff]
      %v270 = vld [vmem:[%s1 + $0x2f0] sm:$0xff]
      %v271 = vld [vmem:[%s1 + $0x2f8] sm:$0xff]
      %v272 = vld [vmem:[%s1 + $0x300] sm:$0xff]
      %v273 = vld [vmem:[%s1 + $0x308] sm:$0xff]
      %v274 = vld [vmem:[%s1 + $0x310] sm:$0xff]
      %v275 = vld [vmem:[%s1 + $0x318] sm:$0xff]
      %v276 = vld [vmem:[%s1 + $0x320] sm:$0xff]
      %v277 = vld [vmem:[%s1 + $0x328] sm:$0xff]
      %v278 = vld [vmem:[%s1 + $0x330] sm:$0xff]
      %v279 = vld [vmem:[%s1 + $0x338] sm:$0xff]
      %v280 = vld [vmem:[%s1 + $0x340] sm:$0xff]
      %v281 = vld [vmem:[%s1 + $0x348] sm:$0xff]
      %v282 = vld [vmem:[%s1 + $0x350] sm:$0xff]
      %v283 = vld [vmem:[%s1 + $0x358] sm:$0xff]
      %v284 = vld [vmem:[%s1 + $0x360] sm:$0xff]
      %v285 = vld [vmem:[%s1 + $0x368] sm:$0xff]
      %v286 = vld [vmem:[%s1 + $0x370] sm:$0xff]
      %v287 = vld [vmem:[%s1 + $0x378] sm:$0xff]
      %v288 = vld [vmem:[%s1 + $0x380] sm:$0xff]
      %v289 = vld [vmem:[%s1 + $0x388] sm:$0xff]
      %v290 = vld [vmem:[%s1 + $0x390] sm:$0xff]
      %v291 = vld [vmem:[%s1 + $0x398] sm:$0xff]
      %v292 = vld [vmem:[%s1 + $0x3a0] sm:$0xff]
      %v293 = vld [vmem:[%s1 + $0x3a8] sm:$0xff]
      %v294 = vld [vmem:[%s1 + $0x3b0] sm:$0xff]
      %v295 = vld [vmem:[%s1 + $0x3b8] sm:$0xff]
      %v296 = vld [vmem:[%s1 + $0x3c0] sm:$0xff]
      %v297 = vld [vmem:[%s1 + $0x3c8] sm:$0xff]
      %v298 = vld [vmem:[%s1 + $0x3d0] sm:$0xff]
      %v299 = vld [vmem:[%s1 + $0x3d8] sm:$0xff]
      %v300 = vld [vmem:[%s1 + $0x3e0] sm:$0xff]
      %v301 = vld [vmem:[%s1 + $0x3e8] sm:$0xff]
      %v302 = vld [vmem:[%s1 + $0x3f0] sm:$0xff]
      %v303 = vld [vmem:[%s1 + $0x3f8] sm:$0xff]
      %v304 = vld [vmem:[%s1 + $0x400] sm:$0xff]
      %v305 = vld [vmem:[%s1 + $0x408] sm:$0xff]
      %v306 = vld [vmem:[%s1 + $0x410] sm:$0xff]
      %v307 = vld [vmem:[%s1 + $0x418] sm:$0xff]
      %v308 = vld [vmem:[%s1 + $0x420] sm:$0xff]
      %v309 = vld [vmem:[%s1 + $0x428] sm:$0xff]
      %v310 = vld [vmem:[%s1 + $0x430] sm:$0xff]
      %v311 = vld [vmem:[%s1 + $0x438] sm:$0xff]
      %v312 = vld [vmem:[%s1 + $0x440] sm:$0xff]
      %v313 = vld [vmem:[%s1 + $0x448] sm:$0xff]
      %v314 = vld [vmem:[%s1 + $0x450] sm:$0xff]
      %v315 = vld [vmem:[%s1 + $0x458] sm:$0xff]
      %v316 = vld [vmem:[%s1 + $0x460] sm:$0xff]
      %v317 = vld [vmem:[%s1 + $0x468] sm:$0xff]
      %v318 = vld [vmem:[%s1 + $0x470] sm:$0xff]
      %v319 = vld [vmem:[%s1 + $0x478] sm:$0xff]
      %v323 = vcombine.high %v173, %v173
      %v325 = vunpack.c.l.s4 1983009808
      %v326 = vunpack.c.0.s8 %v325
      %v327 = vlaneseq
      %v328 = vshrl.u32 %v327, 7
      %v329 = vsub.s32 %v326, %v328
      %v330 = vrot.slane %v173, %v329
      %v332 = vunpack.c.l.s4 1983009808
      %v333 = vunpack.c.0.s8 %v332
      %v334 = vlaneseq
      %v335 = vshrl.u32 %v334, 7
      %v336 = vsub.s32 %v333, %v335
      %v337 = vrot.slane %v323, %v336
      %v338 = vcombine.high %v330, %v330
      %v339 = vcombine.high %v337, %v337
      %v340 = vcombine.high %v174, %v174
      %v342 = vunpack.c.l.s4 1983009808
      %v343 = vunpack.c.0.s8 %v342
      %v344 = vlaneseq
      %v345 = vshrl.u32 %v344, 7
      %v346 = vsub.s32 %v343, %v345
      %v347 = vrot.slane %v174, %v346
      %v349 = vunpack.c.l.s4 1983009808
      %v350 = vunpack.c.0.s8 %v349
      %v351 = vlaneseq
      %v352 = vshrl.u32 %v351, 7
      %v353 = vsub.s32 %v350, %v352
      %v354 = vrot.slane %v340, %v353
      %v355 = vcombine.high %v347, %v347
      %v356 = vcombine.high %v354, %v354
      %v358 = vunpack.c.l.s4 1983009808
      %v359 = vunpack.c.0.s8 %v358
      %v360 = vlaneseq
      %v361 = vshrl.u32 %v360, 7
      %v362 = vsub.s32 %v359, %v361
      %v363 = vrot.slane %v175, %v362
      %v517 = vunpack.c.l.b16 %v176
      %v518 = vunpack.c.h.b16 %v176
      %v519 = vunpack.c.l.b16 %v177
      %v520 = vunpack.c.h.b16 %v177
      %v521 = vunpack.c.l.b16 %v178
      %v522 = vunpack.c.h.b16 %v178
      %v523 = vunpack.c.l.b16 %v179
      %v524 = vunpack.c.h.b16 %v179
      %v525 = vunpack.c.l.b16 %v180
      %v526 = vunpack.c.h.b16 %v180
      %v527 = vunpack.c.l.b16 %v181
      %v528 = vunpack.c.h.b16 %v181
      %v529 = vunpack.c.l.b16 %v182
      %v530 = vunpack.c.h.b16 %v182
      %v531 = vunpack.c.l.b16 %v183
      %v532 = vunpack.c.h.b16 %v183
      %v533 = vunpack.c.l.b16 %v184
      %v534 = vunpack.c.h.b16 %v184
      %v535 = vunpack.c.l.b16 %v185
      %v536 = vunpack.c.h.b16 %v185
      %v537 = vunpack.c.l.b16 %v186
      %v538 = vunpack.c.h.b16 %v186
      %v539 = vunpack.c.l.b16 %v187
      %v540 = vunpack.c.h.b16 %v187
      %v541 = vunpack.c.l.b16 %v188
      %v542 = vunpack.c.h.b16 %v188
      %v543 = vunpack.c.l.b16 %v189
      %v544 = vunpack.c.h.b16 %v189
      %v545 = vunpack.c.l.b16 %v190
      %v546 = vunpack.c.h.b16 %v190
      %v547 = vunpack.c.l.b16 %v191
      %v548 = vunpack.c.h.b16 %v191
      %v549 = vunpack.c.l.b16 %v192
      %v550 = vunpack.c.h.b16 %v192
      %v551 = vunpack.c.l.b16 %v193
      %v552 = vunpack.c.h.b16 %v193
      %v553 = vunpack.c.l.b16 %v194
      %v554 = vunpack.c.h.b16 %v194
      %v555 = vunpack.c.l.b16 %v195
      %v556 = vunpack.c.h.b16 %v195
      %v557 = vunpack.c.l.b16 %v196
      %v558 = vunpack.c.h.b16 %v196
      %v559 = vunpack.c.l.b16 %v197
      %v560 = vunpack.c.h.b16 %v197
      %v561 = vunpack.c.l.b16 %v198
      %v562 = vunpack.c.h.b16 %v198
      %v563 = vunpack.c.l.b16 %v199
      %v564 = vunpack.c.h.b16 %v199
      %v565 = vunpack.c.l.b16 %v200
      %v566 = vunpack.c.h.b16 %v200
      %v567 = vunpack.c.l.b16 %v201
      %v568 = vunpack.c.h.b16 %v201
      %v569 = vunpack.c.l.b16 %v202
      %v570 = vunpack.c.h.b16 %v202
      %v571 = vunpack.c.l.b16 %v203
      %v572 = vunpack.c.h.b16 %v203
      %v573 = vunpack.c.l.b16 %v204
      %v574 = vunpack.c.h.b16 %v204
      %v575 = vunpack.c.l.b16 %v205
      %v576 = vunpack.c.h.b16 %v205
      %v577 = vunpack.c.l.b16 %v206
      %v578 = vunpack.c.h.b16 %v206
      %v579 = vunpack.c.l.b16 %v207
      %v580 = vunpack.c.h.b16 %v207
      %v581 = vunpack.c.l.b16 %v208
      %v582 = vunpack.c.h.b16 %v208
      %v583 = vunpack.c.l.b16 %v209
      %v584 = vunpack.c.h.b16 %v209
      %v585 = vunpack.c.l.b16 %v210
      %v586 = vunpack.c.h.b16 %v210
      %v587 = vunpack.c.l.b16 %v211
      %v588 = vunpack.c.h.b16 %v211
      %v589 = vunpack.c.l.b16 %v212
      %v590 = vunpack.c.h.b16 %v212
      %v591 = vunpack.c.l.b16 %v213
      %v592 = vunpack.c.h.b16 %v213
      %v593 = vunpack.c.l.b16 %v214
      %v594 = vunpack.c.h.b16 %v214
      %v595 = vunpack.c.l.b16 %v215
      %v596 = vunpack.c.h.b16 %v215
      %v597 = vunpack.c.l.b16 %v216
      %v598 = vunpack.c.h.b16 %v216
      %v599 = vunpack.c.l.b16 %v217
      %v600 = vunpack.c.h.b16 %v217
      %v601 = vunpack.c.l.b16 %v218
      %v602 = vunpack.c.h.b16 %v218
      %v603 = vunpack.c.l.b16 %v219
      %v604 = vunpack.c.h.b16 %v219
      %v605 = vunpack.c.l.b16 %v220
      %v606 = vunpack.c.h.b16 %v220
      %v607 = vunpack.c.l.b16 %v221
      %v608 = vunpack.c.h.b16 %v221
      %v609 = vunpack.c.l.b16 %v222
      %v610 = vunpack.c.h.b16 %v222
      %v611 = vunpack.c.l.b16 %v223
      %v612 = vunpack.c.h.b16 %v223
      %v613 = vunpack.c.l.b16 %v224
      %v614 = vunpack.c.h.b16 %v224
      %v615 = vunpack.c.l.b16 %v225
      %v616 = vunpack.c.h.b16 %v225
      %v617 = vunpack.c.l.b16 %v226
      %v618 = vunpack.c.h.b16 %v226
      %v619 = vunpack.c.l.b16 %v227
      %v620 = vunpack.c.h.b16 %v227
      %v621 = vunpack.c.l.b16 %v228
      %v622 = vunpack.c.h.b16 %v228
      %v623 = vunpack.c.l.b16 %v229
      %v624 = vunpack.c.h.b16 %v229
      %v625 = vunpack.c.l.b16 %v230
      %v626 = vunpack.c.h.b16 %v230
      %v627 = vunpack.c.l.b16 %v231
      %v628 = vunpack.c.h.b16 %v231
      %v629 = vunpack.c.l.b16 %v232
      %v630 = vunpack.c.h.b16 %v232
      %v631 = vunpack.c.l.b16 %v233
      %v632 = vunpack.c.h.b16 %v233
      %v633 = vunpack.c.l.b16 %v234
      %v634 = vunpack.c.h.b16 %v234
      %v635 = vunpack.c.l.b16 %v235
      %v636 = vunpack.c.h.b16 %v235
      %v637 = vunpack.c.l.b16 %v236
      %v638 = vunpack.c.h.b16 %v236
      %v639 = vunpack.c.l.b16 %v237
      %v640 = vunpack.c.h.b16 %v237
      %v641 = vunpack.c.l.b16 %v238
      %v642 = vunpack.c.h.b16 %v238
      %v643 = vunpack.c.l.b16 %v239
      %v644 = vunpack.c.h.b16 %v239
      %v645 = vunpack.c.l.b16 %v240
      %v646 = vunpack.c.h.b16 %v240
      %v647 = vunpack.c.l.b16 %v241
      %v648 = vunpack.c.h.b16 %v241
      %v649 = vunpack.c.l.b16 %v242
      %v650 = vunpack.c.h.b16 %v242
      %v651 = vunpack.c.l.b16 %v243
      %v652 = vunpack.c.h.b16 %v243
      %v653 = vunpack.c.l.b16 %v244
      %v654 = vunpack.c.h.b16 %v244
      %v655 = vunpack.c.l.b16 %v245
      %v656 = vunpack.c.h.b16 %v245
      %v657 = vunpack.c.l.b16 %v246
      %v658 = vunpack.c.h.b16 %v246
      %v659 = vunpack.c.l.b16 %v247
      %v660 = vunpack.c.h.b16 %v247
      %v661 = vunpack.c.l.b16 %v248
      %v662 = vunpack.c.h.b16 %v248
      %v663 = vunpack.c.l.b16 %v249
      %v664 = vunpack.c.h.b16 %v249
      %v665 = vunpack.c.l.b16 %v250
      %v666 = vunpack.c.h.b16 %v250
      %v667 = vunpack.c.l.b16 %v251
      %v668 = vunpack.c.h.b16 %v251
      %v669 = vunpack.c.l.b16 %v252
      %v670 = vunpack.c.h.b16 %v252
      %v671 = vunpack.c.l.b16 %v253
      %v672 = vunpack.c.h.b16 %v253
      %v673 = vunpack.c.l.b16 %v254
      %v674 = vunpack.c.h.b16 %v254
      %v675 = vunpack.c.l.b16 %v255
      %v676 = vunpack.c.h.b16 %v255
      %v677 = vunpack.c.l.b16 %v256
      %v678 = vunpack.c.h.b16 %v256
      %v679 = vunpack.c.l.b16 %v257
      %v680 = vunpack.c.h.b16 %v257
      %v681 = vunpack.c.l.b16 %v258
      %v682 = vunpack.c.h.b16 %v258
      %v683 = vunpack.c.l.b16 %v259
      %v684 = vunpack.c.h.b16 %v259
      %v685 = vunpack.c.l.b16 %v260
      %v686 = vunpack.c.h.b16 %v260
      %v687 = vunpack.c.l.b16 %v261
      %v688 = vunpack.c.h.b16 %v261
      %v689 = vunpack.c.l.b16 %v262
      %v690 = vunpack.c.h.b16 %v262
      %v691 = vunpack.c.l.b16 %v263
      %v692 = vunpack.c.h.b16 %v263
      %v693 = vunpack.c.l.b16 %v264
      %v694 = vunpack.c.h.b16 %v264
      %v695 = vunpack.c.l.b16 %v265
      %v696 = vunpack.c.h.b16 %v265
      %v697 = vunpack.c.l.b16 %v266
      %v698 = vunpack.c.h.b16 %v266
      %v699 = vunpack.c.l.b16 %v267
      %v700 = vunpack.c.h.b16 %v267
      %v701 = vunpack.c.l.b16 %v268
      %v702 = vunpack.c.h.b16 %v268
      %v703 = vunpack.c.l.b16 %v269
      %v704 = vunpack.c.h.b16 %v269
      %v705 = vunpack.c.l.b16 %v270
      %v706 = vunpack.c.h.b16 %v270
      %v707 = vunpack.c.l.b16 %v271
      %v708 = vunpack.c.h.b16 %v271
      %v709 = vunpack.c.l.b16 %v272
      %v710 = vunpack.c.h.b16 %v272
      %v711 = vunpack.c.l.b16 %v273
      %v712 = vunpack.c.h.b16 %v273
      %v713 = vunpack.c.l.b16 %v274
      %v714 = vunpack.c.h.b16 %v274
      %v715 = vunpack.c.l.b16 %v275
      %v716 = vunpack.c.h.b16 %v275
      %v717 = vunpack.c.l.b16 %v276
      %v718 = vunpack.c.h.b16 %v276
      %v719 = vunpack.c.l.b16 %v277
      %v720 = vunpack.c.h.b16 %v277
      %v721 = vunpack.c.l.b16 %v278
      %v722 = vunpack.c.h.b16 %v278
      %v723 = vunpack.c.l.b16 %v279
      %v724 = vunpack.c.h.b16 %v279
      %v725 = vunpack.c.l.b16 %v280
      %v726 = vunpack.c.h.b16 %v280
      %v727 = vunpack.c.l.b16 %v281
      %v728 = vunpack.c.h.b16 %v281
      %v729 = vunpack.c.l.b16 %v282
      %v730 = vunpack.c.h.b16 %v282
      %v731 = vunpack.c.l.b16 %v283
      %v732 = vunpack.c.h.b16 %v283
      %v733 = vunpack.c.l.b16 %v284
      %v734 = vunpack.c.h.b16 %v284
      %v735 = vunpack.c.l.b16 %v285
      %v736 = vunpack.c.h.b16 %v285
      %v737 = vunpack.c.l.b16 %v286
      %v738 = vunpack.c.h.b16 %v286
      %v739 = vunpack.c.l.b16 %v287
      %v740 = vunpack.c.h.b16 %v287
      %v741 = vunpack.c.l.b16 %v288
      %v742 = vunpack.c.h.b16 %v288
      %v743 = vunpack.c.l.b16 %v289
      %v744 = vunpack.c.h.b16 %v289
      %v745 = vunpack.c.l.b16 %v290
      %v746 = vunpack.c.h.b16 %v290
      %v747 = vunpack.c.l.b16 %v291
      %v748 = vunpack.c.h.b16 %v291
      %v749 = vunpack.c.l.b16 %v292
      %v750 = vunpack.c.h.b16 %v292
      %v751 = vunpack.c.l.b16 %v293
      %v752 = vunpack.c.h.b16 %v293
      %v753 = vunpack.c.l.b16 %v294
      %v754 = vunpack.c.h.b16 %v294
      %v755 = vunpack.c.l.b16 %v295
      %v756 = vunpack.c.h.b16 %v295
      %v757 = vunpack.c.l.b16 %v296
      %v758 = vunpack.c.h.b16 %v296
      %v759 = vunpack.c.l.b16 %v297
      %v760 = vunpack.c.h.b16 %v297
      %v761 = vunpack.c.l.b16 %v298
      %v762 = vunpack.c.h.b16 %v298
      %v763 = vunpack.c.l.b16 %v299
      %v764 = vunpack.c.h.b16 %v299
      %v765 = vunpack.c.l.b16 %v300
      %v766 = vunpack.c.h.b16 %v300
      %v767 = vunpack.c.l.b16 %v301
      %v768 = vunpack.c.h.b16 %v301
      %v769 = vunpack.c.l.b16 %v302
      %v770 = vunpack.c.h.b16 %v302
      %v771 = vunpack.c.l.b16 %v303
      %v772 = vunpack.c.h.b16 %v303
      %v773 = vunpack.c.l.b16 %v304
      %v774 = vunpack.c.h.b16 %v304
      %v775 = vunpack.c.l.b16 %v305
      %v776 = vunpack.c.h.b16 %v305
      %v777 = vunpack.c.l.b16 %v306
      %v778 = vunpack.c.h.b16 %v306
      %v779 = vunpack.c.l.b16 %v307
      %v780 = vunpack.c.h.b16 %v307
      %v781 = vunpack.c.l.b16 %v308
      %v782 = vunpack.c.h.b16 %v308
      %v783 = vunpack.c.l.b16 %v309
      %v784 = vunpack.c.h.b16 %v309
      %v785 = vunpack.c.l.b16 %v310
      %v786 = vunpack.c.h.b16 %v310
      %v787 = vunpack.c.l.b16 %v311
      %v788 = vunpack.c.h.b16 %v311
      %v789 = vunpack.c.l.b16 %v312
      %v790 = vunpack.c.h.b16 %v312
      %v791 = vunpack.c.l.b16 %v313
      %v792 = vunpack.c.h.b16 %v313
      %v793 = vunpack.c.l.b16 %v314
      %v794 = vunpack.c.h.b16 %v314
      %v795 = vunpack.c.l.b16 %v315
      %v796 = vunpack.c.h.b16 %v315
      %v797 = vunpack.c.l.b16 %v316
      %v798 = vunpack.c.h.b16 %v316
      %v799 = vunpack.c.l.b16 %v317
      %v800 = vunpack.c.h.b16 %v317
      %v801 = vunpack.c.l.b16 %v318
      %v802 = vunpack.c.h.b16 %v318
      %v803 = vunpack.c.l.b16 %v319
      %v804 = vunpack.c.h.b16 %v319
      %v805 = vpack.c.b16 %v519, %v517
      %v806 = vpack.c.b16 %v520, %v518
      %v807 = vpack.c.b16 %v523, %v521
      %v808 = vpack.c.b16 %v524, %v522
      %v809 = vpack.c.b16 %v527, %v525
      %v810 = vpack.c.b16 %v528, %v526
      %v811 = vpack.c.b16 %v531, %v529
      %v812 = vpack.c.b16 %v532, %v530
      %v813 = vpack.c.b16 %v535, %v533
      %v814 = vpack.c.b16 %v536, %v534
      %v815 = vpack.c.b16 %v539, %v537
      %v816 = vpack.c.b16 %v540, %v538
      %v817 = vpack.c.b16 %v543, %v541
      %v818 = vpack.c.b16 %v544, %v542
      %v819 = vpack.c.b16 %v547, %v545
      %v820 = vpack.c.b16 %v548, %v546
      %v821 = vpack.c.b16 %v551, %v549
      %v822 = vpack.c.b16 %v552, %v550
      %v823 = vpack.c.b16 %v555, %v553
      %v824 = vpack.c.b16 %v556, %v554
      %v825 = vpack.c.b16 %v559, %v557
      %v826 = vpack.c.b16 %v560, %v558
      %v827 = vpack.c.b16 %v563, %v561
      %v828 = vpack.c.b16 %v564, %v562
      %v829 = vpack.c.b16 %v567, %v565
      %v830 = vpack.c.b16 %v568, %v566
      %v831 = vpack.c.b16 %v571, %v569
      %v832 = vpack.c.b16 %v572, %v570
      %v833 = vpack.c.b16 %v575, %v573
      %v834 = vpack.c.b16 %v576, %v574
      %v835 = vpack.c.b16 %v579, %v577
      %v836 = vpack.c.b16 %v580, %v578
      %v837 = vpack.c.b16 %v583, %v581
      %v838 = vpack.c.b16 %v584, %v582
      %v839 = vpack.c.b16 %v587, %v585
      %v840 = vpack.c.b16 %v588, %v586
      %v841 = vpack.c.b16 %v591, %v589
      %v842 = vpack.c.b16 %v592, %v590
      %v843 = vpack.c.b16 %v595, %v593
      %v844 = vpack.c.b16 %v596, %v594
      %v845 = vpack.c.b16 %v599, %v597
      %v846 = vpack.c.b16 %v600, %v598
      %v847 = vpack.c.b16 %v603, %v601
      %v848 = vpack.c.b16 %v604, %v602
      %v849 = vpack.c.b16 %v607, %v605
      %v850 = vpack.c.b16 %v608, %v606
      %v851 = vpack.c.b16 %v611, %v609
      %v852 = vpack.c.b16 %v612, %v610
      %v853 = vpack.c.b16 %v615, %v613
      %v854 = vpack.c.b16 %v616, %v614
      %v855 = vpack.c.b16 %v619, %v617
      %v856 = vpack.c.b16 %v620, %v618
      %v857 = vpack.c.b16 %v623, %v621
      %v858 = vpack.c.b16 %v624, %v622
      %v859 = vpack.c.b16 %v627, %v625
      %v860 = vpack.c.b16 %v628, %v626
      %v861 = vpack.c.b16 %v631, %v629
      %v862 = vpack.c.b16 %v632, %v630
      %v863 = vpack.c.b16 %v635, %v633
      %v864 = vpack.c.b16 %v636, %v634
      %v865 = vpack.c.b16 %v639, %v637
      %v866 = vpack.c.b16 %v640, %v638
      %v867 = vpack.c.b16 %v643, %v641
      %v868 = vpack.c.b16 %v644, %v642
      %v869 = vpack.c.b16 %v647, %v645
      %v870 = vpack.c.b16 %v648, %v646
      %v871 = vpack.c.b16 %v651, %v649
      %v872 = vpack.c.b16 %v652, %v650
      %v873 = vpack.c.b16 %v655, %v653
      %v874 = vpack.c.b16 %v656, %v654
      %v875 = vpack.c.b16 %v659, %v657
      %v876 = vpack.c.b16 %v660, %v658
      %v877 = vpack.c.b16 %v663, %v661
      %v878 = vpack.c.b16 %v664, %v662
      %v879 = vpack.c.b16 %v667, %v665
      %v880 = vpack.c.b16 %v668, %v666
      %v881 = vpack.c.b16 %v671, %v669
      %v882 = vpack.c.b16 %v672, %v670
      %v883 = vpack.c.b16 %v675, %v673
      %v884 = vpack.c.b16 %v676, %v674
      %v885 = vpack.c.b16 %v679, %v677
      %v886 = vpack.c.b16 %v680, %v678
      %v887 = vpack.c.b16 %v683, %v681
      %v888 = vpack.c.b16 %v684, %v682
      %v889 = vpack.c.b16 %v687, %v685
      %v890 = vpack.c.b16 %v688, %v686
      %v891 = vpack.c.b16 %v691, %v689
      %v892 = vpack.c.b16 %v692, %v690
      %v893 = vpack.c.b16 %v695, %v693
      %v894 = vpack.c.b16 %v696, %v694
      %v895 = vpack.c.b16 %v699, %v697
      %v896 = vpack.c.b16 %v700, %v698
      %v897 = vpack.c.b16 %v703, %v701
      %v898 = vpack.c.b16 %v704, %v702
      %v899 = vpack.c.b16 %v707, %v705
      %v900 = vpack.c.b16 %v708, %v706
      %v901 = vpack.c.b16 %v711, %v709
      %v902 = vpack.c.b16 %v712, %v710
      %v903 = vpack.c.b16 %v715, %v713
      %v904 = vpack.c.b16 %v716, %v714
      %v905 = vpack.c.b16 %v719, %v717
      %v906 = vpack.c.b16 %v720, %v718
      %v907 = vpack.c.b16 %v723, %v721
      %v908 = vpack.c.b16 %v724, %v722
      %v909 = vpack.c.b16 %v727, %v725
      %v910 = vpack.c.b16 %v728, %v726
      %v911 = vpack.c.b16 %v731, %v729
      %v912 = vpack.c.b16 %v732, %v730
      %v913 = vpack.c.b16 %v735, %v733
      %v914 = vpack.c.b16 %v736, %v734
      %v915 = vpack.c.b16 %v739, %v737
      %v916 = vpack.c.b16 %v740, %v738
      %v917 = vpack.c.b16 %v743, %v741
      %v918 = vpack.c.b16 %v744, %v742
      %v919 = vpack.c.b16 %v747, %v745
      %v920 = vpack.c.b16 %v748, %v746
      %v921 = vpack.c.b16 %v751, %v749
      %v922 = vpack.c.b16 %v752, %v750
      %v923 = vpack.c.b16 %v755, %v753
      %v924 = vpack.c.b16 %v756, %v754
      %v925 = vpack.c.b16 %v759, %v757
      %v926 = vpack.c.b16 %v760, %v758
      %v927 = vpack.c.b16 %v763, %v761
      %v928 = vpack.c.b16 %v764, %v762
      %v929 = vpack.c.b16 %v767, %v765
      %v930 = vpack.c.b16 %v768, %v766
      %v931 = vpack.c.b16 %v771, %v769
      %v932 = vpack.c.b16 %v772, %v770
      %v933 = vpack.c.b16 %v775, %v773
      %v934 = vpack.c.b16 %v776, %v774
      %v935 = vpack.c.b16 %v779, %v777
      %v936 = vpack.c.b16 %v780, %v778
      %v937 = vpack.c.b16 %v783, %v781
      %v938 = vpack.c.b16 %v784, %v782
      %v939 = vpack.c.b16 %v787, %v785
      %v940 = vpack.c.b16 %v788, %v786
      %v941 = vpack.c.b16 %v791, %v789
      %v942 = vpack.c.b16 %v792, %v790
      %v943 = vpack.c.b16 %v795, %v793
      %v944 = vpack.c.b16 %v796, %v794
      %v945 = vpack.c.b16 %v799, %v797
      %v946 = vpack.c.b16 %v800, %v798
      %v947 = vpack.c.b16 %v803, %v801
      %v948 = vpack.c.b16 %v804, %v802
      %1093 = vmatprep.subr.bf16.mxu0 %v820
      %1094 = vmatpush1.bf16.msra.mxu0 %v819
      %1095 = vmatprep.subr.bf16.mxu0 %v818
      %1096 = vmatpush1.bf16.msra.mxu0 %v817
      %1097 = vmatprep.subr.bf16.mxu0 %v816
      %1098 = vmatpush1.bf16.msra.mxu0 %v815
      %1099 = vmatprep.subr.bf16.mxu0 %v814
      %1100 = vmatpush1.bf16.msra.mxu0 %v813
      %1101 = vmatprep.subr.bf16.mxu0 %v812
      %1102 = vmatpush1.bf16.msra.mxu0 %v811
      %1103 = vmatprep.subr.bf16.mxu0 %v810
      %1104 = vmatpush1.bf16.msra.mxu0 %v809
      %1105 = vmatprep.subr.bf16.mxu0 %v808
      %1106 = vmatpush1.bf16.msra.mxu0 %v807
      %1107 = vmatprep.subr.bf16.mxu0 %v806
      %1108 = vmatpush1.bf16.msra.mxu0 %v805
      %1109 = vmatprep.subr.bf16.mxu0 %v836
      %1110 = vmatpush2.bf16.msra.mxu0 %v835
      %1111 = vmatprep.subr.bf16.mxu0 %v834
      %1112 = vmatpush2.bf16.msra.mxu0 %v833
      %1113 = vmatprep.subr.bf16.mxu0 %v832
      %1114 = vmatpush2.bf16.msra.mxu0 %v831
      %1115 = vmatprep.subr.bf16.mxu0 %v830
      %1116 = vmatpush2.bf16.msra.mxu0 %v829
      %1117 = vmatprep.subr.bf16.mxu0 %v828
      %1118 = vmatpush2.bf16.msra.mxu0 %v827
      %1119 = vmatprep.subr.bf16.mxu0 %v826
      %1120 = vmatpush2.bf16.msra.mxu0 %v825
      %1121 = vmatprep.subr.bf16.mxu0 %v824
      %1122 = vmatpush2.bf16.msra.mxu0 %v823
      %1123 = vmatprep.subr.bf16.mxu0 %v822
      %1124 = vmatpush2.bf16.msra.mxu0 %v821
      %1125 = vmatprep.mubr.bf16.mxu0 %v338
      %1126 = vmatmul.mubr.bf16.gmra.mxu0 %v330
      %v1127 = vpop.f32.mrf.mxu0
      %v1128 = vadd.f32 0.0, %v1127
      %v1129 = vpop.f32.mrf.mxu0
      %v1130 = vadd.f32 0.0, %v1129
      %v1131 = vpop.f32.mrf.mxu0
      %v1132 = vpop.f32.mrf.mxu0
      %1133 = vdwg.mxu0
      %1134 = vmatprep.subr.bf16.mxu0 %v852
      %1135 = vmatpush1.bf16.msra.mxu0 %v851
      %1136 = vmatprep.subr.bf16.mxu0 %v850
      %1137 = vmatpush1.bf16.msra.mxu0 %v849
      %1138 = vmatprep.subr.bf16.mxu0 %v848
      %1139 = vmatpush1.bf16.msra.mxu0 %v847
      %1140 = vmatprep.subr.bf16.mxu0 %v846
      %1141 = vmatpush1.bf16.msra.mxu0 %v845
      %1142 = vmatprep.subr.bf16.mxu0 %v844
      %1143 = vmatpush1.bf16.msra.mxu0 %v843
      %1144 = vmatprep.subr.bf16.mxu0 %v842
      %1145 = vmatpush1.bf16.msra.mxu0 %v841
      %1146 = vmatprep.subr.bf16.mxu0 %v840
      %1147 = vmatpush1.bf16.msra.mxu0 %v839
      %1148 = vmatprep.subr.bf16.mxu0 %v838
      %1149 = vmatpush1.bf16.msra.mxu0 %v837
      %1150 = vmatprep.subr.bf16.mxu0 %v868
      %1151 = vmatpush2.bf16.msra.mxu0 %v867
      %1152 = vmatprep.subr.bf16.mxu0 %v866
      %1153 = vmatpush2.bf16.msra.mxu0 %v865
      %1154 = vmatprep.subr.bf16.mxu0 %v864
      %1155 = vmatpush2.bf16.msra.mxu0 %v863
      %1156 = vmatprep.subr.bf16.mxu0 %v862
      %1157 = vmatpush2.bf16.msra.mxu0 %v861
      %1158 = vmatprep.subr.bf16.mxu0 %v860
      %1159 = vmatpush2.bf16.msra.mxu0 %v859
      %1160 = vmatprep.subr.bf16.mxu0 %v858
      %1161 = vmatpush2.bf16.msra.mxu0 %v857
      %1162 = vmatprep.subr.bf16.mxu0 %v856
      %1163 = vmatpush2.bf16.msra.mxu0 %v855
      %1164 = vmatprep.subr.bf16.mxu0 %v854
      %1165 = vmatpush2.bf16.msra.mxu0 %v853
      %1166 = vmatprep.mubr.bf16.mxu0 %v339
      %1167 = vmatmul.mubr.bf16.gmra.mxu0 %v337
      %v1168 = vpop.f32.mrf.mxu0
      %v1169 = vadd.f32 %v1128, %v1168
      %v1170 = vpop.f32.mrf.mxu0
      %v1171 = vadd.f32 %v1130, %v1170
      %v1172 = vpop.f32.mrf.mxu0
      %v1173 = vpop.f32.mrf.mxu0
      %1174 = vdwg.mxu0
      %1175 = vmatprep.subr.bf16.mxu0 %v884
      %1176 = vmatpush1.bf16.msra.mxu0 %v883
      %1177 = vmatprep.subr.bf16.mxu0 %v882
      %1178 = vmatpush1.bf16.msra.mxu0 %v881
      %1179 = vmatprep.subr.bf16.mxu0 %v880
      %1180 = vmatpush1.bf16.msra.mxu0 %v879
      %1181 = vmatprep.subr.bf16.mxu0 %v878
      %1182 = vmatpush1.bf16.msra.mxu0 %v877
      %1183 = vmatprep.subr.bf16.mxu0 %v876
      %1184 = vmatpush1.bf16.msra.mxu0 %v875
      %1185 = vmatprep.subr.bf16.mxu0 %v874
      %1186 = vmatpush1.bf16.msra.mxu0 %v873
      %1187 = vmatprep.subr.bf16.mxu0 %v872
      %1188 = vmatpush1.bf16.msra.mxu0 %v871
      %1189 = vmatprep.subr.bf16.mxu0 %v870
      %1190 = vmatpush1.bf16.msra.mxu0 %v869
      %1191 = vmatprep.subr.bf16.mxu0 %v900
      %1192 = vmatpush2.bf16.msra.mxu0 %v899
      %1193 = vmatprep.subr.bf16.mxu0 %v898
      %1194 = vmatpush2.bf16.msra.mxu0 %v897
      %1195 = vmatprep.subr.bf16.mxu0 %v896
      %1196 = vmatpush2.bf16.msra.mxu0 %v895
      %1197 = vmatprep.subr.bf16.mxu0 %v894
      %1198 = vmatpush2.bf16.msra.mxu0 %v893
      %1199 = vmatprep.subr.bf16.mxu0 %v892
      %1200 = vmatpush2.bf16.msra.mxu0 %v891
      %1201 = vmatprep.subr.bf16.mxu0 %v890
      %1202 = vmatpush2.bf16.msra.mxu0 %v889
      %1203 = vmatprep.subr.bf16.mxu0 %v888
      %1204 = vmatpush2.bf16.msra.mxu0 %v887
      %1205 = vmatprep.subr.bf16.mxu0 %v886
      %1206 = vmatpush2.bf16.msra.mxu0 %v885
      %1207 = vmatprep.mubr.bf16.mxu0 %v355
      %1208 = vmatmul.mubr.bf16.gmra.mxu0 %v347
      %v1209 = vpop.f32.mrf.mxu0
      %v1210 = vadd.f32 %v1169, %v1209
      %v1211 = vpop.f32.mrf.mxu0
      %v1212 = vadd.f32 %v1171, %v1211
      %v1213 = vpop.f32.mrf.mxu0
      %v1214 = vpop.f32.mrf.mxu0
      %1215 = vdwg.mxu0
      %1216 = vmatprep.subr.bf16.mxu0 %v916
      %1217 = vmatpush1.bf16.msra.mxu0 %v915
      %1218 = vmatprep.subr.bf16.mxu0 %v914
      %1219 = vmatpush1.bf16.msra.mxu0 %v913
      %1220 = vmatprep.subr.bf16.mxu0 %v912
      %1221 = vmatpush1.bf16.msra.mxu0 %v911
      %1222 = vmatprep.subr.bf16.mxu0 %v910
      %1223 = vmatpush1.bf16.msra.mxu0 %v909
      %1224 = vmatprep.subr.bf16.mxu0 %v908
      %1225 = vmatpush1.bf16.msra.mxu0 %v907
      %1226 = vmatprep.subr.bf16.mxu0 %v906
      %1227 = vmatpush1.bf16.msra.mxu0 %v905
      %1228 = vmatprep.subr.bf16.mxu0 %v904
      %1229 = vmatpush1.bf16.msra.mxu0 %v903
      %1230 = vmatprep.subr.bf16.mxu0 %v902
      %1231 = vmatpush1.bf16.msra.mxu0 %v901
      %1232 = vmatprep.subr.bf16.mxu0 %v932
      %1233 = vmatpush2.bf16.msra.mxu0 %v931
      %1234 = vmatprep.subr.bf16.mxu0 %v930
      %1235 = vmatpush2.bf16.msra.mxu0 %v929
      %1236 = vmatprep.subr.bf16.mxu0 %v928
      %1237 = vmatpush2.bf16.msra.mxu0 %v927
      %1238 = vmatprep.subr.bf16.mxu0 %v926
      %1239 = vmatpush2.bf16.msra.mxu0 %v925
      %1240 = vmatprep.subr.bf16.mxu0 %v924
      %1241 = vmatpush2.bf16.msra.mxu0 %v923
      %1242 = vmatprep.subr.bf16.mxu0 %v922
      %1243 = vmatpush2.bf16.msra.mxu0 %v921
      %1244 = vmatprep.subr.bf16.mxu0 %v920
      %1245 = vmatpush2.bf16.msra.mxu0 %v919
      %1246 = vmatprep.subr.bf16.mxu0 %v918
      %1247 = vmatpush2.bf16.msra.mxu0 %v917
      %1248 = vmatprep.mubr.bf16.mxu0 %v356
      %1249 = vmatmul.mubr.bf16.gmra.mxu0 %v354
      %v1250 = vpop.f32.mrf.mxu0
      %v1251 = vadd.f32 %v1210, %v1250
      %v1252 = vpop.f32.mrf.mxu0
      %v1253 = vadd.f32 %v1212, %v1252
      %v1254 = vpop.f32.mrf.mxu0
      %v1255 = vpop.f32.mrf.mxu0
      %1256 = vdwg.mxu0
      %1257 = vmatprep.subr.bf16.mxu0 %v948
      %1258 = vmatpush1.bf16.msra.mxu0 %v947
      %1259 = vmatprep.subr.bf16.mxu0 %v946
      %1260 = vmatpush1.bf16.msra.mxu0 %v945
      %1261 = vmatprep.subr.bf16.mxu0 %v944
      %1262 = vmatpush1.bf16.msra.mxu0 %v943
      %1263 = vmatprep.subr.bf16.mxu0 %v942
      %1264 = vmatpush1.bf16.msra.mxu0 %v941
      %1265 = vmatprep.subr.bf16.mxu0 %v940
      %1266 = vmatpush1.bf16.msra.mxu0 %v939
      %1267 = vmatprep.subr.bf16.mxu0 %v938
      %1268 = vmatpush1.bf16.msra.mxu0 %v937
      %1269 = vmatprep.subr.bf16.mxu0 %v936
      %1270 = vmatpush1.bf16.msra.mxu0 %v935
      %1271 = vmatprep.subr.bf16.mxu0 %v934
      %1272 = vmatpush1.bf16.msra.mxu0 %v933
      %1273 = vmatprep.subr.bf16.mxu0 0
      %1274 = vmatpush2.bf16.msra.mxu0 0
      %1275 = vmatprep.subr.bf16.mxu0 0
      %1276 = vmatpush2.bf16.msra.mxu0 0
      %1277 = vmatprep.subr.bf16.mxu0 0
      %1278 = vmatpush2.bf16.msra.mxu0 0
      %1279 = vmatprep.subr.bf16.mxu0 0
      %1280 = vmatpush2.bf16.msra.mxu0 0
      %1281 = vmatprep.subr.bf16.mxu0 0
      %1282 = vmatpush2.bf16.msra.mxu0 0
      %1283 = vmatprep.subr.bf16.mxu0 0
      %1284 = vmatpush2.bf16.msra.mxu0 0
      %1285 = vmatprep.subr.bf16.mxu0 0
      %1286 = vmatpush2.bf16.msra.mxu0 0
      %1287 = vmatprep.subr.bf16.mxu0 0
      %1288 = vmatpush2.bf16.msra.mxu0 0
      %1289 = vmatprep.mubr.bf16.mxu0 0
      %1290 = vmatmul.mubr.bf16.gmra.mxu0 %v363
      %v1291 = vpop.f32.mrf.mxu0
      %v1292 = vadd.f32 %v1251, %v1291
      %v1293 = vpop.f32.mrf.mxu0
      %v1294 = vadd.f32 %v1253, %v1293
      %v1295 = vpop.f32.mrf.mxu0
      %v1296 = vpop.f32.mrf.mxu0
      %1297 = vdwg.mxu0
      %vm1298 = vcmask 1043456
      %v1299 = vsel %vm1298, %v1292, 0.0
      %v1300 = vrot.slane %v1299, 4
      %v1301 = vadd.f32 %v1299, %v1300
      %v1302 = vrot.slane %v1301, 2
      %v1303 = vadd.f32 %v1301, %v1302
      %v1304 = vrot.slane %v1303, 1
      %v1305 = vadd.f32 %v1303, %v1304
      %v1306 = vsel %vm1298, %v1294, 0.0
      %v1307 = vrot.slane %v1306, 4
      %v1308 = vadd.f32 %v1306, %v1307
      %v1309 = vrot.slane %v1308, 2
      %v1310 = vadd.f32 %v1308, %v1309
      %v1311 = vrot.slane %v1310, 1
      %v1312 = vadd.f32 %v1310, %v1311
      %v1313 = vmul.f32 %v1305, 0.25
      %v1314 = vmul.f32 %v1312, 0.25
      %v1315 = vsub.f32 %v1292, %v1313
      %v1316 = vsub.f32 %v1294, %v1314
      %v1317 = vmul.f32 %v1315, %v1315
      %v1318 = vmul.f32 %v1316, %v1316
      %v1319 = vsel %vm1298, %v1317, 0.0
      %v1320 = vrot.slane %v1319, 4
      %v1321 = vadd.f32 %v1319, %v1320
      %v1322 = vrot.slane %v1321, 2
      %v1323 = vadd.f32 %v1321, %v1322
      %v1324 = vrot.slane %v1323, 1
      %v1325 = vadd.f32 %v1323, %v1324
      %v1326 = vsel %vm1298, %v1318, 0.0
      %v1327 = vrot.slane %v1326, 4
      %v1328 = vadd.f32 %v1326, %v1327
      %v1329 = vrot.slane %v1328, 2
      %v1330 = vadd.f32 %v1328, %v1329
      %v1331 = vrot.slane %v1330, 1
      %v1332 = vadd.f32 %v1330, %v1331
      %v1333 = vmul.f32 %v1325, 0.25
      %v1334 = vmul.f32 %v1332, 0.25
      %v1335 = vadd.f32 %v1333, 1e-05
      %v1336 = vadd.f32 %v1334, 1e-05
      %v1337 = vrsqrt.pop %v1335
      %v1338 = vrsqrt.pop %v1336
      %v1339 = vmul.f32 %v1315, %v1337
      %v1340 = vmul.f32 %v1316, %v1338
      %s1341 = sld [smem:[#allocation2]]
      %vm1342 = vcmp.ge.f32.partialorder %v1339, 0.0
      %vm1343 = vcmp.ge.f32.partialorder %v1340, 0.0
      %v1344 = vstv %s1341
      %v1345 = vmul.f32 %v1339, %v1344
      %v1346 = vmul.f32 %v1340, %v1344
      %v1347 = vsel %vm1342, %v1339, %v1345
      %v1348 = vsel %vm1343, %v1340, %v1346
      %v1349 = vpack.c.bf16 %v1347, %v1347
      %v1350 = vpack.c.bf16 %v1348, %v1348
      %v1353 = vcombine.low %v1349, %v1350
      %v1355 = vunpack.c.l.s4 1983009808
      %v1356 = vunpack.c.0.s8 %v1355
      %v1357 = vlaneseq
      %v1358 = vshrl.u32 %v1357, 7
      %v1359 = vsub.s32 %v1356, %v1358
      %v1360 = vrot.slane %v1353, %v1359
      %1362 = vst [vmem:[%s171] sm:$0xf] %v1360
      %p1363 = scmp.lt.s32.totalorder %s15, 1
      %s1364 = scalar_select %p1363, %s15, 1
      %s1365 = smul.addr %s1364, 2
      %s1366 = smul.addr %s1365, 2
      %s1367 = scalar_lea.vmem %s3, %s1366
      // Predicated region
      $region33: #{unet_monai_forward.13} parent=31 // pred_check
        %p1368 = pneg %p101
      $region34: #{unet_monai_forward.13} parent=31 // pred_check_branch
        %1370 = sbr.rel (%p1368) target = $region36
      $region35: #{unet_monai_forward.13} parent=31 // pred_region
        _
      $region36: #{unet_monai_forward.13} parent=31 // pred_fallthru
        _
    $region32: #{unet_monai_forward.13} parent=5 // pred_fallthru
      _
    %p1371 = scmp.le.s32.totalorder 2, %s10
    // Predicated region
    $region37: #{unet_monai_forward.13} parent=5 // pred_check
      %p1372 = pneg %p1371
    $region38: #{unet_monai_forward.13} parent=5 // pred_check_branch
      %1374 = sbr.rel (%p1372) target = $region40
    $region39: #{unet_monai_forward.13} parent=5 // pred_region
      %s1375 = ssub.s32 %s10, 2
      // Predicated region
      $region41: #{unet_monai_forward.13} parent=39 // pred_check
        %p1376 = pneg %p107
      $region42: #{unet_monai_forward.13} parent=39 // pred_check_branch
        %1378 = sbr.rel (%p1376) target = $region44
      $region43: #{unet_monai_forward.13} parent=39 // pred_region
        %p1379 = scmp.lt.s32.totalorder %s16, 1
        %s1380 = scalar_select %p1379, %s16, 1
        %s1381 = smul.addr %s1380, 2
        %s1382 = smul.addr %s1381, 2
        %s1383 = scalar_lea.vmem %s3, %s1382
      $region44: #{unet_monai_forward.13} parent=39 // pred_fallthru
        _
    $region40: #{unet_monai_forward.13} parent=5 // pred_fallthru
      _
  $region6: #{unet_monai_forward.13} parent=0 // loop_footer
    %s14 = sadd.s32 1, %s10
  $region7: #{unet_monai_forward.13} parent=0 // loop_footer_branch
    %9 = sbr.rel target = $region3
  $region8: #{unet_monai_forward.13} parent=0 // loop_exit
    _

// kernel: unet_monai_forward.14
$region0: #{unet_monai_forward.14}
  #allocation0 [shape = 'u32[]', space=smem, size = 0x4, offset = 0x4, fixed_abs, tag = 'smem constant byte address 0x4 - core index']
  #allocation1 [shape = 'u32[144,128]{1,0:T(1,128)}', space=vmem, size = 0x12000, scoped, tag = 'internal scratch']
  #allocation2 [shape = 'f32[1]{0:T(128)S(6)}', space=smem, size = 0x200, scoped, tag = 'scoped memory for unet_monai_forward.14']
  %s0 = inlined_call_operand.vmem [shape: bf16[2,4,512], index: 0, kind: input, shape index: {}]
  %s1 = inlined_call_operand.vmem [shape: bf16[2,4,1024], index: 1, kind: input, shape index: {}]
  %s2 = inlined_call_operand.vmem [shape: bf16[512,256], index: 2, kind: input, shape index: {}]
  %s3 = inlined_call_operand.vmem [shape: bf16[1024,256], index: 3, kind: input, shape index: {}]
  %s4 = inlined_call_operand.vmem [shape: f32[256,256], index: 4, kind: input, shape index: {}]
  %s5 = inlined_call_operand.<no memory space> [shape: f32[1], index: 5, kind: input, shape index: {}]
  %s6 = inlined_call_operand.vmem [shape: bf16[2,4,256], index: 6, kind: output, shape index: {}]
  %s7 = sld [smem:[#allocation0]]
  $region57: #{unet_monai_forward.14} parent=0
    _
  %s9 = ssub.s32 1, %s7
  %s10 = scalar_select 0, %s9, %s7
  %11 = sst [smem:[#allocation2]] %s5
  loop: start=0, step=1, limit=4
  $region2: #{unet_monai_forward.14} parent=0 // loop_pre_header
    _
  $region3: #{unet_monai_forward.14} parent=0 // loop_header
    %s13 = sphi 0, %s17
    %p14 = scmp.ge.s32.totalorder %s13, 4
    %s23 = sphi 0, %s25
    %s26 = sphi 0, %s23
    %s27 = sphi 0, %s26
    %s43 = sphi 0, %s27
    %s49 = sphi 0, %s51
    %s52 = sphi 0, %s49
    %s53 = sphi 0, %s52
    %s69 = sphi 0, %s53
    %s73 = sphi 0, %s73
    %s75 = sphi 0, %s73
    %s76 = sphi 0, %s75
    %s90 = sphi 0, %s76
    %s94 = sphi 0, %s94
    %s96 = sphi 0, %s94
    %s97 = sphi 0, %s96
    %s111 = sphi 0, %s97
    %s115 = sphi 0, %s115
    %s117 = sphi 0, %s115
    %s118 = sphi 0, %s117
    %s132 = sphi 0, %s118
    %s136 = sphi 0, %s136
    %s138 = sphi 0, %s136
    %s139 = sphi 0, %s138
    %s153 = sphi 0, %s139
    %s159 = sphi 0, %s161
    %s162 = sphi 0, %s159
    %s163 = sphi 0, %s162
    %s179 = sphi 0, %s163
  $region4: #{unet_monai_forward.14} parent=0 // loop_header_branch
    %16 = sbr.rel (%p14) target = $region8
  $region5: #{unet_monai_forward.14} parent=0 // loop_body
    %s18 = ssub.s32 %s13, 1
    %s19 = ssub.s32 %s13, 2
    %s20 = sadd.s32 %s13, 1
    %s21 = ssub.s32 %s13, %s20
    %p22 = scmp.eq.s32.totalorder %s21, 0
    %s24 = sadd.s32 %s23, 1
    %s25 = scalar_select %p22, %s23, %s24
    %p28 = pneg %p22
    %p29 = scmp.eq.s32.totalorder %s13, 1
    %p30 = por %p28, %p29
    %p31 = scmp.ne.s32.totalorder %s23, %s26
    %p32 = scmp.eq.s32.totalorder %s13, 0
    %p33 = por %p31, %p32
    %p34 = scmp.ne.s32.totalorder %s23, %s26
    %p35 = scmp.eq.s32.totalorder %s18, 1
    %p36 = por %p34, %p35
    %p37 = scmp.ne.s32.totalorder %s26, %s27
    %p38 = scmp.eq.s32.totalorder %s18, 0
    %p39 = por %p37, %p38
    %p40 = scmp.ne.s32.totalorder %s26, %s27
    %p41 = scmp.eq.s32.totalorder %s19, 1
    %p42 = por %p40, %p41
    %p44 = scmp.ne.s32.totalorder %s27, %s43
    %p45 = scmp.eq.s32.totalorder %s19, 0
    %p46 = por %p44, %p45
    %s47 = ssub.s32 %s13, %s20
    %p48 = scmp.eq.s32.totalorder %s47, 0
    %s50 = sadd.s32 %s49, 1
    %s51 = scalar_select %p48, %s49, %s50
    %p54 = pneg %p48
    %p55 = scmp.eq.s32.totalorder %s13, 1
    %p56 = por %p54, %p55
    %p57 = scmp.ne.s32.totalorder %s49, %s52
    %p58 = scmp.eq.s32.totalorder %s13, 0
    %p59 = por %p57, %p58
    %p60 = scmp.ne.s32.totalorder %s49, %s52
    %p61 = scmp.eq.s32.totalorder %s18, 1
    %p62 = por %p60, %p61
    %p63 = scmp.ne.s32.totalorder %s52, %s53
    %p64 = scmp.eq.s32.totalorder %s18, 0
    %p65 = por %p63, %p64
    %p66 = scmp.ne.s32.totalorder %s52, %s53
    %p67 = scmp.eq.s32.totalorder %s19, 1
    %p68 = por %p66, %p67
    %p70 = scmp.ne.s32.totalorder %s53, %s69
    %p71 = scmp.eq.s32.totalorder %s19, 0
    %p72 = por %p70, %p71
    %s74 = sadd.s32 %s73, 1
    %p77 = scmp.eq.s32.totalorder %s13, 1
    %p78 = scmp.ne.s32.totalorder %s73, %s75
    %p79 = scmp.eq.s32.totalorder %s13, 0
    %p80 = por %p78, %p79
    %p81 = scmp.ne.s32.totalorder %s73, %s75
    %p82 = scmp.eq.s32.totalorder %s18, 1
    %p83 = por %p81, %p82
    %p84 = scmp.ne.s32.totalorder %s75, %s76
    %p85 = scmp.eq.s32.totalorder %s18, 0
    %p86 = por %p84, %p85
    %p87 = scmp.ne.s32.totalorder %s75, %s76
    %p88 = scmp.eq.s32.totalorder %s19, 1
    %p89 = por %p87, %p88
    %p91 = scmp.ne.s32.totalorder %s76, %s90
    %p92 = scmp.eq.s32.totalorder %s19, 0
    %p93 = por %p91, %p92
    %s95 = sadd.s32 %s94, 1
    %p98 = scmp.eq.s32.totalorder %s13, 1
    %p99 = scmp.ne.s32.totalorder %s94, %s96
    %p100 = scmp.eq.s32.totalorder %s13, 0
    %p101 = por %p99, %p100
    %p102 = scmp.ne.s32.totalorder %s94, %s96
    %p103 = scmp.eq.s32.totalorder %s18, 1
    %p104 = por %p102, %p103
    %p105 = scmp.ne.s32.totalorder %s96, %s97
    %p106 = scmp.eq.s32.totalorder %s18, 0
    %p107 = por %p105, %p106
    %p108 = scmp.ne.s32.totalorder %s96, %s97
    %p109 = scmp.eq.s32.totalorder %s19, 1
    %p110 = por %p108, %p109
    %p112 = scmp.ne.s32.totalorder %s97, %s111
    %p113 = scmp.eq.s32.totalorder %s19, 0
    %p114 = por %p112, %p113
    %s116 = sadd.s32 %s115, 1
    %p119 = scmp.eq.s32.totalorder %s13, 1
    %p120 = scmp.ne.s32.totalorder %s115, %s117
    %p121 = scmp.eq.s32.totalorder %s13, 0
    %p122 = por %p120, %p121
    %p123 = scmp.ne.s32.totalorder %s115, %s117
    %p124 = scmp.eq.s32.totalorder %s18, 1
    %p125 = por %p123, %p124
    %p126 = scmp.ne.s32.totalorder %s117, %s118
    %p127 = scmp.eq.s32.totalorder %s18, 0
    %p128 = por %p126, %p127
    %p129 = scmp.ne.s32.totalorder %s117, %s118
    %p130 = scmp.eq.s32.totalorder %s19, 1
    %p131 = por %p129, %p130
    %p133 = scmp.ne.s32.totalorder %s118, %s132
    %p134 = scmp.eq.s32.totalorder %s19, 0
    %p135 = por %p133, %p134
    %s137 = sadd.s32 %s136, 1
    %p140 = scmp.eq.s32.totalorder %s13, 1
    %p141 = scmp.ne.s32.totalorder %s136, %s138
    %p142 = scmp.eq.s32.totalorder %s13, 0
    %p143 = por %p141, %p142
    %p144 = scmp.ne.s32.totalorder %s136, %s138
    %p145 = scmp.eq.s32.totalorder %s18, 1
    %p146 = por %p144, %p145
    %p147 = scmp.ne.s32.totalorder %s138, %s139
    %p148 = scmp.eq.s32.totalorder %s18, 0
    %p149 = por %p147, %p148
    %p150 = scmp.ne.s32.totalorder %s138, %s139
    %p151 = scmp.eq.s32.totalorder %s19, 1
    %p152 = por %p150, %p151
    %p154 = scmp.ne.s32.totalorder %s139, %s153
    %p155 = scmp.eq.s32.totalorder %s19, 0
    %p156 = por %p154, %p155
    %s157 = ssub.s32 %s13, %s20
    %p158 = scmp.eq.s32.totalorder %s157, 0
    %s160 = sadd.s32 %s159, 1
    %s161 = scalar_select %p158, %s159, %s160
    %p164 = pneg %p158
    %p165 = scmp.eq.s32.totalorder %s13, 1
    %p166 = por %p164, %p165
    %p167 = scmp.ne.s32.totalorder %s159, %s162
    %p168 = scmp.eq.s32.totalorder %s13, 0
    %p169 = por %p167, %p168
    %p170 = scmp.ne.s32.totalorder %s159, %s162
    %p171 = scmp.eq.s32.totalorder %s18, 1
    %p172 = por %p170, %p171
    %p173 = scmp.ne.s32.totalorder %s162, %s163
    %p174 = scmp.eq.s32.totalorder %s18, 0
    %p175 = por %p173, %p174
    %p176 = scmp.ne.s32.totalorder %s162, %s163
    %p177 = scmp.eq.s32.totalorder %s19, 1
    %p178 = por %p176, %p177
    %p180 = scmp.ne.s32.totalorder %s163, %s179
    %p181 = scmp.eq.s32.totalorder %s19, 0
    %p182 = por %p180, %p181
    %p183 = scmp.le.s32.totalorder 1, %s13
    %p184 = scmp.lt.s32.totalorder %s13, 3
    %p185 = pnand %p183, %p184
    %p186 = pneg %p185
    // Predicated region
    $region9: #{unet_monai_forward.14} parent=5 // pred_check
      _
    $region10: #{unet_monai_forward.14} parent=5 // pred_check_branch
      %188 = sbr.rel (%p185) target = $region12
    $region11: #{unet_monai_forward.14} parent=5 // pred_region
      %s189 = ssub.s32 %s13, 1
      // Predicated region
      $region13: #{unet_monai_forward.14} parent=11 // pred_check
        %p190 = pneg %p86
      $region14: #{unet_monai_forward.14} parent=11 // pred_check_branch
        %192 = sbr.rel (%p190) target = $region16
      $region15: #{unet_monai_forward.14} parent=11 // pred_region
        _
      $region16: #{unet_monai_forward.14} parent=11 // pred_fallthru
        _
      // Predicated region
      $region17: #{unet_monai_forward.14} parent=11 // pred_check
        %p193 = pneg %p107
      $region18: #{unet_monai_forward.14} parent=11 // pred_check_branch
        %195 = sbr.rel (%p193) target = $region20
      $region19: #{unet_monai_forward.14} parent=11 // pred_region
        _
      $region20: #{unet_monai_forward.14} parent=11 // pred_fallthru
        _
      // Predicated region
      $region21: #{unet_monai_forward.14} parent=11 // pred_check
        %p196 = pneg %p128
      $region22: #{unet_monai_forward.14} parent=11 // pred_check_branch
        %198 = sbr.rel (%p196) target = $region24
      $region23: #{unet_monai_forward.14} parent=11 // pred_region
        _
      $region24: #{unet_monai_forward.14} parent=11 // pred_fallthru
        _
      // Predicated region
      $region25: #{unet_monai_forward.14} parent=11 // pred_check
        %p199 = pneg %p149
      $region26: #{unet_monai_forward.14} parent=11 // pred_check_branch
        %201 = sbr.rel (%p199) target = $region28
      $region27: #{unet_monai_forward.14} parent=11 // pred_region
        _
      $region28: #{unet_monai_forward.14} parent=11 // pred_fallthru
        _
    $region12: #{unet_monai_forward.14} parent=5 // pred_fallthru
      _
    %p202 = scmp.lt.s32.totalorder %s13, 2
    // Predicated region
    $region29: #{unet_monai_forward.14} parent=5 // pred_check
      %p203 = pneg %p202
    $region30: #{unet_monai_forward.14} parent=5 // pred_check_branch
      %205 = sbr.rel (%p203) target = $region32
    $region31: #{unet_monai_forward.14} parent=5 // pred_region
      // Predicated region
      $region33: #{unet_monai_forward.14} parent=31 // pred_check
        %p206 = pneg %p33
      $region34: #{unet_monai_forward.14} parent=31 // pred_check_branch
        %208 = sbr.rel (%p206) target = $region36
      $region35: #{unet_monai_forward.14} parent=31 // pred_region
        %p209 = scmp.lt.s32.totalorder %s13, 1
        %s210 = scalar_select %p209, %s13, 1
        %s211 = smul.addr %s210, 4
        %s212 = smul.addr %s211, 2
        %s213 = scalar_lea.vmem %s0, %s212
      $region36: #{unet_monai_forward.14} parent=31 // pred_fallthru
        _
      // Predicated region
      $region37: #{unet_monai_forward.14} parent=31 // pred_check
        %p214 = pneg %p59
      $region38: #{unet_monai_forward.14} parent=31 // pred_check_branch
        %216 = sbr.rel (%p214) target = $region40
      $region39: #{unet_monai_forward.14} parent=31 // pred_region
        %p217 = scmp.lt.s32.totalorder %s13, 1
        %s218 = scalar_select %p217, %s13, 1
        %s219 = smul.addr %s218, 8
        %s220 = smul.addr %s219, 2
        %s221 = scalar_lea.vmem %s1, %s220
      $region40: #{unet_monai_forward.14} parent=31 // pred_fallthru
        _
    $region32: #{unet_monai_forward.14} parent=5 // pred_fallthru
      _
    %p222 = scmp.le.s32.totalorder 1, %s13
    %p223 = scmp.lt.s32.totalorder %s13, 3
    %p224 = pnand %p222, %p223
    %p225 = pneg %p224
    // Predicated region
    $region41: #{unet_monai_forward.14} parent=5 // pred_check
      _
    $region42: #{unet_monai_forward.14} parent=5 // pred_check_branch
      %227 = sbr.rel (%p224) target = $region44
    $region43: #{unet_monai_forward.14} parent=5 // pred_region
      %s228 = ssub.s32 %s13, 1
      %p229 = scmp.lt.s32.totalorder %s18, 1
      %s230 = scalar_select %p229, %s18, 1
      %s231 = smul.addr %s230, 4
      %s232 = smul.addr %s231, 2
      %s233 = scalar_lea.vmem %s0, %s232
      %p234 = pneg %p39
      %p235 = pneg %p36
      %p236 = scmp.lt.s32.totalorder %s18, 1
      %s237 = scalar_select %p236, %s18, 1
      %s238 = smul.addr %s237, 8
      %s239 = smul.addr %s238, 2
      %s240 = scalar_lea.vmem %s1, %s239
      %p241 = pneg %p65
      %p242 = pneg %p62
      %p243 = pneg %p86
      %p244 = pneg %p83
      %p245 = pneg %p107
      %p246 = pneg %p104
      %p247 = pneg %p128
      %p248 = pneg %p125
      %p249 = pneg %p149
      %p250 = pneg %p146
      %p251 = pneg %p175
      %p252 = pneg %p172
      %p253 = scmp.lt.s32.totalorder %s18, 1
      %s254 = scalar_select %p253, %s18, 1
      %s255 = smul.addr %s254, 2
      %s256 = smul.addr %s255, 2
      %s257 = scalar_lea.vmem %s6, %s256
      %p258 = scmp.lt.s32.totalorder %s18, 1
      %s259 = scalar_select %p258, %s18, 1
      %s260 = smul.addr %s259, 4
      %s261 = smul.addr %s260, 2
      %s262 = scalar_lea.vmem %s0, %s261
      %p263 = scmp.lt.s32.totalorder %s18, 1
      %s264 = scalar_select %p263, %s18, 1
      %s265 = smul.addr %s264, 8
      %s266 = smul.addr %s265, 2
      %s267 = scalar_lea.vmem %s1, %s266
      %p268 = scmp.lt.s32.totalorder %s18, 1
      %s269 = scalar_select %p268, %s18, 1
      %s270 = smul.addr %s269, 2
      %s271 = smul.addr %s270, 2
      %s272 = scalar_lea.vmem %s6, %s271
      %v273 = vld [vmem:[%s262] sm:$0xff]
      %v274 = vld [vmem:[%s2] sm:$0xff]
      %v275 = vld [vmem:[%s2 + $0x8] sm:$0xff]
      %v276 = vld [vmem:[%s2 + $0x10] sm:$0xff]
      %v277 = vld [vmem:[%s2 + $0x18] sm:$0xff]
      %v278 = vld [vmem:[%s2 + $0x20] sm:$0xff]
      %v279 = vld [vmem:[%s2 + $0x28] sm:$0xff]
      %v280 = vld [vmem:[%s2 + $0x30] sm:$0xff]
      %v281 = vld [vmem:[%s2 + $0x38] sm:$0xff]
      %v282 = vld [vmem:[%s2 + $0x40] sm:$0xff]
      %v283 = vld [vmem:[%s2 + $0x48] sm:$0xff]
      %v284 = vld [vmem:[%s2 + $0x50] sm:$0xff]
      %v285 = vld [vmem:[%s2 + $0x58] sm:$0xff]
      %v286 = vld [vmem:[%s2 + $0x60] sm:$0xff]
      %v287 = vld [vmem:[%s2 + $0x68] sm:$0xff]
      %v288 = vld [vmem:[%s2 + $0x70] sm:$0xff]
      %v289 = vld [vmem:[%s2 + $0x78] sm:$0xff]
      %v290 = vld [vmem:[%s2 + $0x80] sm:$0xff]
      %v291 = vld [vmem:[%s2 + $0x88] sm:$0xff]
      %v292 = vld [vmem:[%s2 + $0x90] sm:$0xff]
      %v293 = vld [vmem:[%s2 + $0x98] sm:$0xff]
      %v294 = vld [vmem:[%s2 + $0xa0] sm:$0xff]
      %v295 = vld [vmem:[%s2 + $0xa8] sm:$0xff]
      %v296 = vld [vmem:[%s2 + $0xb0] sm:$0xff]
      %v297 = vld [vmem:[%s2 + $0xb8] sm:$0xff]
      %v298 = vld [vmem:[%s2 + $0xc0] sm:$0xff]
      %v299 = vld [vmem:[%s2 + $0xc8] sm:$0xff]
      %v300 = vld [vmem:[%s2 + $0xd0] sm:$0xff]
      %v301 = vld [vmem:[%s2 + $0xd8] sm:$0xff]
      %v302 = vld [vmem:[%s2 + $0xe0] sm:$0xff]
      %v303 = vld [vmem:[%s2 + $0xe8] sm:$0xff]
      %v304 = vld [vmem:[%s2 + $0xf0] sm:$0xff]
      %v305 = vld [vmem:[%s2 + $0xf8] sm:$0xff]
      %v306 = vld [vmem:[%s2 + $0x100] sm:$0xff]
      %v307 = vld [vmem:[%s2 + $0x108] sm:$0xff]
      %v308 = vld [vmem:[%s2 + $0x110] sm:$0xff]
      %v309 = vld [vmem:[%s2 + $0x118] sm:$0xff]
      %v310 = vld [vmem:[%s2 + $0x120] sm:$0xff]
      %v311 = vld [vmem:[%s2 + $0x128] sm:$0xff]
      %v312 = vld [vmem:[%s2 + $0x130] sm:$0xff]
      %v313 = vld [vmem:[%s2 + $0x138] sm:$0xff]
      %v314 = vld [vmem:[%s2 + $0x140] sm:$0xff]
      %v315 = vld [vmem:[%s2 + $0x148] sm:$0xff]
      %v316 = vld [vmem:[%s2 + $0x150] sm:$0xff]
      %v317 = vld [vmem:[%s2 + $0x158] sm:$0xff]
      %v318 = vld [vmem:[%s2 + $0x160] sm:$0xff]
      %v319 = vld [vmem:[%s2 + $0x168] sm:$0xff]
      %v320 = vld [vmem:[%s2 + $0x170] sm:$0xff]
      %v321 = vld [vmem:[%s2 + $0x178] sm:$0xff]
      %v322 = vld [vmem:[%s2 + $0x180] sm:$0xff]
      %v323 = vld [vmem:[%s2 + $0x188] sm:$0xff]
      %v324 = vld [vmem:[%s2 + $0x190] sm:$0xff]
      %v325 = vld [vmem:[%s2 + $0x198] sm:$0xff]
      %v326 = vld [vmem:[%s2 + $0x1a0] sm:$0xff]
      %v327 = vld [vmem:[%s2 + $0x1a8] sm:$0xff]
      %v328 = vld [vmem:[%s2 + $0x1b0] sm:$0xff]
      %v329 = vld [vmem:[%s2 + $0x1b8] sm:$0xff]
      %v330 = vld [vmem:[%s2 + $0x1c0] sm:$0xff]
      %v331 = vld [vmem:[%s2 + $0x1c8] sm:$0xff]
      %v332 = vld [vmem:[%s2 + $0x1d0] sm:$0xff]
      %v333 = vld [vmem:[%s2 + $0x1d8] sm:$0xff]
      %v334 = vld [vmem:[%s2 + $0x1e0] sm:$0xff]
      %v335 = vld [vmem:[%s2 + $0x1e8] sm:$0xff]
      %v336 = vld [vmem:[%s2 + $0x1f0] sm:$0xff]
      %v337 = vld [vmem:[%s2 + $0x1f8] sm:$0xff]
      %v338 = vld [vmem:[%s267] sm:$0xff]
      %v339 = vld [vmem:[%s267 + $0x8] sm:$0xff]
      %v340 = vld [vmem:[%s3] sm:$0xff]
      %v341 = vld [vmem:[%s3 + $0x8] sm:$0xff]
      %v342 = vld [vmem:[%s3 + $0x10] sm:$0xff]
      %v343 = vld [vmem:[%s3 + $0x18] sm:$0xff]
      %v344 = vld [vmem:[%s3 + $0x20] sm:$0xff]
      %v345 = vld [vmem:[%s3 + $0x28] sm:$0xff]
      %v346 = vld [vmem:[%s3 + $0x30] sm:$0xff]
      %v347 = vld [vmem:[%s3 + $0x38] sm:$0xff]
      %v348 = vld [vmem:[%s3 + $0x40] sm:$0xff]
      %v349 = vld [vmem:[%s3 + $0x48] sm:$0xff]
      %v350 = vld [vmem:[%s3 + $0x50] sm:$0xff]
      %v351 = vld [vmem:[%s3 + $0x58] sm:$0xff]
      %v352 = vld [vmem:[%s3 + $0x60] sm:$0xff]
      %v353 = vld [vmem:[%s3 + $0x68] sm:$0xff]
      %v354 = vld [vmem:[%s3 + $0x70] sm:$0xff]
      %v355 = vld [vmem:[%s3 + $0x78] sm:$0xff]
      %v356 = vld [vmem:[%s3 + $0x80] sm:$0xff]
      %v357 = vld [vmem:[%s3 + $0x88] sm:$0xff]
      %v358 = vld [vmem:[%s3 + $0x90] sm:$0xff]
      %v359 = vld [vmem:[%s3 + $0x98] sm:$0xff]
      %v360 = vld [vmem:[%s3 + $0xa0] sm:$0xff]
      %v361 = vld [vmem:[%s3 + $0xa8] sm:$0xff]
      %v362 = vld [vmem:[%s3 + $0xb0] sm:$0xff]
      %v363 = vld [vmem:[%s3 + $0xb8] sm:$0xff]
      %v364 = vld [vmem:[%s3 + $0xc0] sm:$0xff]
      %v365 = vld [vmem:[%s3 + $0xc8] sm:$0xff]
      %v366 = vld [vmem:[%s3 + $0xd0] sm:$0xff]
      %v367 = vld [vmem:[%s3 + $0xd8] sm:$0xff]
      %v368 = vld [vmem:[%s3 + $0xe0] sm:$0xff]
      %v369 = vld [vmem:[%s3 + $0xe8] sm:$0xff]
      %v370 = vld [vmem:[%s3 + $0xf0] sm:$0xff]
      %v371 = vld [vmem:[%s3 + $0xf8] sm:$0xff]
      %v372 = vld [vmem:[%s3 + $0x100] sm:$0xff]
      %v373 = vld [vmem:[%s3 + $0x108] sm:$0xff]
      %v374 = vld [vmem:[%s3 + $0x110] sm:$0xff]
      %v375 = vld [vmem:[%s3 + $0x118] sm:$0xff]
      %v376 = vld [vmem:[%s3 + $0x120] sm:$0xff]
      %v377 = vld [vmem:[%s3 + $0x128] sm:$0xff]
      %v378 = vld [vmem:[%s3 + $0x130] sm:$0xff]
      %v379 = vld [vmem:[%s3 + $0x138] sm:$0xff]
      %v380 = vld [vmem:[%s3 + $0x140] sm:$0xff]
      %v381 = vld [vmem:[%s3 + $0x148] sm:$0xff]
      %v382 = vld [vmem:[%s3 + $0x150] sm:$0xff]
      %v383 = vld [vmem:[%s3 + $0x158] sm:$0xff]
      %v384 = vld [vmem:[%s3 + $0x160] sm:$0xff]
      %v385 = vld [vmem:[%s3 + $0x168] sm:$0xff]
      %v386 = vld [vmem:[%s3 + $0x170] sm:$0xff]
      %v387 = vld [vmem:[%s3 + $0x178] sm:$0xff]
      %v388 = vld [vmem:[%s3 + $0x180] sm:$0xff]
      %v389 = vld [vmem:[%s3 + $0x188] sm:$0xff]
      %v390 = vld [vmem:[%s3 + $0x190] sm:$0xff]
      %v391 = vld [vmem:[%s3 + $0x198] sm:$0xff]
      %v392 = vld [vmem:[%s3 + $0x1a0] sm:$0xff]
      %v393 = vld [vmem:[%s3 + $0x1a8] sm:$0xff]
      %v394 = vld [vmem:[%s3 + $0x1b0] sm:$0xff]
      %v395 = vld [vmem:[%s3 + $0x1b8] sm:$0xff]
      %v396 = vld [vmem:[%s3 + $0x1c0] sm:$0xff]
      %v397 = vld [vmem:[%s3 + $0x1c8] sm:$0xff]
      %v398 = vld [vmem:[%s3 + $0x1d0] sm:$0xff]
      %v399 = vld [vmem:[%s3 + $0x1d8] sm:$0xff]
      %v400 = vld [vmem:[%s3 + $0x1e0] sm:$0xff]
      %v401 = vld [vmem:[%s3 + $0x1e8] sm:$0xff]
      %v402 = vld [vmem:[%s3 + $0x1f0] sm:$0xff]
      %v403 = vld [vmem:[%s3 + $0x1f8] sm:$0xff]
      %v404 = vld [vmem:[%s3 + $0x200] sm:$0xff]
      %v405 = vld [vmem:[%s3 + $0x208] sm:$0xff]
      %v406 = vld [vmem:[%s3 + $0x210] sm:$0xff]
      %v407 = vld [vmem:[%s3 + $0x218] sm:$0xff]
      %v408 = vld [vmem:[%s3 + $0x220] sm:$0xff]
      %v409 = vld [vmem:[%s3 + $0x228] sm:$0xff]
      %v410 = vld [vmem:[%s3 + $0x230] sm:$0xff]
      %v411 = vld [vmem:[%s3 + $0x238] sm:$0xff]
      %v412 = vld [vmem:[%s3 + $0x240] sm:$0xff]
      %v413 = vld [vmem:[%s3 + $0x248] sm:$0xff]
      %v414 = vld [vmem:[%s3 + $0x250] sm:$0xff]
      %v415 = vld [vmem:[%s3 + $0x258] sm:$0xff]
      %v416 = vld [vmem:[%s3 + $0x260] sm:$0xff]
      %v417 = vld [vmem:[%s3 + $0x268] sm:$0xff]
      %v418 = vld [vmem:[%s3 + $0x270] sm:$0xff]
      %v419 = vld [vmem:[%s3 + $0x278] sm:$0xff]
      %v420 = vld [vmem:[%s3 + $0x280] sm:$0xff]
      %v421 = vld [vmem:[%s3 + $0x288] sm:$0xff]
      %v422 = vld [vmem:[%s3 + $0x290] sm:$0xff]
      %v423 = vld [vmem:[%s3 + $0x298] sm:$0xff]
      %v424 = vld [vmem:[%s3 + $0x2a0] sm:$0xff]
      %v425 = vld [vmem:[%s3 + $0x2a8] sm:$0xff]
      %v426 = vld [vmem:[%s3 + $0x2b0] sm:$0xff]
      %v427 = vld [vmem:[%s3 + $0x2b8] sm:$0xff]
      %v428 = vld [vmem:[%s3 + $0x2c0] sm:$0xff]
      %v429 = vld [vmem:[%s3 + $0x2c8] sm:$0xff]
      %v430 = vld [vmem:[%s3 + $0x2d0] sm:$0xff]
      %v431 = vld [vmem:[%s3 + $0x2d8] sm:$0xff]
      %v432 = vld [vmem:[%s3 + $0x2e0] sm:$0xff]
      %v433 = vld [vmem:[%s3 + $0x2e8] sm:$0xff]
      %v434 = vld [vmem:[%s3 + $0x2f0] sm:$0xff]
      %v435 = vld [vmem:[%s3 + $0x2f8] sm:$0xff]
      %v436 = vld [vmem:[%s3 + $0x300] sm:$0xff]
      %v437 = vld [vmem:[%s3 + $0x308] sm:$0xff]
      %v438 = vld [vmem:[%s3 + $0x310] sm:$0xff]
      %v439 = vld [vmem:[%s3 + $0x318] sm:$0xff]
      %v440 = vld [vmem:[%s3 + $0x320] sm:$0xff]
      %v441 = vld [vmem:[%s3 + $0x328] sm:$0xff]
      %v442 = vld [vmem:[%s3 + $0x330] sm:$0xff]
      %v443 = vld [vmem:[%s3 + $0x338] sm:$0xff]
      %v444 = vld [vmem:[%s3 + $0x340] sm:$0xff]
      %v445 = vld [vmem:[%s3 + $0x348] sm:$0xff]
      %v446 = vld [vmem:[%s3 + $0x350] sm:$0xff]
      %v447 = vld [vmem:[%s3 + $0x358] sm:$0xff]
      %v448 = vld [vmem:[%s3 + $0x360] sm:$0xff]
      %v449 = vld [vmem:[%s3 + $0x368] sm:$0xff]
      %v450 = vld [vmem:[%s3 + $0x370] sm:$0xff]
      %v451 = vld [vmem:[%s3 + $0x378] sm:$0xff]
      %v452 = vld [vmem:[%s3 + $0x380] sm:$0xff]
      %v453 = vld [vmem:[%s3 + $0x388] sm:$0xff]
      %v454 = vld [vmem:[%s3 + $0x390] sm:$0xff]
      %v455 = vld [vmem:[%s3 + $0x398] sm:$0xff]
      %v456 = vld [vmem:[%s3 + $0x3a0] sm:$0xff]
      %v457 = vld [vmem:[%s3 + $0x3a8] sm:$0xff]
      %v458 = vld [vmem:[%s3 + $0x3b0] sm:$0xff]
      %v459 = vld [vmem:[%s3 + $0x3b8] sm:$0xff]
      %v460 = vld [vmem:[%s3 + $0x3c0] sm:$0xff]
      %v461 = vld [vmem:[%s3 + $0x3c8] sm:$0xff]
      %v462 = vld [vmem:[%s3 + $0x3d0] sm:$0xff]
      %v463 = vld [vmem:[%s3 + $0x3d8] sm:$0xff]
      %v464 = vld [vmem:[%s3 + $0x3e0] sm:$0xff]
      %v465 = vld [vmem:[%s3 + $0x3e8] sm:$0xff]
      %v466 = vld [vmem:[%s3 + $0x3f0] sm:$0xff]
      %v467 = vld [vmem:[%s3 + $0x3f8] sm:$0xff]
      %v470 = vcombine.high %v338, %v338
      %v472 = vunpack.c.l.s4 1983009808
      %v473 = vunpack.c.0.s8 %v472
      %v474 = vlaneseq
      %v475 = vshrl.u32 %v474, 7
      %v476 = vsub.s32 %v473, %v475
      %v477 = vrot.slane %v338, %v476
      %v479 = vunpack.c.l.s4 1983009808
      %v480 = vunpack.c.0.s8 %v479
      %v481 = vlaneseq
      %v482 = vshrl.u32 %v481, 7
      %v483 = vsub.s32 %v480, %v482
      %v484 = vrot.slane %v470, %v483
      %v485 = vcombine.high %v477, %v477
      %v486 = vcombine.high %v484, %v484
      %v487 = vcombine.high %v339, %v339
      %v489 = vunpack.c.l.s4 1983009808
      %v490 = vunpack.c.0.s8 %v489
      %v491 = vlaneseq
      %v492 = vshrl.u32 %v491, 7
      %v493 = vsub.s32 %v490, %v492
      %v494 = vrot.slane %v339, %v493
      %v496 = vunpack.c.l.s4 1983009808
      %v497 = vunpack.c.0.s8 %v496
      %v498 = vlaneseq
      %v499 = vshrl.u32 %v498, 7
      %v500 = vsub.s32 %v497, %v499
      %v501 = vrot.slane %v487, %v500
      %v502 = vcombine.high %v494, %v494
      %v503 = vcombine.high %v501, %v501
      %v640 = vunpack.c.l.b16 %v340
      %v641 = vunpack.c.h.b16 %v340
      %v642 = vunpack.c.l.b16 %v341
      %v643 = vunpack.c.h.b16 %v341
      %v644 = vunpack.c.l.b16 %v342
      %v645 = vunpack.c.h.b16 %v342
      %v646 = vunpack.c.l.b16 %v343
      %v647 = vunpack.c.h.b16 %v343
      %v648 = vunpack.c.l.b16 %v344
      %v649 = vunpack.c.h.b16 %v344
      %v650 = vunpack.c.l.b16 %v345
      %v651 = vunpack.c.h.b16 %v345
      %v652 = vunpack.c.l.b16 %v346
      %v653 = vunpack.c.h.b16 %v346
      %v654 = vunpack.c.l.b16 %v347
      %v655 = vunpack.c.h.b16 %v347
      %v656 = vunpack.c.l.b16 %v348
      %v657 = vunpack.c.h.b16 %v348
      %v658 = vunpack.c.l.b16 %v349
      %v659 = vunpack.c.h.b16 %v349
      %v660 = vunpack.c.l.b16 %v350
      %v661 = vunpack.c.h.b16 %v350
      %v662 = vunpack.c.l.b16 %v351
      %v663 = vunpack.c.h.b16 %v351
      %v664 = vunpack.c.l.b16 %v352
      %v665 = vunpack.c.h.b16 %v352
      %v666 = vunpack.c.l.b16 %v353
      %v667 = vunpack.c.h.b16 %v353
      %v668 = vunpack.c.l.b16 %v354
      %v669 = vunpack.c.h.b16 %v354
      %v670 = vunpack.c.l.b16 %v355
      %v671 = vunpack.c.h.b16 %v355
      %v672 = vunpack.c.l.b16 %v356
      %v673 = vunpack.c.h.b16 %v356
      %v674 = vunpack.c.l.b16 %v357
      %v675 = vunpack.c.h.b16 %v357
      %v676 = vunpack.c.l.b16 %v358
      %v677 = vunpack.c.h.b16 %v358
      %v678 = vunpack.c.l.b16 %v359
      %v679 = vunpack.c.h.b16 %v359
      %v680 = vunpack.c.l.b16 %v360
      %v681 = vunpack.c.h.b16 %v360
      %v682 = vunpack.c.l.b16 %v361
      %v683 = vunpack.c.h.b16 %v361
      %v684 = vunpack.c.l.b16 %v362
      %v685 = vunpack.c.h.b16 %v362
      %v686 = vunpack.c.l.b16 %v363
      %v687 = vunpack.c.h.b16 %v363
      %v688 = vunpack.c.l.b16 %v364
      %v689 = vunpack.c.h.b16 %v364
      %v690 = vunpack.c.l.b16 %v365
      %v691 = vunpack.c.h.b16 %v365
      %v692 = vunpack.c.l.b16 %v366
      %v693 = vunpack.c.h.b16 %v366
      %v694 = vunpack.c.l.b16 %v367
      %v695 = vunpack.c.h.b16 %v367
      %v696 = vunpack.c.l.b16 %v368
      %v697 = vunpack.c.h.b16 %v368
      %v698 = vunpack.c.l.b16 %v369
      %v699 = vunpack.c.h.b16 %v369
      %v700 = vunpack.c.l.b16 %v370
      %v701 = vunpack.c.h.b16 %v370
      %v702 = vunpack.c.l.b16 %v371
      %v703 = vunpack.c.h.b16 %v371
      %v704 = vunpack.c.l.b16 %v372
      %v705 = vunpack.c.h.b16 %v372
      %v706 = vunpack.c.l.b16 %v373
      %v707 = vunpack.c.h.b16 %v373
      %v708 = vunpack.c.l.b16 %v374
      %v709 = vunpack.c.h.b16 %v374
      %v710 = vunpack.c.l.b16 %v375
      %v711 = vunpack.c.h.b16 %v375
      %v712 = vunpack.c.l.b16 %v376
      %v713 = vunpack.c.h.b16 %v376
      %v714 = vunpack.c.l.b16 %v377
      %v715 = vunpack.c.h.b16 %v377
      %v716 = vunpack.c.l.b16 %v378
      %v717 = vunpack.c.h.b16 %v378
      %v718 = vunpack.c.l.b16 %v379
      %v719 = vunpack.c.h.b16 %v379
      %v720 = vunpack.c.l.b16 %v380
      %v721 = vunpack.c.h.b16 %v380
      %v722 = vunpack.c.l.b16 %v381
      %v723 = vunpack.c.h.b16 %v381
      %v724 = vunpack.c.l.b16 %v382
      %v725 = vunpack.c.h.b16 %v382
      %v726 = vunpack.c.l.b16 %v383
      %v727 = vunpack.c.h.b16 %v383
      %v728 = vunpack.c.l.b16 %v384
      %v729 = vunpack.c.h.b16 %v384
      %v730 = vunpack.c.l.b16 %v385
      %v731 = vunpack.c.h.b16 %v385
      %v732 = vunpack.c.l.b16 %v386
      %v733 = vunpack.c.h.b16 %v386
      %v734 = vunpack.c.l.b16 %v387
      %v735 = vunpack.c.h.b16 %v387
      %v736 = vunpack.c.l.b16 %v388
      %v737 = vunpack.c.h.b16 %v388
      %v738 = vunpack.c.l.b16 %v389
      %v739 = vunpack.c.h.b16 %v389
      %v740 = vunpack.c.l.b16 %v390
      %v741 = vunpack.c.h.b16 %v390
      %v742 = vunpack.c.l.b16 %v391
      %v743 = vunpack.c.h.b16 %v391
      %v744 = vunpack.c.l.b16 %v392
      %v745 = vunpack.c.h.b16 %v392
      %v746 = vunpack.c.l.b16 %v393
      %v747 = vunpack.c.h.b16 %v393
      %v748 = vunpack.c.l.b16 %v394
      %v749 = vunpack.c.h.b16 %v394
      %v750 = vunpack.c.l.b16 %v395
      %v751 = vunpack.c.h.b16 %v395
      %v752 = vunpack.c.l.b16 %v396
      %v753 = vunpack.c.h.b16 %v396
      %v754 = vunpack.c.l.b16 %v397
      %v755 = vunpack.c.h.b16 %v397
      %v756 = vunpack.c.l.b16 %v398
      %v757 = vunpack.c.h.b16 %v398
      %v758 = vunpack.c.l.b16 %v399
      %v759 = vunpack.c.h.b16 %v399
      %v760 = vunpack.c.l.b16 %v400
      %v761 = vunpack.c.h.b16 %v400
      %v762 = vunpack.c.l.b16 %v401
      %v763 = vunpack.c.h.b16 %v401
      %v764 = vunpack.c.l.b16 %v402
      %v765 = vunpack.c.h.b16 %v402
      %v766 = vunpack.c.l.b16 %v403
      %v767 = vunpack.c.h.b16 %v403
      %v768 = vunpack.c.l.b16 %v404
      %v769 = vunpack.c.h.b16 %v404
      %v770 = vunpack.c.l.b16 %v405
      %v771 = vunpack.c.h.b16 %v405
      %v772 = vunpack.c.l.b16 %v406
      %v773 = vunpack.c.h.b16 %v406
      %v774 = vunpack.c.l.b16 %v407
      %v775 = vunpack.c.h.b16 %v407
      %v776 = vunpack.c.l.b16 %v408
      %v777 = vunpack.c.h.b16 %v408
      %v778 = vunpack.c.l.b16 %v409
      %v779 = vunpack.c.h.b16 %v409
      %v780 = vunpack.c.l.b16 %v410
      %v781 = vunpack.c.h.b16 %v410
      %v782 = vunpack.c.l.b16 %v411
      %v783 = vunpack.c.h.b16 %v411
      %v784 = vunpack.c.l.b16 %v412
      %v785 = vunpack.c.h.b16 %v412
      %v786 = vunpack.c.l.b16 %v413
      %v787 = vunpack.c.h.b16 %v413
      %v788 = vunpack.c.l.b16 %v414
      %v789 = vunpack.c.h.b16 %v414
      %v790 = vunpack.c.l.b16 %v415
      %v791 = vunpack.c.h.b16 %v415
      %v792 = vunpack.c.l.b16 %v416
      %v793 = vunpack.c.h.b16 %v416
      %v794 = vunpack.c.l.b16 %v417
      %v795 = vunpack.c.h.b16 %v417
      %v796 = vunpack.c.l.b16 %v418
      %v797 = vunpack.c.h.b16 %v418
      %v798 = vunpack.c.l.b16 %v419
      %v799 = vunpack.c.h.b16 %v419
      %v800 = vunpack.c.l.b16 %v420
      %v801 = vunpack.c.h.b16 %v420
      %v802 = vunpack.c.l.b16 %v421
      %v803 = vunpack.c.h.b16 %v421
      %v804 = vunpack.c.l.b16 %v422
      %v805 = vunpack.c.h.b16 %v422
      %v806 = vunpack.c.l.b16 %v423
      %v807 = vunpack.c.h.b16 %v423
      %v808 = vunpack.c.l.b16 %v424
      %v809 = vunpack.c.h.b16 %v424
      %v810 = vunpack.c.l.b16 %v425
      %v811 = vunpack.c.h.b16 %v425
      %v812 = vunpack.c.l.b16 %v426
      %v813 = vunpack.c.h.b16 %v426
      %v814 = vunpack.c.l.b16 %v427
      %v815 = vunpack.c.h.b16 %v427
      %v816 = vunpack.c.l.b16 %v428
      %v817 = vunpack.c.h.b16 %v428
      %v818 = vunpack.c.l.b16 %v429
      %v819 = vunpack.c.h.b16 %v429
      %v820 = vunpack.c.l.b16 %v430
      %v821 = vunpack.c.h.b16 %v430
      %v822 = vunpack.c.l.b16 %v431
      %v823 = vunpack.c.h.b16 %v431
      %v824 = vunpack.c.l.b16 %v432
      %v825 = vunpack.c.h.b16 %v432
      %v826 = vunpack.c.l.b16 %v433
      %v827 = vunpack.c.h.b16 %v433
      %v828 = vunpack.c.l.b16 %v434
      %v829 = vunpack.c.h.b16 %v434
      %v830 = vunpack.c.l.b16 %v435
      %v831 = vunpack.c.h.b16 %v435
      %v832 = vunpack.c.l.b16 %v436
      %v833 = vunpack.c.h.b16 %v436
      %v834 = vunpack.c.l.b16 %v437
      %v835 = vunpack.c.h.b16 %v437
      %v836 = vunpack.c.l.b16 %v438
      %v837 = vunpack.c.h.b16 %v438
      %v838 = vunpack.c.l.b16 %v439
      %v839 = vunpack.c.h.b16 %v439
      %v840 = vunpack.c.l.b16 %v440
      %v841 = vunpack.c.h.b16 %v440
      %v842 = vunpack.c.l.b16 %v441
      %v843 = vunpack.c.h.b16 %v441
      %v844 = vunpack.c.l.b16 %v442
      %v845 = vunpack.c.h.b16 %v442
      %v846 = vunpack.c.l.b16 %v443
      %v847 = vunpack.c.h.b16 %v443
      %v848 = vunpack.c.l.b16 %v444
      %v849 = vunpack.c.h.b16 %v444
      %v850 = vunpack.c.l.b16 %v445
      %v851 = vunpack.c.h.b16 %v445
      %v852 = vunpack.c.l.b16 %v446
      %v853 = vunpack.c.h.b16 %v446
      %v854 = vunpack.c.l.b16 %v447
      %v855 = vunpack.c.h.b16 %v447
      %v856 = vunpack.c.l.b16 %v448
      %v857 = vunpack.c.h.b16 %v448
      %v858 = vunpack.c.l.b16 %v449
      %v859 = vunpack.c.h.b16 %v449
      %v860 = vunpack.c.l.b16 %v450
      %v861 = vunpack.c.h.b16 %v450
      %v862 = vunpack.c.l.b16 %v451
      %v863 = vunpack.c.h.b16 %v451
      %v864 = vunpack.c.l.b16 %v452
      %v865 = vunpack.c.h.b16 %v452
      %v866 = vunpack.c.l.b16 %v453
      %v867 = vunpack.c.h.b16 %v453
      %v868 = vunpack.c.l.b16 %v454
      %v869 = vunpack.c.h.b16 %v454
      %v870 = vunpack.c.l.b16 %v455
      %v871 = vunpack.c.h.b16 %v455
      %v872 = vunpack.c.l.b16 %v456
      %v873 = vunpack.c.h.b16 %v456
      %v874 = vunpack.c.l.b16 %v457
      %v875 = vunpack.c.h.b16 %v457
      %v876 = vunpack.c.l.b16 %v458
      %v877 = vunpack.c.h.b16 %v458
      %v878 = vunpack.c.l.b16 %v459
      %v879 = vunpack.c.h.b16 %v459
      %v880 = vunpack.c.l.b16 %v460
      %v881 = vunpack.c.h.b16 %v460
      %v882 = vunpack.c.l.b16 %v461
      %v883 = vunpack.c.h.b16 %v461
      %v884 = vunpack.c.l.b16 %v462
      %v885 = vunpack.c.h.b16 %v462
      %v886 = vunpack.c.l.b16 %v463
      %v887 = vunpack.c.h.b16 %v463
      %v888 = vunpack.c.l.b16 %v464
      %v889 = vunpack.c.h.b16 %v464
      %v890 = vunpack.c.l.b16 %v465
      %v891 = vunpack.c.h.b16 %v465
      %v892 = vunpack.c.l.b16 %v466
      %v893 = vunpack.c.h.b16 %v466
      %v894 = vunpack.c.l.b16 %v467
      %v895 = vunpack.c.h.b16 %v467
      %v896 = vpack.c.b16 %v642, %v640
      %v897 = vpack.c.b16 %v643, %v641
      %v898 = vpack.c.b16 %v646, %v644
      %v899 = vpack.c.b16 %v647, %v645
      %v900 = vpack.c.b16 %v650, %v648
      %v901 = vpack.c.b16 %v651, %v649
      %v902 = vpack.c.b16 %v654, %v652
      %v903 = vpack.c.b16 %v655, %v653
      %v904 = vpack.c.b16 %v658, %v656
      %v905 = vpack.c.b16 %v659, %v657
      %v906 = vpack.c.b16 %v662, %v660
      %v907 = vpack.c.b16 %v663, %v661
      %v908 = vpack.c.b16 %v666, %v664
      %v909 = vpack.c.b16 %v667, %v665
      %v910 = vpack.c.b16 %v670, %v668
      %v911 = vpack.c.b16 %v671, %v669
      %v912 = vpack.c.b16 %v674, %v672
      %v913 = vpack.c.b16 %v675, %v673
      %v914 = vpack.c.b16 %v678, %v676
      %v915 = vpack.c.b16 %v679, %v677
      %v916 = vpack.c.b16 %v682, %v680
      %v917 = vpack.c.b16 %v683, %v681
      %v918 = vpack.c.b16 %v686, %v684
      %v919 = vpack.c.b16 %v687, %v685
      %v920 = vpack.c.b16 %v690, %v688
      %v921 = vpack.c.b16 %v691, %v689
      %v922 = vpack.c.b16 %v694, %v692
      %v923 = vpack.c.b16 %v695, %v693
      %v924 = vpack.c.b16 %v698, %v696
      %v925 = vpack.c.b16 %v699, %v697
      %v926 = vpack.c.b16 %v702, %v700
      %v927 = vpack.c.b16 %v703, %v701
      %v928 = vpack.c.b16 %v706, %v704
      %v929 = vpack.c.b16 %v707, %v705
      %v930 = vpack.c.b16 %v710, %v708
      %v931 = vpack.c.b16 %v711, %v709
      %v932 = vpack.c.b16 %v714, %v712
      %v933 = vpack.c.b16 %v715, %v713
      %v934 = vpack.c.b16 %v718, %v716
      %v935 = vpack.c.b16 %v719, %v717
      %v936 = vpack.c.b16 %v722, %v720
      %v937 = vpack.c.b16 %v723, %v721
      %v938 = vpack.c.b16 %v726, %v724
      %v939 = vpack.c.b16 %v727, %v725
      %v940 = vpack.c.b16 %v730, %v728
      %v941 = vpack.c.b16 %v731, %v729
      %v942 = vpack.c.b16 %v734, %v732
      %v943 = vpack.c.b16 %v735, %v733
      %v944 = vpack.c.b16 %v738, %v736
      %v945 = vpack.c.b16 %v739, %v737
      %v946 = vpack.c.b16 %v742, %v740
      %v947 = vpack.c.b16 %v743, %v741
      %v948 = vpack.c.b16 %v746, %v744
      %v949 = vpack.c.b16 %v747, %v745
      %v950 = vpack.c.b16 %v750, %v748
      %v951 = vpack.c.b16 %v751, %v749
      %v952 = vpack.c.b16 %v754, %v752
      %v953 = vpack.c.b16 %v755, %v753
      %v954 = vpack.c.b16 %v758, %v756
      %v955 = vpack.c.b16 %v759, %v757
      %v956 = vpack.c.b16 %v762, %v760
      %v957 = vpack.c.b16 %v763, %v761
      %v958 = vpack.c.b16 %v766, %v764
      %v959 = vpack.c.b16 %v767, %v765
      %v960 = vpack.c.b16 %v770, %v768
      %v961 = vpack.c.b16 %v771, %v769
      %v962 = vpack.c.b16 %v774, %v772
      %v963 = vpack.c.b16 %v775, %v773
      %v964 = vpack.c.b16 %v778, %v776
      %v965 = vpack.c.b16 %v779, %v777
      %v966 = vpack.c.b16 %v782, %v780
      %v967 = vpack.c.b16 %v783, %v781
      %v968 = vpack.c.b16 %v786, %v784
      %v969 = vpack.c.b16 %v787, %v785
      %v970 = vpack.c.b16 %v790, %v788
      %v971 = vpack.c.b16 %v791, %v789
      %v972 = vpack.c.b16 %v794, %v792
      %v973 = vpack.c.b16 %v795, %v793
      %v974 = vpack.c.b16 %v798, %v796
      %v975 = vpack.c.b16 %v799, %v797
      %v976 = vpack.c.b16 %v802, %v800
      %v977 = vpack.c.b16 %v803, %v801
      %v978 = vpack.c.b16 %v806, %v804
      %v979 = vpack.c.b16 %v807, %v805
      %v980 = vpack.c.b16 %v810, %v808
      %v981 = vpack.c.b16 %v811, %v809
      %v982 = vpack.c.b16 %v814, %v812
      %v983 = vpack.c.b16 %v815, %v813
      %v984 = vpack.c.b16 %v818, %v816
      %v985 = vpack.c.b16 %v819, %v817
      %v986 = vpack.c.b16 %v822, %v820
      %v987 = vpack.c.b16 %v823, %v821
      %v988 = vpack.c.b16 %v826, %v824
      %v989 = vpack.c.b16 %v827, %v825
      %v990 = vpack.c.b16 %v830, %v828
      %v991 = vpack.c.b16 %v831, %v829
      %v992 = vpack.c.b16 %v834, %v832
      %v993 = vpack.c.b16 %v835, %v833
      %v994 = vpack.c.b16 %v838, %v836
      %v995 = vpack.c.b16 %v839, %v837
      %v996 = vpack.c.b16 %v842, %v840
      %v997 = vpack.c.b16 %v843, %v841
      %v998 = vpack.c.b16 %v846, %v844
      %v999 = vpack.c.b16 %v847, %v845
      %v1000 = vpack.c.b16 %v850, %v848
      %v1001 = vpack.c.b16 %v851, %v849
      %v1002 = vpack.c.b16 %v854, %v852
      %v1003 = vpack.c.b16 %v855, %v853
      %v1004 = vpack.c.b16 %v858, %v856
      %v1005 = vpack.c.b16 %v859, %v857
      %v1006 = vpack.c.b16 %v862, %v860
      %v1007 = vpack.c.b16 %v863, %v861
      %v1008 = vpack.c.b16 %v866, %v864
      %v1009 = vpack.c.b16 %v867, %v865
      %v1010 = vpack.c.b16 %v870, %v868
      %v1011 = vpack.c.b16 %v871, %v869
      %v1012 = vpack.c.b16 %v874, %v872
      %v1013 = vpack.c.b16 %v875, %v873
      %v1014 = vpack.c.b16 %v878, %v876
      %v1015 = vpack.c.b16 %v879, %v877
      %v1016 = vpack.c.b16 %v882, %v880
      %v1017 = vpack.c.b16 %v883, %v881
      %v1018 = vpack.c.b16 %v886, %v884
      %v1019 = vpack.c.b16 %v887, %v885
      %v1020 = vpack.c.b16 %v890, %v888
      %v1021 = vpack.c.b16 %v891, %v889
      %v1022 = vpack.c.b16 %v894, %v892
      %v1023 = vpack.c.b16 %v895, %v893
      %1152 = vmatprep.subr.bf16.mxu0 %v911
      %1153 = vmatpush1.bf16.msra.mxu0 %v910
      %1154 = vmatprep.subr.bf16.mxu0 %v909
      %1155 = vmatpush1.bf16.msra.mxu0 %v908
      %1156 = vmatprep.subr.bf16.mxu0 %v907
      %1157 = vmatpush1.bf16.msra.mxu0 %v906
      %1158 = vmatprep.subr.bf16.mxu0 %v905
      %1159 = vmatpush1.bf16.msra.mxu0 %v904
      %1160 = vmatprep.subr.bf16.mxu0 %v903
      %1161 = vmatpush1.bf16.msra.mxu0 %v902
      %1162 = vmatprep.subr.bf16.mxu0 %v901
      %1163 = vmatpush1.bf16.msra.mxu0 %v900
      %1164 = vmatprep.subr.bf16.mxu0 %v899
      %1165 = vmatpush1.bf16.msra.mxu0 %v898
      %1166 = vmatprep.subr.bf16.mxu0 %v897
      %1167 = vmatpush1.bf16.msra.mxu0 %v896
      %1168 = vmatprep.subr.bf16.mxu0 %v927
      %1169 = vmatpush2.bf16.msra.mxu0 %v926
      %1170 = vmatprep.subr.bf16.mxu0 %v925
      %1171 = vmatpush2.bf16.msra.mxu0 %v924
      %1172 = vmatprep.subr.bf16.mxu0 %v923
      %1173 = vmatpush2.bf16.msra.mxu0 %v922
      %1174 = vmatprep.subr.bf16.mxu0 %v921
      %1175 = vmatpush2.bf16.msra.mxu0 %v920
      %1176 = vmatprep.subr.bf16.mxu0 %v919
      %1177 = vmatpush2.bf16.msra.mxu0 %v918
      %1178 = vmatprep.subr.bf16.mxu0 %v917
      %1179 = vmatpush2.bf16.msra.mxu0 %v916
      %1180 = vmatprep.subr.bf16.mxu0 %v915
      %1181 = vmatpush2.bf16.msra.mxu0 %v914
      %1182 = vmatprep.subr.bf16.mxu0 %v913
      %1183 = vmatpush2.bf16.msra.mxu0 %v912
      %1184 = vmatprep.mubr.bf16.mxu0 %v485
      %1185 = vmatmul.mubr.bf16.gmra.mxu0 %v477
      %v1186 = vpop.f32.mrf.mxu0
      %v1187 = vadd.f32 0.0, %v1186
      %v1188 = vpop.f32.mrf.mxu0
      %v1189 = vadd.f32 0.0, %v1188
      %v1190 = vpop.f32.mrf.mxu0
      %v1191 = vpop.f32.mrf.mxu0
      %1192 = vdwg.mxu0
      %1193 = vmatprep.subr.bf16.mxu0 %v943
      %1194 = vmatpush1.bf16.msra.mxu0 %v942
      %1195 = vmatprep.subr.bf16.mxu0 %v941
      %1196 = vmatpush1.bf16.msra.mxu0 %v940
      %1197 = vmatprep.subr.bf16.mxu0 %v939
      %1198 = vmatpush1.bf16.msra.mxu0 %v938
      %1199 = vmatprep.subr.bf16.mxu0 %v937
      %1200 = vmatpush1.bf16.msra.mxu0 %v936
      %1201 = vmatprep.subr.bf16.mxu0 %v935
      %1202 = vmatpush1.bf16.msra.mxu0 %v934
      %1203 = vmatprep.subr.bf16.mxu0 %v933
      %1204 = vmatpush1.bf16.msra.mxu0 %v932
      %1205 = vmatprep.subr.bf16.mxu0 %v931
      %1206 = vmatpush1.bf16.msra.mxu0 %v930
      %1207 = vmatprep.subr.bf16.mxu0 %v929
      %1208 = vmatpush1.bf16.msra.mxu0 %v928
      %1209 = vmatprep.subr.bf16.mxu0 %v959
      %1210 = vmatpush2.bf16.msra.mxu0 %v958
      %1211 = vmatprep.subr.bf16.mxu0 %v957
      %1212 = vmatpush2.bf16.msra.mxu0 %v956
      %1213 = vmatprep.subr.bf16.mxu0 %v955
      %1214 = vmatpush2.bf16.msra.mxu0 %v954
      %1215 = vmatprep.subr.bf16.mxu0 %v953
      %1216 = vmatpush2.bf16.msra.mxu0 %v952
      %1217 = vmatprep.subr.bf16.mxu0 %v951
      %1218 = vmatpush2.bf16.msra.mxu0 %v950
      %1219 = vmatprep.subr.bf16.mxu0 %v949
      %1220 = vmatpush2.bf16.msra.mxu0 %v948
      %1221 = vmatprep.subr.bf16.mxu0 %v947
      %1222 = vmatpush2.bf16.msra.mxu0 %v946
      %1223 = vmatprep.subr.bf16.mxu0 %v945
      %1224 = vmatpush2.bf16.msra.mxu0 %v944
      %1225 = vmatprep.mubr.bf16.mxu0 %v486
      %1226 = vmatmul.mubr.bf16.gmra.mxu0 %v484
      %v1227 = vpop.f32.mrf.mxu0
      %v1228 = vadd.f32 %v1187, %v1227
      %v1229 = vpop.f32.mrf.mxu0
      %v1230 = vadd.f32 %v1189, %v1229
      %v1231 = vpop.f32.mrf.mxu0
      %v1232 = vpop.f32.mrf.mxu0
      %1233 = vdwg.mxu0
      %1234 = vmatprep.subr.bf16.mxu0 %v975
      %1235 = vmatpush1.bf16.msra.mxu0 %v974
      %1236 = vmatprep.subr.bf16.mxu0 %v973
      %1237 = vmatpush1.bf16.msra.mxu0 %v972
      %1238 = vmatprep.subr.bf16.mxu0 %v971
      %1239 = vmatpush1.bf16.msra.mxu0 %v970
      %1240 = vmatprep.subr.bf16.mxu0 %v969
      %1241 = vmatpush1.bf16.msra.mxu0 %v968
      %1242 = vmatprep.subr.bf16.mxu0 %v967
      %1243 = vmatpush1.bf16.msra.mxu0 %v966
      %1244 = vmatprep.subr.bf16.mxu0 %v965
      %1245 = vmatpush1.bf16.msra.mxu0 %v964
      %1246 = vmatprep.subr.bf16.mxu0 %v963
      %1247 = vmatpush1.bf16.msra.mxu0 %v962
      %1248 = vmatprep.subr.bf16.mxu0 %v961
      %1249 = vmatpush1.bf16.msra.mxu0 %v960
      %1250 = vmatprep.subr.bf16.mxu0 %v991
      %1251 = vmatpush2.bf16.msra.mxu0 %v990
      %1252 = vmatprep.subr.bf16.mxu0 %v989
      %1253 = vmatpush2.bf16.msra.mxu0 %v988
      %1254 = vmatprep.subr.bf16.mxu0 %v987
      %1255 = vmatpush2.bf16.msra.mxu0 %v986
      %1256 = vmatprep.subr.bf16.mxu0 %v985
      %1257 = vmatpush2.bf16.msra.mxu0 %v984
      %1258 = vmatprep.subr.bf16.mxu0 %v983
      %1259 = vmatpush2.bf16.msra.mxu0 %v982
      %1260 = vmatprep.subr.bf16.mxu0 %v981
      %1261 = vmatpush2.bf16.msra.mxu0 %v980
      %1262 = vmatprep.subr.bf16.mxu0 %v979
      %1263 = vmatpush2.bf16.msra.mxu0 %v978
      %1264 = vmatprep.subr.bf16.mxu0 %v977
      %1265 = vmatpush2.bf16.msra.mxu0 %v976
      %1266 = vmatprep.mubr.bf16.mxu0 %v502
      %1267 = vmatmul.mubr.bf16.gmra.mxu0 %v494
      %v1268 = vpop.f32.mrf.mxu0
      %v1269 = vadd.f32 %v1228, %v1268
      %v1270 = vpop.f32.mrf.mxu0
      %v1271 = vadd.f32 %v1230, %v1270
      %v1272 = vpop.f32.mrf.mxu0
      %v1273 = vpop.f32.mrf.mxu0
      %1274 = vdwg.mxu0
      %1275 = vmatprep.subr.bf16.mxu0 %v1007
      %1276 = vmatpush1.bf16.msra.mxu0 %v1006
      %1277 = vmatprep.subr.bf16.mxu0 %v1005
      %1278 = vmatpush1.bf16.msra.mxu0 %v1004
      %1279 = vmatprep.subr.bf16.mxu0 %v1003
      %1280 = vmatpush1.bf16.msra.mxu0 %v1002
      %1281 = vmatprep.subr.bf16.mxu0 %v1001
      %1282 = vmatpush1.bf16.msra.mxu0 %v1000
      %1283 = vmatprep.subr.bf16.mxu0 %v999
      %1284 = vmatpush1.bf16.msra.mxu0 %v998
      %1285 = vmatprep.subr.bf16.mxu0 %v997
      %1286 = vmatpush1.bf16.msra.mxu0 %v996
      %1287 = vmatprep.subr.bf16.mxu0 %v995
      %1288 = vmatpush1.bf16.msra.mxu0 %v994
      %1289 = vmatprep.subr.bf16.mxu0 %v993
      %1290 = vmatpush1.bf16.msra.mxu0 %v992
      %1291 = vmatprep.subr.bf16.mxu0 %v1023
      %1292 = vmatpush2.bf16.msra.mxu0 %v1022
      %1293 = vmatprep.subr.bf16.mxu0 %v1021
      %1294 = vmatpush2.bf16.msra.mxu0 %v1020
      %1295 = vmatprep.subr.bf16.mxu0 %v1019
      %1296 = vmatpush2.bf16.msra.mxu0 %v1018
      %1297 = vmatprep.subr.bf16.mxu0 %v1017
      %1298 = vmatpush2.bf16.msra.mxu0 %v1016
      %1299 = vmatprep.subr.bf16.mxu0 %v1015
      %1300 = vmatpush2.bf16.msra.mxu0 %v1014
      %1301 = vmatprep.subr.bf16.mxu0 %v1013
      %1302 = vmatpush2.bf16.msra.mxu0 %v1012
      %1303 = vmatprep.subr.bf16.mxu0 %v1011
      %1304 = vmatpush2.bf16.msra.mxu0 %v1010
      %1305 = vmatprep.subr.bf16.mxu0 %v1009
      %1306 = vmatpush2.bf16.msra.mxu0 %v1008
      %1307 = vmatprep.mubr.bf16.mxu0 %v503
      %1308 = vmatmul.mubr.bf16.gmra.mxu0 %v501
      %v1309 = vpop.f32.mrf.mxu0
      %v1310 = vadd.f32 %v1269, %v1309
      %v1311 = vpop.f32.mrf.mxu0
      %v1312 = vadd.f32 %v1271, %v1311
      %v1313 = vpop.f32.mrf.mxu0
      %v1314 = vpop.f32.mrf.mxu0
      %1315 = vdwg.mxu0
      %v1317 = vcombine.high %v273, %v273
      %v1319 = vunpack.c.l.s4 1983009808
      %v1320 = vunpack.c.0.s8 %v1319
      %v1321 = vlaneseq
      %v1322 = vshrl.u32 %v1321, 7
      %v1323 = vsub.s32 %v1320, %v1322
      %v1324 = vrot.slane %v273, %v1323
      %v1326 = vunpack.c.l.s4 1983009808
      %v1327 = vunpack.c.0.s8 %v1326
      %v1328 = vlaneseq
      %v1329 = vshrl.u32 %v1328, 7
      %v1330 = vsub.s32 %v1327, %v1329
      %v1331 = vrot.slane %v1317, %v1330
      %v1332 = vcombine.high %v1324, %v1324
      %v1333 = vcombine.high %v1331, %v1331
      %v1402 = vunpack.c.l.b16 %v274
      %v1403 = vunpack.c.h.b16 %v274
      %v1404 = vunpack.c.l.b16 %v275
      %v1405 = vunpack.c.h.b16 %v275
      %v1406 = vunpack.c.l.b16 %v276
      %v1407 = vunpack.c.h.b16 %v276
      %v1408 = vunpack.c.l.b16 %v277
      %v1409 = vunpack.c.h.b16 %v277
      %v1410 = vunpack.c.l.b16 %v278
      %v1411 = vunpack.c.h.b16 %v278
      %v1412 = vunpack.c.l.b16 %v279
      %v1413 = vunpack.c.h.b16 %v279
      %v1414 = vunpack.c.l.b16 %v280
      %v1415 = vunpack.c.h.b16 %v280
      %v1416 = vunpack.c.l.b16 %v281
      %v1417 = vunpack.c.h.b16 %v281
      %v1418 = vunpack.c.l.b16 %v282
      %v1419 = vunpack.c.h.b16 %v282
      %v1420 = vunpack.c.l.b16 %v283
      %v1421 = vunpack.c.h.b16 %v283
      %v1422 = vunpack.c.l.b16 %v284
      %v1423 = vunpack.c.h.b16 %v284
      %v1424 = vunpack.c.l.b16 %v285
      %v1425 = vunpack.c.h.b16 %v285
      %v1426 = vunpack.c.l.b16 %v286
      %v1427 = vunpack.c.h.b16 %v286
      %v1428 = vunpack.c.l.b16 %v287
      %v1429 = vunpack.c.h.b16 %v287
      %v1430 = vunpack.c.l.b16 %v288
      %v1431 = vunpack.c.h.b16 %v288
      %v1432 = vunpack.c.l.b16 %v289
      %v1433 = vunpack.c.h.b16 %v289
      %v1434 = vunpack.c.l.b16 %v290
      %v1435 = vunpack.c.h.b16 %v290
      %v1436 = vunpack.c.l.b16 %v291
      %v1437 = vunpack.c.h.b16 %v291
      %v1438 = vunpack.c.l.b16 %v292
      %v1439 = vunpack.c.h.b16 %v292
      %v1440 = vunpack.c.l.b16 %v293
      %v1441 = vunpack.c.h.b16 %v293
      %v1442 = vunpack.c.l.b16 %v294
      %v1443 = vunpack.c.h.b16 %v294
      %v1444 = vunpack.c.l.b16 %v295
      %v1445 = vunpack.c.h.b16 %v295
      %v1446 = vunpack.c.l.b16 %v296
      %v1447 = vunpack.c.h.b16 %v296
      %v1448 = vunpack.c.l.b16 %v297
      %v1449 = vunpack.c.h.b16 %v297
      %v1450 = vunpack.c.l.b16 %v298
      %v1451 = vunpack.c.h.b16 %v298
      %v1452 = vunpack.c.l.b16 %v299
      %v1453 = vunpack.c.h.b16 %v299
      %v1454 = vunpack.c.l.b16 %v300
      %v1455 = vunpack.c.h.b16 %v300
      %v1456 = vunpack.c.l.b16 %v301
      %v1457 = vunpack.c.h.b16 %v301
      %v1458 = vunpack.c.l.b16 %v302
      %v1459 = vunpack.c.h.b16 %v302
      %v1460 = vunpack.c.l.b16 %v303
      %v1461 = vunpack.c.h.b16 %v303
      %v1462 = vunpack.c.l.b16 %v304
      %v1463 = vunpack.c.h.b16 %v304
      %v1464 = vunpack.c.l.b16 %v305
      %v1465 = vunpack.c.h.b16 %v305
      %v1466 = vunpack.c.l.b16 %v306
      %v1467 = vunpack.c.h.b16 %v306
      %v1468 = vunpack.c.l.b16 %v307
      %v1469 = vunpack.c.h.b16 %v307
      %v1470 = vunpack.c.l.b16 %v308
      %v1471 = vunpack.c.h.b16 %v308
      %v1472 = vunpack.c.l.b16 %v309
      %v1473 = vunpack.c.h.b16 %v309
      %v1474 = vunpack.c.l.b16 %v310
      %v1475 = vunpack.c.h.b16 %v310
      %v1476 = vunpack.c.l.b16 %v311
      %v1477 = vunpack.c.h.b16 %v311
      %v1478 = vunpack.c.l.b16 %v312
      %v1479 = vunpack.c.h.b16 %v312
      %v1480 = vunpack.c.l.b16 %v313
      %v1481 = vunpack.c.h.b16 %v313
      %v1482 = vunpack.c.l.b16 %v314
      %v1483 = vunpack.c.h.b16 %v314
      %v1484 = vunpack.c.l.b16 %v315
      %v1485 = vunpack.c.h.b16 %v315
      %v1486 = vunpack.c.l.b16 %v316
      %v1487 = vunpack.c.h.b16 %v316
      %v1488 = vunpack.c.l.b16 %v317
      %v1489 = vunpack.c.h.b16 %v317
      %v1490 = vunpack.c.l.b16 %v318
      %v1491 = vunpack.c.h.b16 %v318
      %v1492 = vunpack.c.l.b16 %v319
      %v1493 = vunpack.c.h.b16 %v319
      %v1494 = vunpack.c.l.b16 %v320
      %v1495 = vunpack.c.h.b16 %v320
      %v1496 = vunpack.c.l.b16 %v321
      %v1497 = vunpack.c.h.b16 %v321
      %v1498 = vunpack.c.l.b16 %v322
      %v1499 = vunpack.c.h.b16 %v322
      %v1500 = vunpack.c.l.b16 %v323
      %v1501 = vunpack.c.h.b16 %v323
      %v1502 = vunpack.c.l.b16 %v324
      %v1503 = vunpack.c.h.b16 %v324
      %v1504 = vunpack.c.l.b16 %v325
      %v1505 = vunpack.c.h.b16 %v325
      %v1506 = vunpack.c.l.b16 %v326
      %v1507 = vunpack.c.h.b16 %v326
      %v1508 = vunpack.c.l.b16 %v327
      %v1509 = vunpack.c.h.b16 %v327
      %v1510 = vunpack.c.l.b16 %v328
      %v1511 = vunpack.c.h.b16 %v328
      %v1512 = vunpack.c.l.b16 %v329
      %v1513 = vunpack.c.h.b16 %v329
      %v1514 = vunpack.c.l.b16 %v330
      %v1515 = vunpack.c.h.b16 %v330
      %v1516 = vunpack.c.l.b16 %v331
      %v1517 = vunpack.c.h.b16 %v331
      %v1518 = vunpack.c.l.b16 %v332
      %v1519 = vunpack.c.h.b16 %v332
      %v1520 = vunpack.c.l.b16 %v333
      %v1521 = vunpack.c.h.b16 %v333
      %v1522 = vunpack.c.l.b16 %v334
      %v1523 = vunpack.c.h.b16 %v334
      %v1524 = vunpack.c.l.b16 %v335
      %v1525 = vunpack.c.h.b16 %v335
      %v1526 = vunpack.c.l.b16 %v336
      %v1527 = vunpack.c.h.b16 %v336
      %v1528 = vunpack.c.l.b16 %v337
      %v1529 = vunpack.c.h.b16 %v337
      %v1530 = vpack.c.b16 %v1404, %v1402
      %v1531 = vpack.c.b16 %v1405, %v1403
      %v1532 = vpack.c.b16 %v1408, %v1406
      %v1533 = vpack.c.b16 %v1409, %v1407
      %v1534 = vpack.c.b16 %v1412, %v1410
      %v1535 = vpack.c.b16 %v1413, %v1411
      %v1536 = vpack.c.b16 %v1416, %v1414
      %v1537 = vpack.c.b16 %v1417, %v1415
      %v1538 = vpack.c.b16 %v1420, %v1418
      %v1539 = vpack.c.b16 %v1421, %v1419
      %v1540 = vpack.c.b16 %v1424, %v1422
      %v1541 = vpack.c.b16 %v1425, %v1423
      %v1542 = vpack.c.b16 %v1428, %v1426
      %v1543 = vpack.c.b16 %v1429, %v1427
      %v1544 = vpack.c.b16 %v1432, %v1430
      %v1545 = vpack.c.b16 %v1433, %v1431
      %v1546 = vpack.c.b16 %v1436, %v1434
      %v1547 = vpack.c.b16 %v1437, %v1435
      %v1548 = vpack.c.b16 %v1440, %v1438
      %v1549 = vpack.c.b16 %v1441, %v1439
      %v1550 = vpack.c.b16 %v1444, %v1442
      %v1551 = vpack.c.b16 %v1445, %v1443
      %v1552 = vpack.c.b16 %v1448, %v1446
      %v1553 = vpack.c.b16 %v1449, %v1447
      %v1554 = vpack.c.b16 %v1452, %v1450
      %v1555 = vpack.c.b16 %v1453, %v1451
      %v1556 = vpack.c.b16 %v1456, %v1454
      %v1557 = vpack.c.b16 %v1457, %v1455
      %v1558 = vpack.c.b16 %v1460, %v1458
      %v1559 = vpack.c.b16 %v1461, %v1459
      %v1560 = vpack.c.b16 %v1464, %v1462
      %v1561 = vpack.c.b16 %v1465, %v1463
      %v1562 = vpack.c.b16 %v1468, %v1466
      %v1563 = vpack.c.b16 %v1469, %v1467
      %v1564 = vpack.c.b16 %v1472, %v1470
      %v1565 = vpack.c.b16 %v1473, %v1471
      %v1566 = vpack.c.b16 %v1476, %v1474
      %v1567 = vpack.c.b16 %v1477, %v1475
      %v1568 = vpack.c.b16 %v1480, %v1478
      %v1569 = vpack.c.b16 %v1481, %v1479
      %v1570 = vpack.c.b16 %v1484, %v1482
      %v1571 = vpack.c.b16 %v1485, %v1483
      %v1572 = vpack.c.b16 %v1488, %v1486
      %v1573 = vpack.c.b16 %v1489, %v1487
      %v1574 = vpack.c.b16 %v1492, %v1490
      %v1575 = vpack.c.b16 %v1493, %v1491
      %v1576 = vpack.c.b16 %v1496, %v1494
      %v1577 = vpack.c.b16 %v1497, %v1495
      %v1578 = vpack.c.b16 %v1500, %v1498
      %v1579 = vpack.c.b16 %v1501, %v1499
      %v1580 = vpack.c.b16 %v1504, %v1502
      %v1581 = vpack.c.b16 %v1505, %v1503
      %v1582 = vpack.c.b16 %v1508, %v1506
      %v1583 = vpack.c.b16 %v1509, %v1507
      %v1584 = vpack.c.b16 %v1512, %v1510
      %v1585 = vpack.c.b16 %v1513, %v1511
      %v1586 = vpack.c.b16 %v1516, %v1514
      %v1587 = vpack.c.b16 %v1517, %v1515
      %v1588 = vpack.c.b16 %v1520, %v1518
      %v1589 = vpack.c.b16 %v1521, %v1519
      %v1590 = vpack.c.b16 %v1524, %v1522
      %v1591 = vpack.c.b16 %v1525, %v1523
      %v1592 = vpack.c.b16 %v1528, %v1526
      %v1593 = vpack.c.b16 %v1529, %v1527
      %1658 = vmatprep.subr.bf16.mxu0 %v1545
      %1659 = vmatpush1.bf16.msra.mxu0 %v1544
      %1660 = vmatprep.subr.bf16.mxu0 %v1543
      %1661 = vmatpush1.bf16.msra.mxu0 %v1542
      %1662 = vmatprep.subr.bf16.mxu0 %v1541
      %1663 = vmatpush1.bf16.msra.mxu0 %v1540
      %1664 = vmatprep.subr.bf16.mxu0 %v1539
      %1665 = vmatpush1.bf16.msra.mxu0 %v1538
      %1666 = vmatprep.subr.bf16.mxu0 %v1537
      %1667 = vmatpush1.bf16.msra.mxu0 %v1536
      %1668 = vmatprep.subr.bf16.mxu0 %v1535
      %1669 = vmatpush1.bf16.msra.mxu0 %v1534
      %1670 = vmatprep.subr.bf16.mxu0 %v1533
      %1671 = vmatpush1.bf16.msra.mxu0 %v1532
      %1672 = vmatprep.subr.bf16.mxu0 %v1531
      %1673 = vmatpush1.bf16.msra.mxu0 %v1530
      %1674 = vmatprep.subr.bf16.mxu0 %v1561
      %1675 = vmatpush2.bf16.msra.mxu0 %v1560
      %1676 = vmatprep.subr.bf16.mxu0 %v1559
      %1677 = vmatpush2.bf16.msra.mxu0 %v1558
      %1678 = vmatprep.subr.bf16.mxu0 %v1557
      %1679 = vmatpush2.bf16.msra.mxu0 %v1556
      %1680 = vmatprep.subr.bf16.mxu0 %v1555
      %1681 = vmatpush2.bf16.msra.mxu0 %v1554
      %1682 = vmatprep.subr.bf16.mxu0 %v1553
      %1683 = vmatpush2.bf16.msra.mxu0 %v1552
      %1684 = vmatprep.subr.bf16.mxu0 %v1551
      %1685 = vmatpush2.bf16.msra.mxu0 %v1550
      %1686 = vmatprep.subr.bf16.mxu0 %v1549
      %1687 = vmatpush2.bf16.msra.mxu0 %v1548
      %1688 = vmatprep.subr.bf16.mxu0 %v1547
      %1689 = vmatpush2.bf16.msra.mxu0 %v1546
      %1690 = vmatprep.mubr.bf16.mxu0 %v1332
      %1691 = vmatmul.mubr.bf16.gmra.mxu0 %v1324
      %v1692 = vpop.f32.mrf.mxu0
      %v1693 = vadd.f32 %v1310, %v1692
      %v1694 = vpop.f32.mrf.mxu0
      %v1695 = vadd.f32 %v1312, %v1694
      %v1696 = vpop.f32.mrf.mxu0
      %v1697 = vpop.f32.mrf.mxu0
      %1698 = vdwg.mxu0
      %1699 = vmatprep.subr.bf16.mxu0 %v1577
      %1700 = vmatpush1.bf16.msra.mxu0 %v1576
      %1701 = vmatprep.subr.bf16.mxu0 %v1575
      %1702 = vmatpush1.bf16.msra.mxu0 %v1574
      %1703 = vmatprep.subr.bf16.mxu0 %v1573
      %1704 = vmatpush1.bf16.msra.mxu0 %v1572
      %1705 = vmatprep.subr.bf16.mxu0 %v1571
      %1706 = vmatpush1.bf16.msra.mxu0 %v1570
      %1707 = vmatprep.subr.bf16.mxu0 %v1569
      %1708 = vmatpush1.bf16.msra.mxu0 %v1568
      %1709 = vmatprep.subr.bf16.mxu0 %v1567
      %1710 = vmatpush1.bf16.msra.mxu0 %v1566
      %1711 = vmatprep.subr.bf16.mxu0 %v1565
      %1712 = vmatpush1.bf16.msra.mxu0 %v1564
      %1713 = vmatprep.subr.bf16.mxu0 %v1563
      %1714 = vmatpush1.bf16.msra.mxu0 %v1562
      %1715 = vmatprep.subr.bf16.mxu0 %v1593
      %1716 = vmatpush2.bf16.msra.mxu0 %v1592
      %1717 = vmatprep.subr.bf16.mxu0 %v1591
      %1718 = vmatpush2.bf16.msra.mxu0 %v1590
      %1719 = vmatprep.subr.bf16.mxu0 %v1589
      %1720 = vmatpush2.bf16.msra.mxu0 %v1588
      %1721 = vmatprep.subr.bf16.mxu0 %v1587
      %1722 = vmatpush2.bf16.msra.mxu0 %v1586
      %1723 = vmatprep.subr.bf16.mxu0 %v1585
      %1724 = vmatpush2.bf16.msra.mxu0 %v1584
      %1725 = vmatprep.subr.bf16.mxu0 %v1583
      %1726 = vmatpush2.bf16.msra.mxu0 %v1582
      %1727 = vmatprep.subr.bf16.mxu0 %v1581
      %1728 = vmatpush2.bf16.msra.mxu0 %v1580
      %1729 = vmatprep.subr.bf16.mxu0 %v1579
      %1730 = vmatpush2.bf16.msra.mxu0 %v1578
      %1731 = vmatprep.mubr.bf16.mxu0 %v1333
      %1732 = vmatmul.mubr.bf16.gmra.mxu0 %v1331
      %v1733 = vpop.f32.mrf.mxu0
      %v1734 = vadd.f32 %v1693, %v1733
      %v1735 = vpop.f32.mrf.mxu0
      %v1736 = vadd.f32 %v1695, %v1735
      %v1737 = vpop.f32.mrf.mxu0
      %v1738 = vpop.f32.mrf.mxu0
      %1739 = vdwg.mxu0
      %vm1740 = vcmask 1043456
      %v1741 = vsel %vm1740, %v1734, 0.0
      %v1742 = vrot.slane %v1741, 4
      %v1743 = vadd.f32 %v1741, %v1742
      %v1744 = vrot.slane %v1743, 2
      %v1745 = vadd.f32 %v1743, %v1744
      %v1746 = vrot.slane %v1745, 1
      %v1747 = vadd.f32 %v1745, %v1746
      %v1748 = vsel %vm1740, %v1736, 0.0
      %v1749 = vrot.slane %v1748, 4
      %v1750 = vadd.f32 %v1748, %v1749
      %v1751 = vrot.slane %v1750, 2
      %v1752 = vadd.f32 %v1750, %v1751
      %v1753 = vrot.slane %v1752, 1
      %v1754 = vadd.f32 %v1752, %v1753
      %v1755 = vld [vmem:[%s4] sm:$0xff]
      %v1756 = vld [vmem:[%s4 + $0x8] sm:$0xff]
      %v1757 = vld [vmem:[%s4 + $0x10] sm:$0xff]
      %v1758 = vld [vmem:[%s4 + $0x18] sm:$0xff]
      %v1759 = vld [vmem:[%s4 + $0x20] sm:$0xff]
      %v1760 = vld [vmem:[%s4 + $0x28] sm:$0xff]
      %v1761 = vld [vmem:[%s4 + $0x30] sm:$0xff]
      %v1762 = vld [vmem:[%s4 + $0x38] sm:$0xff]
      %v1763 = vld [vmem:[%s4 + $0x40] sm:$0xff]
      %v1764 = vld [vmem:[%s4 + $0x48] sm:$0xff]
      %v1765 = vld [vmem:[%s4 + $0x50] sm:$0xff]
      %v1766 = vld [vmem:[%s4 + $0x58] sm:$0xff]
      %v1767 = vld [vmem:[%s4 + $0x60] sm:$0xff]
      %v1768 = vld [vmem:[%s4 + $0x68] sm:$0xff]
      %v1769 = vld [vmem:[%s4 + $0x70] sm:$0xff]
      %v1770 = vld [vmem:[%s4 + $0x78] sm:$0xff]
      %v1771 = vld [vmem:[%s4 + $0x80] sm:$0xff]
      %v1772 = vld [vmem:[%s4 + $0x88] sm:$0xff]
      %v1773 = vld [vmem:[%s4 + $0x90] sm:$0xff]
      %v1774 = vld [vmem:[%s4 + $0x98] sm:$0xff]
      %v1775 = vld [vmem:[%s4 + $0xa0] sm:$0xff]
      %v1776 = vld [vmem:[%s4 + $0xa8] sm:$0xff]
      %v1777 = vld [vmem:[%s4 + $0xb0] sm:$0xff]
      %v1778 = vld [vmem:[%s4 + $0xb8] sm:$0xff]
      %v1779 = vld [vmem:[%s4 + $0xc0] sm:$0xff]
      %v1780 = vld [vmem:[%s4 + $0xc8] sm:$0xff]
      %v1781 = vld [vmem:[%s4 + $0xd0] sm:$0xff]
      %v1782 = vld [vmem:[%s4 + $0xd8] sm:$0xff]
      %v1783 = vld [vmem:[%s4 + $0xe0] sm:$0xff]
      %v1784 = vld [vmem:[%s4 + $0xe8] sm:$0xff]
      %v1785 = vld [vmem:[%s4 + $0xf0] sm:$0xff]
      %v1786 = vld [vmem:[%s4 + $0xf8] sm:$0xff]
      %v1787 = vld [vmem:[%s4 + $0x100] sm:$0xff]
      %v1788 = vld [vmem:[%s4 + $0x108] sm:$0xff]
      %v1789 = vld [vmem:[%s4 + $0x110] sm:$0xff]
      %v1790 = vld [vmem:[%s4 + $0x118] sm:$0xff]
      %v1791 = vld [vmem:[%s4 + $0x120] sm:$0xff]
      %v1792 = vld [vmem:[%s4 + $0x128] sm:$0xff]
      %v1793 = vld [vmem:[%s4 + $0x130] sm:$0xff]
      %v1794 = vld [vmem:[%s4 + $0x138] sm:$0xff]
      %v1795 = vld [vmem:[%s4 + $0x140] sm:$0xff]
      %v1796 = vld [vmem:[%s4 + $0x148] sm:$0xff]
      %v1797 = vld [vmem:[%s4 + $0x150] sm:$0xff]
      %v1798 = vld [vmem:[%s4 + $0x158] sm:$0xff]
      %v1799 = vld [vmem:[%s4 + $0x160] sm:$0xff]
      %v1800 = vld [vmem:[%s4 + $0x168] sm:$0xff]
      %v1801 = vld [vmem:[%s4 + $0x170] sm:$0xff]
      %v1802 = vld [vmem:[%s4 + $0x178] sm:$0xff]
      %v1803 = vld [vmem:[%s4 + $0x180] sm:$0xff]
      %v1804 = vld [vmem:[%s4 + $0x188] sm:$0xff]
      %v1805 = vld [vmem:[%s4 + $0x190] sm:$0xff]
      %v1806 = vld [vmem:[%s4 + $0x198] sm:$0xff]
      %v1807 = vld [vmem:[%s4 + $0x1a0] sm:$0xff]
      %v1808 = vld [vmem:[%s4 + $0x1a8] sm:$0xff]
      %v1809 = vld [vmem:[%s4 + $0x1b0] sm:$0xff]
      %v1810 = vld [vmem:[%s4 + $0x1b8] sm:$0xff]
      %v1811 = vld [vmem:[%s4 + $0x1c0] sm:$0xff]
      %v1812 = vld [vmem:[%s4 + $0x1c8] sm:$0xff]
      %v1813 = vld [vmem:[%s4 + $0x1d0] sm:$0xff]
      %v1814 = vld [vmem:[%s4 + $0x1d8] sm:$0xff]
      %v1815 = vld [vmem:[%s4 + $0x1e0] sm:$0xff]
      %v1816 = vld [vmem:[%s4 + $0x1e8] sm:$0xff]
      %v1817 = vld [vmem:[%s4 + $0x1f0] sm:$0xff]
      %v1818 = vld [vmem:[%s4 + $0x1f8] sm:$0xff]
      %1819 = vmatprep.subr.mxu0 %v1786
      %1820 = vmatpush1.msra.mxu0 %v1785
      %1821 = vmatprep.subr.mxu0 %v1784
      %1822 = vmatpush1.msra.mxu0 %v1783
      %1823 = vmatprep.subr.mxu0 %v1782
      %1824 = vmatpush1.msra.mxu0 %v1781
      %1825 = vmatprep.subr.mxu0 %v1780
      %1826 = vmatpush1.msra.mxu0 %v1779
      %1827 = vmatprep.subr.mxu0 %v1778
      %1828 = vmatpush1.msra.mxu0 %v1777
      %1829 = vmatprep.subr.mxu0 %v1776
      %1830 = vmatpush1.msra.mxu0 %v1775
      %1831 = vmatprep.subr.mxu0 %v1774
      %1832 = vmatpush1.msra.mxu0 %v1773
      %1833 = vmatprep.subr.mxu0 %v1772
      %1834 = vmatpush1.msra.mxu0 %v1771
      %1835 = vmatprep.subr.mxu0 %v1770
      %1836 = vmatpush1.msra.mxu0 %v1769
      %1837 = vmatprep.subr.mxu0 %v1768
      %1838 = vmatpush1.msra.mxu0 %v1767
      %1839 = vmatprep.subr.mxu0 %v1766
      %1840 = vmatpush1.msra.mxu0 %v1765
      %1841 = vmatprep.subr.mxu0 %v1764
      %1842 = vmatpush1.msra.mxu0 %v1763
      %1843 = vmatprep.subr.mxu0 %v1762
      %1844 = vmatpush1.msra.mxu0 %v1761
      %1845 = vmatprep.subr.mxu0 %v1760
      %1846 = vmatpush1.msra.mxu0 %v1759
      %1847 = vmatprep.subr.mxu0 %v1758
      %1848 = vmatpush1.msra.mxu0 %v1757
      %1849 = vmatprep.subr.mxu0 %v1756
      %1850 = vmatpush1.msra.mxu0 %v1755
      %1851 = vmatprep.subr.mxu0 %v1818
      %1852 = vmatpush2.msra.mxu0 %v1817
      %1853 = vmatprep.subr.mxu0 %v1816
      %1854 = vmatpush2.msra.mxu0 %v1815
      %1855 = vmatprep.subr.mxu0 %v1814
      %1856 = vmatpush2.msra.mxu0 %v1813
      %1857 = vmatprep.subr.mxu0 %v1812
      %1858 = vmatpush2.msra.mxu0 %v1811
      %1859 = vmatprep.subr.mxu0 %v1810
      %1860 = vmatpush2.msra.mxu0 %v1809
      %1861 = vmatprep.subr.mxu0 %v1808
      %1862 = vmatpush2.msra.mxu0 %v1807
      %1863 = vmatprep.subr.mxu0 %v1806
      %1864 = vmatpush2.msra.mxu0 %v1805
      %1865 = vmatprep.subr.mxu0 %v1804
      %1866 = vmatpush2.msra.mxu0 %v1803
      %1867 = vmatprep.subr.mxu0 %v1802
      %1868 = vmatpush2.msra.mxu0 %v1801
      %1869 = vmatprep.subr.mxu0 %v1800
      %1870 = vmatpush2.msra.mxu0 %v1799
      %1871 = vmatprep.subr.mxu0 %v1798
      %1872 = vmatpush2.msra.mxu0 %v1797
      %1873 = vmatprep.subr.mxu0 %v1796
      %1874 = vmatpush2.msra.mxu0 %v1795
      %1875 = vmatprep.subr.mxu0 %v1794
      %1876 = vmatpush2.msra.mxu0 %v1793
      %1877 = vmatprep.subr.mxu0 %v1792
      %1878 = vmatpush2.msra.mxu0 %v1791
      %1879 = vmatprep.subr.mxu0 %v1790
      %1880 = vmatpush2.msra.mxu0 %v1789
      %1881 = vmatprep.subr.mxu0 %v1788
      %1882 = vmatpush2.msra.mxu0 %v1787
      %1883 = vmatprep.mubr.f32.mxu0 %v1754
      %1884 = vmatmul.mubr.f32.gmra.mxu0 %v1747
      %v1885 = vpop.f32.mrf.mxu0
      %v1886 = vadd.f32 0.0, %v1885
      %v1887 = vpop.f32.mrf.mxu0
      %v1888 = vadd.f32 0.0, %v1887
      %1889 = vdwg.mxu0
      %v1890 = vlaneseq
      %v1891 = vshrl.u32 %v1890, 7
      %v1892 = vsub.s32 0, %v1891
      %v1893 = vrot.slane %v1886, %v1892
      %v1894 = vlaneseq
      %v1895 = vshrl.u32 %v1894, 7
      %v1896 = vsub.s32 0, %v1895
      %v1897 = vrot.slane %v1888, %v1896
      %v1898 = vsub.f32 %v1734, %v1893
      %v1899 = vsub.f32 %v1736, %v1897
      %v1900 = vmul.f32 %v1898, %v1898
      %v1901 = vmul.f32 %v1899, %v1899
      %v1902 = vsel %vm1740, %v1900, 0.0
      %v1903 = vrot.slane %v1902, 4
      %v1904 = vadd.f32 %v1902, %v1903
      %v1905 = vrot.slane %v1904, 2
      %v1906 = vadd.f32 %v1904, %v1905
      %v1907 = vrot.slane %v1906, 1
      %v1908 = vadd.f32 %v1906, %v1907
      %v1909 = vsel %vm1740, %v1901, 0.0
      %v1910 = vrot.slane %v1909, 4
      %v1911 = vadd.f32 %v1909, %v1910
      %v1912 = vrot.slane %v1911, 2
      %v1913 = vadd.f32 %v1911, %v1912
      %v1914 = vrot.slane %v1913, 1
      %v1915 = vadd.f32 %v1913, %v1914
      %1916 = vmatprep.subr.mxu0 %v1786
      %1917 = vmatpush1.msra.mxu0 %v1785
      %1918 = vmatprep.subr.mxu0 %v1784
      %1919 = vmatpush1.msra.mxu0 %v1783
      %1920 = vmatprep.subr.mxu0 %v1782
      %1921 = vmatpush1.msra.mxu0 %v1781
      %1922 = vmatprep.subr.mxu0 %v1780
      %1923 = vmatpush1.msra.mxu0 %v1779
      %1924 = vmatprep.subr.mxu0 %v1778
      %1925 = vmatpush1.msra.mxu0 %v1777
      %1926 = vmatprep.subr.mxu0 %v1776
      %1927 = vmatpush1.msra.mxu0 %v1775
      %1928 = vmatprep.subr.mxu0 %v1774
      %1929 = vmatpush1.msra.mxu0 %v1773
      %1930 = vmatprep.subr.mxu0 %v1772
      %1931 = vmatpush1.msra.mxu0 %v1771
      %1932 = vmatprep.subr.mxu0 %v1770
      %1933 = vmatpush1.msra.mxu0 %v1769
      %1934 = vmatprep.subr.mxu0 %v1768
      %1935 = vmatpush1.msra.mxu0 %v1767
      %1936 = vmatprep.subr.mxu0 %v1766
      %1937 = vmatpush1.msra.mxu0 %v1765
      %1938 = vmatprep.subr.mxu0 %v1764
      %1939 = vmatpush1.msra.mxu0 %v1763
      %1940 = vmatprep.subr.mxu0 %v1762
      %1941 = vmatpush1.msra.mxu0 %v1761
      %1942 = vmatprep.subr.mxu0 %v1760
      %1943 = vmatpush1.msra.mxu0 %v1759
      %1944 = vmatprep.subr.mxu0 %v1758
      %1945 = vmatpush1.msra.mxu0 %v1757
      %1946 = vmatprep.subr.mxu0 %v1756
      %1947 = vmatpush1.msra.mxu0 %v1755
      %1948 = vmatprep.subr.mxu0 %v1818
      %1949 = vmatpush2.msra.mxu0 %v1817
      %1950 = vmatprep.subr.mxu0 %v1816
      %1951 = vmatpush2.msra.mxu0 %v1815
      %1952 = vmatprep.subr.mxu0 %v1814
      %1953 = vmatpush2.msra.mxu0 %v1813
      %1954 = vmatprep.subr.mxu0 %v1812
      %1955 = vmatpush2.msra.mxu0 %v1811
      %1956 = vmatprep.subr.mxu0 %v1810
      %1957 = vmatpush2.msra.mxu0 %v1809
      %1958 = vmatprep.subr.mxu0 %v1808
      %1959 = vmatpush2.msra.mxu0 %v1807
      %1960 = vmatprep.subr.mxu0 %v1806
      %1961 = vmatpush2.msra.mxu0 %v1805
      %1962 = vmatprep.subr.mxu0 %v1804
      %1963 = vmatpush2.msra.mxu0 %v1803
      %1964 = vmatprep.subr.mxu0 %v1802
      %1965 = vmatpush2.msra.mxu0 %v1801
      %1966 = vmatprep.subr.mxu0 %v1800
      %1967 = vmatpush2.msra.mxu0 %v1799
      %1968 = vmatprep.subr.mxu0 %v1798
      %1969 = vmatpush2.msra.mxu0 %v1797
      %1970 = vmatprep.subr.mxu0 %v1796
      %1971 = vmatpush2.msra.mxu0 %v1795
      %1972 = vmatprep.subr.mxu0 %v1794
      %1973 = vmatpush2.msra.mxu0 %v1793
      %1974 = vmatprep.subr.mxu0 %v1792
      %1975 = vmatpush2.msra.mxu0 %v1791
      %1976 = vmatprep.subr.mxu0 %v1790
      %1977 = vmatpush2.msra.mxu0 %v1789
      %1978 = vmatprep.subr.mxu0 %v1788
      %1979 = vmatpush2.msra.mxu0 %v1787
      %1980 = vmatprep.mubr.f32.mxu0 %v1915
      %1981 = vmatmul.mubr.f32.gmra.mxu0 %v1908
      %v1982 = vpop.f32.mrf.mxu0
      %v1983 = vadd.f32 1e-05, %v1982
      %v1984 = vpop.f32.mrf.mxu0
      %v1985 = vadd.f32 1e-05, %v1984
      %1986 = vdwg.mxu0
      %v1987 = vrsqrt.pop %v1983
      %v1988 = vrsqrt.pop %v1985
      %v1989 = vlaneseq
      %v1990 = vshrl.u32 %v1989, 7
      %v1991 = vsub.s32 0, %v1990
      %v1992 = vrot.slane %v1987, %v1991
      %v1993 = vlaneseq
      %v1994 = vshrl.u32 %v1993, 7
      %v1995 = vsub.s32 0, %v1994
      %v1996 = vrot.slane %v1988, %v1995
      %v1997 = vmul.f32 %v1898, %v1992
      %v1998 = vmul.f32 %v1899, %v1996
      %s1999 = sld [smem:[#allocation2]]
      %vm2000 = vcmp.ge.f32.partialorder %v1997, 0.0
      %vm2001 = vcmp.ge.f32.partialorder %v1998, 0.0
      %v2002 = vstv %s1999
      %v2003 = vmul.f32 %v1997, %v2002
      %v2004 = vmul.f32 %v1998, %v2002
      %v2005 = vsel %vm2000, %v1997, %v2003
      %v2006 = vsel %vm2001, %v1998, %v2004
      %v2007 = vpack.c.bf16 %v2005, %v2005
      %v2008 = vpack.c.bf16 %v2006, %v2006
      %v2011 = vcombine.low %v2007, %v2008
      %v2013 = vunpack.c.l.s4 1983009808
      %v2014 = vunpack.c.0.s8 %v2013
      %v2015 = vlaneseq
      %v2016 = vshrl.u32 %v2015, 7
      %v2017 = vsub.s32 %v2014, %v2016
      %v2018 = vrot.slane %v2011, %v2017
      %2020 = vst [vmem:[%s272] sm:$0xf] %v2018
      %p2021 = scmp.lt.s32.totalorder %s18, 1
      %s2022 = scalar_select %p2021, %s18, 1
      %s2023 = smul.addr %s2022, 2
      %s2024 = smul.addr %s2023, 2
      %s2025 = scalar_lea.vmem %s6, %s2024
      // Predicated region
      $region45: #{unet_monai_forward.14} parent=43 // pred_check
        %p2026 = pneg %p172
      $region46: #{unet_monai_forward.14} parent=43 // pred_check_branch
        %2028 = sbr.rel (%p2026) target = $region48
      $region47: #{unet_monai_forward.14} parent=43 // pred_region
        _
      $region48: #{unet_monai_forward.14} parent=43 // pred_fallthru
        _
    $region44: #{unet_monai_forward.14} parent=5 // pred_fallthru
      _
    %p2029 = scmp.le.s32.totalorder 2, %s13
    // Predicated region
    $region49: #{unet_monai_forward.14} parent=5 // pred_check
      %p2030 = pneg %p2029
    $region50: #{unet_monai_forward.14} parent=5 // pred_check_branch
      %2032 = sbr.rel (%p2030) target = $region52
    $region51: #{unet_monai_forward.14} parent=5 // pred_region
      %s2033 = ssub.s32 %s13, 2
      // Predicated region
      $region53: #{unet_monai_forward.14} parent=51 // pred_check
        %p2034 = pneg %p178
      $region54: #{unet_monai_forward.14} parent=51 // pred_check_branch
        %2036 = sbr.rel (%p2034) target = $region56
      $region55: #{unet_monai_forward.14} parent=51 // pred_region
        %p2037 = scmp.lt.s32.totalorder %s19, 1
        %s2038 = scalar_select %p2037, %s19, 1
        %s2039 = smul.addr %s2038, 2
        %s2040 = smul.addr %s2039, 2
        %s2041 = scalar_lea.vmem %s6, %s2040
      $region56: #{unet_monai_forward.14} parent=51 // pred_fallthru
        _
    $region52: #{unet_monai_forward.14} parent=5 // pred_fallthru
      _
  $region6: #{unet_monai_forward.14} parent=0 // loop_footer
    %s17 = sadd.s32 1, %s13
  $region7: #{unet_monai_forward.14} parent=0 // loop_footer_branch
    %12 = sbr.rel target = $region3
  $region8: #{unet_monai_forward.14} parent=0 // loop_exit
    _

// kernel: unet_monai_forward.15
$region0: #{unet_monai_forward.15}
  #allocation0 [shape = 'u32[]', space=smem, size = 0x4, offset = 0x4, fixed_abs, tag = 'smem constant byte address 0x4 - core index']
  #allocation1 [shape = 'u32[144,128]{1,0:T(1,128)}', space=vmem, size = 0x12000, scoped, tag = 'internal scratch']
  #allocation2 [shape = 'f32[1]{0:T(128)S(6)}', space=smem, size = 0x200, scoped, tag = 'scoped memory for unet_monai_forward.15']
  %s0 = inlined_call_operand.vmem [shape: bf16[2,16,256], index: 0, kind: input, shape index: {}]
  %s1 = inlined_call_operand.vmem [shape: bf16[2,16,256], index: 1, kind: input, shape index: {}]
  %s2 = inlined_call_operand.vmem [shape: bf16[256,128], index: 2, kind: input, shape index: {}]
  %s3 = inlined_call_operand.vmem [shape: bf16[256,128], index: 3, kind: input, shape index: {}]
  %s4 = inlined_call_operand.vmem [shape: f32[128,128], index: 4, kind: input, shape index: {}]
  %s5 = inlined_call_operand.<no memory space> [shape: f32[1], index: 5, kind: input, shape index: {}]
  %s6 = inlined_call_operand.vmem [shape: bf16[2,16,128], index: 6, kind: output, shape index: {}]
  %s7 = sld [smem:[#allocation0]]
  $region57: #{unet_monai_forward.15} parent=0
    _
  %s9 = ssub.s32 1, %s7
  %s10 = scalar_select 0, %s9, %s7
  %11 = sst [smem:[#allocation2]] %s5
  loop: start=0, step=1, limit=4
  $region2: #{unet_monai_forward.15} parent=0 // loop_pre_header
    _
  $region3: #{unet_monai_forward.15} parent=0 // loop_header
    %s13 = sphi 0, %s17
    %p14 = scmp.ge.s32.totalorder %s13, 4
    %s23 = sphi 0, %s25
    %s26 = sphi 0, %s23
    %s27 = sphi 0, %s26
    %s43 = sphi 0, %s27
    %s49 = sphi 0, %s51
    %s52 = sphi 0, %s49
    %s53 = sphi 0, %s52
    %s69 = sphi 0, %s53
    %s73 = sphi 0, %s73
    %s75 = sphi 0, %s73
    %s76 = sphi 0, %s75
    %s90 = sphi 0, %s76
    %s94 = sphi 0, %s94
    %s96 = sphi 0, %s94
    %s97 = sphi 0, %s96
    %s111 = sphi 0, %s97
    %s115 = sphi 0, %s115
    %s117 = sphi 0, %s115
    %s118 = sphi 0, %s117
    %s132 = sphi 0, %s118
    %s136 = sphi 0, %s136
    %s138 = sphi 0, %s136
    %s139 = sphi 0, %s138
    %s153 = sphi 0, %s139
    %s159 = sphi 0, %s161
    %s162 = sphi 0, %s159
    %s163 = sphi 0, %s162
    %s179 = sphi 0, %s163
  $region4: #{unet_monai_forward.15} parent=0 // loop_header_branch
    %16 = sbr.rel (%p14) target = $region8
  $region5: #{unet_monai_forward.15} parent=0 // loop_body
    %s18 = ssub.s32 %s13, 1
    %s19 = ssub.s32 %s13, 2
    %s20 = sadd.s32 %s13, 1
    %s21 = ssub.s32 %s13, %s20
    %p22 = scmp.eq.s32.totalorder %s21, 0
    %s24 = sadd.s32 %s23, 1
    %s25 = scalar_select %p22, %s23, %s24
    %p28 = pneg %p22
    %p29 = scmp.eq.s32.totalorder %s13, 1
    %p30 = por %p28, %p29
    %p31 = scmp.ne.s32.totalorder %s23, %s26
    %p32 = scmp.eq.s32.totalorder %s13, 0
    %p33 = por %p31, %p32
    %p34 = scmp.ne.s32.totalorder %s23, %s26
    %p35 = scmp.eq.s32.totalorder %s18, 1
    %p36 = por %p34, %p35
    %p37 = scmp.ne.s32.totalorder %s26, %s27
    %p38 = scmp.eq.s32.totalorder %s18, 0
    %p39 = por %p37, %p38
    %p40 = scmp.ne.s32.totalorder %s26, %s27
    %p41 = scmp.eq.s32.totalorder %s19, 1
    %p42 = por %p40, %p41
    %p44 = scmp.ne.s32.totalorder %s27, %s43
    %p45 = scmp.eq.s32.totalorder %s19, 0
    %p46 = por %p44, %p45
    %s47 = ssub.s32 %s13, %s20
    %p48 = scmp.eq.s32.totalorder %s47, 0
    %s50 = sadd.s32 %s49, 1
    %s51 = scalar_select %p48, %s49, %s50
    %p54 = pneg %p48
    %p55 = scmp.eq.s32.totalorder %s13, 1
    %p56 = por %p54, %p55
    %p57 = scmp.ne.s32.totalorder %s49, %s52
    %p58 = scmp.eq.s32.totalorder %s13, 0
    %p59 = por %p57, %p58
    %p60 = scmp.ne.s32.totalorder %s49, %s52
    %p61 = scmp.eq.s32.totalorder %s18, 1
    %p62 = por %p60, %p61
    %p63 = scmp.ne.s32.totalorder %s52, %s53
    %p64 = scmp.eq.s32.totalorder %s18, 0
    %p65 = por %p63, %p64
    %p66 = scmp.ne.s32.totalorder %s52, %s53
    %p67 = scmp.eq.s32.totalorder %s19, 1
    %p68 = por %p66, %p67
    %p70 = scmp.ne.s32.totalorder %s53, %s69
    %p71 = scmp.eq.s32.totalorder %s19, 0
    %p72 = por %p70, %p71
    %s74 = sadd.s32 %s73, 1
    %p77 = scmp.eq.s32.totalorder %s13, 1
    %p78 = scmp.ne.s32.totalorder %s73, %s75
    %p79 = scmp.eq.s32.totalorder %s13, 0
    %p80 = por %p78, %p79
    %p81 = scmp.ne.s32.totalorder %s73, %s75
    %p82 = scmp.eq.s32.totalorder %s18, 1
    %p83 = por %p81, %p82
    %p84 = scmp.ne.s32.totalorder %s75, %s76
    %p85 = scmp.eq.s32.totalorder %s18, 0
    %p86 = por %p84, %p85
    %p87 = scmp.ne.s32.totalorder %s75, %s76
    %p88 = scmp.eq.s32.totalorder %s19, 1
    %p89 = por %p87, %p88
    %p91 = scmp.ne.s32.totalorder %s76, %s90
    %p92 = scmp.eq.s32.totalorder %s19, 0
    %p93 = por %p91, %p92
    %s95 = sadd.s32 %s94, 1
    %p98 = scmp.eq.s32.totalorder %s13, 1
    %p99 = scmp.ne.s32.totalorder %s94, %s96
    %p100 = scmp.eq.s32.totalorder %s13, 0
    %p101 = por %p99, %p100
    %p102 = scmp.ne.s32.totalorder %s94, %s96
    %p103 = scmp.eq.s32.totalorder %s18, 1
    %p104 = por %p102, %p103
    %p105 = scmp.ne.s32.totalorder %s96, %s97
    %p106 = scmp.eq.s32.totalorder %s18, 0
    %p107 = por %p105, %p106
    %p108 = scmp.ne.s32.totalorder %s96, %s97
    %p109 = scmp.eq.s32.totalorder %s19, 1
    %p110 = por %p108, %p109
    %p112 = scmp.ne.s32.totalorder %s97, %s111
    %p113 = scmp.eq.s32.totalorder %s19, 0
    %p114 = por %p112, %p113
    %s116 = sadd.s32 %s115, 1
    %p119 = scmp.eq.s32.totalorder %s13, 1
    %p120 = scmp.ne.s32.totalorder %s115, %s117
    %p121 = scmp.eq.s32.totalorder %s13, 0
    %p122 = por %p120, %p121
    %p123 = scmp.ne.s32.totalorder %s115, %s117
    %p124 = scmp.eq.s32.totalorder %s18, 1
    %p125 = por %p123, %p124
    %p126 = scmp.ne.s32.totalorder %s117, %s118
    %p127 = scmp.eq.s32.totalorder %s18, 0
    %p128 = por %p126, %p127
    %p129 = scmp.ne.s32.totalorder %s117, %s118
    %p130 = scmp.eq.s32.totalorder %s19, 1
    %p131 = por %p129, %p130
    %p133 = scmp.ne.s32.totalorder %s118, %s132
    %p134 = scmp.eq.s32.totalorder %s19, 0
    %p135 = por %p133, %p134
    %s137 = sadd.s32 %s136, 1
    %p140 = scmp.eq.s32.totalorder %s13, 1
    %p141 = scmp.ne.s32.totalorder %s136, %s138
    %p142 = scmp.eq.s32.totalorder %s13, 0
    %p143 = por %p141, %p142
    %p144 = scmp.ne.s32.totalorder %s136, %s138
    %p145 = scmp.eq.s32.totalorder %s18, 1
    %p146 = por %p144, %p145
    %p147 = scmp.ne.s32.totalorder %s138, %s139
    %p148 = scmp.eq.s32.totalorder %s18, 0
    %p149 = por %p147, %p148
    %p150 = scmp.ne.s32.totalorder %s138, %s139
    %p151 = scmp.eq.s32.totalorder %s19, 1
    %p152 = por %p150, %p151
    %p154 = scmp.ne.s32.totalorder %s139, %s153
    %p155 = scmp.eq.s32.totalorder %s19, 0
    %p156 = por %p154, %p155
    %s157 = ssub.s32 %s13, %s20
    %p158 = scmp.eq.s32.totalorder %s157, 0
    %s160 = sadd.s32 %s159, 1
    %s161 = scalar_select %p158, %s159, %s160
    %p164 = pneg %p158
    %p165 = scmp.eq.s32.totalorder %s13, 1
    %p166 = por %p164, %p165
    %p167 = scmp.ne.s32.totalorder %s159, %s162
    %p168 = scmp.eq.s32.totalorder %s13, 0
    %p169 = por %p167, %p168
    %p170 = scmp.ne.s32.totalorder %s159, %s162
    %p171 = scmp.eq.s32.totalorder %s18, 1
    %p172 = por %p170, %p171
    %p173 = scmp.ne.s32.totalorder %s162, %s163
    %p174 = scmp.eq.s32.totalorder %s18, 0
    %p175 = por %p173, %p174
    %p176 = scmp.ne.s32.totalorder %s162, %s163
    %p177 = scmp.eq.s32.totalorder %s19, 1
    %p178 = por %p176, %p177
    %p180 = scmp.ne.s32.totalorder %s163, %s179
    %p181 = scmp.eq.s32.totalorder %s19, 0
    %p182 = por %p180, %p181
    %p183 = scmp.le.s32.totalorder 1, %s13
    %p184 = scmp.lt.s32.totalorder %s13, 3
    %p185 = pnand %p183, %p184
    %p186 = pneg %p185
    // Predicated region
    $region9: #{unet_monai_forward.15} parent=5 // pred_check
      _
    $region10: #{unet_monai_forward.15} parent=5 // pred_check_branch
      %188 = sbr.rel (%p185) target = $region12
    $region11: #{unet_monai_forward.15} parent=5 // pred_region
      %s189 = ssub.s32 %s13, 1
      // Predicated region
      $region13: #{unet_monai_forward.15} parent=11 // pred_check
        %p190 = pneg %p86
      $region14: #{unet_monai_forward.15} parent=11 // pred_check_branch
        %192 = sbr.rel (%p190) target = $region16
      $region15: #{unet_monai_forward.15} parent=11 // pred_region
        _
      $region16: #{unet_monai_forward.15} parent=11 // pred_fallthru
        _
      // Predicated region
      $region17: #{unet_monai_forward.15} parent=11 // pred_check
        %p193 = pneg %p107
      $region18: #{unet_monai_forward.15} parent=11 // pred_check_branch
        %195 = sbr.rel (%p193) target = $region20
      $region19: #{unet_monai_forward.15} parent=11 // pred_region
        _
      $region20: #{unet_monai_forward.15} parent=11 // pred_fallthru
        _
      // Predicated region
      $region21: #{unet_monai_forward.15} parent=11 // pred_check
        %p196 = pneg %p128
      $region22: #{unet_monai_forward.15} parent=11 // pred_check_branch
        %198 = sbr.rel (%p196) target = $region24
      $region23: #{unet_monai_forward.15} parent=11 // pred_region
        _
      $region24: #{unet_monai_forward.15} parent=11 // pred_fallthru
        _
      // Predicated region
      $region25: #{unet_monai_forward.15} parent=11 // pred_check
        %p199 = pneg %p149
      $region26: #{unet_monai_forward.15} parent=11 // pred_check_branch
        %201 = sbr.rel (%p199) target = $region28
      $region27: #{unet_monai_forward.15} parent=11 // pred_region
        _
      $region28: #{unet_monai_forward.15} parent=11 // pred_fallthru
        _
    $region12: #{unet_monai_forward.15} parent=5 // pred_fallthru
      _
    %p202 = scmp.lt.s32.totalorder %s13, 2
    // Predicated region
    $region29: #{unet_monai_forward.15} parent=5 // pred_check
      %p203 = pneg %p202
    $region30: #{unet_monai_forward.15} parent=5 // pred_check_branch
      %205 = sbr.rel (%p203) target = $region32
    $region31: #{unet_monai_forward.15} parent=5 // pred_region
      // Predicated region
      $region33: #{unet_monai_forward.15} parent=31 // pred_check
        %p206 = pneg %p33
      $region34: #{unet_monai_forward.15} parent=31 // pred_check_branch
        %208 = sbr.rel (%p206) target = $region36
      $region35: #{unet_monai_forward.15} parent=31 // pred_region
        %p209 = scmp.lt.s32.totalorder %s13, 1
        %s210 = scalar_select %p209, %s13, 1
        %s211 = smul.addr %s210, 4
        %s212 = smul.addr %s211, 4
        %s213 = scalar_lea.vmem %s0, %s212
      $region36: #{unet_monai_forward.15} parent=31 // pred_fallthru
        _
      // Predicated region
      $region37: #{unet_monai_forward.15} parent=31 // pred_check
        %p214 = pneg %p59
      $region38: #{unet_monai_forward.15} parent=31 // pred_check_branch
        %216 = sbr.rel (%p214) target = $region40
      $region39: #{unet_monai_forward.15} parent=31 // pred_region
        %p217 = scmp.lt.s32.totalorder %s13, 1
        %s218 = scalar_select %p217, %s13, 1
        %s219 = smul.addr %s218, 4
        %s220 = smul.addr %s219, 4
        %s221 = scalar_lea.vmem %s1, %s220
      $region40: #{unet_monai_forward.15} parent=31 // pred_fallthru
        _
    $region32: #{unet_monai_forward.15} parent=5 // pred_fallthru
      _
    %p222 = scmp.le.s32.totalorder 1, %s13
    %p223 = scmp.lt.s32.totalorder %s13, 3
    %p224 = pnand %p222, %p223
    %p225 = pneg %p224
    // Predicated region
    $region41: #{unet_monai_forward.15} parent=5 // pred_check
      _
    $region42: #{unet_monai_forward.15} parent=5 // pred_check_branch
      %227 = sbr.rel (%p224) target = $region44
    $region43: #{unet_monai_forward.15} parent=5 // pred_region
      %s228 = ssub.s32 %s13, 1
      %p229 = scmp.lt.s32.totalorder %s18, 1
      %s230 = scalar_select %p229, %s18, 1
      %s231 = smul.addr %s230, 4
      %s232 = smul.addr %s231, 4
      %s233 = scalar_lea.vmem %s0, %s232
      %p234 = pneg %p39
      %p235 = pneg %p36
      %p236 = scmp.lt.s32.totalorder %s18, 1
      %s237 = scalar_select %p236, %s18, 1
      %s238 = smul.addr %s237, 4
      %s239 = smul.addr %s238, 4
      %s240 = scalar_lea.vmem %s1, %s239
      %p241 = pneg %p65
      %p242 = pneg %p62
      %p243 = pneg %p86
      %p244 = pneg %p83
      %p245 = pneg %p107
      %p246 = pneg %p104
      %p247 = pneg %p128
      %p248 = pneg %p125
      %p249 = pneg %p149
      %p250 = pneg %p146
      %p251 = pneg %p175
      %p252 = pneg %p172
      %p253 = scmp.lt.s32.totalorder %s18, 1
      %s254 = scalar_select %p253, %s18, 1
      %s255 = smul.addr %s254, 2
      %s256 = smul.addr %s255, 4
      %s257 = scalar_lea.vmem %s6, %s256
      %p258 = scmp.lt.s32.totalorder %s18, 1
      %s259 = scalar_select %p258, %s18, 1
      %s260 = smul.addr %s259, 4
      %s261 = smul.addr %s260, 4
      %s262 = scalar_lea.vmem %s0, %s261
      %p263 = scmp.lt.s32.totalorder %s18, 1
      %s264 = scalar_select %p263, %s18, 1
      %s265 = smul.addr %s264, 4
      %s266 = smul.addr %s265, 4
      %s267 = scalar_lea.vmem %s1, %s266
      %p268 = scmp.lt.s32.totalorder %s18, 1
      %s269 = scalar_select %p268, %s18, 1
      %s270 = smul.addr %s269, 2
      %s271 = smul.addr %s270, 4
      %s272 = scalar_lea.vmem %s6, %s271
      %v274 = vld [vmem:[%s262] sm:$0xff]
      %v275 = vld [vmem:[%s262 + $0x8] sm:$0xff]
      %v276 = vld [vmem:[%s2] sm:$0xf]
      %v277 = vld [vmem:[%s2 + $0x4] sm:$0xf]
      %v278 = vld [vmem:[%s2 + $0x8] sm:$0xf]
      %v279 = vld [vmem:[%s2 + $0xc] sm:$0xf]
      %v280 = vld [vmem:[%s2 + $0x10] sm:$0xf]
      %v281 = vld [vmem:[%s2 + $0x14] sm:$0xf]
      %v282 = vld [vmem:[%s2 + $0x18] sm:$0xf]
      %v283 = vld [vmem:[%s2 + $0x1c] sm:$0xf]
      %v284 = vld [vmem:[%s2 + $0x20] sm:$0xf]
      %v285 = vld [vmem:[%s2 + $0x24] sm:$0xf]
      %v286 = vld [vmem:[%s2 + $0x28] sm:$0xf]
      %v287 = vld [vmem:[%s2 + $0x2c] sm:$0xf]
      %v288 = vld [vmem:[%s2 + $0x30] sm:$0xf]
      %v289 = vld [vmem:[%s2 + $0x34] sm:$0xf]
      %v290 = vld [vmem:[%s2 + $0x38] sm:$0xf]
      %v291 = vld [vmem:[%s2 + $0x3c] sm:$0xf]
      %v292 = vld [vmem:[%s2 + $0x40] sm:$0xf]
      %v293 = vld [vmem:[%s2 + $0x44] sm:$0xf]
      %v294 = vld [vmem:[%s2 + $0x48] sm:$0xf]
      %v295 = vld [vmem:[%s2 + $0x4c] sm:$0xf]
      %v296 = vld [vmem:[%s2 + $0x50] sm:$0xf]
      %v297 = vld [vmem:[%s2 + $0x54] sm:$0xf]
      %v298 = vld [vmem:[%s2 + $0x58] sm:$0xf]
      %v299 = vld [vmem:[%s2 + $0x5c] sm:$0xf]
      %v300 = vld [vmem:[%s2 + $0x60] sm:$0xf]
      %v301 = vld [vmem:[%s2 + $0x64] sm:$0xf]
      %v302 = vld [vmem:[%s2 + $0x68] sm:$0xf]
      %v303 = vld [vmem:[%s2 + $0x6c] sm:$0xf]
      %v304 = vld [vmem:[%s2 + $0x70] sm:$0xf]
      %v305 = vld [vmem:[%s2 + $0x74] sm:$0xf]
      %v306 = vld [vmem:[%s2 + $0x78] sm:$0xf]
      %v307 = vld [vmem:[%s2 + $0x7c] sm:$0xf]
      %v308 = vld [vmem:[%s267] sm:$0xff]
      %v309 = vld [vmem:[%s267 + $0x8] sm:$0xff]
      %v310 = vld [vmem:[%s3] sm:$0xf]
      %v311 = vld [vmem:[%s3 + $0x4] sm:$0xf]
      %v312 = vld [vmem:[%s3 + $0x8] sm:$0xf]
      %v313 = vld [vmem:[%s3 + $0xc] sm:$0xf]
      %v314 = vld [vmem:[%s3 + $0x10] sm:$0xf]
      %v315 = vld [vmem:[%s3 + $0x14] sm:$0xf]
      %v316 = vld [vmem:[%s3 + $0x18] sm:$0xf]
      %v317 = vld [vmem:[%s3 + $0x1c] sm:$0xf]
      %v318 = vld [vmem:[%s3 + $0x20] sm:$0xf]
      %v319 = vld [vmem:[%s3 + $0x24] sm:$0xf]
      %v320 = vld [vmem:[%s3 + $0x28] sm:$0xf]
      %v321 = vld [vmem:[%s3 + $0x2c] sm:$0xf]
      %v322 = vld [vmem:[%s3 + $0x30] sm:$0xf]
      %v323 = vld [vmem:[%s3 + $0x34] sm:$0xf]
      %v324 = vld [vmem:[%s3 + $0x38] sm:$0xf]
      %v325 = vld [vmem:[%s3 + $0x3c] sm:$0xf]
      %v326 = vld [vmem:[%s3 + $0x40] sm:$0xf]
      %v327 = vld [vmem:[%s3 + $0x44] sm:$0xf]
      %v328 = vld [vmem:[%s3 + $0x48] sm:$0xf]
      %v329 = vld [vmem:[%s3 + $0x4c] sm:$0xf]
      %v330 = vld [vmem:[%s3 + $0x50] sm:$0xf]
      %v331 = vld [vmem:[%s3 + $0x54] sm:$0xf]
      %v332 = vld [vmem:[%s3 + $0x58] sm:$0xf]
      %v333 = vld [vmem:[%s3 + $0x5c] sm:$0xf]
      %v334 = vld [vmem:[%s3 + $0x60] sm:$0xf]
      %v335 = vld [vmem:[%s3 + $0x64] sm:$0xf]
      %v336 = vld [vmem:[%s3 + $0x68] sm:$0xf]
      %v337 = vld [vmem:[%s3 + $0x6c] sm:$0xf]
      %v338 = vld [vmem:[%s3 + $0x70] sm:$0xf]
      %v339 = vld [vmem:[%s3 + $0x74] sm:$0xf]
      %v340 = vld [vmem:[%s3 + $0x78] sm:$0xf]
      %v341 = vld [vmem:[%s3 + $0x7c] sm:$0xf]
      %v344 = vunpack.c.l.b16 %v308
      %v345 = vunpack.c.h.b16 %v308
      %v346 = vunpack.c.l.b16 %v309
      %v347 = vunpack.c.h.b16 %v309
      %v348 = vpack.c.b16 %v346, %v344
      %v349 = vpack.c.b16 %v347, %v345
      %v384 = vunpack.c.l.b16 %v310
      %v385 = vunpack.c.l.b16 %v311
      %v386 = vunpack.c.l.b16 %v312
      %v387 = vunpack.c.l.b16 %v313
      %v388 = vunpack.c.l.b16 %v314
      %v389 = vunpack.c.l.b16 %v315
      %v390 = vunpack.c.l.b16 %v316
      %v391 = vunpack.c.l.b16 %v317
      %v392 = vunpack.c.l.b16 %v318
      %v393 = vunpack.c.l.b16 %v319
      %v394 = vunpack.c.l.b16 %v320
      %v395 = vunpack.c.l.b16 %v321
      %v396 = vunpack.c.l.b16 %v322
      %v397 = vunpack.c.l.b16 %v323
      %v398 = vunpack.c.l.b16 %v324
      %v399 = vunpack.c.l.b16 %v325
      %v400 = vunpack.c.l.b16 %v326
      %v401 = vunpack.c.l.b16 %v327
      %v402 = vunpack.c.l.b16 %v328
      %v403 = vunpack.c.l.b16 %v329
      %v404 = vunpack.c.l.b16 %v330
      %v405 = vunpack.c.l.b16 %v331
      %v406 = vunpack.c.l.b16 %v332
      %v407 = vunpack.c.l.b16 %v333
      %v408 = vunpack.c.l.b16 %v334
      %v409 = vunpack.c.l.b16 %v335
      %v410 = vunpack.c.l.b16 %v336
      %v411 = vunpack.c.l.b16 %v337
      %v412 = vunpack.c.l.b16 %v338
      %v413 = vunpack.c.l.b16 %v339
      %v414 = vunpack.c.l.b16 %v340
      %v415 = vunpack.c.l.b16 %v341
      %v416 = vpack.c.b16 %v385, %v384
      %v417 = vpack.c.b16 %v387, %v386
      %v418 = vpack.c.b16 %v389, %v388
      %v419 = vpack.c.b16 %v391, %v390
      %v420 = vpack.c.b16 %v393, %v392
      %v421 = vpack.c.b16 %v395, %v394
      %v422 = vpack.c.b16 %v397, %v396
      %v423 = vpack.c.b16 %v399, %v398
      %v424 = vpack.c.b16 %v401, %v400
      %v425 = vpack.c.b16 %v403, %v402
      %v426 = vpack.c.b16 %v405, %v404
      %v427 = vpack.c.b16 %v407, %v406
      %v428 = vpack.c.b16 %v409, %v408
      %v429 = vpack.c.b16 %v411, %v410
      %v430 = vpack.c.b16 %v413, %v412
      %v431 = vpack.c.b16 %v415, %v414
      %448 = vmatprep.subr.bf16.mxu0 0
      %449 = vmatpush1.bf16.msra.mxu0 %v423
      %450 = vmatprep.subr.bf16.mxu0 0
      %451 = vmatpush1.bf16.msra.mxu0 %v422
      %452 = vmatprep.subr.bf16.mxu0 0
      %453 = vmatpush1.bf16.msra.mxu0 %v421
      %454 = vmatprep.subr.bf16.mxu0 0
      %455 = vmatpush1.bf16.msra.mxu0 %v420
      %456 = vmatprep.subr.bf16.mxu0 0
      %457 = vmatpush1.bf16.msra.mxu0 %v419
      %458 = vmatprep.subr.bf16.mxu0 0
      %459 = vmatpush1.bf16.msra.mxu0 %v418
      %460 = vmatprep.subr.bf16.mxu0 0
      %461 = vmatpush1.bf16.msra.mxu0 %v417
      %462 = vmatprep.subr.bf16.mxu0 0
      %463 = vmatpush1.bf16.msra.mxu0 %v416
      %464 = vmatprep.subr.bf16.mxu0 0
      %465 = vmatpush2.bf16.msra.mxu0 %v431
      %466 = vmatprep.subr.bf16.mxu0 0
      %467 = vmatpush2.bf16.msra.mxu0 %v430
      %468 = vmatprep.subr.bf16.mxu0 0
      %469 = vmatpush2.bf16.msra.mxu0 %v429
      %470 = vmatprep.subr.bf16.mxu0 0
      %471 = vmatpush2.bf16.msra.mxu0 %v428
      %472 = vmatprep.subr.bf16.mxu0 0
      %473 = vmatpush2.bf16.msra.mxu0 %v427
      %474 = vmatprep.subr.bf16.mxu0 0
      %475 = vmatpush2.bf16.msra.mxu0 %v426
      %476 = vmatprep.subr.bf16.mxu0 0
      %477 = vmatpush2.bf16.msra.mxu0 %v425
      %478 = vmatprep.subr.bf16.mxu0 0
      %479 = vmatpush2.bf16.msra.mxu0 %v424
      %480 = vmatprep.mubr.bf16.mxu0 %v349
      %481 = vmatmul.mubr.bf16.gmra.mxu0 %v348
      %v482 = vpop.f32.mrf.mxu0
      %v483 = vadd.f32 0.0, %v482
      %v484 = vpop.f32.mrf.mxu0
      %v485 = vpop.f32.mrf.mxu0
      %v486 = vadd.f32 0.0, %v485
      %v487 = vpop.f32.mrf.mxu0
      %488 = vdwg.mxu0
      %v491 = vunpack.c.l.b16 %v274
      %v492 = vunpack.c.h.b16 %v274
      %v493 = vunpack.c.l.b16 %v275
      %v494 = vunpack.c.h.b16 %v275
      %v495 = vpack.c.b16 %v493, %v491
      %v496 = vpack.c.b16 %v494, %v492
      %v531 = vunpack.c.l.b16 %v276
      %v532 = vunpack.c.l.b16 %v277
      %v533 = vunpack.c.l.b16 %v278
      %v534 = vunpack.c.l.b16 %v279
      %v535 = vunpack.c.l.b16 %v280
      %v536 = vunpack.c.l.b16 %v281
      %v537 = vunpack.c.l.b16 %v282
      %v538 = vunpack.c.l.b16 %v283
      %v539 = vunpack.c.l.b16 %v284
      %v540 = vunpack.c.l.b16 %v285
      %v541 = vunpack.c.l.b16 %v286
      %v542 = vunpack.c.l.b16 %v287
      %v543 = vunpack.c.l.b16 %v288
      %v544 = vunpack.c.l.b16 %v289
      %v545 = vunpack.c.l.b16 %v290
      %v546 = vunpack.c.l.b16 %v291
      %v547 = vunpack.c.l.b16 %v292
      %v548 = vunpack.c.l.b16 %v293
      %v549 = vunpack.c.l.b16 %v294
      %v550 = vunpack.c.l.b16 %v295
      %v551 = vunpack.c.l.b16 %v296
      %v552 = vunpack.c.l.b16 %v297
      %v553 = vunpack.c.l.b16 %v298
      %v554 = vunpack.c.l.b16 %v299
      %v555 = vunpack.c.l.b16 %v300
      %v556 = vunpack.c.l.b16 %v301
      %v557 = vunpack.c.l.b16 %v302
      %v558 = vunpack.c.l.b16 %v303
      %v559 = vunpack.c.l.b16 %v304
      %v560 = vunpack.c.l.b16 %v305
      %v561 = vunpack.c.l.b16 %v306
      %v562 = vunpack.c.l.b16 %v307
      %v563 = vpack.c.b16 %v532, %v531
      %v564 = vpack.c.b16 %v534, %v533
      %v565 = vpack.c.b16 %v536, %v535
      %v566 = vpack.c.b16 %v538, %v537
      %v567 = vpack.c.b16 %v540, %v539
      %v568 = vpack.c.b16 %v542, %v541
      %v569 = vpack.c.b16 %v544, %v543
      %v570 = vpack.c.b16 %v546, %v545
      %v571 = vpack.c.b16 %v548, %v547
      %v572 = vpack.c.b16 %v550, %v549
      %v573 = vpack.c.b16 %v552, %v551
      %v574 = vpack.c.b16 %v554, %v553
      %v575 = vpack.c.b16 %v556, %v555
      %v576 = vpack.c.b16 %v558, %v557
      %v577 = vpack.c.b16 %v560, %v559
      %v578 = vpack.c.b16 %v562, %v561
      %595 = vmatprep.subr.bf16.mxu0 0
      %596 = vmatpush1.bf16.msra.mxu0 %v570
      %597 = vmatprep.subr.bf16.mxu0 0
      %598 = vmatpush1.bf16.msra.mxu0 %v569
      %599 = vmatprep.subr.bf16.mxu0 0
      %600 = vmatpush1.bf16.msra.mxu0 %v568
      %601 = vmatprep.subr.bf16.mxu0 0
      %602 = vmatpush1.bf16.msra.mxu0 %v567
      %603 = vmatprep.subr.bf16.mxu0 0
      %604 = vmatpush1.bf16.msra.mxu0 %v566
      %605 = vmatprep.subr.bf16.mxu0 0
      %606 = vmatpush1.bf16.msra.mxu0 %v565
      %607 = vmatprep.subr.bf16.mxu0 0
      %608 = vmatpush1.bf16.msra.mxu0 %v564
      %609 = vmatprep.subr.bf16.mxu0 0
      %610 = vmatpush1.bf16.msra.mxu0 %v563
      %611 = vmatprep.subr.bf16.mxu0 0
      %612 = vmatpush2.bf16.msra.mxu0 %v578
      %613 = vmatprep.subr.bf16.mxu0 0
      %614 = vmatpush2.bf16.msra.mxu0 %v577
      %615 = vmatprep.subr.bf16.mxu0 0
      %616 = vmatpush2.bf16.msra.mxu0 %v576
      %617 = vmatprep.subr.bf16.mxu0 0
      %618 = vmatpush2.bf16.msra.mxu0 %v575
      %619 = vmatprep.subr.bf16.mxu0 0
      %620 = vmatpush2.bf16.msra.mxu0 %v574
      %621 = vmatprep.subr.bf16.mxu0 0
      %622 = vmatpush2.bf16.msra.mxu0 %v573
      %623 = vmatprep.subr.bf16.mxu0 0
      %624 = vmatpush2.bf16.msra.mxu0 %v572
      %625 = vmatprep.subr.bf16.mxu0 0
      %626 = vmatpush2.bf16.msra.mxu0 %v571
      %627 = vmatprep.mubr.bf16.mxu0 %v496
      %628 = vmatmul.mubr.bf16.gmra.mxu0 %v495
      %v629 = vpop.f32.mrf.mxu0
      %v630 = vadd.f32 %v483, %v629
      %v631 = vpop.f32.mrf.mxu0
      %v632 = vpop.f32.mrf.mxu0
      %v633 = vadd.f32 %v486, %v632
      %v634 = vpop.f32.mrf.mxu0
      %635 = vdwg.mxu0
      %v636 = vadd.f32 %v630, %v633
      %v637 = vrot.slane %v636, 4
      %v638 = vadd.f32 %v636, %v637
      %v639 = vrot.slane %v638, 2
      %v640 = vadd.f32 %v638, %v639
      %v641 = vrot.slane %v640, 1
      %v642 = vadd.f32 %v640, %v641
      %v643 = vld [vmem:[%s4] sm:$0xff]
      %v644 = vld [vmem:[%s4 + $0x8] sm:$0xff]
      %v645 = vld [vmem:[%s4 + $0x10] sm:$0xff]
      %v646 = vld [vmem:[%s4 + $0x18] sm:$0xff]
      %v647 = vld [vmem:[%s4 + $0x20] sm:$0xff]
      %v648 = vld [vmem:[%s4 + $0x28] sm:$0xff]
      %v649 = vld [vmem:[%s4 + $0x30] sm:$0xff]
      %v650 = vld [vmem:[%s4 + $0x38] sm:$0xff]
      %v651 = vld [vmem:[%s4 + $0x40] sm:$0xff]
      %v652 = vld [vmem:[%s4 + $0x48] sm:$0xff]
      %v653 = vld [vmem:[%s4 + $0x50] sm:$0xff]
      %v654 = vld [vmem:[%s4 + $0x58] sm:$0xff]
      %v655 = vld [vmem:[%s4 + $0x60] sm:$0xff]
      %v656 = vld [vmem:[%s4 + $0x68] sm:$0xff]
      %v657 = vld [vmem:[%s4 + $0x70] sm:$0xff]
      %v658 = vld [vmem:[%s4 + $0x78] sm:$0xff]
      %659 = vmatprep.subr.mxu0 0.0
      %660 = vmatpush1.msra.mxu0 %v658
      %661 = vmatprep.subr.mxu0 0.0
      %662 = vmatpush1.msra.mxu0 %v657
      %663 = vmatprep.subr.mxu0 0.0
      %664 = vmatpush1.msra.mxu0 %v656
      %665 = vmatprep.subr.mxu0 0.0
      %666 = vmatpush1.msra.mxu0 %v655
      %667 = vmatprep.subr.mxu0 0.0
      %668 = vmatpush1.msra.mxu0 %v654
      %669 = vmatprep.subr.mxu0 0.0
      %670 = vmatpush1.msra.mxu0 %v653
      %671 = vmatprep.subr.mxu0 0.0
      %672 = vmatpush1.msra.mxu0 %v652
      %673 = vmatprep.subr.mxu0 0.0
      %674 = vmatpush1.msra.mxu0 %v651
      %675 = vmatprep.subr.mxu0 0.0
      %676 = vmatpush1.msra.mxu0 %v650
      %677 = vmatprep.subr.mxu0 0.0
      %678 = vmatpush1.msra.mxu0 %v649
      %679 = vmatprep.subr.mxu0 0.0
      %680 = vmatpush1.msra.mxu0 %v648
      %681 = vmatprep.subr.mxu0 0.0
      %682 = vmatpush1.msra.mxu0 %v647
      %683 = vmatprep.subr.mxu0 0.0
      %684 = vmatpush1.msra.mxu0 %v646
      %685 = vmatprep.subr.mxu0 0.0
      %686 = vmatpush1.msra.mxu0 %v645
      %687 = vmatprep.subr.mxu0 0.0
      %688 = vmatpush1.msra.mxu0 %v644
      %689 = vmatprep.subr.mxu0 0.0
      %690 = vmatpush1.msra.mxu0 %v643
      %691 = vmatprep.subr.mxu0 0.0
      %692 = vmatpush2.msra.mxu0 0.0
      %693 = vmatprep.subr.mxu0 0.0
      %694 = vmatpush2.msra.mxu0 0.0
      %695 = vmatprep.subr.mxu0 0.0
      %696 = vmatpush2.msra.mxu0 0.0
      %697 = vmatprep.subr.mxu0 0.0
      %698 = vmatpush2.msra.mxu0 0.0
      %699 = vmatprep.subr.mxu0 0.0
      %700 = vmatpush2.msra.mxu0 0.0
      %701 = vmatprep.subr.mxu0 0.0
      %702 = vmatpush2.msra.mxu0 0.0
      %703 = vmatprep.subr.mxu0 0.0
      %704 = vmatpush2.msra.mxu0 0.0
      %705 = vmatprep.subr.mxu0 0.0
      %706 = vmatpush2.msra.mxu0 0.0
      %707 = vmatprep.subr.mxu0 0.0
      %708 = vmatpush2.msra.mxu0 0.0
      %709 = vmatprep.subr.mxu0 0.0
      %710 = vmatpush2.msra.mxu0 0.0
      %711 = vmatprep.subr.mxu0 0.0
      %712 = vmatpush2.msra.mxu0 0.0
      %713 = vmatprep.subr.mxu0 0.0
      %714 = vmatpush2.msra.mxu0 0.0
      %715 = vmatprep.subr.mxu0 0.0
      %716 = vmatpush2.msra.mxu0 0.0
      %717 = vmatprep.subr.mxu0 0.0
      %718 = vmatpush2.msra.mxu0 0.0
      %719 = vmatprep.subr.mxu0 0.0
      %720 = vmatpush2.msra.mxu0 0.0
      %721 = vmatprep.subr.mxu0 0.0
      %722 = vmatpush2.msra.mxu0 0.0
      %723 = vmatprep.mubr.f32.mxu0 0.0
      %724 = vmatmul.mubr.f32.gmra.mxu0 %v642
      %v725 = vpop.f32.mrf.mxu0
      %v726 = vadd.f32 0.0, %v725
      %v727 = vpop.f32.mrf.mxu0
      %728 = vdwg.mxu0
      %v729 = vlaneseq
      %v730 = vshrl.u32 %v729, 7
      %v731 = vsub.s32 0, %v730
      %v732 = vrot.slane %v726, %v731
      %v733 = vsub.f32 %v630, %v732
      %v734 = vsub.f32 %v633, %v732
      %v735 = vmul.f32 %v733, %v733
      %v736 = vmul.f32 %v734, %v734
      %v737 = vadd.f32 %v735, %v736
      %v738 = vrot.slane %v737, 4
      %v739 = vadd.f32 %v737, %v738
      %v740 = vrot.slane %v739, 2
      %v741 = vadd.f32 %v739, %v740
      %v742 = vrot.slane %v741, 1
      %v743 = vadd.f32 %v741, %v742
      %744 = vmatprep.subr.mxu0 0.0
      %745 = vmatpush1.msra.mxu0 %v658
      %746 = vmatprep.subr.mxu0 0.0
      %747 = vmatpush1.msra.mxu0 %v657
      %748 = vmatprep.subr.mxu0 0.0
      %749 = vmatpush1.msra.mxu0 %v656
      %750 = vmatprep.subr.mxu0 0.0
      %751 = vmatpush1.msra.mxu0 %v655
      %752 = vmatprep.subr.mxu0 0.0
      %753 = vmatpush1.msra.mxu0 %v654
      %754 = vmatprep.subr.mxu0 0.0
      %755 = vmatpush1.msra.mxu0 %v653
      %756 = vmatprep.subr.mxu0 0.0
      %757 = vmatpush1.msra.mxu0 %v652
      %758 = vmatprep.subr.mxu0 0.0
      %759 = vmatpush1.msra.mxu0 %v651
      %760 = vmatprep.subr.mxu0 0.0
      %761 = vmatpush1.msra.mxu0 %v650
      %762 = vmatprep.subr.mxu0 0.0
      %763 = vmatpush1.msra.mxu0 %v649
      %764 = vmatprep.subr.mxu0 0.0
      %765 = vmatpush1.msra.mxu0 %v648
      %766 = vmatprep.subr.mxu0 0.0
      %767 = vmatpush1.msra.mxu0 %v647
      %768 = vmatprep.subr.mxu0 0.0
      %769 = vmatpush1.msra.mxu0 %v646
      %770 = vmatprep.subr.mxu0 0.0
      %771 = vmatpush1.msra.mxu0 %v645
      %772 = vmatprep.subr.mxu0 0.0
      %773 = vmatpush1.msra.mxu0 %v644
      %774 = vmatprep.subr.mxu0 0.0
      %775 = vmatpush1.msra.mxu0 %v643
      %776 = vmatprep.subr.mxu0 0.0
      %777 = vmatpush2.msra.mxu0 0.0
      %778 = vmatprep.subr.mxu0 0.0
      %779 = vmatpush2.msra.mxu0 0.0
      %780 = vmatprep.subr.mxu0 0.0
      %781 = vmatpush2.msra.mxu0 0.0
      %782 = vmatprep.subr.mxu0 0.0
      %783 = vmatpush2.msra.mxu0 0.0
      %784 = vmatprep.subr.mxu0 0.0
      %785 = vmatpush2.msra.mxu0 0.0
      %786 = vmatprep.subr.mxu0 0.0
      %787 = vmatpush2.msra.mxu0 0.0
      %788 = vmatprep.subr.mxu0 0.0
      %789 = vmatpush2.msra.mxu0 0.0
      %790 = vmatprep.subr.mxu0 0.0
      %791 = vmatpush2.msra.mxu0 0.0
      %792 = vmatprep.subr.mxu0 0.0
      %793 = vmatpush2.msra.mxu0 0.0
      %794 = vmatprep.subr.mxu0 0.0
      %795 = vmatpush2.msra.mxu0 0.0
      %796 = vmatprep.subr.mxu0 0.0
      %797 = vmatpush2.msra.mxu0 0.0
      %798 = vmatprep.subr.mxu0 0.0
      %799 = vmatpush2.msra.mxu0 0.0
      %800 = vmatprep.subr.mxu0 0.0
      %801 = vmatpush2.msra.mxu0 0.0
      %802 = vmatprep.subr.mxu0 0.0
      %803 = vmatpush2.msra.mxu0 0.0
      %804 = vmatprep.subr.mxu0 0.0
      %805 = vmatpush2.msra.mxu0 0.0
      %806 = vmatprep.subr.mxu0 0.0
      %807 = vmatpush2.msra.mxu0 0.0
      %808 = vmatprep.mubr.f32.mxu0 0.0
      %809 = vmatmul.mubr.f32.gmra.mxu0 %v743
      %v810 = vpop.f32.mrf.mxu0
      %v811 = vadd.f32 1e-05, %v810
      %v812 = vpop.f32.mrf.mxu0
      %813 = vdwg.mxu0
      %v814 = vrsqrt.pop %v811
      %v815 = vlaneseq
      %v816 = vshrl.u32 %v815, 7
      %v817 = vsub.s32 0, %v816
      %v818 = vrot.slane %v814, %v817
      %v819 = vmul.f32 %v733, %v818
      %v820 = vmul.f32 %v734, %v818
      %s821 = sld [smem:[#allocation2]]
      %vm822 = vcmp.ge.f32.partialorder %v819, 0.0
      %vm823 = vcmp.ge.f32.partialorder %v820, 0.0
      %v824 = vstv %s821
      %v825 = vmul.f32 %v819, %v824
      %v826 = vmul.f32 %v820, %v824
      %v827 = vsel %vm822, %v819, %v825
      %v828 = vsel %vm823, %v820, %v826
      %v829 = vpack.c.bf16 %v828, %v827
      %v831 = vunpack.c.l.b16 %v829
      %v832 = vunpack.c.h.b16 %v829
      %v833 = vpack.c.b16 %v831, %v831
      %v834 = vpack.c.b16 %v832, %v832
      %837 = vst [vmem:[%s272] sm:$0xf] %v833
      %838 = vst [vmem:[%s272 + $0x4] sm:$0xf] %v834
      %p839 = scmp.lt.s32.totalorder %s18, 1
      %s840 = scalar_select %p839, %s18, 1
      %s841 = smul.addr %s840, 2
      %s842 = smul.addr %s841, 4
      %s843 = scalar_lea.vmem %s6, %s842
      // Predicated region
      $region45: #{unet_monai_forward.15} parent=43 // pred_check
        %p844 = pneg %p172
      $region46: #{unet_monai_forward.15} parent=43 // pred_check_branch
        %846 = sbr.rel (%p844) target = $region48
      $region47: #{unet_monai_forward.15} parent=43 // pred_region
        _
      $region48: #{unet_monai_forward.15} parent=43 // pred_fallthru
        _
    $region44: #{unet_monai_forward.15} parent=5 // pred_fallthru
      _
    %p847 = scmp.le.s32.totalorder 2, %s13
    // Predicated region
    $region49: #{unet_monai_forward.15} parent=5 // pred_check
      %p848 = pneg %p847
    $region50: #{unet_monai_forward.15} parent=5 // pred_check_branch
      %850 = sbr.rel (%p848) target = $region52
    $region51: #{unet_monai_forward.15} parent=5 // pred_region
      %s851 = ssub.s32 %s13, 2
      // Predicated region
      $region53: #{unet_monai_forward.15} parent=51 // pred_check
        %p852 = pneg %p178
      $region54: #{unet_monai_forward.15} parent=51 // pred_check_branch
        %854 = sbr.rel (%p852) target = $region56
      $region55: #{unet_monai_forward.15} parent=51 // pred_region
        %p855 = scmp.lt.s32.totalorder %s19, 1
        %s856 = scalar_select %p855, %s19, 1
        %s857 = smul.addr %s856, 2
        %s858 = smul.addr %s857, 4
        %s859 = scalar_lea.vmem %s6, %s858
      $region56: #{unet_monai_forward.15} parent=51 // pred_fallthru
        _
    $region52: #{unet_monai_forward.15} parent=5 // pred_fallthru
      _
  $region6: #{unet_monai_forward.15} parent=0 // loop_footer
    %s17 = sadd.s32 1, %s13
  $region7: #{unet_monai_forward.15} parent=0 // loop_footer_branch
    %12 = sbr.rel target = $region3
  $region8: #{unet_monai_forward.15} parent=0 // loop_exit
    _

// kernel: unet_monai_forward.16
$region0: #{unet_monai_forward.16}
  #allocation0 [shape = 'u32[]', space=smem, size = 0x4, offset = 0x4, fixed_abs, tag = 'smem constant byte address 0x4 - core index']
  #allocation1 [shape = 'u32[144,128]{1,0:T(1,128)}', space=vmem, size = 0x12000, scoped, tag = 'internal scratch']
  #allocation2 [shape = 'f32[1]{0:T(128)S(6)}', space=smem, size = 0x200, scoped, tag = 'scoped memory for unet_monai_forward.16']
  %s0 = inlined_call_operand.vmem [shape: bf16[2,128,64], index: 0, kind: input, shape index: {}]
  %s1 = inlined_call_operand.vmem [shape: bf16[2,128,64], index: 1, kind: input, shape index: {}]
  %s2 = inlined_call_operand.vmem [shape: bf16[64,128], index: 2, kind: input, shape index: {}]
  %s3 = inlined_call_operand.vmem [shape: bf16[64,128], index: 3, kind: input, shape index: {}]
  %s4 = inlined_call_operand.vmem [shape: f32[64,64], index: 4, kind: input, shape index: {}]
  %s5 = inlined_call_operand.<no memory space> [shape: f32[1], index: 5, kind: input, shape index: {}]
  %s6 = inlined_call_operand.vmem [shape: bf16[2,64,64], index: 6, kind: output, shape index: {}]
  %s7 = sld [smem:[#allocation0]]
  $region57: #{unet_monai_forward.16} parent=0
    _
  %s9 = ssub.s32 1, %s7
  %s10 = scalar_select 0, %s9, %s7
  %11 = sst [smem:[#allocation2]] %s5
  loop: start=0, step=1, limit=4
  $region2: #{unet_monai_forward.16} parent=0 // loop_pre_header
    _
  $region3: #{unet_monai_forward.16} parent=0 // loop_header
    %s13 = sphi 0, %s17
    %p14 = scmp.ge.s32.totalorder %s13, 4
    %s23 = sphi 0, %s25
    %s26 = sphi 0, %s23
    %s27 = sphi 0, %s26
    %s43 = sphi 0, %s27
    %s49 = sphi 0, %s51
    %s52 = sphi 0, %s49
    %s53 = sphi 0, %s52
    %s69 = sphi 0, %s53
    %s73 = sphi 0, %s73
    %s75 = sphi 0, %s73
    %s76 = sphi 0, %s75
    %s90 = sphi 0, %s76
    %s94 = sphi 0, %s94
    %s96 = sphi 0, %s94
    %s97 = sphi 0, %s96
    %s111 = sphi 0, %s97
    %s115 = sphi 0, %s115
    %s117 = sphi 0, %s115
    %s118 = sphi 0, %s117
    %s132 = sphi 0, %s118
    %s136 = sphi 0, %s136
    %s138 = sphi 0, %s136
    %s139 = sphi 0, %s138
    %s153 = sphi 0, %s139
    %s159 = sphi 0, %s161
    %s162 = sphi 0, %s159
    %s163 = sphi 0, %s162
    %s179 = sphi 0, %s163
  $region4: #{unet_monai_forward.16} parent=0 // loop_header_branch
    %16 = sbr.rel (%p14) target = $region8
  $region5: #{unet_monai_forward.16} parent=0 // loop_body
    %s18 = ssub.s32 %s13, 1
    %s19 = ssub.s32 %s13, 2
    %s20 = sadd.s32 %s13, 1
    %s21 = ssub.s32 %s13, %s20
    %p22 = scmp.eq.s32.totalorder %s21, 0
    %s24 = sadd.s32 %s23, 1
    %s25 = scalar_select %p22, %s23, %s24
    %p28 = pneg %p22
    %p29 = scmp.eq.s32.totalorder %s13, 1
    %p30 = por %p28, %p29
    %p31 = scmp.ne.s32.totalorder %s23, %s26
    %p32 = scmp.eq.s32.totalorder %s13, 0
    %p33 = por %p31, %p32
    %p34 = scmp.ne.s32.totalorder %s23, %s26
    %p35 = scmp.eq.s32.totalorder %s18, 1
    %p36 = por %p34, %p35
    %p37 = scmp.ne.s32.totalorder %s26, %s27
    %p38 = scmp.eq.s32.totalorder %s18, 0
    %p39 = por %p37, %p38
    %p40 = scmp.ne.s32.totalorder %s26, %s27
    %p41 = scmp.eq.s32.totalorder %s19, 1
    %p42 = por %p40, %p41
    %p44 = scmp.ne.s32.totalorder %s27, %s43
    %p45 = scmp.eq.s32.totalorder %s19, 0
    %p46 = por %p44, %p45
    %s47 = ssub.s32 %s13, %s20
    %p48 = scmp.eq.s32.totalorder %s47, 0
    %s50 = sadd.s32 %s49, 1
    %s51 = scalar_select %p48, %s49, %s50
    %p54 = pneg %p48
    %p55 = scmp.eq.s32.totalorder %s13, 1
    %p56 = por %p54, %p55
    %p57 = scmp.ne.s32.totalorder %s49, %s52
    %p58 = scmp.eq.s32.totalorder %s13, 0
    %p59 = por %p57, %p58
    %p60 = scmp.ne.s32.totalorder %s49, %s52
    %p61 = scmp.eq.s32.totalorder %s18, 1
    %p62 = por %p60, %p61
    %p63 = scmp.ne.s32.totalorder %s52, %s53
    %p64 = scmp.eq.s32.totalorder %s18, 0
    %p65 = por %p63, %p64
    %p66 = scmp.ne.s32.totalorder %s52, %s53
    %p67 = scmp.eq.s32.totalorder %s19, 1
    %p68 = por %p66, %p67
    %p70 = scmp.ne.s32.totalorder %s53, %s69
    %p71 = scmp.eq.s32.totalorder %s19, 0
    %p72 = por %p70, %p71
    %s74 = sadd.s32 %s73, 1
    %p77 = scmp.eq.s32.totalorder %s13, 1
    %p78 = scmp.ne.s32.totalorder %s73, %s75
    %p79 = scmp.eq.s32.totalorder %s13, 0
    %p80 = por %p78, %p79
    %p81 = scmp.ne.s32.totalorder %s73, %s75
    %p82 = scmp.eq.s32.totalorder %s18, 1
    %p83 = por %p81, %p82
    %p84 = scmp.ne.s32.totalorder %s75, %s76
    %p85 = scmp.eq.s32.totalorder %s18, 0
    %p86 = por %p84, %p85
    %p87 = scmp.ne.s32.totalorder %s75, %s76
    %p88 = scmp.eq.s32.totalorder %s19, 1
    %p89 = por %p87, %p88
    %p91 = scmp.ne.s32.totalorder %s76, %s90
    %p92 = scmp.eq.s32.totalorder %s19, 0
    %p93 = por %p91, %p92
    %s95 = sadd.s32 %s94, 1
    %p98 = scmp.eq.s32.totalorder %s13, 1
    %p99 = scmp.ne.s32.totalorder %s94, %s96
    %p100 = scmp.eq.s32.totalorder %s13, 0
    %p101 = por %p99, %p100
    %p102 = scmp.ne.s32.totalorder %s94, %s96
    %p103 = scmp.eq.s32.totalorder %s18, 1
    %p104 = por %p102, %p103
    %p105 = scmp.ne.s32.totalorder %s96, %s97
    %p106 = scmp.eq.s32.totalorder %s18, 0
    %p107 = por %p105, %p106
    %p108 = scmp.ne.s32.totalorder %s96, %s97
    %p109 = scmp.eq.s32.totalorder %s19, 1
    %p110 = por %p108, %p109
    %p112 = scmp.ne.s32.totalorder %s97, %s111
    %p113 = scmp.eq.s32.totalorder %s19, 0
    %p114 = por %p112, %p113
    %s116 = sadd.s32 %s115, 1
    %p119 = scmp.eq.s32.totalorder %s13, 1
    %p120 = scmp.ne.s32.totalorder %s115, %s117
    %p121 = scmp.eq.s32.totalorder %s13, 0
    %p122 = por %p120, %p121
    %p123 = scmp.ne.s32.totalorder %s115, %s117
    %p124 = scmp.eq.s32.totalorder %s18, 1
    %p125 = por %p123, %p124
    %p126 = scmp.ne.s32.totalorder %s117, %s118
    %p127 = scmp.eq.s32.totalorder %s18, 0
    %p128 = por %p126, %p127
    %p129 = scmp.ne.s32.totalorder %s117, %s118
    %p130 = scmp.eq.s32.totalorder %s19, 1
    %p131 = por %p129, %p130
    %p133 = scmp.ne.s32.totalorder %s118, %s132
    %p134 = scmp.eq.s32.totalorder %s19, 0
    %p135 = por %p133, %p134
    %s137 = sadd.s32 %s136, 1
    %p140 = scmp.eq.s32.totalorder %s13, 1
    %p141 = scmp.ne.s32.totalorder %s136, %s138
    %p142 = scmp.eq.s32.totalorder %s13, 0
    %p143 = por %p141, %p142
    %p144 = scmp.ne.s32.totalorder %s136, %s138
    %p145 = scmp.eq.s32.totalorder %s18, 1
    %p146 = por %p144, %p145
    %p147 = scmp.ne.s32.totalorder %s138, %s139
    %p148 = scmp.eq.s32.totalorder %s18, 0
    %p149 = por %p147, %p148
    %p150 = scmp.ne.s32.totalorder %s138, %s139
    %p151 = scmp.eq.s32.totalorder %s19, 1
    %p152 = por %p150, %p151
    %p154 = scmp.ne.s32.totalorder %s139, %s153
    %p155 = scmp.eq.s32.totalorder %s19, 0
    %p156 = por %p154, %p155
    %s157 = ssub.s32 %s13, %s20
    %p158 = scmp.eq.s32.totalorder %s157, 0
    %s160 = sadd.s32 %s159, 1
    %s161 = scalar_select %p158, %s159, %s160
    %p164 = pneg %p158
    %p165 = scmp.eq.s32.totalorder %s13, 1
    %p166 = por %p164, %p165
    %p167 = scmp.ne.s32.totalorder %s159, %s162
    %p168 = scmp.eq.s32.totalorder %s13, 0
    %p169 = por %p167, %p168
    %p170 = scmp.ne.s32.totalorder %s159, %s162
    %p171 = scmp.eq.s32.totalorder %s18, 1
    %p172 = por %p170, %p171
    %p173 = scmp.ne.s32.totalorder %s162, %s163
    %p174 = scmp.eq.s32.totalorder %s18, 0
    %p175 = por %p173, %p174
    %p176 = scmp.ne.s32.totalorder %s162, %s163
    %p177 = scmp.eq.s32.totalorder %s19, 1
    %p178 = por %p176, %p177
    %p180 = scmp.ne.s32.totalorder %s163, %s179
    %p181 = scmp.eq.s32.totalorder %s19, 0
    %p182 = por %p180, %p181
    %p183 = scmp.le.s32.totalorder 1, %s13
    %p184 = scmp.lt.s32.totalorder %s13, 3
    %p185 = pnand %p183, %p184
    %p186 = pneg %p185
    // Predicated region
    $region9: #{unet_monai_forward.16} parent=5 // pred_check
      _
    $region10: #{unet_monai_forward.16} parent=5 // pred_check_branch
      %188 = sbr.rel (%p185) target = $region12
    $region11: #{unet_monai_forward.16} parent=5 // pred_region
      %s189 = ssub.s32 %s13, 1
      // Predicated region
      $region13: #{unet_monai_forward.16} parent=11 // pred_check
        %p190 = pneg %p86
      $region14: #{unet_monai_forward.16} parent=11 // pred_check_branch
        %192 = sbr.rel (%p190) target = $region16
      $region15: #{unet_monai_forward.16} parent=11 // pred_region
        _
      $region16: #{unet_monai_forward.16} parent=11 // pred_fallthru
        _
      // Predicated region
      $region17: #{unet_monai_forward.16} parent=11 // pred_check
        %p193 = pneg %p107
      $region18: #{unet_monai_forward.16} parent=11 // pred_check_branch
        %195 = sbr.rel (%p193) target = $region20
      $region19: #{unet_monai_forward.16} parent=11 // pred_region
        _
      $region20: #{unet_monai_forward.16} parent=11 // pred_fallthru
        _
      // Predicated region
      $region21: #{unet_monai_forward.16} parent=11 // pred_check
        %p196 = pneg %p128
      $region22: #{unet_monai_forward.16} parent=11 // pred_check_branch
        %198 = sbr.rel (%p196) target = $region24
      $region23: #{unet_monai_forward.16} parent=11 // pred_region
        _
      $region24: #{unet_monai_forward.16} parent=11 // pred_fallthru
        _
      // Predicated region
      $region25: #{unet_monai_forward.16} parent=11 // pred_check
        %p199 = pneg %p149
      $region26: #{unet_monai_forward.16} parent=11 // pred_check_branch
        %201 = sbr.rel (%p199) target = $region28
      $region27: #{unet_monai_forward.16} parent=11 // pred_region
        _
      $region28: #{unet_monai_forward.16} parent=11 // pred_fallthru
        _
    $region12: #{unet_monai_forward.16} parent=5 // pred_fallthru
      _
    %p202 = scmp.lt.s32.totalorder %s13, 2
    // Predicated region
    $region29: #{unet_monai_forward.16} parent=5 // pred_check
      %p203 = pneg %p202
    $region30: #{unet_monai_forward.16} parent=5 // pred_check_branch
      %205 = sbr.rel (%p203) target = $region32
    $region31: #{unet_monai_forward.16} parent=5 // pred_region
      // Predicated region
      $region33: #{unet_monai_forward.16} parent=31 // pred_check
        %p206 = pneg %p33
      $region34: #{unet_monai_forward.16} parent=31 // pred_check_branch
        %208 = sbr.rel (%p206) target = $region36
      $region35: #{unet_monai_forward.16} parent=31 // pred_region
        %p209 = scmp.lt.s32.totalorder %s13, 1
        %s210 = scalar_select %p209, %s13, 1
        %s211 = smul.addr %s210, 16
        %s212 = smul.addr %s211, 4
        %s213 = scalar_lea.vmem %s0, %s212
      $region36: #{unet_monai_forward.16} parent=31 // pred_fallthru
        _
      // Predicated region
      $region37: #{unet_monai_forward.16} parent=31 // pred_check
        %p214 = pneg %p59
      $region38: #{unet_monai_forward.16} parent=31 // pred_check_branch
        %216 = sbr.rel (%p214) target = $region40
      $region39: #{unet_monai_forward.16} parent=31 // pred_region
        %p217 = scmp.lt.s32.totalorder %s13, 1
        %s218 = scalar_select %p217, %s13, 1
        %s219 = smul.addr %s218, 16
        %s220 = smul.addr %s219, 4
        %s221 = scalar_lea.vmem %s1, %s220
      $region40: #{unet_monai_forward.16} parent=31 // pred_fallthru
        _
    $region32: #{unet_monai_forward.16} parent=5 // pred_fallthru
      _
    %p222 = scmp.le.s32.totalorder 1, %s13
    %p223 = scmp.lt.s32.totalorder %s13, 3
    %p224 = pnand %p222, %p223
    %p225 = pneg %p224
    // Predicated region
    $region41: #{unet_monai_forward.16} parent=5 // pred_check
      _
    $region42: #{unet_monai_forward.16} parent=5 // pred_check_branch
      %227 = sbr.rel (%p224) target = $region44
    $region43: #{unet_monai_forward.16} parent=5 // pred_region
      %s228 = ssub.s32 %s13, 1
      %p229 = scmp.lt.s32.totalorder %s18, 1
      %s230 = scalar_select %p229, %s18, 1
      %s231 = smul.addr %s230, 16
      %s232 = smul.addr %s231, 4
      %s233 = scalar_lea.vmem %s0, %s232
      %p234 = pneg %p39
      %p235 = pneg %p36
      %p236 = scmp.lt.s32.totalorder %s18, 1
      %s237 = scalar_select %p236, %s18, 1
      %s238 = smul.addr %s237, 16
      %s239 = smul.addr %s238, 4
      %s240 = scalar_lea.vmem %s1, %s239
      %p241 = pneg %p65
      %p242 = pneg %p62
      %p243 = pneg %p86
      %p244 = pneg %p83
      %p245 = pneg %p107
      %p246 = pneg %p104
      %p247 = pneg %p128
      %p248 = pneg %p125
      %p249 = pneg %p149
      %p250 = pneg %p146
      %p251 = pneg %p175
      %p252 = pneg %p172
      %p253 = scmp.lt.s32.totalorder %s18, 1
      %s254 = scalar_select %p253, %s18, 1
      %s255 = smul.addr %s254, 8
      %s256 = smul.addr %s255, 4
      %s257 = scalar_lea.vmem %s6, %s256
      %p258 = scmp.lt.s32.totalorder %s18, 1
      %s259 = scalar_select %p258, %s18, 1
      %s260 = smul.addr %s259, 16
      %s261 = smul.addr %s260, 4
      %s262 = scalar_lea.vmem %s0, %s261
      %p263 = scmp.lt.s32.totalorder %s18, 1
      %s264 = scalar_select %p263, %s18, 1
      %s265 = smul.addr %s264, 16
      %s266 = smul.addr %s265, 4
      %s267 = scalar_lea.vmem %s1, %s266
      %p268 = scmp.lt.s32.totalorder %s18, 1
      %s269 = scalar_select %p268, %s18, 1
      %s270 = smul.addr %s269, 8
      %s271 = smul.addr %s270, 4
      %s272 = scalar_lea.vmem %s6, %s271
      %v274 = vld [vmem:[%s2] sm:$0xf]
      %v275 = vld [vmem:[%s2 + $0x4] sm:$0xf]
      %v276 = vld [vmem:[%s2 + $0x8] sm:$0xf]
      %v277 = vld [vmem:[%s2 + $0xc] sm:$0xf]
      %v278 = vld [vmem:[%s2 + $0x10] sm:$0xf]
      %v279 = vld [vmem:[%s2 + $0x14] sm:$0xf]
      %v280 = vld [vmem:[%s2 + $0x18] sm:$0xf]
      %v281 = vld [vmem:[%s2 + $0x1c] sm:$0xf]
      %v282 = vld [vmem:[%s262] sm:$0xf]
      %v283 = vld [vmem:[%s262 + $0x4] sm:$0xf]
      %v284 = vld [vmem:[%s262 + $0x8] sm:$0xf]
      %v285 = vld [vmem:[%s262 + $0xc] sm:$0xf]
      %v286 = vld [vmem:[%s262 + $0x10] sm:$0xf]
      %v287 = vld [vmem:[%s262 + $0x14] sm:$0xf]
      %v288 = vld [vmem:[%s262 + $0x18] sm:$0xf]
      %v289 = vld [vmem:[%s262 + $0x1c] sm:$0xf]
      %v290 = vld [vmem:[%s262 + $0x20] sm:$0xf]
      %v291 = vld [vmem:[%s262 + $0x24] sm:$0xf]
      %v292 = vld [vmem:[%s262 + $0x28] sm:$0xf]
      %v293 = vld [vmem:[%s262 + $0x2c] sm:$0xf]
      %v294 = vld [vmem:[%s262 + $0x30] sm:$0xf]
      %v295 = vld [vmem:[%s262 + $0x34] sm:$0xf]
      %v296 = vld [vmem:[%s262 + $0x38] sm:$0xf]
      %v297 = vld [vmem:[%s262 + $0x3c] sm:$0xf]
      %v298 = vld [vmem:[%s3] sm:$0xf]
      %v299 = vld [vmem:[%s3 + $0x4] sm:$0xf]
      %v300 = vld [vmem:[%s3 + $0x8] sm:$0xf]
      %v301 = vld [vmem:[%s3 + $0xc] sm:$0xf]
      %v302 = vld [vmem:[%s3 + $0x10] sm:$0xf]
      %v303 = vld [vmem:[%s3 + $0x14] sm:$0xf]
      %v304 = vld [vmem:[%s3 + $0x18] sm:$0xf]
      %v305 = vld [vmem:[%s3 + $0x1c] sm:$0xf]
      %v306 = vld [vmem:[%s267] sm:$0xf]
      %v307 = vld [vmem:[%s267 + $0x4] sm:$0xf]
      %v308 = vld [vmem:[%s267 + $0x8] sm:$0xf]
      %v309 = vld [vmem:[%s267 + $0xc] sm:$0xf]
      %v310 = vld [vmem:[%s267 + $0x10] sm:$0xf]
      %v311 = vld [vmem:[%s267 + $0x14] sm:$0xf]
      %v312 = vld [vmem:[%s267 + $0x18] sm:$0xf]
      %v313 = vld [vmem:[%s267 + $0x1c] sm:$0xf]
      %v314 = vld [vmem:[%s267 + $0x20] sm:$0xf]
      %v315 = vld [vmem:[%s267 + $0x24] sm:$0xf]
      %v316 = vld [vmem:[%s267 + $0x28] sm:$0xf]
      %v317 = vld [vmem:[%s267 + $0x2c] sm:$0xf]
      %v318 = vld [vmem:[%s267 + $0x30] sm:$0xf]
      %v319 = vld [vmem:[%s267 + $0x34] sm:$0xf]
      %v320 = vld [vmem:[%s267 + $0x38] sm:$0xf]
      %v321 = vld [vmem:[%s267 + $0x3c] sm:$0xf]
      %v330 = vunpack.c.l.b16 %v298
      %v331 = vunpack.c.l.b16 %v299
      %v332 = vunpack.c.l.b16 %v300
      %v333 = vunpack.c.l.b16 %v301
      %v334 = vunpack.c.l.b16 %v302
      %v335 = vunpack.c.l.b16 %v303
      %v336 = vunpack.c.l.b16 %v304
      %v337 = vunpack.c.l.b16 %v305
      %v338 = vpack.c.b16 %v331, %v330
      %v339 = vpack.c.b16 %v333, %v332
      %v340 = vpack.c.b16 %v335, %v334
      %v341 = vpack.c.b16 %v337, %v336
      %v362 = vunpack.c.l.b16 %v306
      %v363 = vunpack.c.l.b16 %v307
      %v364 = vunpack.c.l.b16 %v308
      %v365 = vunpack.c.l.b16 %v309
      %v366 = vunpack.c.l.b16 %v310
      %v367 = vunpack.c.l.b16 %v311
      %v368 = vunpack.c.l.b16 %v312
      %v369 = vunpack.c.l.b16 %v313
      %v370 = vunpack.c.l.b16 %v314
      %v371 = vunpack.c.l.b16 %v315
      %v372 = vunpack.c.l.b16 %v316
      %v373 = vunpack.c.l.b16 %v317
      %v374 = vunpack.c.l.b16 %v318
      %v375 = vunpack.c.l.b16 %v319
      %v376 = vunpack.c.l.b16 %v320
      %v377 = vunpack.c.l.b16 %v321
      %v378 = vpack.c.b16 %v363, %v362
      %v379 = vpack.c.b16 %v365, %v364
      %v380 = vpack.c.b16 %v367, %v366
      %v381 = vpack.c.b16 %v369, %v368
      %v382 = vpack.c.b16 %v371, %v370
      %v383 = vpack.c.b16 %v373, %v372
      %v384 = vpack.c.b16 %v375, %v374
      %v385 = vpack.c.b16 %v377, %v376
      %394 = vmatprep.subr.bf16.mxu0 0
      %395 = vmatpush1.bf16.msra.mxu0 %v385
      %396 = vmatprep.subr.bf16.mxu0 0
      %397 = vmatpush1.bf16.msra.mxu0 %v384
      %398 = vmatprep.subr.bf16.mxu0 0
      %399 = vmatpush1.bf16.msra.mxu0 %v383
      %400 = vmatprep.subr.bf16.mxu0 0
      %401 = vmatpush1.bf16.msra.mxu0 %v382
      %402 = vmatprep.subr.bf16.mxu0 0
      %403 = vmatpush1.bf16.msra.mxu0 %v381
      %404 = vmatprep.subr.bf16.mxu0 0
      %405 = vmatpush1.bf16.msra.mxu0 %v380
      %406 = vmatprep.subr.bf16.mxu0 0
      %407 = vmatpush1.bf16.msra.mxu0 %v379
      %408 = vmatprep.subr.bf16.mxu0 0
      %409 = vmatpush1.bf16.msra.mxu0 %v378
      %410 = vmatprep.subr.bf16.mxu0 0
      %411 = vmatpush2.bf16.msra.mxu0 0
      %412 = vmatprep.subr.bf16.mxu0 0
      %413 = vmatpush2.bf16.msra.mxu0 0
      %414 = vmatprep.subr.bf16.mxu0 0
      %415 = vmatpush2.bf16.msra.mxu0 0
      %416 = vmatprep.subr.bf16.mxu0 0
      %417 = vmatpush2.bf16.msra.mxu0 0
      %418 = vmatprep.subr.bf16.mxu0 0
      %419 = vmatpush2.bf16.msra.mxu0 0
      %420 = vmatprep.subr.bf16.mxu0 0
      %421 = vmatpush2.bf16.msra.mxu0 0
      %422 = vmatprep.subr.bf16.mxu0 0
      %423 = vmatpush2.bf16.msra.mxu0 0
      %424 = vmatprep.subr.bf16.mxu0 0
      %425 = vmatpush2.bf16.msra.mxu0 0
      %426 = vmatprep.mubr.bf16.mxu0 0
      %427 = vmatmul.mubr.bf16.gmra.mxu0 %v338
      %v428 = vpop.f32.mrf.mxu0
      %v429 = vadd.f32 0.0, %v428
      %v430 = vpop.f32.mrf.mxu0
      %v431 = vpop.f32.mrf.mxu0
      %v432 = vadd.f32 0.0, %v431
      %v433 = vpop.f32.mrf.mxu0
      %434 = vmatprep.mubr.bf16.mxu0 0
      %435 = vmatmul.mubr.bf16.gmra.mxu0 %v339
      %v436 = vpop.f32.mrf.mxu0
      %v437 = vadd.f32 0.0, %v436
      %v438 = vpop.f32.mrf.mxu0
      %v439 = vpop.f32.mrf.mxu0
      %v440 = vadd.f32 0.0, %v439
      %v441 = vpop.f32.mrf.mxu0
      %442 = vmatprep.mubr.bf16.mxu0 0
      %443 = vmatmul.mubr.bf16.gmra.mxu0 %v340
      %v444 = vpop.f32.mrf.mxu0
      %v445 = vadd.f32 0.0, %v444
      %v446 = vpop.f32.mrf.mxu0
      %v447 = vpop.f32.mrf.mxu0
      %v448 = vadd.f32 0.0, %v447
      %v449 = vpop.f32.mrf.mxu0
      %450 = vmatprep.mubr.bf16.mxu0 0
      %451 = vmatmul.mubr.bf16.gmra.mxu0 %v341
      %v452 = vpop.f32.mrf.mxu0
      %v453 = vadd.f32 0.0, %v452
      %v454 = vpop.f32.mrf.mxu0
      %v455 = vpop.f32.mrf.mxu0
      %v456 = vadd.f32 0.0, %v455
      %v457 = vpop.f32.mrf.mxu0
      %458 = vdwg.mxu0
      %v467 = vunpack.c.l.b16 %v274
      %v468 = vunpack.c.l.b16 %v275
      %v469 = vunpack.c.l.b16 %v276
      %v470 = vunpack.c.l.b16 %v277
      %v471 = vunpack.c.l.b16 %v278
      %v472 = vunpack.c.l.b16 %v279
      %v473 = vunpack.c.l.b16 %v280
      %v474 = vunpack.c.l.b16 %v281
      %v475 = vpack.c.b16 %v468, %v467
      %v476 = vpack.c.b16 %v470, %v469
      %v477 = vpack.c.b16 %v472, %v471
      %v478 = vpack.c.b16 %v474, %v473
      %v499 = vunpack.c.l.b16 %v282
      %v500 = vunpack.c.l.b16 %v283
      %v501 = vunpack.c.l.b16 %v284
      %v502 = vunpack.c.l.b16 %v285
      %v503 = vunpack.c.l.b16 %v286
      %v504 = vunpack.c.l.b16 %v287
      %v505 = vunpack.c.l.b16 %v288
      %v506 = vunpack.c.l.b16 %v289
      %v507 = vunpack.c.l.b16 %v290
      %v508 = vunpack.c.l.b16 %v291
      %v509 = vunpack.c.l.b16 %v292
      %v510 = vunpack.c.l.b16 %v293
      %v511 = vunpack.c.l.b16 %v294
      %v512 = vunpack.c.l.b16 %v295
      %v513 = vunpack.c.l.b16 %v296
      %v514 = vunpack.c.l.b16 %v297
      %v515 = vpack.c.b16 %v500, %v499
      %v516 = vpack.c.b16 %v502, %v501
      %v517 = vpack.c.b16 %v504, %v503
      %v518 = vpack.c.b16 %v506, %v505
      %v519 = vpack.c.b16 %v508, %v507
      %v520 = vpack.c.b16 %v510, %v509
      %v521 = vpack.c.b16 %v512, %v511
      %v522 = vpack.c.b16 %v514, %v513
      %531 = vmatprep.subr.bf16.mxu0 0
      %532 = vmatpush1.bf16.msra.mxu0 %v522
      %533 = vmatprep.subr.bf16.mxu0 0
      %534 = vmatpush1.bf16.msra.mxu0 %v521
      %535 = vmatprep.subr.bf16.mxu0 0
      %536 = vmatpush1.bf16.msra.mxu0 %v520
      %537 = vmatprep.subr.bf16.mxu0 0
      %538 = vmatpush1.bf16.msra.mxu0 %v519
      %539 = vmatprep.subr.bf16.mxu0 0
      %540 = vmatpush1.bf16.msra.mxu0 %v518
      %541 = vmatprep.subr.bf16.mxu0 0
      %542 = vmatpush1.bf16.msra.mxu0 %v517
      %543 = vmatprep.subr.bf16.mxu0 0
      %544 = vmatpush1.bf16.msra.mxu0 %v516
      %545 = vmatprep.subr.bf16.mxu0 0
      %546 = vmatpush1.bf16.msra.mxu0 %v515
      %547 = vmatprep.subr.bf16.mxu0 0
      %548 = vmatpush2.bf16.msra.mxu0 0
      %549 = vmatprep.subr.bf16.mxu0 0
      %550 = vmatpush2.bf16.msra.mxu0 0
      %551 = vmatprep.subr.bf16.mxu0 0
      %552 = vmatpush2.bf16.msra.mxu0 0
      %553 = vmatprep.subr.bf16.mxu0 0
      %554 = vmatpush2.bf16.msra.mxu0 0
      %555 = vmatprep.subr.bf16.mxu0 0
      %556 = vmatpush2.bf16.msra.mxu0 0
      %557 = vmatprep.subr.bf16.mxu0 0
      %558 = vmatpush2.bf16.msra.mxu0 0
      %559 = vmatprep.subr.bf16.mxu0 0
      %560 = vmatpush2.bf16.msra.mxu0 0
      %561 = vmatprep.subr.bf16.mxu0 0
      %562 = vmatpush2.bf16.msra.mxu0 0
      %563 = vmatprep.mubr.bf16.mxu0 0
      %564 = vmatmul.mubr.bf16.gmra.mxu0 %v475
      %v565 = vpop.f32.mrf.mxu0
      %v566 = vadd.f32 %v429, %v565
      %v567 = vpop.f32.mrf.mxu0
      %v568 = vpop.f32.mrf.mxu0
      %v569 = vadd.f32 %v432, %v568
      %v570 = vpop.f32.mrf.mxu0
      %571 = vmatprep.mubr.bf16.mxu0 0
      %572 = vmatmul.mubr.bf16.gmra.mxu0 %v476
      %v573 = vpop.f32.mrf.mxu0
      %v574 = vadd.f32 %v437, %v573
      %v575 = vpop.f32.mrf.mxu0
      %v576 = vpop.f32.mrf.mxu0
      %v577 = vadd.f32 %v440, %v576
      %v578 = vpop.f32.mrf.mxu0
      %579 = vmatprep.mubr.bf16.mxu0 0
      %580 = vmatmul.mubr.bf16.gmra.mxu0 %v477
      %v581 = vpop.f32.mrf.mxu0
      %v582 = vadd.f32 %v445, %v581
      %v583 = vpop.f32.mrf.mxu0
      %v584 = vpop.f32.mrf.mxu0
      %v585 = vadd.f32 %v448, %v584
      %v586 = vpop.f32.mrf.mxu0
      %587 = vmatprep.mubr.bf16.mxu0 0
      %588 = vmatmul.mubr.bf16.gmra.mxu0 %v478
      %v589 = vpop.f32.mrf.mxu0
      %v590 = vadd.f32 %v453, %v589
      %v591 = vpop.f32.mrf.mxu0
      %v592 = vpop.f32.mrf.mxu0
      %v593 = vadd.f32 %v456, %v592
      %v594 = vpop.f32.mrf.mxu0
      %595 = vdwg.mxu0
      %vm596 = vcmask 523264
      %v597 = vsel %vm596, %v566, 0.0
      %598 = vadd.xlane.f32.xlu0 %v597
      %v599 = vpop.xlane.xlu0 %598
      %v600 = vsel %vm596, %v569, 0.0
      %601 = vadd.xlane.f32.xlu0 %v600
      %v602 = vpop.xlane.xlu0 %601
      %v603 = vsel %vm596, %v574, 0.0
      %604 = vadd.xlane.f32.xlu0 %v603
      %v605 = vpop.xlane.xlu0 %604
      %v606 = vsel %vm596, %v577, 0.0
      %607 = vadd.xlane.f32.xlu0 %v606
      %v608 = vpop.xlane.xlu0 %607
      %v609 = vsel %vm596, %v582, 0.0
      %610 = vadd.xlane.f32.xlu0 %v609
      %v611 = vpop.xlane.xlu0 %610
      %v612 = vsel %vm596, %v585, 0.0
      %613 = vadd.xlane.f32.xlu0 %v612
      %v614 = vpop.xlane.xlu0 %613
      %v615 = vsel %vm596, %v590, 0.0
      %616 = vadd.xlane.f32.xlu0 %v615
      %v617 = vpop.xlane.xlu0 %616
      %v618 = vsel %vm596, %v593, 0.0
      %619 = vadd.xlane.f32.xlu0 %v618
      %v620 = vpop.xlane.xlu0 %619
      %v621 = vld [vmem:[%s4] sm:$0xff]
      %v622 = vld [vmem:[%s4 + $0x8] sm:$0xff]
      %v623 = vld [vmem:[%s4 + $0x10] sm:$0xff]
      %v624 = vld [vmem:[%s4 + $0x18] sm:$0xff]
      %v625 = vld [vmem:[%s4 + $0x20] sm:$0xff]
      %v626 = vld [vmem:[%s4 + $0x28] sm:$0xff]
      %v627 = vld [vmem:[%s4 + $0x30] sm:$0xff]
      %v628 = vld [vmem:[%s4 + $0x38] sm:$0xff]
      %v630 = vsel %vm596, %v621, 0
      %v633 = vsel %vm596, %v622, 0
      %v636 = vsel %vm596, %v623, 0
      %v639 = vsel %vm596, %v624, 0
      %v642 = vsel %vm596, %v625, 0
      %v645 = vsel %vm596, %v626, 0
      %v648 = vsel %vm596, %v627, 0
      %v651 = vsel %vm596, %v628, 0
      %653 = vmatprep.subr.mxu0 0.0
      %654 = vmatpush1.msra.mxu0 0.0
      %655 = vmatprep.subr.mxu0 0.0
      %656 = vmatpush1.msra.mxu0 0.0
      %657 = vmatprep.subr.mxu0 0.0
      %658 = vmatpush1.msra.mxu0 0.0
      %659 = vmatprep.subr.mxu0 0.0
      %660 = vmatpush1.msra.mxu0 0.0
      %661 = vmatprep.subr.mxu0 0.0
      %662 = vmatpush1.msra.mxu0 0.0
      %663 = vmatprep.subr.mxu0 0.0
      %664 = vmatpush1.msra.mxu0 0.0
      %665 = vmatprep.subr.mxu0 0.0
      %666 = vmatpush1.msra.mxu0 0.0
      %667 = vmatprep.subr.mxu0 0.0
      %668 = vmatpush1.msra.mxu0 0.0
      %669 = vmatprep.subr.mxu0 0.0
      %670 = vmatpush1.msra.mxu0 %v620
      %671 = vmatprep.subr.mxu0 0.0
      %672 = vmatpush1.msra.mxu0 %v617
      %673 = vmatprep.subr.mxu0 0.0
      %674 = vmatpush1.msra.mxu0 %v614
      %675 = vmatprep.subr.mxu0 0.0
      %676 = vmatpush1.msra.mxu0 %v611
      %677 = vmatprep.subr.mxu0 0.0
      %678 = vmatpush1.msra.mxu0 %v608
      %679 = vmatprep.subr.mxu0 0.0
      %680 = vmatpush1.msra.mxu0 %v605
      %681 = vmatprep.subr.mxu0 0.0
      %682 = vmatpush1.msra.mxu0 %v602
      %683 = vmatprep.subr.mxu0 0.0
      %684 = vmatpush1.msra.mxu0 %v599
      %685 = vmatprep.subr.mxu0 0.0
      %686 = vmatpush2.msra.mxu0 0.0
      %687 = vmatprep.subr.mxu0 0.0
      %688 = vmatpush2.msra.mxu0 0.0
      %689 = vmatprep.subr.mxu0 0.0
      %690 = vmatpush2.msra.mxu0 0.0
      %691 = vmatprep.subr.mxu0 0.0
      %692 = vmatpush2.msra.mxu0 0.0
      %693 = vmatprep.subr.mxu0 0.0
      %694 = vmatpush2.msra.mxu0 0.0
      %695 = vmatprep.subr.mxu0 0.0
      %696 = vmatpush2.msra.mxu0 0.0
      %697 = vmatprep.subr.mxu0 0.0
      %698 = vmatpush2.msra.mxu0 0.0
      %699 = vmatprep.subr.mxu0 0.0
      %700 = vmatpush2.msra.mxu0 0.0
      %701 = vmatprep.subr.mxu0 0.0
      %702 = vmatpush2.msra.mxu0 0.0
      %703 = vmatprep.subr.mxu0 0.0
      %704 = vmatpush2.msra.mxu0 0.0
      %705 = vmatprep.subr.mxu0 0.0
      %706 = vmatpush2.msra.mxu0 0.0
      %707 = vmatprep.subr.mxu0 0.0
      %708 = vmatpush2.msra.mxu0 0.0
      %709 = vmatprep.subr.mxu0 0.0
      %710 = vmatpush2.msra.mxu0 0.0
      %711 = vmatprep.subr.mxu0 0.0
      %712 = vmatpush2.msra.mxu0 0.0
      %713 = vmatprep.subr.mxu0 0.0
      %714 = vmatpush2.msra.mxu0 0.0
      %715 = vmatprep.subr.mxu0 0.0
      %716 = vmatpush2.msra.mxu0 0.0
      %717 = vmatprep.mubr.f32.mxu0 0.0
      %718 = vmatmul.mubr.f32.gmra.mxu0 %v630
      %v719 = vpop.f32.mrf.mxu0
      %v720 = vadd.f32 0.0, %v719
      %v721 = vpop.f32.mrf.mxu0
      %722 = vmatprep.mubr.f32.mxu0 0.0
      %723 = vmatmul.mubr.f32.gmra.mxu0 %v633
      %v724 = vpop.f32.mrf.mxu0
      %v725 = vadd.f32 0.0, %v724
      %v726 = vpop.f32.mrf.mxu0
      %727 = vmatprep.mubr.f32.mxu0 0.0
      %728 = vmatmul.mubr.f32.gmra.mxu0 %v636
      %v729 = vpop.f32.mrf.mxu0
      %v730 = vadd.f32 0.0, %v729
      %v731 = vpop.f32.mrf.mxu0
      %732 = vmatprep.mubr.f32.mxu0 0.0
      %733 = vmatmul.mubr.f32.gmra.mxu0 %v639
      %v734 = vpop.f32.mrf.mxu0
      %v735 = vadd.f32 0.0, %v734
      %v736 = vpop.f32.mrf.mxu0
      %737 = vmatprep.mubr.f32.mxu0 0.0
      %738 = vmatmul.mubr.f32.gmra.mxu0 %v642
      %v739 = vpop.f32.mrf.mxu0
      %v740 = vadd.f32 0.0, %v739
      %v741 = vpop.f32.mrf.mxu0
      %742 = vmatprep.mubr.f32.mxu0 0.0
      %743 = vmatmul.mubr.f32.gmra.mxu0 %v645
      %v744 = vpop.f32.mrf.mxu0
      %v745 = vadd.f32 0.0, %v744
      %v746 = vpop.f32.mrf.mxu0
      %747 = vmatprep.mubr.f32.mxu0 0.0
      %748 = vmatmul.mubr.f32.gmra.mxu0 %v648
      %v749 = vpop.f32.mrf.mxu0
      %v750 = vadd.f32 0.0, %v749
      %v751 = vpop.f32.mrf.mxu0
      %752 = vmatprep.mubr.f32.mxu0 0.0
      %753 = vmatmul.mubr.f32.gmra.mxu0 %v651
      %v754 = vpop.f32.mrf.mxu0
      %v755 = vadd.f32 0.0, %v754
      %v756 = vpop.f32.mrf.mxu0
      %757 = vdwg.mxu0
      %759 = vset.pattern.permute.xlu0 0
      %760 = vperm.xlu0 %759, %v720
      %v761 = vpop.permute.xlu0 %760
      %764 = vset.pattern.permute.xlu0 0
      %765 = vperm.xlu0 %764, %v725
      %v766 = vpop.permute.xlu0 %765
      %769 = vset.pattern.permute.xlu0 0
      %770 = vperm.xlu0 %769, %v730
      %v771 = vpop.permute.xlu0 %770
      %774 = vset.pattern.permute.xlu0 0
      %775 = vperm.xlu0 %774, %v735
      %v776 = vpop.permute.xlu0 %775
      %779 = vset.pattern.permute.xlu0 0
      %780 = vperm.xlu0 %779, %v740
      %v781 = vpop.permute.xlu0 %780
      %784 = vset.pattern.permute.xlu0 0
      %785 = vperm.xlu0 %784, %v745
      %v786 = vpop.permute.xlu0 %785
      %789 = vset.pattern.permute.xlu0 0
      %790 = vperm.xlu0 %789, %v750
      %v791 = vpop.permute.xlu0 %790
      %794 = vset.pattern.permute.xlu0 0
      %795 = vperm.xlu0 %794, %v755
      %v796 = vpop.permute.xlu0 %795
      %v798 = vsub.f32 %v566, %v761
      %v799 = vsub.f32 %v569, %v766
      %v800 = vsub.f32 %v574, %v771
      %v801 = vsub.f32 %v577, %v776
      %v802 = vsub.f32 %v582, %v781
      %v803 = vsub.f32 %v585, %v786
      %v804 = vsub.f32 %v590, %v791
      %v805 = vsub.f32 %v593, %v796
      %v806 = vmul.f32 %v798, %v798
      %v807 = vmul.f32 %v799, %v799
      %v808 = vmul.f32 %v800, %v800
      %v809 = vmul.f32 %v801, %v801
      %v810 = vmul.f32 %v802, %v802
      %v811 = vmul.f32 %v803, %v803
      %v812 = vmul.f32 %v804, %v804
      %v813 = vmul.f32 %v805, %v805
      %v814 = vsel %vm596, %v806, 0.0
      %815 = vadd.xlane.f32.xlu0 %v814
      %v816 = vpop.xlane.xlu0 %815
      %v817 = vsel %vm596, %v807, 0.0
      %818 = vadd.xlane.f32.xlu0 %v817
      %v819 = vpop.xlane.xlu0 %818
      %v820 = vsel %vm596, %v808, 0.0
      %821 = vadd.xlane.f32.xlu0 %v820
      %v822 = vpop.xlane.xlu0 %821
      %v823 = vsel %vm596, %v809, 0.0
      %824 = vadd.xlane.f32.xlu0 %v823
      %v825 = vpop.xlane.xlu0 %824
      %v826 = vsel %vm596, %v810, 0.0
      %827 = vadd.xlane.f32.xlu0 %v826
      %v828 = vpop.xlane.xlu0 %827
      %v829 = vsel %vm596, %v811, 0.0
      %830 = vadd.xlane.f32.xlu0 %v829
      %v831 = vpop.xlane.xlu0 %830
      %v832 = vsel %vm596, %v812, 0.0
      %833 = vadd.xlane.f32.xlu0 %v832
      %v834 = vpop.xlane.xlu0 %833
      %v835 = vsel %vm596, %v813, 0.0
      %836 = vadd.xlane.f32.xlu0 %v835
      %v837 = vpop.xlane.xlu0 %836
      %838 = vmatprep.subr.mxu0 0.0
      %839 = vmatpush1.msra.mxu0 0.0
      %840 = vmatprep.subr.mxu0 0.0
      %841 = vmatpush1.msra.mxu0 0.0
      %842 = vmatprep.subr.mxu0 0.0
      %843 = vmatpush1.msra.mxu0 0.0
      %844 = vmatprep.subr.mxu0 0.0
      %845 = vmatpush1.msra.mxu0 0.0
      %846 = vmatprep.subr.mxu0 0.0
      %847 = vmatpush1.msra.mxu0 0.0
      %848 = vmatprep.subr.mxu0 0.0
      %849 = vmatpush1.msra.mxu0 0.0
      %850 = vmatprep.subr.mxu0 0.0
      %851 = vmatpush1.msra.mxu0 0.0
      %852 = vmatprep.subr.mxu0 0.0
      %853 = vmatpush1.msra.mxu0 0.0
      %854 = vmatprep.subr.mxu0 0.0
      %855 = vmatpush1.msra.mxu0 %v837
      %856 = vmatprep.subr.mxu0 0.0
      %857 = vmatpush1.msra.mxu0 %v834
      %858 = vmatprep.subr.mxu0 0.0
      %859 = vmatpush1.msra.mxu0 %v831
      %860 = vmatprep.subr.mxu0 0.0
      %861 = vmatpush1.msra.mxu0 %v828
      %862 = vmatprep.subr.mxu0 0.0
      %863 = vmatpush1.msra.mxu0 %v825
      %864 = vmatprep.subr.mxu0 0.0
      %865 = vmatpush1.msra.mxu0 %v822
      %866 = vmatprep.subr.mxu0 0.0
      %867 = vmatpush1.msra.mxu0 %v819
      %868 = vmatprep.subr.mxu0 0.0
      %869 = vmatpush1.msra.mxu0 %v816
      %870 = vmatprep.subr.mxu0 0.0
      %871 = vmatpush2.msra.mxu0 0.0
      %872 = vmatprep.subr.mxu0 0.0
      %873 = vmatpush2.msra.mxu0 0.0
      %874 = vmatprep.subr.mxu0 0.0
      %875 = vmatpush2.msra.mxu0 0.0
      %876 = vmatprep.subr.mxu0 0.0
      %877 = vmatpush2.msra.mxu0 0.0
      %878 = vmatprep.subr.mxu0 0.0
      %879 = vmatpush2.msra.mxu0 0.0
      %880 = vmatprep.subr.mxu0 0.0
      %881 = vmatpush2.msra.mxu0 0.0
      %882 = vmatprep.subr.mxu0 0.0
      %883 = vmatpush2.msra.mxu0 0.0
      %884 = vmatprep.subr.mxu0 0.0
      %885 = vmatpush2.msra.mxu0 0.0
      %886 = vmatprep.subr.mxu0 0.0
      %887 = vmatpush2.msra.mxu0 0.0
      %888 = vmatprep.subr.mxu0 0.0
      %889 = vmatpush2.msra.mxu0 0.0
      %890 = vmatprep.subr.mxu0 0.0
      %891 = vmatpush2.msra.mxu0 0.0
      %892 = vmatprep.subr.mxu0 0.0
      %893 = vmatpush2.msra.mxu0 0.0
      %894 = vmatprep.subr.mxu0 0.0
      %895 = vmatpush2.msra.mxu0 0.0
      %896 = vmatprep.subr.mxu0 0.0
      %897 = vmatpush2.msra.mxu0 0.0
      %898 = vmatprep.subr.mxu0 0.0
      %899 = vmatpush2.msra.mxu0 0.0
      %900 = vmatprep.subr.mxu0 0.0
      %901 = vmatpush2.msra.mxu0 0.0
      %902 = vmatprep.mubr.f32.mxu0 0.0
      %903 = vmatmul.mubr.f32.gmra.mxu0 %v630
      %v904 = vpop.f32.mrf.mxu0
      %v905 = vadd.f32 1e-05, %v904
      %v906 = vpop.f32.mrf.mxu0
      %907 = vmatprep.mubr.f32.mxu0 0.0
      %908 = vmatmul.mubr.f32.gmra.mxu0 %v633
      %v909 = vpop.f32.mrf.mxu0
      %v910 = vadd.f32 1e-05, %v909
      %v911 = vpop.f32.mrf.mxu0
      %912 = vmatprep.mubr.f32.mxu0 0.0
      %913 = vmatmul.mubr.f32.gmra.mxu0 %v636
      %v914 = vpop.f32.mrf.mxu0
      %v915 = vadd.f32 1e-05, %v914
      %v916 = vpop.f32.mrf.mxu0
      %917 = vmatprep.mubr.f32.mxu0 0.0
      %918 = vmatmul.mubr.f32.gmra.mxu0 %v639
      %v919 = vpop.f32.mrf.mxu0
      %v920 = vadd.f32 1e-05, %v919
      %v921 = vpop.f32.mrf.mxu0
      %922 = vmatprep.mubr.f32.mxu0 0.0
      %923 = vmatmul.mubr.f32.gmra.mxu0 %v642
      %v924 = vpop.f32.mrf.mxu0
      %v925 = vadd.f32 1e-05, %v924
      %v926 = vpop.f32.mrf.mxu0
      %927 = vmatprep.mubr.f32.mxu0 0.0
      %928 = vmatmul.mubr.f32.gmra.mxu0 %v645
      %v929 = vpop.f32.mrf.mxu0
      %v930 = vadd.f32 1e-05, %v929
      %v931 = vpop.f32.mrf.mxu0
      %932 = vmatprep.mubr.f32.mxu0 0.0
      %933 = vmatmul.mubr.f32.gmra.mxu0 %v648
      %v934 = vpop.f32.mrf.mxu0
      %v935 = vadd.f32 1e-05, %v934
      %v936 = vpop.f32.mrf.mxu0
      %937 = vmatprep.mubr.f32.mxu0 0.0
      %938 = vmatmul.mubr.f32.gmra.mxu0 %v651
      %v939 = vpop.f32.mrf.mxu0
      %v940 = vadd.f32 1e-05, %v939
      %v941 = vpop.f32.mrf.mxu0
      %942 = vdwg.mxu0
      %v943 = vrsqrt.pop %v905
      %v944 = vrsqrt.pop %v910
      %v945 = vrsqrt.pop %v915
      %v946 = vrsqrt.pop %v920
      %v947 = vrsqrt.pop %v925
      %v948 = vrsqrt.pop %v930
      %v949 = vrsqrt.pop %v935
      %v950 = vrsqrt.pop %v940
      %952 = vset.pattern.permute.xlu0 0
      %953 = vperm.xlu0 %952, %v943
      %v954 = vpop.permute.xlu0 %953
      %957 = vset.pattern.permute.xlu0 0
      %958 = vperm.xlu0 %957, %v944
      %v959 = vpop.permute.xlu0 %958
      %962 = vset.pattern.permute.xlu0 0
      %963 = vperm.xlu0 %962, %v945
      %v964 = vpop.permute.xlu0 %963
      %967 = vset.pattern.permute.xlu0 0
      %968 = vperm.xlu0 %967, %v946
      %v969 = vpop.permute.xlu0 %968
      %972 = vset.pattern.permute.xlu0 0
      %973 = vperm.xlu0 %972, %v947
      %v974 = vpop.permute.xlu0 %973
      %977 = vset.pattern.permute.xlu0 0
      %978 = vperm.xlu0 %977, %v948
      %v979 = vpop.permute.xlu0 %978
      %982 = vset.pattern.permute.xlu0 0
      %983 = vperm.xlu0 %982, %v949
      %v984 = vpop.permute.xlu0 %983
      %987 = vset.pattern.permute.xlu0 0
      %988 = vperm.xlu0 %987, %v950
      %v989 = vpop.permute.xlu0 %988
      %v991 = vmul.f32 %v798, %v954
      %v992 = vmul.f32 %v799, %v959
      %v993 = vmul.f32 %v800, %v964
      %v994 = vmul.f32 %v801, %v969
      %v995 = vmul.f32 %v802, %v974
      %v996 = vmul.f32 %v803, %v979
      %v997 = vmul.f32 %v804, %v984
      %v998 = vmul.f32 %v805, %v989
      %s999 = sld [smem:[#allocation2]]
      %vm1000 = vcmp.ge.f32.partialorder %v991, 0.0
      %vm1001 = vcmp.ge.f32.partialorder %v992, 0.0
      %vm1002 = vcmp.ge.f32.partialorder %v993, 0.0
      %vm1003 = vcmp.ge.f32.partialorder %v994, 0.0
      %vm1004 = vcmp.ge.f32.partialorder %v995, 0.0
      %vm1005 = vcmp.ge.f32.partialorder %v996, 0.0
      %vm1006 = vcmp.ge.f32.partialorder %v997, 0.0
      %vm1007 = vcmp.ge.f32.partialorder %v998, 0.0
      %v1008 = vstv %s999
      %v1009 = vmul.f32 %v991, %v1008
      %v1010 = vmul.f32 %v992, %v1008
      %v1011 = vmul.f32 %v993, %v1008
      %v1012 = vmul.f32 %v994, %v1008
      %v1013 = vmul.f32 %v995, %v1008
      %v1014 = vmul.f32 %v996, %v1008
      %v1015 = vmul.f32 %v997, %v1008
      %v1016 = vmul.f32 %v998, %v1008
      %v1017 = vsel %vm1000, %v991, %v1009
      %v1018 = vsel %vm1001, %v992, %v1010
      %v1019 = vsel %vm1002, %v993, %v1011
      %v1020 = vsel %vm1003, %v994, %v1012
      %v1021 = vsel %vm1004, %v995, %v1013
      %v1022 = vsel %vm1005, %v996, %v1014
      %v1023 = vsel %vm1006, %v997, %v1015
      %v1024 = vsel %vm1007, %v998, %v1016
      %v1025 = vpack.c.bf16 %v1018, %v1017
      %v1026 = vpack.c.bf16 %v1020, %v1019
      %v1027 = vpack.c.bf16 %v1022, %v1021
      %v1028 = vpack.c.bf16 %v1024, %v1023
      %v1033 = vunpack.c.l.b16 %v1025
      %v1034 = vunpack.c.h.b16 %v1025
      %v1035 = vunpack.c.l.b16 %v1026
      %v1036 = vunpack.c.h.b16 %v1026
      %v1037 = vunpack.c.l.b16 %v1027
      %v1038 = vunpack.c.h.b16 %v1027
      %v1039 = vunpack.c.l.b16 %v1028
      %v1040 = vunpack.c.h.b16 %v1028
      %v1041 = vpack.c.b16 %v1033, %v1033
      %v1042 = vpack.c.b16 %v1034, %v1034
      %v1043 = vpack.c.b16 %v1035, %v1035
      %v1044 = vpack.c.b16 %v1036, %v1036
      %v1045 = vpack.c.b16 %v1037, %v1037
      %v1046 = vpack.c.b16 %v1038, %v1038
      %v1047 = vpack.c.b16 %v1039, %v1039
      %v1048 = vpack.c.b16 %v1040, %v1040
      %vm1057 = vcmask 519168
      %1058 = vst.msk [vmem:[%s272] sm:$0xf] %vm1057, %v1041
      %1059 = vst.msk [vmem:[%s272 + $0x4] sm:$0xf] %vm1057, %v1042
      %1060 = vst.msk [vmem:[%s272 + $0x8] sm:$0xf] %vm1057, %v1043
      %1061 = vst.msk [vmem:[%s272 + $0xc] sm:$0xf] %vm1057, %v1044
      %1062 = vst.msk [vmem:[%s272 + $0x10] sm:$0xf] %vm1057, %v1045
      %1063 = vst.msk [vmem:[%s272 + $0x14] sm:$0xf] %vm1057, %v1046
      %1064 = vst.msk [vmem:[%s272 + $0x18] sm:$0xf] %vm1057, %v1047
      %1065 = vst.msk [vmem:[%s272 + $0x1c] sm:$0xf] %vm1057, %v1048
      %p1066 = scmp.lt.s32.totalorder %s18, 1
      %s1067 = scalar_select %p1066, %s18, 1
      %s1068 = smul.addr %s1067, 8
      %s1069 = smul.addr %s1068, 4
      %s1070 = scalar_lea.vmem %s6, %s1069
      // Predicated region
      $region45: #{unet_monai_forward.16} parent=43 // pred_check
        %p1071 = pneg %p172
      $region46: #{unet_monai_forward.16} parent=43 // pred_check_branch
        %1073 = sbr.rel (%p1071) target = $region48
      $region47: #{unet_monai_forward.16} parent=43 // pred_region
        _
      $region48: #{unet_monai_forward.16} parent=43 // pred_fallthru
        _
    $region44: #{unet_monai_forward.16} parent=5 // pred_fallthru
      _
    %p1074 = scmp.le.s32.totalorder 2, %s13
    // Predicated region
    $region49: #{unet_monai_forward.16} parent=5 // pred_check
      %p1075 = pneg %p1074
    $region50: #{unet_monai_forward.16} parent=5 // pred_check_branch
      %1077 = sbr.rel (%p1075) target = $region52
    $region51: #{unet_monai_forward.16} parent=5 // pred_region
      %s1078 = ssub.s32 %s13, 2
      // Predicated region
      $region53: #{unet_monai_forward.16} parent=51 // pred_check
        %p1079 = pneg %p178
      $region54: #{unet_monai_forward.16} parent=51 // pred_check_branch
        %1081 = sbr.rel (%p1079) target = $region56
      $region55: #{unet_monai_forward.16} parent=51 // pred_region
        %p1082 = scmp.lt.s32.totalorder %s19, 1
        %s1083 = scalar_select %p1082, %s19, 1
        %s1084 = smul.addr %s1083, 8
        %s1085 = smul.addr %s1084, 4
        %s1086 = scalar_lea.vmem %s6, %s1085
      $region56: #{unet_monai_forward.16} parent=51 // pred_fallthru
        _
    $region52: #{unet_monai_forward.16} parent=5 // pred_fallthru
      _
  $region6: #{unet_monai_forward.16} parent=0 // loop_footer
    %s17 = sadd.s32 1, %s13
  $region7: #{unet_monai_forward.16} parent=0 // loop_footer_branch
    %12 = sbr.rel target = $region3
  $region8: #{unet_monai_forward.16} parent=0 // loop_exit
    _

// kernel: tile.7
$region0: #{tile.7}
  #allocation0 [shape = 's32[1]{0}', space=sflag, size = 0x4, scoped, tag = 'scoped memory for tile.7']
  %s0 = inlined_call_operand.<no memory space> [shape: f32[], index: 0, kind: input, shape index: {}]
  %s1 = inlined_call_operand.vmem [shape: f32[4,1], index: 1, kind: output, shape index: {}]
  %v2 = vstv %s0
  %3 = vst [vmem:[%s1] sm:$0xf] %v2

// kernel: unet_monai_forward.17
$region0: #{unet_monai_forward.17}
  #allocation0 [shape = 'u32[]', space=smem, size = 0x4, offset = 0x4, fixed_abs, tag = 'smem constant byte address 0x4 - core index']
  #allocation1 [shape = 'u32[144,128]{1,0:T(1,128)}', space=vmem, size = 0x12000, scoped, tag = 'internal scratch']
  %s0 = inlined_call_operand.vmem [shape: bf16[2,64,256], index: 0, kind: input, shape index: {}]
  %s1 = inlined_call_operand.vmem [shape: bf16[2,64,256], index: 1, kind: input, shape index: {}]
  %s2 = inlined_call_operand.vmem [shape: bf16[4,64], index: 2, kind: input, shape index: {}]
  %s3 = inlined_call_operand.vmem [shape: bf16[4,64], index: 3, kind: input, shape index: {}]
  %s4 = inlined_call_operand.vmem [shape: f32[4,1], index: 4, kind: input, shape index: {}]
  %s5 = inlined_call_operand.vmem [shape: f32[2,4,256], index: 5, kind: output, shape index: {}]
  %s6 = sld [smem:[#allocation0]]
  $region53: #{unet_monai_forward.17} parent=0
    _
  %s8 = ssub.s32 1, %s6
  %s9 = scalar_select 0, %s8, %s6
  loop: start=0, step=1, limit=4
  $region2: #{unet_monai_forward.17} parent=0 // loop_pre_header
    _
  $region3: #{unet_monai_forward.17} parent=0 // loop_header
    %s11 = sphi 0, %s15
    %p12 = scmp.ge.s32.totalorder %s11, 4
    %s21 = sphi 0, %s23
    %s24 = sphi 0, %s21
    %s25 = sphi 0, %s24
    %s41 = sphi 0, %s25
    %s47 = sphi 0, %s49
    %s50 = sphi 0, %s47
    %s51 = sphi 0, %s50
    %s67 = sphi 0, %s51
    %s71 = sphi 0, %s71
    %s73 = sphi 0, %s71
    %s74 = sphi 0, %s73
    %s88 = sphi 0, %s74
    %s92 = sphi 0, %s92
    %s94 = sphi 0, %s92
    %s95 = sphi 0, %s94
    %s109 = sphi 0, %s95
    %s113 = sphi 0, %s113
    %s115 = sphi 0, %s113
    %s116 = sphi 0, %s115
    %s130 = sphi 0, %s116
    %s136 = sphi 0, %s138
    %s139 = sphi 0, %s136
    %s140 = sphi 0, %s139
    %s156 = sphi 0, %s140
  $region4: #{unet_monai_forward.17} parent=0 // loop_header_branch
    %14 = sbr.rel (%p12) target = $region8
  $region5: #{unet_monai_forward.17} parent=0 // loop_body
    %s16 = ssub.s32 %s11, 1
    %s17 = ssub.s32 %s11, 2
    %s18 = sadd.s32 %s11, 1
    %s19 = ssub.s32 %s11, %s18
    %p20 = scmp.eq.s32.totalorder %s19, 0
    %s22 = sadd.s32 %s21, 1
    %s23 = scalar_select %p20, %s21, %s22
    %p26 = pneg %p20
    %p27 = scmp.eq.s32.totalorder %s11, 1
    %p28 = por %p26, %p27
    %p29 = scmp.ne.s32.totalorder %s21, %s24
    %p30 = scmp.eq.s32.totalorder %s11, 0
    %p31 = por %p29, %p30
    %p32 = scmp.ne.s32.totalorder %s21, %s24
    %p33 = scmp.eq.s32.totalorder %s16, 1
    %p34 = por %p32, %p33
    %p35 = scmp.ne.s32.totalorder %s24, %s25
    %p36 = scmp.eq.s32.totalorder %s16, 0
    %p37 = por %p35, %p36
    %p38 = scmp.ne.s32.totalorder %s24, %s25
    %p39 = scmp.eq.s32.totalorder %s17, 1
    %p40 = por %p38, %p39
    %p42 = scmp.ne.s32.totalorder %s25, %s41
    %p43 = scmp.eq.s32.totalorder %s17, 0
    %p44 = por %p42, %p43
    %s45 = ssub.s32 %s11, %s18
    %p46 = scmp.eq.s32.totalorder %s45, 0
    %s48 = sadd.s32 %s47, 1
    %s49 = scalar_select %p46, %s47, %s48
    %p52 = pneg %p46
    %p53 = scmp.eq.s32.totalorder %s11, 1
    %p54 = por %p52, %p53
    %p55 = scmp.ne.s32.totalorder %s47, %s50
    %p56 = scmp.eq.s32.totalorder %s11, 0
    %p57 = por %p55, %p56
    %p58 = scmp.ne.s32.totalorder %s47, %s50
    %p59 = scmp.eq.s32.totalorder %s16, 1
    %p60 = por %p58, %p59
    %p61 = scmp.ne.s32.totalorder %s50, %s51
    %p62 = scmp.eq.s32.totalorder %s16, 0
    %p63 = por %p61, %p62
    %p64 = scmp.ne.s32.totalorder %s50, %s51
    %p65 = scmp.eq.s32.totalorder %s17, 1
    %p66 = por %p64, %p65
    %p68 = scmp.ne.s32.totalorder %s51, %s67
    %p69 = scmp.eq.s32.totalorder %s17, 0
    %p70 = por %p68, %p69
    %s72 = sadd.s32 %s71, 1
    %p75 = scmp.eq.s32.totalorder %s11, 1
    %p76 = scmp.ne.s32.totalorder %s71, %s73
    %p77 = scmp.eq.s32.totalorder %s11, 0
    %p78 = por %p76, %p77
    %p79 = scmp.ne.s32.totalorder %s71, %s73
    %p80 = scmp.eq.s32.totalorder %s16, 1
    %p81 = por %p79, %p80
    %p82 = scmp.ne.s32.totalorder %s73, %s74
    %p83 = scmp.eq.s32.totalorder %s16, 0
    %p84 = por %p82, %p83
    %p85 = scmp.ne.s32.totalorder %s73, %s74
    %p86 = scmp.eq.s32.totalorder %s17, 1
    %p87 = por %p85, %p86
    %p89 = scmp.ne.s32.totalorder %s74, %s88
    %p90 = scmp.eq.s32.totalorder %s17, 0
    %p91 = por %p89, %p90
    %s93 = sadd.s32 %s92, 1
    %p96 = scmp.eq.s32.totalorder %s11, 1
    %p97 = scmp.ne.s32.totalorder %s92, %s94
    %p98 = scmp.eq.s32.totalorder %s11, 0
    %p99 = por %p97, %p98
    %p100 = scmp.ne.s32.totalorder %s92, %s94
    %p101 = scmp.eq.s32.totalorder %s16, 1
    %p102 = por %p100, %p101
    %p103 = scmp.ne.s32.totalorder %s94, %s95
    %p104 = scmp.eq.s32.totalorder %s16, 0
    %p105 = por %p103, %p104
    %p106 = scmp.ne.s32.totalorder %s94, %s95
    %p107 = scmp.eq.s32.totalorder %s17, 1
    %p108 = por %p106, %p107
    %p110 = scmp.ne.s32.totalorder %s95, %s109
    %p111 = scmp.eq.s32.totalorder %s17, 0
    %p112 = por %p110, %p111
    %s114 = sadd.s32 %s113, 1
    %p117 = scmp.eq.s32.totalorder %s11, 1
    %p118 = scmp.ne.s32.totalorder %s113, %s115
    %p119 = scmp.eq.s32.totalorder %s11, 0
    %p120 = por %p118, %p119
    %p121 = scmp.ne.s32.totalorder %s113, %s115
    %p122 = scmp.eq.s32.totalorder %s16, 1
    %p123 = por %p121, %p122
    %p124 = scmp.ne.s32.totalorder %s115, %s116
    %p125 = scmp.eq.s32.totalorder %s16, 0
    %p126 = por %p124, %p125
    %p127 = scmp.ne.s32.totalorder %s115, %s116
    %p128 = scmp.eq.s32.totalorder %s17, 1
    %p129 = por %p127, %p128
    %p131 = scmp.ne.s32.totalorder %s116, %s130
    %p132 = scmp.eq.s32.totalorder %s17, 0
    %p133 = por %p131, %p132
    %s134 = ssub.s32 %s11, %s18
    %p135 = scmp.eq.s32.totalorder %s134, 0
    %s137 = sadd.s32 %s136, 1
    %s138 = scalar_select %p135, %s136, %s137
    %p141 = pneg %p135
    %p142 = scmp.eq.s32.totalorder %s11, 1
    %p143 = por %p141, %p142
    %p144 = scmp.ne.s32.totalorder %s136, %s139
    %p145 = scmp.eq.s32.totalorder %s11, 0
    %p146 = por %p144, %p145
    %p147 = scmp.ne.s32.totalorder %s136, %s139
    %p148 = scmp.eq.s32.totalorder %s16, 1
    %p149 = por %p147, %p148
    %p150 = scmp.ne.s32.totalorder %s139, %s140
    %p151 = scmp.eq.s32.totalorder %s16, 0
    %p152 = por %p150, %p151
    %p153 = scmp.ne.s32.totalorder %s139, %s140
    %p154 = scmp.eq.s32.totalorder %s17, 1
    %p155 = por %p153, %p154
    %p157 = scmp.ne.s32.totalorder %s140, %s156
    %p158 = scmp.eq.s32.totalorder %s17, 0
    %p159 = por %p157, %p158
    %p160 = scmp.le.s32.totalorder 1, %s11
    %p161 = scmp.lt.s32.totalorder %s11, 3
    %p162 = pnand %p160, %p161
    %p163 = pneg %p162
    // Predicated region
    $region9: #{unet_monai_forward.17} parent=5 // pred_check
      _
    $region10: #{unet_monai_forward.17} parent=5 // pred_check_branch
      %165 = sbr.rel (%p162) target = $region12
    $region11: #{unet_monai_forward.17} parent=5 // pred_region
      %s166 = ssub.s32 %s11, 1
      // Predicated region
      $region13: #{unet_monai_forward.17} parent=11 // pred_check
        %p167 = pneg %p84
      $region14: #{unet_monai_forward.17} parent=11 // pred_check_branch
        %169 = sbr.rel (%p167) target = $region16
      $region15: #{unet_monai_forward.17} parent=11 // pred_region
        _
      $region16: #{unet_monai_forward.17} parent=11 // pred_fallthru
        _
      // Predicated region
      $region17: #{unet_monai_forward.17} parent=11 // pred_check
        %p170 = pneg %p105
      $region18: #{unet_monai_forward.17} parent=11 // pred_check_branch
        %172 = sbr.rel (%p170) target = $region20
      $region19: #{unet_monai_forward.17} parent=11 // pred_region
        _
      $region20: #{unet_monai_forward.17} parent=11 // pred_fallthru
        _
      // Predicated region
      $region21: #{unet_monai_forward.17} parent=11 // pred_check
        %p173 = pneg %p126
      $region22: #{unet_monai_forward.17} parent=11 // pred_check_branch
        %175 = sbr.rel (%p173) target = $region24
      $region23: #{unet_monai_forward.17} parent=11 // pred_region
        _
      $region24: #{unet_monai_forward.17} parent=11 // pred_fallthru
        _
    $region12: #{unet_monai_forward.17} parent=5 // pred_fallthru
      _
    %p176 = scmp.lt.s32.totalorder %s11, 2
    // Predicated region
    $region25: #{unet_monai_forward.17} parent=5 // pred_check
      %p177 = pneg %p176
    $region26: #{unet_monai_forward.17} parent=5 // pred_check_branch
      %179 = sbr.rel (%p177) target = $region28
    $region27: #{unet_monai_forward.17} parent=5 // pred_region
      // Predicated region
      $region29: #{unet_monai_forward.17} parent=27 // pred_check
        %p180 = pneg %p31
      $region30: #{unet_monai_forward.17} parent=27 // pred_check_branch
        %182 = sbr.rel (%p180) target = $region32
      $region31: #{unet_monai_forward.17} parent=27 // pred_region
        %p183 = scmp.lt.s32.totalorder %s11, 1
        %s184 = scalar_select %p183, %s11, 1
        %s185 = smul.addr %s184, 16
        %s186 = smul.addr %s185, 4
        %s187 = scalar_lea.vmem %s0, %s186
      $region32: #{unet_monai_forward.17} parent=27 // pred_fallthru
        _
      // Predicated region
      $region33: #{unet_monai_forward.17} parent=27 // pred_check
        %p188 = pneg %p57
      $region34: #{unet_monai_forward.17} parent=27 // pred_check_branch
        %190 = sbr.rel (%p188) target = $region36
      $region35: #{unet_monai_forward.17} parent=27 // pred_region
        %p191 = scmp.lt.s32.totalorder %s11, 1
        %s192 = scalar_select %p191, %s11, 1
        %s193 = smul.addr %s192, 16
        %s194 = smul.addr %s193, 4
        %s195 = scalar_lea.vmem %s1, %s194
      $region36: #{unet_monai_forward.17} parent=27 // pred_fallthru
        _
    $region28: #{unet_monai_forward.17} parent=5 // pred_fallthru
      _
    %p196 = scmp.le.s32.totalorder 1, %s11
    %p197 = scmp.lt.s32.totalorder %s11, 3
    %p198 = pnand %p196, %p197
    %p199 = pneg %p198
    // Predicated region
    $region37: #{unet_monai_forward.17} parent=5 // pred_check
      _
    $region38: #{unet_monai_forward.17} parent=5 // pred_check_branch
      %201 = sbr.rel (%p198) target = $region40
    $region39: #{unet_monai_forward.17} parent=5 // pred_region
      %s202 = ssub.s32 %s11, 1
      %p203 = scmp.lt.s32.totalorder %s16, 1
      %s204 = scalar_select %p203, %s16, 1
      %s205 = smul.addr %s204, 16
      %s206 = smul.addr %s205, 4
      %s207 = scalar_lea.vmem %s0, %s206
      %p208 = pneg %p37
      %p209 = pneg %p34
      %p210 = scmp.lt.s32.totalorder %s16, 1
      %s211 = scalar_select %p210, %s16, 1
      %s212 = smul.addr %s211, 16
      %s213 = smul.addr %s212, 4
      %s214 = scalar_lea.vmem %s1, %s213
      %p215 = pneg %p63
      %p216 = pneg %p60
      %p217 = pneg %p84
      %p218 = pneg %p81
      %p219 = pneg %p105
      %p220 = pneg %p102
      %p221 = pneg %p126
      %p222 = pneg %p123
      %p223 = pneg %p152
      %p224 = pneg %p149
      %p225 = scmp.lt.s32.totalorder %s16, 1
      %s226 = scalar_select %p225, %s16, 1
      %s227 = smul.addr %s226, 2
      %s228 = smul.addr %s227, 4
      %s229 = scalar_lea.vmem %s5, %s228
      %p230 = scmp.lt.s32.totalorder %s16, 1
      %s231 = scalar_select %p230, %s16, 1
      %s232 = smul.addr %s231, 16
      %s233 = smul.addr %s232, 4
      %s234 = scalar_lea.vmem %s0, %s233
      %p235 = scmp.lt.s32.totalorder %s16, 1
      %s236 = scalar_select %p235, %s16, 1
      %s237 = smul.addr %s236, 16
      %s238 = smul.addr %s237, 4
      %s239 = scalar_lea.vmem %s1, %s238
      %p240 = scmp.lt.s32.totalorder %s16, 1
      %s241 = scalar_select %p240, %s16, 1
      %s242 = smul.addr %s241, 2
      %s243 = smul.addr %s242, 4
      %s244 = scalar_lea.vmem %s5, %s243
      %v246 = vld [vmem:[%s2] sm:$0x3]
      %v247 = vld [vmem:[%s234] sm:$0xff]
      %v248 = vld [vmem:[%s234 + $0x8] sm:$0xff]
      %v249 = vld [vmem:[%s234 + $0x10] sm:$0xff]
      %v250 = vld [vmem:[%s234 + $0x18] sm:$0xff]
      %v251 = vld [vmem:[%s234 + $0x20] sm:$0xff]
      %v252 = vld [vmem:[%s234 + $0x28] sm:$0xff]
      %v253 = vld [vmem:[%s234 + $0x30] sm:$0xff]
      %v254 = vld [vmem:[%s234 + $0x38] sm:$0xff]
      %v255 = vld [vmem:[%s3] sm:$0x3]
      %v256 = vld [vmem:[%s239] sm:$0xff]
      %v257 = vld [vmem:[%s239 + $0x8] sm:$0xff]
      %v258 = vld [vmem:[%s239 + $0x10] sm:$0xff]
      %v259 = vld [vmem:[%s239 + $0x18] sm:$0xff]
      %v260 = vld [vmem:[%s239 + $0x20] sm:$0xff]
      %v261 = vld [vmem:[%s239 + $0x28] sm:$0xff]
      %v262 = vld [vmem:[%s239 + $0x30] sm:$0xff]
      %v263 = vld [vmem:[%s239 + $0x38] sm:$0xff]
      %v272 = vunpack.c.l.b16 %v256
      %v273 = vunpack.c.h.b16 %v256
      %v274 = vunpack.c.l.b16 %v257
      %v275 = vunpack.c.h.b16 %v257
      %v276 = vunpack.c.l.b16 %v258
      %v277 = vunpack.c.h.b16 %v258
      %v278 = vunpack.c.l.b16 %v259
      %v279 = vunpack.c.h.b16 %v259
      %v280 = vunpack.c.l.b16 %v260
      %v281 = vunpack.c.h.b16 %v260
      %v282 = vunpack.c.l.b16 %v261
      %v283 = vunpack.c.h.b16 %v261
      %v284 = vunpack.c.l.b16 %v262
      %v285 = vunpack.c.h.b16 %v262
      %v286 = vunpack.c.l.b16 %v263
      %v287 = vunpack.c.h.b16 %v263
      %v288 = vpack.c.b16 %v274, %v272
      %v289 = vpack.c.b16 %v275, %v273
      %v290 = vpack.c.b16 %v278, %v276
      %v291 = vpack.c.b16 %v279, %v277
      %v292 = vpack.c.b16 %v282, %v280
      %v293 = vpack.c.b16 %v283, %v281
      %v294 = vpack.c.b16 %v286, %v284
      %v295 = vpack.c.b16 %v287, %v285
      %vm304 = vcmask 523264
      %v306 = vsel %vm304, %v255, 0
      %308 = vmatprep.subr.bf16.mxu0 0
      %309 = vmatpush1.bf16.msra.mxu0 0
      %310 = vmatprep.subr.bf16.mxu0 0
      %311 = vmatpush1.bf16.msra.mxu0 0
      %312 = vmatprep.subr.bf16.mxu0 0
      %313 = vmatpush1.bf16.msra.mxu0 0
      %314 = vmatprep.subr.bf16.mxu0 0
      %315 = vmatpush1.bf16.msra.mxu0 0
      %316 = vmatprep.subr.bf16.mxu0 %v295
      %317 = vmatpush1.bf16.msra.mxu0 %v294
      %318 = vmatprep.subr.bf16.mxu0 %v293
      %319 = vmatpush1.bf16.msra.mxu0 %v292
      %320 = vmatprep.subr.bf16.mxu0 %v291
      %321 = vmatpush1.bf16.msra.mxu0 %v290
      %322 = vmatprep.subr.bf16.mxu0 %v289
      %323 = vmatpush1.bf16.msra.mxu0 %v288
      %324 = vmatprep.subr.bf16.mxu0 0
      %325 = vmatpush2.bf16.msra.mxu0 0
      %326 = vmatprep.subr.bf16.mxu0 0
      %327 = vmatpush2.bf16.msra.mxu0 0
      %328 = vmatprep.subr.bf16.mxu0 0
      %329 = vmatpush2.bf16.msra.mxu0 0
      %330 = vmatprep.subr.bf16.mxu0 0
      %331 = vmatpush2.bf16.msra.mxu0 0
      %332 = vmatprep.subr.bf16.mxu0 0
      %333 = vmatpush2.bf16.msra.mxu0 0
      %334 = vmatprep.subr.bf16.mxu0 0
      %335 = vmatpush2.bf16.msra.mxu0 0
      %336 = vmatprep.subr.bf16.mxu0 0
      %337 = vmatpush2.bf16.msra.mxu0 0
      %338 = vmatprep.subr.bf16.mxu0 0
      %339 = vmatpush2.bf16.msra.mxu0 0
      %340 = vmatprep.mubr.bf16.mxu0 0
      %341 = vmatmul.mubr.bf16.gmra.mxu0 %v306
      %v342 = vpop.f32.mrf.mxu0
      %v343 = vadd.f32 0.0, %v342
      %v344 = vpop.f32.mrf.mxu0
      %v345 = vadd.f32 0.0, %v344
      %v346 = vpop.f32.mrf.mxu0
      %v347 = vpop.f32.mrf.mxu0
      %348 = vdwg.mxu0
      %v357 = vunpack.c.l.b16 %v247
      %v358 = vunpack.c.h.b16 %v247
      %v359 = vunpack.c.l.b16 %v248
      %v360 = vunpack.c.h.b16 %v248
      %v361 = vunpack.c.l.b16 %v249
      %v362 = vunpack.c.h.b16 %v249
      %v363 = vunpack.c.l.b16 %v250
      %v364 = vunpack.c.h.b16 %v250
      %v365 = vunpack.c.l.b16 %v251
      %v366 = vunpack.c.h.b16 %v251
      %v367 = vunpack.c.l.b16 %v252
      %v368 = vunpack.c.h.b16 %v252
      %v369 = vunpack.c.l.b16 %v253
      %v370 = vunpack.c.h.b16 %v253
      %v371 = vunpack.c.l.b16 %v254
      %v372 = vunpack.c.h.b16 %v254
      %v373 = vpack.c.b16 %v359, %v357
      %v374 = vpack.c.b16 %v360, %v358
      %v375 = vpack.c.b16 %v363, %v361
      %v376 = vpack.c.b16 %v364, %v362
      %v377 = vpack.c.b16 %v367, %v365
      %v378 = vpack.c.b16 %v368, %v366
      %v379 = vpack.c.b16 %v371, %v369
      %v380 = vpack.c.b16 %v372, %v370
      %v390 = vsel %vm304, %v246, 0
      %392 = vmatprep.subr.bf16.mxu0 0
      %393 = vmatpush1.bf16.msra.mxu0 0
      %394 = vmatprep.subr.bf16.mxu0 0
      %395 = vmatpush1.bf16.msra.mxu0 0
      %396 = vmatprep.subr.bf16.mxu0 0
      %397 = vmatpush1.bf16.msra.mxu0 0
      %398 = vmatprep.subr.bf16.mxu0 0
      %399 = vmatpush1.bf16.msra.mxu0 0
      %400 = vmatprep.subr.bf16.mxu0 %v380
      %401 = vmatpush1.bf16.msra.mxu0 %v379
      %402 = vmatprep.subr.bf16.mxu0 %v378
      %403 = vmatpush1.bf16.msra.mxu0 %v377
      %404 = vmatprep.subr.bf16.mxu0 %v376
      %405 = vmatpush1.bf16.msra.mxu0 %v375
      %406 = vmatprep.subr.bf16.mxu0 %v374
      %407 = vmatpush1.bf16.msra.mxu0 %v373
      %408 = vmatprep.subr.bf16.mxu0 0
      %409 = vmatpush2.bf16.msra.mxu0 0
      %410 = vmatprep.subr.bf16.mxu0 0
      %411 = vmatpush2.bf16.msra.mxu0 0
      %412 = vmatprep.subr.bf16.mxu0 0
      %413 = vmatpush2.bf16.msra.mxu0 0
      %414 = vmatprep.subr.bf16.mxu0 0
      %415 = vmatpush2.bf16.msra.mxu0 0
      %416 = vmatprep.subr.bf16.mxu0 0
      %417 = vmatpush2.bf16.msra.mxu0 0
      %418 = vmatprep.subr.bf16.mxu0 0
      %419 = vmatpush2.bf16.msra.mxu0 0
      %420 = vmatprep.subr.bf16.mxu0 0
      %421 = vmatpush2.bf16.msra.mxu0 0
      %422 = vmatprep.subr.bf16.mxu0 0
      %423 = vmatpush2.bf16.msra.mxu0 0
      %424 = vmatprep.mubr.bf16.mxu0 0
      %425 = vmatmul.mubr.bf16.gmra.mxu0 %v390
      %v426 = vpop.f32.mrf.mxu0
      %v427 = vadd.f32 %v343, %v426
      %v428 = vpop.f32.mrf.mxu0
      %v429 = vadd.f32 %v345, %v428
      %v430 = vpop.f32.mrf.mxu0
      %v431 = vpop.f32.mrf.mxu0
      %432 = vdwg.mxu0
      %v433 = vld [vmem:[%s4] sm:$0xf]
      %435 = vset.pattern.permute.xlu0 0
      %436 = vperm.xlu0 %435, %v433
      %v437 = vpop.permute.xlu0 %436
      %v439 = vadd.f32 %v427, %v437
      %v440 = vadd.f32 %v429, %v437
      %v443 = vcombine.low %v439, %v440
      %445 = vst [vmem:[%s244] sm:$0xff] %v443
      %p446 = scmp.lt.s32.totalorder %s16, 1
      %s447 = scalar_select %p446, %s16, 1
      %s448 = smul.addr %s447, 2
      %s449 = smul.addr %s448, 4
      %s450 = scalar_lea.vmem %s5, %s449
      // Predicated region
      $region41: #{unet_monai_forward.17} parent=39 // pred_check
        %p451 = pneg %p149
      $region42: #{unet_monai_forward.17} parent=39 // pred_check_branch
        %453 = sbr.rel (%p451) target = $region44
      $region43: #{unet_monai_forward.17} parent=39 // pred_region
        _
      $region44: #{unet_monai_forward.17} parent=39 // pred_fallthru
        _
    $region40: #{unet_monai_forward.17} parent=5 // pred_fallthru
      _
    %p454 = scmp.le.s32.totalorder 2, %s11
    // Predicated region
    $region45: #{unet_monai_forward.17} parent=5 // pred_check
      %p455 = pneg %p454
    $region46: #{unet_monai_forward.17} parent=5 // pred_check_branch
      %457 = sbr.rel (%p455) target = $region48
    $region47: #{unet_monai_forward.17} parent=5 // pred_region
      %s458 = ssub.s32 %s11, 2
      // Predicated region
      $region49: #{unet_monai_forward.17} parent=47 // pred_check
        %p459 = pneg %p155
      $region50: #{unet_monai_forward.17} parent=47 // pred_check_branch
        %461 = sbr.rel (%p459) target = $region52
      $region51: #{unet_monai_forward.17} parent=47 // pred_region
        %p462 = scmp.lt.s32.totalorder %s17, 1
        %s463 = scalar_select %p462, %s17, 1
        %s464 = smul.addr %s463, 2
        %s465 = smul.addr %s464, 4
        %s466 = scalar_lea.vmem %s5, %s465
      $region52: #{unet_monai_forward.17} parent=47 // pred_fallthru
        _
    $region48: #{unet_monai_forward.17} parent=5 // pred_fallthru
      _
  $region6: #{unet_monai_forward.17} parent=0 // loop_footer
    %s15 = sadd.s32 1, %s11
  $region7: #{unet_monai_forward.17} parent=0 // loop_footer_branch
    %10 = sbr.rel target = $region3
  $region8: #{unet_monai_forward.17} parent=0 // loop_exit
    _

</llo_original>
